<compile_context>
chip_gen: v6e
topology: v6e:2x2x1
jax: 0.10.0
libtpu: 0.0.40
codegen_flags: <defaults>
</compile_context>

<pallas_src>
import jax
import jax.numpy as jnp
from jax.experimental import pallas as pl
from jax.experimental.pallas import tpu as pltpu


def conv_head_kernel(x_ref, w_ref, bias_ref, fc1w_ref, fc1b_ref,
                     fc2w_ref, fc2b_ref, out_ref, patch_ref, acc_ref):
    """Fused conv3x3 + folded BN + ReLU + maxpool2x2 + GAP + fc1/ReLU/fc2.

    Grid: (batch, channel-chunk).  Per step:
      x_ref:     (1, H+2, W+2, Cc) bf16  zero-padded NHWC channel chunk
      w_ref:     (9*Cc, Cout)      bf16  conv weights (BN scale folded in),
                                         rows ordered (tap, ci_local)
      bias_ref:  (1, Cout)  f32  folded BN/conv bias
      fc1w_ref:  (Cout, Cout) bf16   fc1b_ref: (1, Cout) f32
      fc2w_ref:  (Cout, NCp)  bf16   fc2b_ref: (1, NCp)  f32  (classes padded)
      out_ref:   (1, 1, NCp)  f32  logits for this image
      patch_ref: (H*W, 9*Cc)  bf16 VMEM scratch (im2col patch)
      acc_ref:   (H*W, Cout)  f32  VMEM scratch (conv accumulator)
    """
    kc = pl.program_id(1)
    n_kc = pl.num_programs(1)

    Hp, Wp, Cc = x_ref.shape[1], x_ref.shape[2], x_ref.shape[3]
    H, W = Hp - 2, Wp - 2
    Cout = acc_ref.shape[1]

    @pl.when(kc == 0)
    def _():
        acc_ref[...] = jnp.zeros_like(acc_ref)

    # im2col for this channel chunk: each of the 9 shifted windows is stored
    # into the patch scratch at a lane offset that is a multiple of Cc (=128).
    for t in range(9):
        ky, kx = t // 3, t % 3
        win = x_ref[0, ky:ky + H, kx:kx + W, :].reshape(H * W, Cc)
        patch_ref[:, t * Cc:(t + 1) * Cc] = win

    # One deep-K bf16 MXU matmul per chunk, f32 accumulation across chunks.
    acc_ref[...] += jnp.dot(patch_ref[...], w_ref[...],
                            preferred_element_type=jnp.float32)

    @pl.when(kc == n_kc - 1)
    def _():
        # BN scale already folded into the weights: epilogue is +bias, ReLU.
        y = jnp.maximum(acc_ref[...] + bias_ref[...], 0.0)        # (H*W, Cout)

        # 2x2 max pool, stride 2: h-direction via leading-axis regroup,
        # w-direction on the already-halved array.
        y4 = y.reshape(H // 2, 2, W, Cout)
        yh = jnp.maximum(y4[:, 0], y4[:, 1])                      # (H/2, W, Cout)
        p4 = yh.reshape(H // 2, W // 2, 2, Cout)
        p = jnp.maximum(p4[:, :, 0, :], p4[:, :, 1, :])           # (H/2, W/2, Cout)

        # Global average pool -> (1, Cout) f32.
        hw = (H // 2) * (W // 2)
        g = jnp.sum(p.reshape(hw, Cout), axis=0, keepdims=True) * (1.0 / float(hw))

        # fc1 -> ReLU -> (Dropout eval identity) -> fc2.
        h = jnp.dot(g.astype(jnp.bfloat16), fc1w_ref[...],
                    preferred_element_type=jnp.float32) + fc1b_ref[...]
        h = jnp.maximum(h, 0.0)
        logits = jnp.dot(h.astype(jnp.bfloat16), fc2w_ref[...],
                         preferred_element_type=jnp.float32) + fc2b_ref[...]
        out_ref[0] = logits


def xception_head(x_nchw, params, *, c_chunk=None):
    """x_nchw: [N, Cin, H, W] f32 backbone feature map -> [N, num_classes]."""
    (conv_w, conv_b, gamma, beta, run_mean, run_var,
     fc1_w, fc1_b, fc2_w, fc2_b) = params

    N, Cin, H, W = x_nchw.shape
    Cout = conv_w.shape[3]
    NC = fc2_w.shape[1]
    assert H % 2 == 0 and W % 2 == 0

    # K-tile size over input channels (one chunk carries all 9 taps of those
    # channels).  256 -> 2.3 MiB bf16 weight blocks at real Xception widths.
    if c_chunk is None:
        c_chunk = min(Cin, 256)
    assert Cin % c_chunk == 0 and c_chunk % 128 == 0
    n_kc = Cin // c_chunk

    # Fold BatchNorm (eval) into the conv: per-out-channel scale goes into the
    # weights, the remaining affine becomes a single f32 bias.
    eps = 1e-5
    scale = gamma / jnp.sqrt(run_var + eps)                                # (Cout,)
    bias = (beta - run_mean * scale + conv_b * scale).astype(jnp.float32)

    # HWIO (3,3,Cin,Cout) * scale -> chunked (kc, tap, ci_local) row order,
    # matching the in-kernel im2col patch layout.
    w_scaled = conv_w * scale[None, None, None, :]
    w_conv = (w_scaled.reshape(3, 3, n_kc, c_chunk, Cout)
              .transpose(2, 0, 1, 3, 4)
              .reshape(n_kc * 9 * c_chunk, Cout)
              .astype(jnp.bfloat16))

    # Cast to bf16 BEFORE transpose/pad so the single pre-kernel activation
    # materialization is half-width (XLA fuses cast+transpose+pad).
    x = jnp.transpose(x_nchw.astype(jnp.bfloat16), (0, 2, 3, 1))
    x = jnp.pad(x, ((0, 0), (1, 1), (1, 1), (0, 0)))

    # Pad classes to a lane-dense 128 so the logits store is unmasked.
    NCp = max(128, ((NC + 127) // 128) * 128)
    w2p = (jnp.zeros((Cout, NCp), jnp.float32).at[:, :NC].set(fc2_w)
           .astype(jnp.bfloat16))
    b2p = jnp.zeros((1, NCp), jnp.float32).at[0, :NC].set(fc2_b)

    logits_p = pl.pallas_call(
        conv_head_kernel,
        out_shape=jax.ShapeDtypeStruct((N, 1, NCp), jnp.float32),
        grid_spec=pltpu.PrefetchScalarGridSpec(
            num_scalar_prefetch=0,
            grid=(N, n_kc),
            in_specs=[
                pl.BlockSpec((1, H + 2, W + 2, c_chunk),
                             lambda b, kc: (b, 0, 0, kc)),
                pl.BlockSpec((9 * c_chunk, Cout), lambda b, kc: (kc, 0)),
                pl.BlockSpec((1, Cout), lambda b, kc: (0, 0)),
                pl.BlockSpec((Cout, Cout), lambda b, kc: (0, 0)),
                pl.BlockSpec((1, Cout), lambda b, kc: (0, 0)),
                pl.BlockSpec((Cout, NCp), lambda b, kc: (0, 0)),
                pl.BlockSpec((1, NCp), lambda b, kc: (0, 0)),
            ],
            out_specs=pl.BlockSpec((1, 1, NCp), lambda b, kc: (b, 0, 0)),
            scratch_shapes=[
                pltpu.VMEM((H * W, 9 * c_chunk), jnp.bfloat16),   # im2col patch
                pltpu.VMEM((H * W, Cout), jnp.float32),           # conv accum
            ],
        ),
        compiler_params=pltpu.CompilerParams(
            dimension_semantics=("parallel", "arbitrary"),
            vmem_limit_bytes=32 * 1024 * 1024,
        ),
    )(x, w_conv, bias.reshape(1, Cout),
      fc1_w.astype(jnp.bfloat16), fc1_b.reshape(1, Cout).astype(jnp.float32),
      w2p, b2p)

    return logits_p.reshape(N, NCp)[:, :NC]


if __name__ == "__main__":
    key = jax.random.PRNGKey(0)
    ks = jax.random.split(key, 8)

    # Small shapes: N=2, backbone feature map 128 x 16 x 16 (stands in for
    # Xception's 2048-channel map), conv out 512, num_classes=5.
    N, Cin, H, W = 2, 128, 16, 16
    Cout, NC = 512, 5

    x = jax.random.normal(ks[0], (N, Cin, H, W), jnp.float32)

    conv_w = jax.random.normal(ks[1], (3, 3, Cin, Cout), jnp.float32) * 0.02  # HWIO
    conv_b = jax.random.normal(ks[2], (Cout,), jnp.float32) * 0.02
    gamma = jnp.ones((Cout,), jnp.float32)
    beta = jnp.zeros((Cout,), jnp.float32)
    run_mean = jnp.zeros((Cout,), jnp.float32)
    run_var = jnp.ones((Cout,), jnp.float32)
    fc1_w = jax.random.normal(ks[3], (Cout, Cout), jnp.float32) * 0.02        # [in, out]
    fc1_b = jax.random.normal(ks[4], (Cout,), jnp.float32) * 0.02
    fc2_w = jax.random.normal(ks[5], (Cout, NC), jnp.float32) * 0.02          # [in, out]
    fc2_b = jax.random.normal(ks[6], (NC,), jnp.float32) * 0.02

    params = (conv_w, conv_b, gamma, beta, run_mean, run_var,
              fc1_w, fc1_b, fc2_w, fc2_b)

    out = xception_head(x, params)
    jax.block_until_ready(out)
    assert out.shape == (N, NC)
    print("KERNEL_OK")
</pallas_src>

<mosaic_0001>
module attributes {stable_mosaic.version = 11 : i64} {
  func.func @conv_head_kernel(%arg0: i32, %arg1: i32, %arg2: memref<1x18x18x128xbf16, #tpu.memory_space<vmem>>, %arg3: memref<1152x512xbf16, #tpu.memory_space<vmem>>, %arg4: memref<1x512xf32, #tpu.memory_space<vmem>>, %arg5: memref<512x512xbf16, #tpu.memory_space<vmem>>, %arg6: memref<1x512xf32, #tpu.memory_space<vmem>>, %arg7: memref<512x128xbf16, #tpu.memory_space<vmem>>, %arg8: memref<1x128xf32, #tpu.memory_space<vmem>>, %arg9: memref<1x1x128xf32, #tpu.memory_space<vmem>>, %arg10: memref<256x1152xbf16, #tpu.memory_space<vmem>>, %arg11: memref<256x512xf32, #tpu.memory_space<vmem>>) attributes {dimension_semantics = [#tpu.dimension_semantics<parallel>, #tpu.dimension_semantics<arbitrary>], iteration_bounds = array<i64: 2, 1>, scalar_prefetch = 0 : i64, scratch_operands = 2 : i64, tpu.core_type = #tpu.core_type<tc>, window_params = [{transform_indices = @transform_0, window_bounds = array<i64: 1, 18, 18, 128>}, {transform_indices = @transform_1, window_bounds = array<i64: 1152, 512>}, {pipeline_mode = #tpu.pipeline_mode<synchronous>, transform_indices = @transform_2, window_bounds = array<i64: 1, 512>}, {pipeline_mode = #tpu.pipeline_mode<synchronous>, transform_indices = @transform_3, window_bounds = array<i64: 512, 512>}, {pipeline_mode = #tpu.pipeline_mode<synchronous>, transform_indices = @transform_4, window_bounds = array<i64: 1, 512>}, {pipeline_mode = #tpu.pipeline_mode<synchronous>, transform_indices = @transform_5, window_bounds = array<i64: 512, 128>}, {pipeline_mode = #tpu.pipeline_mode<synchronous>, transform_indices = @transform_6, window_bounds = array<i64: 1, 128>}, {transform_indices = @transform_7, window_bounds = array<i64: 1, 1, 128>}]} {
    %c0_i32 = arith.constant 0 : i32
    %0 = arith.cmpi eq, %arg1, %c0_i32 : i32
    %1 = arith.extui %0 : i1 to i32
    %c0_i32_0 = arith.constant 0 : i32
    %2 = arith.cmpi ne, %1, %c0_i32_0 : i32
    scf.if %2 {
      %cst_54 = arith.constant 0.000000e+00 : f32
      %48 = vector.broadcast %cst_54 : f32 to vector<256x512xf32>
      %c0_55 = arith.constant 0 : index
      %c0_56 = arith.constant 0 : index
      %49 = vector.load %arg11[%c0_55, %c0_56] : memref<256x512xf32, #tpu.memory_space<vmem>>, vector<256x512xf32>
      tpu.vector_store %arg11[%c0_55, %c0_56], %48 {strides = array<i32>} : memref<256x512xf32, #tpu.memory_space<vmem>>, vector<256x512xf32>,
    } else {
    }
    %c0 = arith.constant 0 : index
    %c0_1 = arith.constant 0 : index
    %c0_2 = arith.constant 0 : index
    %c0_3 = arith.constant 0 : index
    %3 = vector.load %arg2[%c0, %c0_1, %c0_2, %c0_3] : memref<1x18x18x128xbf16, #tpu.memory_space<vmem>>, vector<1x16x16x128xbf16>
    %4 = vector.shape_cast %3 : vector<1x16x16x128xbf16> to vector<16x16x128xbf16>
    %5 = vector.shape_cast %4 : vector<16x16x128xbf16> to vector<256x128xbf16>
    %c0_4 = arith.constant 0 : index
    %c0_5 = arith.constant 0 : index
    %6 = vector.load %arg10[%c0_4, %c0_5] : memref<256x1152xbf16, #tpu.memory_space<vmem>>, vector<256x128xbf16>
    tpu.vector_store %arg10[%c0_4, %c0_5], %5 {strides = array<i32>} : memref<256x1152xbf16, #tpu.memory_space<vmem>>, vector<256x128xbf16>,
    %c0_6 = arith.constant 0 : index
    %c0_7 = arith.constant 0 : index
    %c1 = arith.constant 1 : index
    %c0_8 = arith.constant 0 : index
    %7 = vector.load %arg2[%c0_6, %c0_7, %c1, %c0_8] : memref<1x18x18x128xbf16, #tpu.memory_space<vmem>>, vector<1x16x16x128xbf16>
    %8 = vector.shape_cast %7 : vector<1x16x16x128xbf16> to vector<16x16x128xbf16>
    %9 = vector.shape_cast %8 : vector<16x16x128xbf16> to vector<256x128xbf16>
    %c0_9 = arith.constant 0 : index
    %c128 = arith.constant 128 : index
    %10 = vector.load %arg10[%c0_9, %c128] : memref<256x1152xbf16, #tpu.memory_space<vmem>>, vector<256x128xbf16>
    tpu.vector_store %arg10[%c0_9, %c128], %9 {strides = array<i32>} : memref<256x1152xbf16, #tpu.memory_space<vmem>>, vector<256x128xbf16>,
    %c0_10 = arith.constant 0 : index
    %c0_11 = arith.constant 0 : index
    %c2 = arith.constant 2 : index
    %c0_12 = arith.constant 0 : index
    %11 = vector.load %arg2[%c0_10, %c0_11, %c2, %c0_12] : memref<1x18x18x128xbf16, #tpu.memory_space<vmem>>, vector<1x16x16x128xbf16>
    %12 = vector.shape_cast %11 : vector<1x16x16x128xbf16> to vector<16x16x128xbf16>
    %13 = vector.shape_cast %12 : vector<16x16x128xbf16> to vector<256x128xbf16>
    %c0_13 = arith.constant 0 : index
    %c256 = arith.constant 256 : index
    %14 = vector.load %arg10[%c0_13, %c256] : memref<256x1152xbf16, #tpu.memory_space<vmem>>, vector<256x128xbf16>
    tpu.vector_store %arg10[%c0_13, %c256], %13 {strides = array<i32>} : memref<256x1152xbf16, #tpu.memory_space<vmem>>, vector<256x128xbf16>,
    %c0_14 = arith.constant 0 : index
    %c1_15 = arith.constant 1 : index
    %c0_16 = arith.constant 0 : index
    %c0_17 = arith.constant 0 : index
    %15 = vector.load %arg2[%c0_14, %c1_15, %c0_16, %c0_17] : memref<1x18x18x128xbf16, #tpu.memory_space<vmem>>, vector<1x16x16x128xbf16>
    %16 = vector.shape_cast %15 : vector<1x16x16x128xbf16> to vector<16x16x128xbf16>
    %17 = vector.shape_cast %16 : vector<16x16x128xbf16> to vector<256x128xbf16>
    %c0_18 = arith.constant 0 : index
    %c384 = arith.constant 384 : index
    %18 = vector.load %arg10[%c0_18, %c384] : memref<256x1152xbf16, #tpu.memory_space<vmem>>, vector<256x128xbf16>
    tpu.vector_store %arg10[%c0_18, %c384], %17 {strides = array<i32>} : memref<256x1152xbf16, #tpu.memory_space<vmem>>, vector<256x128xbf16>,
    %c0_19 = arith.constant 0 : index
    %c1_20 = arith.constant 1 : index
    %c1_21 = arith.constant 1 : index
    %c0_22 = arith.constant 0 : index
    %19 = vector.load %arg2[%c0_19, %c1_20, %c1_21, %c0_22] : memref<1x18x18x128xbf16, #tpu.memory_space<vmem>>, vector<1x16x16x128xbf16>
    %20 = vector.shape_cast %19 : vector<1x16x16x128xbf16> to vector<16x16x128xbf16>
    %21 = vector.shape_cast %20 : vector<16x16x128xbf16> to vector<256x128xbf16>
    %c0_23 = arith.constant 0 : index
    %c512 = arith.constant 512 : index
    %22 = vector.load %arg10[%c0_23, %c512] : memref<256x1152xbf16, #tpu.memory_space<vmem>>, vector<256x128xbf16>
    tpu.vector_store %arg10[%c0_23, %c512], %21 {strides = array<i32>} : memref<256x1152xbf16, #tpu.memory_space<vmem>>, vector<256x128xbf16>,
    %c0_24 = arith.constant 0 : index
    %c1_25 = arith.constant 1 : index
    %c2_26 = arith.constant 2 : index
    %c0_27 = arith.constant 0 : index
    %23 = vector.load %arg2[%c0_24, %c1_25, %c2_26, %c0_27] : memref<1x18x18x128xbf16, #tpu.memory_space<vmem>>, vector<1x16x16x128xbf16>
    %24 = vector.shape_cast %23 : vector<1x16x16x128xbf16> to vector<16x16x128xbf16>
    %25 = vector.shape_cast %24 : vector<16x16x128xbf16> to vector<256x128xbf16>
    %c0_28 = arith.constant 0 : index
    %c640 = arith.constant 640 : index
    %26 = vector.load %arg10[%c0_28, %c640] : memref<256x1152xbf16, #tpu.memory_space<vmem>>, vector<256x128xbf16>
    tpu.vector_store %arg10[%c0_28, %c640], %25 {strides = array<i32>} : memref<256x1152xbf16, #tpu.memory_space<vmem>>, vector<256x128xbf16>,
    %c0_29 = arith.constant 0 : index
    %c2_30 = arith.constant 2 : index
    %c0_31 = arith.constant 0 : index
    %c0_32 = arith.constant 0 : index
    %27 = vector.load %arg2[%c0_29, %c2_30, %c0_31, %c0_32] : memref<1x18x18x128xbf16, #tpu.memory_space<vmem>>, vector<1x16x16x128xbf16>
    %28 = vector.shape_cast %27 : vector<1x16x16x128xbf16> to vector<16x16x128xbf16>
    %29 = vector.shape_cast %28 : vector<16x16x128xbf16> to vector<256x128xbf16>
    %c0_33 = arith.constant 0 : index
    %c768 = arith.constant 768 : index
    %30 = vector.load %arg10[%c0_33, %c768] : memref<256x1152xbf16, #tpu.memory_space<vmem>>, vector<256x128xbf16>
    tpu.vector_store %arg10[%c0_33, %c768], %29 {strides = array<i32>} : memref<256x1152xbf16, #tpu.memory_space<vmem>>, vector<256x128xbf16>,
    %c0_34 = arith.constant 0 : index
    %c2_35 = arith.constant 2 : index
    %c1_36 = arith.constant 1 : index
    %c0_37 = arith.constant 0 : index
    %31 = vector.load %arg2[%c0_34, %c2_35, %c1_36, %c0_37] : memref<1x18x18x128xbf16, #tpu.memory_space<vmem>>, vector<1x16x16x128xbf16>
    %32 = vector.shape_cast %31 : vector<1x16x16x128xbf16> to vector<16x16x128xbf16>
    %33 = vector.shape_cast %32 : vector<16x16x128xbf16> to vector<256x128xbf16>
    %c0_38 = arith.constant 0 : index
    %c896 = arith.constant 896 : index
    %34 = vector.load %arg10[%c0_38, %c896] : memref<256x1152xbf16, #tpu.memory_space<vmem>>, vector<256x128xbf16>
    tpu.vector_store %arg10[%c0_38, %c896], %33 {strides = array<i32>} : memref<256x1152xbf16, #tpu.memory_space<vmem>>, vector<256x128xbf16>,
    %c0_39 = arith.constant 0 : index
    %c2_40 = arith.constant 2 : index
    %c2_41 = arith.constant 2 : index
    %c0_42 = arith.constant 0 : index
    %35 = vector.load %arg2[%c0_39, %c2_40, %c2_41, %c0_42] : memref<1x18x18x128xbf16, #tpu.memory_space<vmem>>, vector<1x16x16x128xbf16>
    %36 = vector.shape_cast %35 : vector<1x16x16x128xbf16> to vector<16x16x128xbf16>
    %37 = vector.shape_cast %36 : vector<16x16x128xbf16> to vector<256x128xbf16>
    %c0_43 = arith.constant 0 : index
    %c1024 = arith.constant 1024 : index
    %38 = vector.load %arg10[%c0_43, %c1024] : memref<256x1152xbf16, #tpu.memory_space<vmem>>, vector<256x128xbf16>
    tpu.vector_store %arg10[%c0_43, %c1024], %37 {strides = array<i32>} : memref<256x1152xbf16, #tpu.memory_space<vmem>>, vector<256x128xbf16>,
    %c0_44 = arith.constant 0 : index
    %c0_45 = arith.constant 0 : index
    %39 = vector.load %arg11[%c0_44, %c0_45] : memref<256x512xf32, #tpu.memory_space<vmem>>, vector<256x512xf32>
    %c0_46 = arith.constant 0 : index
    %c0_47 = arith.constant 0 : index
    %40 = vector.load %arg10[%c0_46, %c0_47] : memref<256x1152xbf16, #tpu.memory_space<vmem>>, vector<256x1152xbf16>
    %c0_48 = arith.constant 0 : index
    %c0_49 = arith.constant 0 : index
    %41 = vector.load %arg3[%c0_48, %c0_49] : memref<1152x512xbf16, #tpu.memory_space<vmem>>, vector<1152x512xbf16>
    %cst = arith.constant dense<0.000000e+00> : vector<256x512xf32>
    %42 = tpu.matmul %40, %41, %cst {dimension_numbers = #tpu.dot_dimension_numbers<[1], [0], [0], [1], [0, 0, 1, 1], [], []>} : vector<256x1152xbf16>, vector<1152x512xbf16>, vector<256x512xf32> -> vector<256x512xf32>
    %43 = arith.addf %39, %42 : vector<256x512xf32>
    %c0_50 = arith.constant 0 : index
    %c0_51 = arith.constant 0 : index
    %44 = vector.load %arg11[%c0_50, %c0_51] : memref<256x512xf32, #tpu.memory_space<vmem>>, vector<256x512xf32>
    tpu.vector_store %arg11[%c0_50, %c0_51], %43 {strides = array<i32>} : memref<256x512xf32, #tpu.memory_space<vmem>>, vector<256x512xf32>,
    %c0_i32_52 = arith.constant 0 : i32
    %45 = arith.cmpi eq, %arg1, %c0_i32_52 : i32
    %46 = arith.extui %45 : i1 to i32
    %c0_i32_53 = arith.constant 0 : i32
    %47 = arith.cmpi ne, %46, %c0_i32_53 : i32
    scf.if %47 {
      %c0_54 = arith.constant 0 : index
      %c0_55 = arith.constant 0 : index
      %48 = vector.load %arg11[%c0_54, %c0_55] : memref<256x512xf32, #tpu.memory_space<vmem>>, vector<256x512xf32>
      %c0_56 = arith.constant 0 : index
      %c0_57 = arith.constant 0 : index
      %49 = vector.load %arg4[%c0_56, %c0_57] : memref<1x512xf32, #tpu.memory_space<vmem>>, vector<1x512xf32>
      %50 = vector.broadcast %49 : vector<1x512xf32> to vector<256x512xf32>
      %51 = arith.addf %48, %50 : vector<256x512xf32>
      %cst_58 = arith.constant 0.000000e+00 : f32
      %52 = vector.broadcast %cst_58 : f32 to vector<256x512xf32>
      %53 = arith.maximumf %51, %52 : vector<256x512xf32>
      %54 = vector.shape_cast %53 : vector<256x512xf32> to vector<8x2x16x512xf32>
      %55 = vector.extract_strided_slice %54 {offsets = [0, 0, 0, 0], sizes = [8, 1, 16, 512], strides = [1, 1, 1, 1]} : vector<8x2x16x512xf32> to vector<8x1x16x512xf32>
      %56 = vector.shape_cast %55 : vector<8x1x16x512xf32> to vector<8x16x512xf32>
      %57 = vector.extract_strided_slice %54 {offsets = [0, 1, 0, 0], sizes = [8, 1, 16, 512], strides = [1, 1, 1, 1]} : vector<8x2x16x512xf32> to vector<8x1x16x512xf32>
      %58 = vector.shape_cast %57 : vector<8x1x16x512xf32> to vector<8x16x512xf32>
      %59 = arith.maximumf %56, %58 : vector<8x16x512xf32>
      %60 = vector.shape_cast %59 : vector<8x16x512xf32> to vector<8x8x2x512xf32>
      %61 = vector.extract_strided_slice %60 {offsets = [0, 0, 0, 0], sizes = [8, 8, 1, 512], strides = [1, 1, 1, 1]} : vector<8x8x2x512xf32> to vector<8x8x1x512xf32>
      %62 = vector.shape_cast %61 : vector<8x8x1x512xf32> to vector<8x8x512xf32>
      %63 = vector.extract_strided_slice %60 {offsets = [0, 0, 1, 0], sizes = [8, 8, 1, 512], strides = [1, 1, 1, 1]} : vector<8x8x2x512xf32> to vector<8x8x1x512xf32>
      %64 = vector.shape_cast %63 : vector<8x8x1x512xf32> to vector<8x8x512xf32>
      %65 = arith.maximumf %62, %64 : vector<8x8x512xf32>
      %66 = vector.shape_cast %65 : vector<8x8x512xf32> to vector<64x512xf32>
      %cst_59 = arith.constant dense<0.000000e+00> : vector<512xf32>
      %67 = vector.multi_reduction <add>, %66, %cst_59 [0] : vector<64x512xf32> to vector<512xf32>
      %68 = vector.shape_cast %67 : vector<512xf32> to vector<1x512xf32>
      %cst_60 = arith.constant 1.562500e-02 : f32
      %69 = vector.broadcast %cst_60 : f32 to vector<1x512xf32>
      %70 = arith.mulf %68, %69 : vector<1x512xf32>
      %71 = arith.truncf %70 : vector<1x512xf32> to vector<1x512xbf16>
      %c0_61 = arith.constant 0 : index
      %c0_62 = arith.constant 0 : index
      %72 = vector.load %arg5[%c0_61, %c0_62] : memref<512x512xbf16, #tpu.memory_space<vmem>>, vector<512x512xbf16>
      %cst_63 = arith.constant dense<0.000000e+00> : vector<1x512xf32>
      %73 = tpu.matmul %71, %72, %cst_63 {dimension_numbers = #tpu.dot_dimension_numbers<[1], [0], [0], [1], [0, 0, 1, 1], [], []>} : vector<1x512xbf16>, vector<512x512xbf16>, vector<1x512xf32> -> vector<1x512xf32>
      %c0_64 = arith.constant 0 : index
      %c0_65 = arith.constant 0 : index
      %74 = vector.load %arg6[%c0_64, %c0_65] : memref<1x512xf32, #tpu.memory_space<vmem>>, vector<1x512xf32>
      %75 = arith.addf %73, %74 : vector<1x512xf32>
      %cst_66 = arith.constant 0.000000e+00 : f32
      %76 = vector.broadcast %cst_66 : f32 to vector<1x512xf32>
      %77 = arith.maximumf %75, %76 : vector<1x512xf32>
      %78 = arith.truncf %77 : vector<1x512xf32> to vector<1x512xbf16>
      %c0_67 = arith.constant 0 : index
      %c0_68 = arith.constant 0 : index
      %79 = vector.load %arg7[%c0_67, %c0_68] : memref<512x128xbf16, #tpu.memory_space<vmem>>, vector<512x128xbf16>
      %cst_69 = arith.constant dense<0.000000e+00> : vector<1x128xf32>
      %80 = tpu.matmul %78, %79, %cst_69 {dimension_numbers = #tpu.dot_dimension_numbers<[1], [0], [0], [1], [0, 0, 1, 1], [], []>} : vector<1x512xbf16>, vector<512x128xbf16>, vector<1x128xf32> -> vector<1x128xf32>
      %c0_70 = arith.constant 0 : index
      %c0_71 = arith.constant 0 : index
      %81 = vector.load %arg8[%c0_70, %c0_71] : memref<1x128xf32, #tpu.memory_space<vmem>>, vector<1x128xf32>
      %82 = arith.addf %80, %81 : vector<1x128xf32>
      %c0_72 = arith.constant 0 : index
      %c0_73 = arith.constant 0 : index
      %c0_74 = arith.constant 0 : index
      %83 = vector.load %arg9[%c0_72, %c0_73, %c0_74] : memref<1x1x128xf32, #tpu.memory_space<vmem>>, vector<1x1x128xf32>
      %84 = vector.shape_cast %83 : vector<1x1x128xf32> to vector<1x128xf32>
      %85 = vector.shape_cast %82 : vector<1x128xf32> to vector<1x1x128xf32>
      tpu.vector_store %arg9[%c0_72, %c0_73, %c0_74], %85 {strides = array<i32>} : memref<1x1x128xf32, #tpu.memory_space<vmem>>, vector<1x1x128xf32>,
    } else {
    }
    return
  }
  func.func @transform_0(%arg0: i32, %arg1: i32) -> (i32, i32, i32, i32) {
    %c0_i32 = arith.constant 0 : i32
    %c0_i32_0 = arith.constant 0 : i32
    %c0_i32_1 = arith.constant 0 : i32
    return %arg0, %c0_i32, %c0_i32_0, %arg1 : i32, i32, i32, i32
  }
  func.func @transform_1(%arg0: i32, %arg1: i32) -> (i32, i32) {
    %c0_i32 = arith.constant 0 : i32
    %c0_i32_0 = arith.constant 0 : i32
    return %arg1, %c0_i32 : i32, i32
  }
  func.func @transform_2(%arg0: i32, %arg1: i32) -> (i32, i32) {
    %c0_i32 = arith.constant 0 : i32
    %c0_i32_0 = arith.constant 0 : i32
    %c0_i32_1 = arith.constant 0 : i32
    return %c0_i32, %c0_i32_0 : i32, i32
  }
  func.func @transform_3(%arg0: i32, %arg1: i32) -> (i32, i32) {
    %c0_i32 = arith.constant 0 : i32
    %c0_i32_0 = arith.constant 0 : i32
    %c0_i32_1 = arith.constant 0 : i32
    return %c0_i32, %c0_i32_0 : i32, i32
  }
  func.func @transform_4(%arg0: i32, %arg1: i32) -> (i32, i32) {
    %c0_i32 = arith.constant 0 : i32
    %c0_i32_0 = arith.constant 0 : i32
    %c0_i32_1 = arith.constant 0 : i32
    return %c0_i32, %c0_i32_0 : i32, i32
  }
  func.func @transform_5(%arg0: i32, %arg1: i32) -> (i32, i32) {
    %c0_i32 = arith.constant 0 : i32
    %c0_i32_0 = arith.constant 0 : i32
    %c0_i32_1 = arith.constant 0 : i32
    return %c0_i32, %c0_i32_0 : i32, i32
  }
  func.func @transform_6(%arg0: i32, %arg1: i32) -> (i32, i32) {
    %c0_i32 = arith.constant 0 : i32
    %c0_i32_0 = arith.constant 0 : i32
    %c0_i32_1 = arith.constant 0 : i32
    return %c0_i32, %c0_i32_0 : i32, i32
  }
  func.func @transform_7(%arg0: i32, %arg1: i32) -> (i32, i32, i32) {
    %c0_i32 = arith.constant 0 : i32
    %c0_i32_0 = arith.constant 0 : i32
    %c0_i32_1 = arith.constant 0 : i32
    return %arg0, %c0_i32, %c0_i32_0 : i32, i32, i32
  }
}

</mosaic_0001>

<llo_original>
// kernel: tpu_custom_call.1
$region0: #{tpu_custom_call.1}
  #allocation0 [shape = 'u32[]', space=smem, size = 0x4, offset = 0x4, fixed_abs, tag = 'smem constant byte address 0x4 - core index']
  #allocation1 [shape = 'u32[144,128]{1,0:T(1,128)}', space=vmem, size = 0x12000, scoped, tag = 'internal scratch']
  #allocation2 [shape = 'bf16[256,1152]{1,0:T(8,128)(2,1)}', space=vmem, size = 0x90000, scoped, tag = 'scratch operand']
  #allocation3 [shape = 'f32[256,512]{1,0:T(8,128)}', space=vmem, size = 0x80000, scoped, tag = 'scratch operand']
  %s0 = inlined_call_operand.vmem [shape: bf16[2,18,18,128], index: 0, kind: input, shape index: {}]
  %s1 = inlined_call_operand.hbm [shape: bf16[1152,512], index: 1, kind: input, shape index: {}]
  %s2 = inlined_call_operand.hbm [shape: f32[1,512], index: 2, kind: input, shape index: {}]
  %s3 = inlined_call_operand.hbm [shape: bf16[512,512], index: 3, kind: input, shape index: {}]
  %s4 = inlined_call_operand.hbm [shape: f32[1,512], index: 4, kind: input, shape index: {}]
  %s5 = inlined_call_operand.hbm [shape: bf16[512,128], index: 5, kind: input, shape index: {}]
  %s6 = inlined_call_operand.hbm [shape: f32[1,128], index: 6, kind: input, shape index: {}]
  %s7 = inlined_call_operand.hbm [shape: f32[2,1,128], index: 7, kind: output, shape index: {}]
  %s8 = sld [smem:[#allocation0]]
  $region93: #{tpu_custom_call.1} parent=0
    _
  %s10 = ssub.s32 1, %s8
  %s11 = scalar_select 0, %s10, %s8
  $region1: #{tpu_custom_call.1} parent=0
    #allocation4 [shape = 'u8[1179648]{0}', space=vmem, size = 0x120000, scoped, tag = 'input window, operand 1, single buffered']
    #allocation5 [shape = 's32[2]{0}', space=sflag, size = 0x8, scoped, tag = 'scoped memory for tpu_custom_call.1']
    #allocation6 [shape = 's32[2]{0}', space=sflag, size = 0x8, scoped, tag = 'scoped memory for tpu_custom_call.1']
    #allocation7 [shape = 'u8[2048]{0}', space=vmem, size = 0x800, scoped, tag = 'input window, operand 2, single buffered']
    #allocation8 [shape = 's32[1]{0}', space=sflag, size = 0x4, scoped, tag = 'scoped memory for tpu_custom_call.1']
    #allocation9 [shape = 'u8[524288]{0}', space=vmem, size = 0x80000, scoped, tag = 'input window, operand 3, single buffered']
    #allocation10 [shape = 'u8[2048]{0}', space=vmem, size = 0x800, scoped, tag = 'input window, operand 4, single buffered']
    #allocation11 [shape = 's32[1]{0}', space=sflag, size = 0x4, scoped, tag = 'scoped memory for tpu_custom_call.1']
    #allocation12 [shape = 'u8[131072]{0}', space=vmem, size = 0x20000, scoped, tag = 'input window, operand 5, single buffered']
    #allocation13 [shape = 'u8[512]{0}', space=vmem, size = 0x400, scoped, tag = 'input window, operand 6, single buffered']
    #allocation14 [shape = 's32[1]{0}', space=sflag, size = 0x4, scoped, tag = 'scoped memory for tpu_custom_call.1']
    #allocation15 [shape = 'u8[1024]{0}', space=vmem, size = 0x400, scoped, tag = 'output window, operand 0']
    %12 = vsyncpa [#allocation5], 0
    %13 = vsyncpa [#allocation8], 0
    %14 = vsyncpa [#allocation11], 0
    %15 = vsyncpa [#allocation14], 0
    %16 = vsyncpa [#allocation6], 0
    %s17 = scalar_lea.sflag [#allocation6], 1
    %18 = vsyncpa %s17, 0
    loop: start=0, step=1, limit=4
    $region2: #{tpu_custom_call.1} parent=1 // loop_pre_header
      _
    $region3: #{tpu_custom_call.1} parent=1 // loop_header
      %s20 = sphi 0, %s24
      %p21 = scmp.ge.s32.totalorder %s20, 4
      %s27 = sphi 0, %s39
      %s28 = sphi 0, %s35
      %s29 = sphi 0, %s27
      %s30 = sphi 0, %s28
      %s31 = sphi 0, %s29
      %s32 = sphi 0, %s30
      %s44 = sphi 0, %s46
      %s47 = sphi 0, %s44
      %s48 = sphi 0, %s47
      %s64 = sphi 0, %s48
      %s70 = sphi 0, %s72
      %s73 = sphi 0, %s70
      %s74 = sphi 0, %s73
      %s90 = sphi 0, %s74
      %s94 = sphi 0, %s94
      %s96 = sphi 0, %s94
      %s97 = sphi 0, %s96
      %s111 = sphi 0, %s97
      %s115 = sphi 0, %s115
      %s117 = sphi 0, %s115
      %s118 = sphi 0, %s117
      %s132 = sphi 0, %s118
      %s136 = sphi 0, %s136
      %s138 = sphi 0, %s136
      %s139 = sphi 0, %s138
      %s153 = sphi 0, %s139
      %s157 = sphi 0, %s157
      %s159 = sphi 0, %s157
      %s160 = sphi 0, %s159
      %s174 = sphi 0, %s160
      %s178 = sphi 0, %s178
      %s180 = sphi 0, %s178
      %s181 = sphi 0, %s180
      %s195 = sphi 0, %s181
      %s201 = sphi 0, %s203
      %s204 = sphi 0, %s201
      %s205 = sphi 0, %s204
      %s221 = sphi 0, %s205
    $region4: #{tpu_custom_call.1} parent=1 // loop_header_branch
      %23 = sbr.rel (%p21) target = $region8
    $region5: #{tpu_custom_call.1} parent=1 // loop_body
      %s25 = ssub.s32 %s20, 1
      %s26 = ssub.s32 %s20, 2
      %s33 = sadd.s32 1, %s28
      %p34 = scmp.ge.s32.totalorder %s33, 1
      %s35 = scalar_select %p34, 0, %s33
      %s36 = sadd.s32 1, %s27
      %s37 = scalar_select %p34, %s36, %s27
      %p38 = scmp.ge.s32.totalorder %s37, 2
      %s39 = scalar_select %p38, 0, %s37
      %s40 = ssub.s32 %s27, %s39
      %s41 = ssub.s32 %s28, %s35
      %s42 = sor.u32 %s40, %s41
      %p43 = scmp.eq.s32.totalorder %s42, 0
      %s45 = sadd.s32 %s44, 1
      %s46 = scalar_select %p43, %s44, %s45
      %p49 = pneg %p43
      %p50 = scmp.eq.s32.totalorder %s20, 1
      %p51 = por %p49, %p50
      %p52 = scmp.ne.s32.totalorder %s44, %s47
      %p53 = scmp.eq.s32.totalorder %s20, 0
      %p54 = por %p52, %p53
      %p55 = scmp.ne.s32.totalorder %s44, %s47
      %p56 = scmp.eq.s32.totalorder %s25, 1
      %p57 = por %p55, %p56
      %p58 = scmp.ne.s32.totalorder %s47, %s48
      %p59 = scmp.eq.s32.totalorder %s25, 0
      %p60 = por %p58, %p59
      %p61 = scmp.ne.s32.totalorder %s47, %s48
      %p62 = scmp.eq.s32.totalorder %s26, 1
      %p63 = por %p61, %p62
      %p65 = scmp.ne.s32.totalorder %s48, %s64
      %p66 = scmp.eq.s32.totalorder %s26, 0
      %p67 = por %p65, %p66
      %s68 = ssub.s32 %s28, %s35
      %p69 = scmp.eq.s32.totalorder %s68, 0
      %s71 = sadd.s32 %s70, 1
      %s72 = scalar_select %p69, %s70, %s71
      %p75 = pneg %p69
      %p76 = scmp.eq.s32.totalorder %s20, 1
      %p77 = por %p75, %p76
      %p78 = scmp.ne.s32.totalorder %s70, %s73
      %p79 = scmp.eq.s32.totalorder %s20, 0
      %p80 = por %p78, %p79
      %p81 = scmp.ne.s32.totalorder %s70, %s73
      %p82 = scmp.eq.s32.totalorder %s25, 1
      %p83 = por %p81, %p82
      %p84 = scmp.ne.s32.totalorder %s73, %s74
      %p85 = scmp.eq.s32.totalorder %s25, 0
      %p86 = por %p84, %p85
      %p87 = scmp.ne.s32.totalorder %s73, %s74
      %p88 = scmp.eq.s32.totalorder %s26, 1
      %p89 = por %p87, %p88
      %p91 = scmp.ne.s32.totalorder %s74, %s90
      %p92 = scmp.eq.s32.totalorder %s26, 0
      %p93 = por %p91, %p92
      %s95 = sadd.s32 %s94, 1
      %p98 = scmp.eq.s32.totalorder %s20, 1
      %p99 = scmp.ne.s32.totalorder %s94, %s96
      %p100 = scmp.eq.s32.totalorder %s20, 0
      %p101 = por %p99, %p100
      %p102 = scmp.ne.s32.totalorder %s94, %s96
      %p103 = scmp.eq.s32.totalorder %s25, 1
      %p104 = por %p102, %p103
      %p105 = scmp.ne.s32.totalorder %s96, %s97
      %p106 = scmp.eq.s32.totalorder %s25, 0
      %p107 = por %p105, %p106
      %p108 = scmp.ne.s32.totalorder %s96, %s97
      %p109 = scmp.eq.s32.totalorder %s26, 1
      %p110 = por %p108, %p109
      %p112 = scmp.ne.s32.totalorder %s97, %s111
      %p113 = scmp.eq.s32.totalorder %s26, 0
      %p114 = por %p112, %p113
      %s116 = sadd.s32 %s115, 1
      %p119 = scmp.eq.s32.totalorder %s20, 1
      %p120 = scmp.ne.s32.totalorder %s115, %s117
      %p121 = scmp.eq.s32.totalorder %s20, 0
      %p122 = por %p120, %p121
      %p123 = scmp.ne.s32.totalorder %s115, %s117
      %p124 = scmp.eq.s32.totalorder %s25, 1
      %p125 = por %p123, %p124
      %p126 = scmp.ne.s32.totalorder %s117, %s118
      %p127 = scmp.eq.s32.totalorder %s25, 0
      %p128 = por %p126, %p127
      %p129 = scmp.ne.s32.totalorder %s117, %s118
      %p130 = scmp.eq.s32.totalorder %s26, 1
      %p131 = por %p129, %p130
      %p133 = scmp.ne.s32.totalorder %s118, %s132
      %p134 = scmp.eq.s32.totalorder %s26, 0
      %p135 = por %p133, %p134
      %s137 = sadd.s32 %s136, 1
      %p140 = scmp.eq.s32.totalorder %s20, 1
      %p141 = scmp.ne.s32.totalorder %s136, %s138
      %p142 = scmp.eq.s32.totalorder %s20, 0
      %p143 = por %p141, %p142
      %p144 = scmp.ne.s32.totalorder %s136, %s138
      %p145 = scmp.eq.s32.totalorder %s25, 1
      %p146 = por %p144, %p145
      %p147 = scmp.ne.s32.totalorder %s138, %s139
      %p148 = scmp.eq.s32.totalorder %s25, 0
      %p149 = por %p147, %p148
      %p150 = scmp.ne.s32.totalorder %s138, %s139
      %p151 = scmp.eq.s32.totalorder %s26, 1
      %p152 = por %p150, %p151
      %p154 = scmp.ne.s32.totalorder %s139, %s153
      %p155 = scmp.eq.s32.totalorder %s26, 0
      %p156 = por %p154, %p155
      %s158 = sadd.s32 %s157, 1
      %p161 = scmp.eq.s32.totalorder %s20, 1
      %p162 = scmp.ne.s32.totalorder %s157, %s159
      %p163 = scmp.eq.s32.totalorder %s20, 0
      %p164 = por %p162, %p163
      %p165 = scmp.ne.s32.totalorder %s157, %s159
      %p166 = scmp.eq.s32.totalorder %s25, 1
      %p167 = por %p165, %p166
      %p168 = scmp.ne.s32.totalorder %s159, %s160
      %p169 = scmp.eq.s32.totalorder %s25, 0
      %p170 = por %p168, %p169
      %p171 = scmp.ne.s32.totalorder %s159, %s160
      %p172 = scmp.eq.s32.totalorder %s26, 1
      %p173 = por %p171, %p172
      %p175 = scmp.ne.s32.totalorder %s160, %s174
      %p176 = scmp.eq.s32.totalorder %s26, 0
      %p177 = por %p175, %p176
      %s179 = sadd.s32 %s178, 1
      %p182 = scmp.eq.s32.totalorder %s20, 1
      %p183 = scmp.ne.s32.totalorder %s178, %s180
      %p184 = scmp.eq.s32.totalorder %s20, 0
      %p185 = por %p183, %p184
      %p186 = scmp.ne.s32.totalorder %s178, %s180
      %p187 = scmp.eq.s32.totalorder %s25, 1
      %p188 = por %p186, %p187
      %p189 = scmp.ne.s32.totalorder %s180, %s181
      %p190 = scmp.eq.s32.totalorder %s25, 0
      %p191 = por %p189, %p190
      %p192 = scmp.ne.s32.totalorder %s180, %s181
      %p193 = scmp.eq.s32.totalorder %s26, 1
      %p194 = por %p192, %p193
      %p196 = scmp.ne.s32.totalorder %s181, %s195
      %p197 = scmp.eq.s32.totalorder %s26, 0
      %p198 = por %p196, %p197
      %s199 = ssub.s32 %s27, %s39
      %p200 = scmp.eq.s32.totalorder %s199, 0
      %s202 = sadd.s32 %s201, 1
      %s203 = scalar_select %p200, %s201, %s202
      %p206 = pneg %p200
      %p207 = scmp.eq.s32.totalorder %s20, 1
      %p208 = por %p206, %p207
      %p209 = scmp.ne.s32.totalorder %s201, %s204
      %p210 = scmp.eq.s32.totalorder %s20, 0
      %p211 = por %p209, %p210
      %p212 = scmp.ne.s32.totalorder %s201, %s204
      %p213 = scmp.eq.s32.totalorder %s25, 1
      %p214 = por %p212, %p213
      %p215 = scmp.ne.s32.totalorder %s204, %s205
      %p216 = scmp.eq.s32.totalorder %s25, 0
      %p217 = por %p215, %p216
      %p218 = scmp.ne.s32.totalorder %s204, %s205
      %p219 = scmp.eq.s32.totalorder %s26, 1
      %p220 = por %p218, %p219
      %p222 = scmp.ne.s32.totalorder %s205, %s221
      %p223 = scmp.eq.s32.totalorder %s26, 0
      %p224 = por %p222, %p223
      %p225 = scmp.le.s32.totalorder 1, %s20
      %p226 = scmp.lt.s32.totalorder %s20, 3
      %p227 = pnand %p225, %p226
      %p228 = pneg %p227
      // Predicated region
      $region9: #{tpu_custom_call.1} parent=5 // pred_check
        _
      $region10: #{tpu_custom_call.1} parent=5 // pred_check_branch
        %230 = sbr.rel (%p227) target = $region12
      $region11: #{tpu_custom_call.1} parent=5 // pred_region
        %s231 = ssub.s32 %s20, 1
        // Predicated region
        $region13: #{tpu_custom_call.1} parent=11 // pred_check
          %p232 = pneg %p86
        $region14: #{tpu_custom_call.1} parent=11 // pred_check_branch
          %234 = sbr.rel (%p232) target = $region16
        $region15: #{tpu_custom_call.1} parent=11 // pred_region
          %s235 = smul.u32 144, %s30
          %s237 = ssub.s32 36864, 36864
          %238 = vsyncadd [#allocation5], %s237
          %s239 = smul.addr %s235, 4
          %s240 = smul.addr %s239, 64
          %s241 = scalar_lea.hbm %s1, %s240
          %s242 = sshll.u32 [#allocation4], 4
          %s243 = int_to_ptr.vmem [resolvable:$true] %s242
          %248 = dma.hbm_to_vmem [thread:$0]  %s241, 36864, %s243, [#allocation5], 256, 256, 16
        $region16: #{tpu_custom_call.1} parent=11 // pred_fallthru
          _
        // Predicated region
        $region17: #{tpu_custom_call.1} parent=11 // pred_check
          %p249 = pneg %p107
        $region18: #{tpu_custom_call.1} parent=11 // pred_check_branch
          %251 = sbr.rel (%p249) target = $region20
        $region19: #{tpu_custom_call.1} parent=11 // pred_region
          %s253 = ssub.s32 64, 64
          %254 = vsyncadd [#allocation8], %s253
          %s256 = sshll.u32 [#allocation7], 4
          %s257 = int_to_ptr.vmem [resolvable:$true] %s256
          %259 = dma.hbm_to_vmem [thread:$0]  %s2, 64, %s257, [#allocation8]
        $region20: #{tpu_custom_call.1} parent=11 // pred_fallthru
          _
        // Predicated region
        $region21: #{tpu_custom_call.1} parent=11 // pred_check
          %p260 = pneg %p128
        $region22: #{tpu_custom_call.1} parent=11 // pred_check_branch
          %262 = sbr.rel (%p260) target = $region24
        $region23: #{tpu_custom_call.1} parent=11 // pred_region
          %s264 = ssub.s32 16384, 16384
          %265 = vsyncadd [#allocation8], %s264
          %s266 = sshll.u32 [#allocation9], 4
          %s267 = int_to_ptr.vmem [resolvable:$true] %s266
          %272 = dma.hbm_to_vmem [thread:$0]  %s3, 16384, %s267, [#allocation8], 256, 256, 16
        $region24: #{tpu_custom_call.1} parent=11 // pred_fallthru
          _
        // Predicated region
        $region25: #{tpu_custom_call.1} parent=11 // pred_check
          %p273 = pneg %p149
        $region26: #{tpu_custom_call.1} parent=11 // pred_check_branch
          %275 = sbr.rel (%p273) target = $region28
        $region27: #{tpu_custom_call.1} parent=11 // pred_region
          %s277 = ssub.s32 64, 64
          %278 = vsyncadd [#allocation11], %s277
          %s280 = sshll.u32 [#allocation10], 4
          %s281 = int_to_ptr.vmem [resolvable:$true] %s280
          %283 = dma.hbm_to_vmem [thread:$0]  %s4, 64, %s281, [#allocation11]
        $region28: #{tpu_custom_call.1} parent=11 // pred_fallthru
          _
        // Predicated region
        $region29: #{tpu_custom_call.1} parent=11 // pred_check
          %p284 = pneg %p170
        $region30: #{tpu_custom_call.1} parent=11 // pred_check_branch
          %286 = sbr.rel (%p284) target = $region32
        $region31: #{tpu_custom_call.1} parent=11 // pred_region
          %s288 = ssub.s32 4096, 4096
          %289 = vsyncadd [#allocation11], %s288
          %s290 = sshll.u32 [#allocation12], 4
          %s291 = int_to_ptr.vmem [resolvable:$true] %s290
          %296 = dma.hbm_to_vmem [thread:$0]  %s5, 4096, %s291, [#allocation11], 64, 64, 4
        $region32: #{tpu_custom_call.1} parent=11 // pred_fallthru
          _
        // Predicated region
        $region33: #{tpu_custom_call.1} parent=11 // pred_check
          %p297 = pneg %p191
        $region34: #{tpu_custom_call.1} parent=11 // pred_check_branch
          %299 = sbr.rel (%p297) target = $region36
        $region35: #{tpu_custom_call.1} parent=11 // pred_region
          %s301 = ssub.s32 16, 16
          %302 = vsyncadd [#allocation14], %s301
          %s304 = sshll.u32 [#allocation13], 4
          %s305 = int_to_ptr.vmem [resolvable:$true] %s304
          %307 = dma.hbm_to_vmem [thread:$0]  %s6, 16, %s305, [#allocation14]
        $region36: #{tpu_custom_call.1} parent=11 // pred_fallthru
          _
      $region12: #{tpu_custom_call.1} parent=5 // pred_fallthru
        _
      %p308 = scmp.lt.s32.totalorder %s20, 2
      // Predicated region
      $region37: #{tpu_custom_call.1} parent=5 // pred_check
        %p309 = pneg %p308
      $region38: #{tpu_custom_call.1} parent=5 // pred_check_branch
        %311 = sbr.rel (%p309) target = $region40
      $region39: #{tpu_custom_call.1} parent=5 // pred_region
        // Predicated region
        $region41: #{tpu_custom_call.1} parent=39 // pred_check
          %p312 = pneg %p54
        $region42: #{tpu_custom_call.1} parent=39 // pred_check_branch
          %314 = sbr.rel (%p312) target = $region44
        $region43: #{tpu_custom_call.1} parent=39 // pred_region
          %p315 = scmp.lt.s32.totalorder %s27, 1
          %s316 = scalar_select %p315, %s27, 1
          %p317 = scmp.lt.s32.totalorder %s28, 0
          %s318 = scalar_select %p317, %s28, 0
          %s319 = smul.addr %s316, 54
          %s320 = sadd.s32 %s318, %s319
          %s321 = smul.addr %s320, 4
          %s322 = scalar_lea.vmem %s0, %s321
        $region44: #{tpu_custom_call.1} parent=39 // pred_fallthru
          _
      $region40: #{tpu_custom_call.1} parent=5 // pred_fallthru
        _
      %p323 = scmp.le.s32.totalorder 1, %s20
      %p324 = scmp.lt.s32.totalorder %s20, 3
      %p325 = pnand %p323, %p324
      %p326 = pneg %p325
      // Predicated region
      $region45: #{tpu_custom_call.1} parent=5 // pred_check
        _
      $region46: #{tpu_custom_call.1} parent=5 // pred_check_branch
        %328 = sbr.rel (%p325) target = $region48
      $region47: #{tpu_custom_call.1} parent=5 // pred_region
        %s329 = ssub.s32 %s20, 1
        // Predicated region
        $region49: #{tpu_custom_call.1} parent=47 // pred_check
          %p330 = pneg %p86
        $region50: #{tpu_custom_call.1} parent=47 // pred_check_branch
          %332 = sbr.rel (%p330) target = $region52
        $region51: #{tpu_custom_call.1} parent=47 // pred_region
          %333 = dma.done [#allocation5], 36864
        $region52: #{tpu_custom_call.1} parent=47 // pred_fallthru
          _
        // Predicated region
        $region53: #{tpu_custom_call.1} parent=47 // pred_check
          %p334 = pneg %p107
        $region54: #{tpu_custom_call.1} parent=47 // pred_check_branch
          %336 = sbr.rel (%p334) target = $region56
        $region55: #{tpu_custom_call.1} parent=47 // pred_region
          %337 = dma.done [#allocation8], 64
        $region56: #{tpu_custom_call.1} parent=47 // pred_fallthru
          _
        // Predicated region
        $region57: #{tpu_custom_call.1} parent=47 // pred_check
          %p338 = pneg %p128
        $region58: #{tpu_custom_call.1} parent=47 // pred_check_branch
          %340 = sbr.rel (%p338) target = $region60
        $region59: #{tpu_custom_call.1} parent=47 // pred_region
          %341 = dma.done [#allocation8], 16384
        $region60: #{tpu_custom_call.1} parent=47 // pred_fallthru
          _
        // Predicated region
        $region61: #{tpu_custom_call.1} parent=47 // pred_check
          %p342 = pneg %p149
        $region62: #{tpu_custom_call.1} parent=47 // pred_check_branch
          %344 = sbr.rel (%p342) target = $region64
        $region63: #{tpu_custom_call.1} parent=47 // pred_region
          %345 = dma.done [#allocation11], 64
        $region64: #{tpu_custom_call.1} parent=47 // pred_fallthru
          _
        // Predicated region
        $region65: #{tpu_custom_call.1} parent=47 // pred_check
          %p346 = pneg %p170
        $region66: #{tpu_custom_call.1} parent=47 // pred_check_branch
          %348 = sbr.rel (%p346) target = $region68
        $region67: #{tpu_custom_call.1} parent=47 // pred_region
          %349 = dma.done [#allocation11], 4096
        $region68: #{tpu_custom_call.1} parent=47 // pred_fallthru
          _
        // Predicated region
        $region69: #{tpu_custom_call.1} parent=47 // pred_check
          %p350 = pneg %p191
        $region70: #{tpu_custom_call.1} parent=47 // pred_check_branch
          %352 = sbr.rel (%p350) target = $region72
        $region71: #{tpu_custom_call.1} parent=47 // pred_region
          %353 = dma.done [#allocation14], 16
        $region72: #{tpu_custom_call.1} parent=47 // pred_fallthru
          _
        %p354 = scmp.lt.s32.totalorder %s29, 1
        %s355 = scalar_select %p354, %s29, 1
        %p356 = scmp.lt.s32.totalorder %s30, 0
        %s357 = scalar_select %p356, %s30, 0
        %s358 = smul.addr %s355, 54
        %s359 = sadd.s32 %s357, %s358
        %s360 = smul.addr %s359, 4
        %s361 = scalar_lea.vmem %s0, %s360
        %p362 = pneg %p60
        %p363 = pneg %p57
        %p364 = pneg %p86
        %p365 = pneg %p83
        %p366 = pneg %p107
        %p367 = pneg %p104
        %p368 = pneg %p128
        %p369 = pneg %p125
        %p370 = pneg %p149
        %p371 = pneg %p146
        %p372 = pneg %p170
        %p373 = pneg %p167
        %p374 = pneg %p191
        %p375 = pneg %p188
        %p376 = pneg %p217
        %p377 = pneg %p214
        %s378 = sand.u32 %s204, 1
        %s379 = scalar_lea.sflag [#allocation6], %s378
        %s380 = sand.u32 %s204, 1
        %s381 = scalar_lea.vmem [#allocation15], %s380
        %p382 = scmp.lt.s32.totalorder %s29, 1
        %s383 = scalar_select %p382, %s29, 1
        %p384 = scmp.lt.s32.totalorder %s30, 0
        %s385 = scalar_select %p384, %s30, 0
        %s386 = smul.addr %s383, 54
        %s387 = sadd.s32 %s385, %s386
        %s388 = smul.addr %s387, 4
        %s389 = scalar_lea.vmem %s0, %s388
        %s390 = smul.u32 144, %s30
        %p392 = scmp.eq.s32.totalorder %s30, 0
        // Predicated region
        $region73: #{tpu_custom_call.1} parent=47 // pred_check
          %p393 = pneg %p392
        $region74: #{tpu_custom_call.1} parent=47 // pred_check_branch
          %395 = sbr.rel (%p393) target = $region76
        $region75: #{tpu_custom_call.1} parent=47 // pred_region
          %396 = vst [vmem:[#allocation3] sm:$0xff] 0.0
          %397 = vst [vmem:[#allocation3 + $0x8] sm:$0xff] 0.0
          %398 = vst [vmem:[#allocation3 + $0x10] sm:$0xff] 0.0
          %399 = vst [vmem:[#allocation3 + $0x18] sm:$0xff] 0.0
          %400 = vst [vmem:[#allocation3 + $0x20] sm:$0xff] 0.0
          %401 = vst [vmem:[#allocation3 + $0x28] sm:$0xff] 0.0
          %402 = vst [vmem:[#allocation3 + $0x30] sm:$0xff] 0.0
          %403 = vst [vmem:[#allocation3 + $0x38] sm:$0xff] 0.0
          %404 = vst [vmem:[#allocation3 + $0x40] sm:$0xff] 0.0
          %405 = vst [vmem:[#allocation3 + $0x48] sm:$0xff] 0.0
          %406 = vst [vmem:[#allocation3 + $0x50] sm:$0xff] 0.0
          %407 = vst [vmem:[#allocation3 + $0x58] sm:$0xff] 0.0
          %408 = vst [vmem:[#allocation3 + $0x60] sm:$0xff] 0.0
          %409 = vst [vmem:[#allocation3 + $0x68] sm:$0xff] 0.0
          %410 = vst [vmem:[#allocation3 + $0x70] sm:$0xff] 0.0
          %411 = vst [vmem:[#allocation3 + $0x78] sm:$0xff] 0.0
          %412 = vst [vmem:[#allocation3 + $0x80] sm:$0xff] 0.0
          %413 = vst [vmem:[#allocation3 + $0x88] sm:$0xff] 0.0
          %414 = vst [vmem:[#allocation3 + $0x90] sm:$0xff] 0.0
          %415 = vst [vmem:[#allocation3 + $0x98] sm:$0xff] 0.0
          %416 = vst [vmem:[#allocation3 + $0xa0] sm:$0xff] 0.0
          %417 = vst [vmem:[#allocation3 + $0xa8] sm:$0xff] 0.0
          %418 = vst [vmem:[#allocation3 + $0xb0] sm:$0xff] 0.0
          %419 = vst [vmem:[#allocation3 + $0xb8] sm:$0xff] 0.0
          %420 = vst [vmem:[#allocation3 + $0xc0] sm:$0xff] 0.0
          %421 = vst [vmem:[#allocation3 + $0xc8] sm:$0xff] 0.0
          %422 = vst [vmem:[#allocation3 + $0xd0] sm:$0xff] 0.0
          %423 = vst [vmem:[#allocation3 + $0xd8] sm:$0xff] 0.0
          %424 = vst [vmem:[#allocation3 + $0xe0] sm:$0xff] 0.0
          %425 = vst [vmem:[#allocation3 + $0xe8] sm:$0xff] 0.0
          %426 = vst [vmem:[#allocation3 + $0xf0] sm:$0xff] 0.0
          %427 = vst [vmem:[#allocation3 + $0xf8] sm:$0xff] 0.0
          %428 = vst [vmem:[#allocation3 + $0x100] sm:$0xff] 0.0
          %429 = vst [vmem:[#allocation3 + $0x108] sm:$0xff] 0.0
          %430 = vst [vmem:[#allocation3 + $0x110] sm:$0xff] 0.0
          %431 = vst [vmem:[#allocation3 + $0x118] sm:$0xff] 0.0
          %432 = vst [vmem:[#allocation3 + $0x120] sm:$0xff] 0.0
          %433 = vst [vmem:[#allocation3 + $0x128] sm:$0xff] 0.0
          %434 = vst [vmem:[#allocation3 + $0x130] sm:$0xff] 0.0
          %435 = vst [vmem:[#allocation3 + $0x138] sm:$0xff] 0.0
          %436 = vst [vmem:[#allocation3 + $0x140] sm:$0xff] 0.0
          %437 = vst [vmem:[#allocation3 + $0x148] sm:$0xff] 0.0
          %438 = vst [vmem:[#allocation3 + $0x150] sm:$0xff] 0.0
          %439 = vst [vmem:[#allocation3 + $0x158] sm:$0xff] 0.0
          %440 = vst [vmem:[#allocation3 + $0x160] sm:$0xff] 0.0
          %441 = vst [vmem:[#allocation3 + $0x168] sm:$0xff] 0.0
          %442 = vst [vmem:[#allocation3 + $0x170] sm:$0xff] 0.0
          %443 = vst [vmem:[#allocation3 + $0x178] sm:$0xff] 0.0
          %444 = vst [vmem:[#allocation3 + $0x180] sm:$0xff] 0.0
          %445 = vst [vmem:[#allocation3 + $0x188] sm:$0xff] 0.0
          %446 = vst [vmem:[#allocation3 + $0x190] sm:$0xff] 0.0
          %447 = vst [vmem:[#allocation3 + $0x198] sm:$0xff] 0.0
          %448 = vst [vmem:[#allocation3 + $0x1a0] sm:$0xff] 0.0
          %449 = vst [vmem:[#allocation3 + $0x1a8] sm:$0xff] 0.0
          %450 = vst [vmem:[#allocation3 + $0x1b0] sm:$0xff] 0.0
          %451 = vst [vmem:[#allocation3 + $0x1b8] sm:$0xff] 0.0
          %452 = vst [vmem:[#allocation3 + $0x1c0] sm:$0xff] 0.0
          %453 = vst [vmem:[#allocation3 + $0x1c8] sm:$0xff] 0.0
          %454 = vst [vmem:[#allocation3 + $0x1d0] sm:$0xff] 0.0
          %455 = vst [vmem:[#allocation3 + $0x1d8] sm:$0xff] 0.0
          %456 = vst [vmem:[#allocation3 + $0x1e0] sm:$0xff] 0.0
          %457 = vst [vmem:[#allocation3 + $0x1e8] sm:$0xff] 0.0
          %458 = vst [vmem:[#allocation3 + $0x1f0] sm:$0xff] 0.0
          %459 = vst [vmem:[#allocation3 + $0x1f8] sm:$0xff] 0.0
          %460 = vst [vmem:[#allocation3 + $0x200] sm:$0xff] 0.0
          %461 = vst [vmem:[#allocation3 + $0x208] sm:$0xff] 0.0
          %462 = vst [vmem:[#allocation3 + $0x210] sm:$0xff] 0.0
          %463 = vst [vmem:[#allocation3 + $0x218] sm:$0xff] 0.0
          %464 = vst [vmem:[#allocation3 + $0x220] sm:$0xff] 0.0
          %465 = vst [vmem:[#allocation3 + $0x228] sm:$0xff] 0.0
          %466 = vst [vmem:[#allocation3 + $0x230] sm:$0xff] 0.0
          %467 = vst [vmem:[#allocation3 + $0x238] sm:$0xff] 0.0
          %468 = vst [vmem:[#allocation3 + $0x240] sm:$0xff] 0.0
          %469 = vst [vmem:[#allocation3 + $0x248] sm:$0xff] 0.0
          %470 = vst [vmem:[#allocation3 + $0x250] sm:$0xff] 0.0
          %471 = vst [vmem:[#allocation3 + $0x258] sm:$0xff] 0.0
          %472 = vst [vmem:[#allocation3 + $0x260] sm:$0xff] 0.0
          %473 = vst [vmem:[#allocation3 + $0x268] sm:$0xff] 0.0
          %474 = vst [vmem:[#allocation3 + $0x270] sm:$0xff] 0.0
          %475 = vst [vmem:[#allocation3 + $0x278] sm:$0xff] 0.0
          %476 = vst [vmem:[#allocation3 + $0x280] sm:$0xff] 0.0
          %477 = vst [vmem:[#allocation3 + $0x288] sm:$0xff] 0.0
          %478 = vst [vmem:[#allocation3 + $0x290] sm:$0xff] 0.0
          %479 = vst [vmem:[#allocation3 + $0x298] sm:$0xff] 0.0
          %480 = vst [vmem:[#allocation3 + $0x2a0] sm:$0xff] 0.0
          %481 = vst [vmem:[#allocation3 + $0x2a8] sm:$0xff] 0.0
          %482 = vst [vmem:[#allocation3 + $0x2b0] sm:$0xff] 0.0
          %483 = vst [vmem:[#allocation3 + $0x2b8] sm:$0xff] 0.0
          %484 = vst [vmem:[#allocation3 + $0x2c0] sm:$0xff] 0.0
          %485 = vst [vmem:[#allocation3 + $0x2c8] sm:$0xff] 0.0
          %486 = vst [vmem:[#allocation3 + $0x2d0] sm:$0xff] 0.0
          %487 = vst [vmem:[#allocation3 + $0x2d8] sm:$0xff] 0.0
          %488 = vst [vmem:[#allocation3 + $0x2e0] sm:$0xff] 0.0
          %489 = vst [vmem:[#allocation3 + $0x2e8] sm:$0xff] 0.0
          %490 = vst [vmem:[#allocation3 + $0x2f0] sm:$0xff] 0.0
          %491 = vst [vmem:[#allocation3 + $0x2f8] sm:$0xff] 0.0
          %492 = vst [vmem:[#allocation3 + $0x300] sm:$0xff] 0.0
          %493 = vst [vmem:[#allocation3 + $0x308] sm:$0xff] 0.0
          %494 = vst [vmem:[#allocation3 + $0x310] sm:$0xff] 0.0
          %495 = vst [vmem:[#allocation3 + $0x318] sm:$0xff] 0.0
          %496 = vst [vmem:[#allocation3 + $0x320] sm:$0xff] 0.0
          %497 = vst [vmem:[#allocation3 + $0x328] sm:$0xff] 0.0
          %498 = vst [vmem:[#allocation3 + $0x330] sm:$0xff] 0.0
          %499 = vst [vmem:[#allocation3 + $0x338] sm:$0xff] 0.0
          %500 = vst [vmem:[#allocation3 + $0x340] sm:$0xff] 0.0
          %501 = vst [vmem:[#allocation3 + $0x348] sm:$0xff] 0.0
          %502 = vst [vmem:[#allocation3 + $0x350] sm:$0xff] 0.0
          %503 = vst [vmem:[#allocation3 + $0x358] sm:$0xff] 0.0
          %504 = vst [vmem:[#allocation3 + $0x360] sm:$0xff] 0.0
          %505 = vst [vmem:[#allocation3 + $0x368] sm:$0xff] 0.0
          %506 = vst [vmem:[#allocation3 + $0x370] sm:$0xff] 0.0
          %507 = vst [vmem:[#allocation3 + $0x378] sm:$0xff] 0.0
          %508 = vst [vmem:[#allocation3 + $0x380] sm:$0xff] 0.0
          %509 = vst [vmem:[#allocation3 + $0x388] sm:$0xff] 0.0
          %510 = vst [vmem:[#allocation3 + $0x390] sm:$0xff] 0.0
          %511 = vst [vmem:[#allocation3 + $0x398] sm:$0xff] 0.0
          %512 = vst [vmem:[#allocation3 + $0x3a0] sm:$0xff] 0.0
          %513 = vst [vmem:[#allocation3 + $0x3a8] sm:$0xff] 0.0
          %514 = vst [vmem:[#allocation3 + $0x3b0] sm:$0xff] 0.0
          %515 = vst [vmem:[#allocation3 + $0x3b8] sm:$0xff] 0.0
          %516 = vst [vmem:[#allocation3 + $0x3c0] sm:$0xff] 0.0
          %517 = vst [vmem:[#allocation3 + $0x3c8] sm:$0xff] 0.0
          %518 = vst [vmem:[#allocation3 + $0x3d0] sm:$0xff] 0.0
          %519 = vst [vmem:[#allocation3 + $0x3d8] sm:$0xff] 0.0
          %520 = vst [vmem:[#allocation3 + $0x3e0] sm:$0xff] 0.0
          %521 = vst [vmem:[#allocation3 + $0x3e8] sm:$0xff] 0.0
          %522 = vst [vmem:[#allocation3 + $0x3f0] sm:$0xff] 0.0
          %523 = vst [vmem:[#allocation3 + $0x3f8] sm:$0xff] 0.0
        $region76: #{tpu_custom_call.1} parent=47 // pred_fallthru
          _
        %v524 = vld [vmem:[%s389] sm:$0xf]
        %v525 = vld [vmem:[%s389 + $0x4] sm:$0xf]
        %v526 = vld [vmem:[%s389 + $0xc] sm:$0xf]
        %v527 = vld [vmem:[%s389 + $0x10] sm:$0xf]
        %v528 = vld [vmem:[%s389 + $0x18] sm:$0xf]
        %v529 = vld [vmem:[%s389 + $0x1c] sm:$0xf]
        %v530 = vld [vmem:[%s389 + $0x24] sm:$0xf]
        %v531 = vld [vmem:[%s389 + $0x28] sm:$0xf]
        %v532 = vld [vmem:[%s389 + $0x30] sm:$0xf]
        %v533 = vld [vmem:[%s389 + $0x34] sm:$0xf]
        %v534 = vld [vmem:[%s389 + $0x3c] sm:$0xf]
        %v535 = vld [vmem:[%s389 + $0x40] sm:$0xf]
        %v536 = vld [vmem:[%s389 + $0x48] sm:$0xf]
        %v537 = vld [vmem:[%s389 + $0x4c] sm:$0xf]
        %v538 = vld [vmem:[%s389 + $0x54] sm:$0xf]
        %v539 = vld [vmem:[%s389 + $0x58] sm:$0xf]
        %v540 = vld [vmem:[%s389 + $0x60] sm:$0xf]
        %v541 = vld [vmem:[%s389 + $0x64] sm:$0xf]
        %v542 = vld [vmem:[%s389 + $0x6c] sm:$0xf]
        %v543 = vld [vmem:[%s389 + $0x70] sm:$0xf]
        %v544 = vld [vmem:[%s389 + $0x78] sm:$0xf]
        %v545 = vld [vmem:[%s389 + $0x7c] sm:$0xf]
        %v546 = vld [vmem:[%s389 + $0x84] sm:$0xf]
        %v547 = vld [vmem:[%s389 + $0x88] sm:$0xf]
        %v548 = vld [vmem:[%s389 + $0x90] sm:$0xf]
        %v549 = vld [vmem:[%s389 + $0x94] sm:$0xf]
        %v550 = vld [vmem:[%s389 + $0x9c] sm:$0xf]
        %v551 = vld [vmem:[%s389 + $0xa0] sm:$0xf]
        %v552 = vld [vmem:[%s389 + $0xa8] sm:$0xf]
        %v553 = vld [vmem:[%s389 + $0xac] sm:$0xf]
        %v554 = vld [vmem:[%s389 + $0xb4] sm:$0xf]
        %v555 = vld [vmem:[%s389 + $0xb8] sm:$0xf]
        %556 = vst [vmem:[#allocation2] sm:$0xf] %v524
        %557 = vst [vmem:[#allocation2 + $0x24] sm:$0xf] %v525
        %558 = vst [vmem:[#allocation2 + $0x48] sm:$0xf] %v526
        %559 = vst [vmem:[#allocation2 + $0x6c] sm:$0xf] %v527
        %560 = vst [vmem:[#allocation2 + $0x90] sm:$0xf] %v528
        %561 = vst [vmem:[#allocation2 + $0xb4] sm:$0xf] %v529
        %562 = vst [vmem:[#allocation2 + $0xd8] sm:$0xf] %v530
        %563 = vst [vmem:[#allocation2 + $0xfc] sm:$0xf] %v531
        %564 = vst [vmem:[#allocation2 + $0x120] sm:$0xf] %v532
        %565 = vst [vmem:[#allocation2 + $0x144] sm:$0xf] %v533
        %566 = vst [vmem:[#allocation2 + $0x168] sm:$0xf] %v534
        %567 = vst [vmem:[#allocation2 + $0x18c] sm:$0xf] %v535
        %568 = vst [vmem:[#allocation2 + $0x1b0] sm:$0xf] %v536
        %569 = vst [vmem:[#allocation2 + $0x1d4] sm:$0xf] %v537
        %570 = vst [vmem:[#allocation2 + $0x1f8] sm:$0xf] %v538
        %571 = vst [vmem:[#allocation2 + $0x21c] sm:$0xf] %v539
        %572 = vst [vmem:[#allocation2 + $0x240] sm:$0xf] %v540
        %573 = vst [vmem:[#allocation2 + $0x264] sm:$0xf] %v541
        %574 = vst [vmem:[#allocation2 + $0x288] sm:$0xf] %v542
        %575 = vst [vmem:[#allocation2 + $0x2ac] sm:$0xf] %v543
        %576 = vst [vmem:[#allocation2 + $0x2d0] sm:$0xf] %v544
        %577 = vst [vmem:[#allocation2 + $0x2f4] sm:$0xf] %v545
        %578 = vst [vmem:[#allocation2 + $0x318] sm:$0xf] %v546
        %579 = vst [vmem:[#allocation2 + $0x33c] sm:$0xf] %v547
        %580 = vst [vmem:[#allocation2 + $0x360] sm:$0xf] %v548
        %581 = vst [vmem:[#allocation2 + $0x384] sm:$0xf] %v549
        %582 = vst [vmem:[#allocation2 + $0x3a8] sm:$0xf] %v550
        %583 = vst [vmem:[#allocation2 + $0x3cc] sm:$0xf] %v551
        %584 = vst [vmem:[#allocation2 + $0x3f0] sm:$0xf] %v552
        %585 = vst [vmem:[#allocation2 + $0x414] sm:$0xf] %v553
        %586 = vst [vmem:[#allocation2 + $0x438] sm:$0xf] %v554
        %587 = vst [vmem:[#allocation2 + $0x45c] sm:$0xf] %v555
        %v588 = vld [vmem:[%s389] sm:$0xf]
        %v589 = vld [vmem:[%s389 + $0x4] sm:$0xf]
        %v590 = vld [vmem:[%s389 + $0x8] sm:$0x1]
        %v591 = vld [vmem:[%s389 + $0xc] sm:$0xf]
        %v592 = vld [vmem:[%s389 + $0x10] sm:$0xf]
        %v593 = vld [vmem:[%s389 + $0x14] sm:$0x1]
        %v594 = vld [vmem:[%s389 + $0x18] sm:$0xf]
        %v595 = vld [vmem:[%s389 + $0x1c] sm:$0xf]
        %v596 = vld [vmem:[%s389 + $0x20] sm:$0x1]
        %v597 = vld [vmem:[%s389 + $0x24] sm:$0xf]
        %v598 = vld [vmem:[%s389 + $0x28] sm:$0xf]
        %v599 = vld [vmem:[%s389 + $0x2c] sm:$0x1]
        %v600 = vld [vmem:[%s389 + $0x30] sm:$0xf]
        %v601 = vld [vmem:[%s389 + $0x34] sm:$0xf]
        %v602 = vld [vmem:[%s389 + $0x38] sm:$0x1]
        %v603 = vld [vmem:[%s389 + $0x3c] sm:$0xf]
        %v604 = vld [vmem:[%s389 + $0x40] sm:$0xf]
        %v605 = vld [vmem:[%s389 + $0x44] sm:$0x1]
        %v606 = vld [vmem:[%s389 + $0x48] sm:$0xf]
        %v607 = vld [vmem:[%s389 + $0x4c] sm:$0xf]
        %v608 = vld [vmem:[%s389 + $0x50] sm:$0x1]
        %v609 = vld [vmem:[%s389 + $0x54] sm:$0xf]
        %v610 = vld [vmem:[%s389 + $0x58] sm:$0xf]
        %v611 = vld [vmem:[%s389 + $0x5c] sm:$0x1]
        %v612 = vld [vmem:[%s389 + $0x60] sm:$0xf]
        %v613 = vld [vmem:[%s389 + $0x64] sm:$0xf]
        %v614 = vld [vmem:[%s389 + $0x68] sm:$0x1]
        %v615 = vld [vmem:[%s389 + $0x6c] sm:$0xf]
        %v616 = vld [vmem:[%s389 + $0x70] sm:$0xf]
        %v617 = vld [vmem:[%s389 + $0x74] sm:$0x1]
        %v618 = vld [vmem:[%s389 + $0x78] sm:$0xf]
        %v619 = vld [vmem:[%s389 + $0x7c] sm:$0xf]
        %v620 = vld [vmem:[%s389 + $0x80] sm:$0x1]
        %v621 = vld [vmem:[%s389 + $0x84] sm:$0xf]
        %v622 = vld [vmem:[%s389 + $0x88] sm:$0xf]
        %v623 = vld [vmem:[%s389 + $0x8c] sm:$0x1]
        %v624 = vld [vmem:[%s389 + $0x90] sm:$0xf]
        %v625 = vld [vmem:[%s389 + $0x94] sm:$0xf]
        %v626 = vld [vmem:[%s389 + $0x98] sm:$0x1]
        %v627 = vld [vmem:[%s389 + $0x9c] sm:$0xf]
        %v628 = vld [vmem:[%s389 + $0xa0] sm:$0xf]
        %v629 = vld [vmem:[%s389 + $0xa4] sm:$0x1]
        %v630 = vld [vmem:[%s389 + $0xa8] sm:$0xf]
        %v631 = vld [vmem:[%s389 + $0xac] sm:$0xf]
        %v632 = vld [vmem:[%s389 + $0xb0] sm:$0x1]
        %v633 = vld [vmem:[%s389 + $0xb4] sm:$0xf]
        %v634 = vld [vmem:[%s389 + $0xb8] sm:$0xf]
        %v635 = vld [vmem:[%s389 + $0xbc] sm:$0x1]
        %vm636 = vsmask.f32 3328
        %vm637 = vsmask.f32 7440
        %vm638 = vmor %vm636, %vm637
        %v640 = vshrl.u32 %v588, 16
        %v642 = vrot.slane %v640, 4
        %v643 = vshll.u32 %v588, 16
        %v645 = vrot.slane %v643, 5
        %v646 = vor.u32 %v642, %v645
        %v647 = vrot.slane %v646, 4
        %v649 = vshll.u32 %v589, 16
        %v651 = vrot.slane %v649, 5
        %v652 = vsel %vm638, %v647, %v651
        %v653 = vshrl.u32 %v589, 16
        %v655 = vrot.slane %v653, 4
        %v656 = vor.u32 %v655, %v651
        %v657 = vrot.slane %v656, 4
        %v659 = vshll.u32 %v590, 16
        %v661 = vrot.slane %v659, 5
        %v662 = vsel %vm638, %v657, %v661
        %v664 = vshrl.u32 %v591, 16
        %v666 = vrot.slane %v664, 4
        %v667 = vshll.u32 %v591, 16
        %v669 = vrot.slane %v667, 5
        %v670 = vor.u32 %v666, %v669
        %v671 = vrot.slane %v670, 4
        %v673 = vshll.u32 %v592, 16
        %v675 = vrot.slane %v673, 5
        %v676 = vsel %vm638, %v671, %v675
        %v677 = vshrl.u32 %v592, 16
        %v679 = vrot.slane %v677, 4
        %v680 = vor.u32 %v679, %v675
        %v681 = vrot.slane %v680, 4
        %v683 = vshll.u32 %v593, 16
        %v685 = vrot.slane %v683, 5
        %v686 = vsel %vm638, %v681, %v685
        %v688 = vshrl.u32 %v594, 16
        %v690 = vrot.slane %v688, 4
        %v691 = vshll.u32 %v594, 16
        %v693 = vrot.slane %v691, 5
        %v694 = vor.u32 %v690, %v693
        %v695 = vrot.slane %v694, 4
        %v697 = vshll.u32 %v595, 16
        %v699 = vrot.slane %v697, 5
        %v700 = vsel %vm638, %v695, %v699
        %v701 = vshrl.u32 %v595, 16
        %v703 = vrot.slane %v701, 4
        %v704 = vor.u32 %v703, %v699
        %v705 = vrot.slane %v704, 4
        %v707 = vshll.u32 %v596, 16
        %v709 = vrot.slane %v707, 5
        %v710 = vsel %vm638, %v705, %v709
        %v712 = vshrl.u32 %v597, 16
        %v714 = vrot.slane %v712, 4
        %v715 = vshll.u32 %v597, 16
        %v717 = vrot.slane %v715, 5
        %v718 = vor.u32 %v714, %v717
        %v719 = vrot.slane %v718, 4
        %v721 = vshll.u32 %v598, 16
        %v723 = vrot.slane %v721, 5
        %v724 = vsel %vm638, %v719, %v723
        %v725 = vshrl.u32 %v598, 16
        %v727 = vrot.slane %v725, 4
        %v728 = vor.u32 %v727, %v723
        %v729 = vrot.slane %v728, 4
        %v731 = vshll.u32 %v599, 16
        %v733 = vrot.slane %v731, 5
        %v734 = vsel %vm638, %v729, %v733
        %v736 = vshrl.u32 %v600, 16
        %v738 = vrot.slane %v736, 4
        %v739 = vshll.u32 %v600, 16
        %v741 = vrot.slane %v739, 5
        %v742 = vor.u32 %v738, %v741
        %v743 = vrot.slane %v742, 4
        %v745 = vshll.u32 %v601, 16
        %v747 = vrot.slane %v745, 5
        %v748 = vsel %vm638, %v743, %v747
        %v749 = vshrl.u32 %v601, 16
        %v751 = vrot.slane %v749, 4
        %v752 = vor.u32 %v751, %v747
        %v753 = vrot.slane %v752, 4
        %v755 = vshll.u32 %v602, 16
        %v757 = vrot.slane %v755, 5
        %v758 = vsel %vm638, %v753, %v757
        %v760 = vshrl.u32 %v603, 16
        %v762 = vrot.slane %v760, 4
        %v763 = vshll.u32 %v603, 16
        %v765 = vrot.slane %v763, 5
        %v766 = vor.u32 %v762, %v765
        %v767 = vrot.slane %v766, 4
        %v769 = vshll.u32 %v604, 16
        %v771 = vrot.slane %v769, 5
        %v772 = vsel %vm638, %v767, %v771
        %v773 = vshrl.u32 %v604, 16
        %v775 = vrot.slane %v773, 4
        %v776 = vor.u32 %v775, %v771
        %v777 = vrot.slane %v776, 4
        %v779 = vshll.u32 %v605, 16
        %v781 = vrot.slane %v779, 5
        %v782 = vsel %vm638, %v777, %v781
        %v784 = vshrl.u32 %v606, 16
        %v786 = vrot.slane %v784, 4
        %v787 = vshll.u32 %v606, 16
        %v789 = vrot.slane %v787, 5
        %v790 = vor.u32 %v786, %v789
        %v791 = vrot.slane %v790, 4
        %v793 = vshll.u32 %v607, 16
        %v795 = vrot.slane %v793, 5
        %v796 = vsel %vm638, %v791, %v795
        %v797 = vshrl.u32 %v607, 16
        %v799 = vrot.slane %v797, 4
        %v800 = vor.u32 %v799, %v795
        %v801 = vrot.slane %v800, 4
        %v803 = vshll.u32 %v608, 16
        %v805 = vrot.slane %v803, 5
        %v806 = vsel %vm638, %v801, %v805
        %v808 = vshrl.u32 %v609, 16
        %v810 = vrot.slane %v808, 4
        %v811 = vshll.u32 %v609, 16
        %v813 = vrot.slane %v811, 5
        %v814 = vor.u32 %v810, %v813
        %v815 = vrot.slane %v814, 4
        %v817 = vshll.u32 %v610, 16
        %v819 = vrot.slane %v817, 5
        %v820 = vsel %vm638, %v815, %v819
        %v821 = vshrl.u32 %v610, 16
        %v823 = vrot.slane %v821, 4
        %v824 = vor.u32 %v823, %v819
        %v825 = vrot.slane %v824, 4
        %v827 = vshll.u32 %v611, 16
        %v829 = vrot.slane %v827, 5
        %v830 = vsel %vm638, %v825, %v829
        %v832 = vshrl.u32 %v612, 16
        %v834 = vrot.slane %v832, 4
        %v835 = vshll.u32 %v612, 16
        %v837 = vrot.slane %v835, 5
        %v838 = vor.u32 %v834, %v837
        %v839 = vrot.slane %v838, 4
        %v841 = vshll.u32 %v613, 16
        %v843 = vrot.slane %v841, 5
        %v844 = vsel %vm638, %v839, %v843
        %v845 = vshrl.u32 %v613, 16
        %v847 = vrot.slane %v845, 4
        %v848 = vor.u32 %v847, %v843
        %v849 = vrot.slane %v848, 4
        %v851 = vshll.u32 %v614, 16
        %v853 = vrot.slane %v851, 5
        %v854 = vsel %vm638, %v849, %v853
        %v856 = vshrl.u32 %v615, 16
        %v858 = vrot.slane %v856, 4
        %v859 = vshll.u32 %v615, 16
        %v861 = vrot.slane %v859, 5
        %v862 = vor.u32 %v858, %v861
        %v863 = vrot.slane %v862, 4
        %v865 = vshll.u32 %v616, 16
        %v867 = vrot.slane %v865, 5
        %v868 = vsel %vm638, %v863, %v867
        %v869 = vshrl.u32 %v616, 16
        %v871 = vrot.slane %v869, 4
        %v872 = vor.u32 %v871, %v867
        %v873 = vrot.slane %v872, 4
        %v875 = vshll.u32 %v617, 16
        %v877 = vrot.slane %v875, 5
        %v878 = vsel %vm638, %v873, %v877
        %v880 = vshrl.u32 %v618, 16
        %v882 = vrot.slane %v880, 4
        %v883 = vshll.u32 %v618, 16
        %v885 = vrot.slane %v883, 5
        %v886 = vor.u32 %v882, %v885
        %v887 = vrot.slane %v886, 4
        %v889 = vshll.u32 %v619, 16
        %v891 = vrot.slane %v889, 5
        %v892 = vsel %vm638, %v887, %v891
        %v893 = vshrl.u32 %v619, 16
        %v895 = vrot.slane %v893, 4
        %v896 = vor.u32 %v895, %v891
        %v897 = vrot.slane %v896, 4
        %v899 = vshll.u32 %v620, 16
        %v901 = vrot.slane %v899, 5
        %v902 = vsel %vm638, %v897, %v901
        %v904 = vshrl.u32 %v621, 16
        %v906 = vrot.slane %v904, 4
        %v907 = vshll.u32 %v621, 16
        %v909 = vrot.slane %v907, 5
        %v910 = vor.u32 %v906, %v909
        %v911 = vrot.slane %v910, 4
        %v913 = vshll.u32 %v622, 16
        %v915 = vrot.slane %v913, 5
        %v916 = vsel %vm638, %v911, %v915
        %v917 = vshrl.u32 %v622, 16
        %v919 = vrot.slane %v917, 4
        %v920 = vor.u32 %v919, %v915
        %v921 = vrot.slane %v920, 4
        %v923 = vshll.u32 %v623, 16
        %v925 = vrot.slane %v923, 5
        %v926 = vsel %vm638, %v921, %v925
        %v928 = vshrl.u32 %v624, 16
        %v930 = vrot.slane %v928, 4
        %v931 = vshll.u32 %v624, 16
        %v933 = vrot.slane %v931, 5
        %v934 = vor.u32 %v930, %v933
        %v935 = vrot.slane %v934, 4
        %v937 = vshll.u32 %v625, 16
        %v939 = vrot.slane %v937, 5
        %v940 = vsel %vm638, %v935, %v939
        %v941 = vshrl.u32 %v625, 16
        %v943 = vrot.slane %v941, 4
        %v944 = vor.u32 %v943, %v939
        %v945 = vrot.slane %v944, 4
        %v947 = vshll.u32 %v626, 16
        %v949 = vrot.slane %v947, 5
        %v950 = vsel %vm638, %v945, %v949
        %v952 = vshrl.u32 %v627, 16
        %v954 = vrot.slane %v952, 4
        %v955 = vshll.u32 %v627, 16
        %v957 = vrot.slane %v955, 5
        %v958 = vor.u32 %v954, %v957
        %v959 = vrot.slane %v958, 4
        %v961 = vshll.u32 %v628, 16
        %v963 = vrot.slane %v961, 5
        %v964 = vsel %vm638, %v959, %v963
        %v965 = vshrl.u32 %v628, 16
        %v967 = vrot.slane %v965, 4
        %v968 = vor.u32 %v967, %v963
        %v969 = vrot.slane %v968, 4
        %v971 = vshll.u32 %v629, 16
        %v973 = vrot.slane %v971, 5
        %v974 = vsel %vm638, %v969, %v973
        %v976 = vshrl.u32 %v630, 16
        %v978 = vrot.slane %v976, 4
        %v979 = vshll.u32 %v630, 16
        %v981 = vrot.slane %v979, 5
        %v982 = vor.u32 %v978, %v981
        %v983 = vrot.slane %v982, 4
        %v985 = vshll.u32 %v631, 16
        %v987 = vrot.slane %v985, 5
        %v988 = vsel %vm638, %v983, %v987
        %v989 = vshrl.u32 %v631, 16
        %v991 = vrot.slane %v989, 4
        %v992 = vor.u32 %v991, %v987
        %v993 = vrot.slane %v992, 4
        %v995 = vshll.u32 %v632, 16
        %v997 = vrot.slane %v995, 5
        %v998 = vsel %vm638, %v993, %v997
        %v1000 = vshrl.u32 %v633, 16
        %v1002 = vrot.slane %v1000, 4
        %v1003 = vshll.u32 %v633, 16
        %v1005 = vrot.slane %v1003, 5
        %v1006 = vor.u32 %v1002, %v1005
        %v1007 = vrot.slane %v1006, 4
        %v1009 = vshll.u32 %v634, 16
        %v1011 = vrot.slane %v1009, 5
        %v1012 = vsel %vm638, %v1007, %v1011
        %v1013 = vshrl.u32 %v634, 16
        %v1015 = vrot.slane %v1013, 4
        %v1016 = vor.u32 %v1015, %v1011
        %v1017 = vrot.slane %v1016, 4
        %v1019 = vshll.u32 %v635, 16
        %v1021 = vrot.slane %v1019, 5
        %v1022 = vsel %vm638, %v1017, %v1021
        %1055 = vst [vmem:[#allocation2 + $0x4] sm:$0xf] %v652
        %1056 = vst [vmem:[#allocation2 + $0x28] sm:$0xf] %v662
        %1057 = vst [vmem:[#allocation2 + $0x4c] sm:$0xf] %v676
        %1058 = vst [vmem:[#allocation2 + $0x70] sm:$0xf] %v686
        %1059 = vst [vmem:[#allocation2 + $0x94] sm:$0xf] %v700
        %1060 = vst [vmem:[#allocation2 + $0xb8] sm:$0xf] %v710
        %1061 = vst [vmem:[#allocation2 + $0xdc] sm:$0xf] %v724
        %1062 = vst [vmem:[#allocation2 + $0x100] sm:$0xf] %v734
        %1063 = vst [vmem:[#allocation2 + $0x124] sm:$0xf] %v748
        %1064 = vst [vmem:[#allocation2 + $0x148] sm:$0xf] %v758
        %1065 = vst [vmem:[#allocation2 + $0x16c] sm:$0xf] %v772
        %1066 = vst [vmem:[#allocation2 + $0x190] sm:$0xf] %v782
        %1067 = vst [vmem:[#allocation2 + $0x1b4] sm:$0xf] %v796
        %1068 = vst [vmem:[#allocation2 + $0x1d8] sm:$0xf] %v806
        %1069 = vst [vmem:[#allocation2 + $0x1fc] sm:$0xf] %v820
        %1070 = vst [vmem:[#allocation2 + $0x220] sm:$0xf] %v830
        %1071 = vst [vmem:[#allocation2 + $0x244] sm:$0xf] %v844
        %1072 = vst [vmem:[#allocation2 + $0x268] sm:$0xf] %v854
        %1073 = vst [vmem:[#allocation2 + $0x28c] sm:$0xf] %v868
        %1074 = vst [vmem:[#allocation2 + $0x2b0] sm:$0xf] %v878
        %1075 = vst [vmem:[#allocation2 + $0x2d4] sm:$0xf] %v892
        %1076 = vst [vmem:[#allocation2 + $0x2f8] sm:$0xf] %v902
        %1077 = vst [vmem:[#allocation2 + $0x31c] sm:$0xf] %v916
        %1078 = vst [vmem:[#allocation2 + $0x340] sm:$0xf] %v926
        %1079 = vst [vmem:[#allocation2 + $0x364] sm:$0xf] %v940
        %1080 = vst [vmem:[#allocation2 + $0x388] sm:$0xf] %v950
        %1081 = vst [vmem:[#allocation2 + $0x3ac] sm:$0xf] %v964
        %1082 = vst [vmem:[#allocation2 + $0x3d0] sm:$0xf] %v974
        %1083 = vst [vmem:[#allocation2 + $0x3f4] sm:$0xf] %v988
        %1084 = vst [vmem:[#allocation2 + $0x418] sm:$0xf] %v998
        %1085 = vst [vmem:[#allocation2 + $0x43c] sm:$0xf] %v1012
        %1086 = vst [vmem:[#allocation2 + $0x460] sm:$0xf] %v1022
        %v1087 = vld [vmem:[%s389] sm:$0xe]
        %v1088 = vld [vmem:[%s389 + $0x4] sm:$0xf]
        %v1089 = vld [vmem:[%s389 + $0x8] sm:$0x1]
        %v1090 = vld [vmem:[%s389 + $0xc] sm:$0xe]
        %v1091 = vld [vmem:[%s389 + $0x10] sm:$0xf]
        %v1092 = vld [vmem:[%s389 + $0x14] sm:$0x1]
        %v1093 = vld [vmem:[%s389 + $0x18] sm:$0xe]
        %v1094 = vld [vmem:[%s389 + $0x1c] sm:$0xf]
        %v1095 = vld [vmem:[%s389 + $0x20] sm:$0x1]
        %v1096 = vld [vmem:[%s389 + $0x24] sm:$0xe]
        %v1097 = vld [vmem:[%s389 + $0x28] sm:$0xf]
        %v1098 = vld [vmem:[%s389 + $0x2c] sm:$0x1]
        %v1099 = vld [vmem:[%s389 + $0x30] sm:$0xe]
        %v1100 = vld [vmem:[%s389 + $0x34] sm:$0xf]
        %v1101 = vld [vmem:[%s389 + $0x38] sm:$0x1]
        %v1102 = vld [vmem:[%s389 + $0x3c] sm:$0xe]
        %v1103 = vld [vmem:[%s389 + $0x40] sm:$0xf]
        %v1104 = vld [vmem:[%s389 + $0x44] sm:$0x1]
        %v1105 = vld [vmem:[%s389 + $0x48] sm:$0xe]
        %v1106 = vld [vmem:[%s389 + $0x4c] sm:$0xf]
        %v1107 = vld [vmem:[%s389 + $0x50] sm:$0x1]
        %v1108 = vld [vmem:[%s389 + $0x54] sm:$0xe]
        %v1109 = vld [vmem:[%s389 + $0x58] sm:$0xf]
        %v1110 = vld [vmem:[%s389 + $0x5c] sm:$0x1]
        %v1111 = vld [vmem:[%s389 + $0x60] sm:$0xe]
        %v1112 = vld [vmem:[%s389 + $0x64] sm:$0xf]
        %v1113 = vld [vmem:[%s389 + $0x68] sm:$0x1]
        %v1114 = vld [vmem:[%s389 + $0x6c] sm:$0xe]
        %v1115 = vld [vmem:[%s389 + $0x70] sm:$0xf]
        %v1116 = vld [vmem:[%s389 + $0x74] sm:$0x1]
        %v1117 = vld [vmem:[%s389 + $0x78] sm:$0xe]
        %v1118 = vld [vmem:[%s389 + $0x7c] sm:$0xf]
        %v1119 = vld [vmem:[%s389 + $0x80] sm:$0x1]
        %v1120 = vld [vmem:[%s389 + $0x84] sm:$0xe]
        %v1121 = vld [vmem:[%s389 + $0x88] sm:$0xf]
        %v1122 = vld [vmem:[%s389 + $0x8c] sm:$0x1]
        %v1123 = vld [vmem:[%s389 + $0x90] sm:$0xe]
        %v1124 = vld [vmem:[%s389 + $0x94] sm:$0xf]
        %v1125 = vld [vmem:[%s389 + $0x98] sm:$0x1]
        %v1126 = vld [vmem:[%s389 + $0x9c] sm:$0xe]
        %v1127 = vld [vmem:[%s389 + $0xa0] sm:$0xf]
        %v1128 = vld [vmem:[%s389 + $0xa4] sm:$0x1]
        %v1129 = vld [vmem:[%s389 + $0xa8] sm:$0xe]
        %v1130 = vld [vmem:[%s389 + $0xac] sm:$0xf]
        %v1131 = vld [vmem:[%s389 + $0xb0] sm:$0x1]
        %v1132 = vld [vmem:[%s389 + $0xb4] sm:$0xe]
        %v1133 = vld [vmem:[%s389 + $0xb8] sm:$0xf]
        %v1134 = vld [vmem:[%s389 + $0xbc] sm:$0x1]
        %vm1183 = vcmask 1042432
        %vm1184 = vcmask 1046532
        %vm1185 = vmor %vm1183, %vm1184
        %v1186 = vrot.slane %v1087, 5
        %v1187 = vrot.slane %v1186, 4
        %v1188 = vrot.slane %v1088, 5
        %v1189 = vsel %vm1185, %v1187, %v1188
        %v1190 = vrot.slane %v1188, 4
        %v1191 = vrot.slane %v1089, 5
        %v1192 = vsel %vm1185, %v1190, %v1191
        %v1193 = vrot.slane %v1090, 5
        %v1194 = vrot.slane %v1193, 4
        %v1195 = vrot.slane %v1091, 5
        %v1196 = vsel %vm1185, %v1194, %v1195
        %v1197 = vrot.slane %v1195, 4
        %v1198 = vrot.slane %v1092, 5
        %v1199 = vsel %vm1185, %v1197, %v1198
        %v1200 = vrot.slane %v1093, 5
        %v1201 = vrot.slane %v1200, 4
        %v1202 = vrot.slane %v1094, 5
        %v1203 = vsel %vm1185, %v1201, %v1202
        %v1204 = vrot.slane %v1202, 4
        %v1205 = vrot.slane %v1095, 5
        %v1206 = vsel %vm1185, %v1204, %v1205
        %v1207 = vrot.slane %v1096, 5
        %v1208 = vrot.slane %v1207, 4
        %v1209 = vrot.slane %v1097, 5
        %v1210 = vsel %vm1185, %v1208, %v1209
        %v1211 = vrot.slane %v1209, 4
        %v1212 = vrot.slane %v1098, 5
        %v1213 = vsel %vm1185, %v1211, %v1212
        %v1214 = vrot.slane %v1099, 5
        %v1215 = vrot.slane %v1214, 4
        %v1216 = vrot.slane %v1100, 5
        %v1217 = vsel %vm1185, %v1215, %v1216
        %v1218 = vrot.slane %v1216, 4
        %v1219 = vrot.slane %v1101, 5
        %v1220 = vsel %vm1185, %v1218, %v1219
        %v1221 = vrot.slane %v1102, 5
        %v1222 = vrot.slane %v1221, 4
        %v1223 = vrot.slane %v1103, 5
        %v1224 = vsel %vm1185, %v1222, %v1223
        %v1225 = vrot.slane %v1223, 4
        %v1226 = vrot.slane %v1104, 5
        %v1227 = vsel %vm1185, %v1225, %v1226
        %v1228 = vrot.slane %v1105, 5
        %v1229 = vrot.slane %v1228, 4
        %v1230 = vrot.slane %v1106, 5
        %v1231 = vsel %vm1185, %v1229, %v1230
        %v1232 = vrot.slane %v1230, 4
        %v1233 = vrot.slane %v1107, 5
        %v1234 = vsel %vm1185, %v1232, %v1233
        %v1235 = vrot.slane %v1108, 5
        %v1236 = vrot.slane %v1235, 4
        %v1237 = vrot.slane %v1109, 5
        %v1238 = vsel %vm1185, %v1236, %v1237
        %v1239 = vrot.slane %v1237, 4
        %v1240 = vrot.slane %v1110, 5
        %v1241 = vsel %vm1185, %v1239, %v1240
        %v1242 = vrot.slane %v1111, 5
        %v1243 = vrot.slane %v1242, 4
        %v1244 = vrot.slane %v1112, 5
        %v1245 = vsel %vm1185, %v1243, %v1244
        %v1246 = vrot.slane %v1244, 4
        %v1247 = vrot.slane %v1113, 5
        %v1248 = vsel %vm1185, %v1246, %v1247
        %v1249 = vrot.slane %v1114, 5
        %v1250 = vrot.slane %v1249, 4
        %v1251 = vrot.slane %v1115, 5
        %v1252 = vsel %vm1185, %v1250, %v1251
        %v1253 = vrot.slane %v1251, 4
        %v1254 = vrot.slane %v1116, 5
        %v1255 = vsel %vm1185, %v1253, %v1254
        %v1256 = vrot.slane %v1117, 5
        %v1257 = vrot.slane %v1256, 4
        %v1258 = vrot.slane %v1118, 5
        %v1259 = vsel %vm1185, %v1257, %v1258
        %v1260 = vrot.slane %v1258, 4
        %v1261 = vrot.slane %v1119, 5
        %v1262 = vsel %vm1185, %v1260, %v1261
        %v1263 = vrot.slane %v1120, 5
        %v1264 = vrot.slane %v1263, 4
        %v1265 = vrot.slane %v1121, 5
        %v1266 = vsel %vm1185, %v1264, %v1265
        %v1267 = vrot.slane %v1265, 4
        %v1268 = vrot.slane %v1122, 5
        %v1269 = vsel %vm1185, %v1267, %v1268
        %v1270 = vrot.slane %v1123, 5
        %v1271 = vrot.slane %v1270, 4
        %v1272 = vrot.slane %v1124, 5
        %v1273 = vsel %vm1185, %v1271, %v1272
        %v1274 = vrot.slane %v1272, 4
        %v1275 = vrot.slane %v1125, 5
        %v1276 = vsel %vm1185, %v1274, %v1275
        %v1277 = vrot.slane %v1126, 5
        %v1278 = vrot.slane %v1277, 4
        %v1279 = vrot.slane %v1127, 5
        %v1280 = vsel %vm1185, %v1278, %v1279
        %v1281 = vrot.slane %v1279, 4
        %v1282 = vrot.slane %v1128, 5
        %v1283 = vsel %vm1185, %v1281, %v1282
        %v1284 = vrot.slane %v1129, 5
        %v1285 = vrot.slane %v1284, 4
        %v1286 = vrot.slane %v1130, 5
        %v1287 = vsel %vm1185, %v1285, %v1286
        %v1288 = vrot.slane %v1286, 4
        %v1289 = vrot.slane %v1131, 5
        %v1290 = vsel %vm1185, %v1288, %v1289
        %v1291 = vrot.slane %v1132, 5
        %v1292 = vrot.slane %v1291, 4
        %v1293 = vrot.slane %v1133, 5
        %v1294 = vsel %vm1185, %v1292, %v1293
        %v1295 = vrot.slane %v1293, 4
        %v1296 = vrot.slane %v1134, 5
        %v1297 = vsel %vm1185, %v1295, %v1296
        %1330 = vst [vmem:[#allocation2 + $0x8] sm:$0xf] %v1189
        %1331 = vst [vmem:[#allocation2 + $0x2c] sm:$0xf] %v1192
        %1332 = vst [vmem:[#allocation2 + $0x50] sm:$0xf] %v1196
        %1333 = vst [vmem:[#allocation2 + $0x74] sm:$0xf] %v1199
        %1334 = vst [vmem:[#allocation2 + $0x98] sm:$0xf] %v1203
        %1335 = vst [vmem:[#allocation2 + $0xbc] sm:$0xf] %v1206
        %1336 = vst [vmem:[#allocation2 + $0xe0] sm:$0xf] %v1210
        %1337 = vst [vmem:[#allocation2 + $0x104] sm:$0xf] %v1213
        %1338 = vst [vmem:[#allocation2 + $0x128] sm:$0xf] %v1217
        %1339 = vst [vmem:[#allocation2 + $0x14c] sm:$0xf] %v1220
        %1340 = vst [vmem:[#allocation2 + $0x170] sm:$0xf] %v1224
        %1341 = vst [vmem:[#allocation2 + $0x194] sm:$0xf] %v1227
        %1342 = vst [vmem:[#allocation2 + $0x1b8] sm:$0xf] %v1231
        %1343 = vst [vmem:[#allocation2 + $0x1dc] sm:$0xf] %v1234
        %1344 = vst [vmem:[#allocation2 + $0x200] sm:$0xf] %v1238
        %1345 = vst [vmem:[#allocation2 + $0x224] sm:$0xf] %v1241
        %1346 = vst [vmem:[#allocation2 + $0x248] sm:$0xf] %v1245
        %1347 = vst [vmem:[#allocation2 + $0x26c] sm:$0xf] %v1248
        %1348 = vst [vmem:[#allocation2 + $0x290] sm:$0xf] %v1252
        %1349 = vst [vmem:[#allocation2 + $0x2b4] sm:$0xf] %v1255
        %1350 = vst [vmem:[#allocation2 + $0x2d8] sm:$0xf] %v1259
        %1351 = vst [vmem:[#allocation2 + $0x2fc] sm:$0xf] %v1262
        %1352 = vst [vmem:[#allocation2 + $0x320] sm:$0xf] %v1266
        %1353 = vst [vmem:[#allocation2 + $0x344] sm:$0xf] %v1269
        %1354 = vst [vmem:[#allocation2 + $0x368] sm:$0xf] %v1273
        %1355 = vst [vmem:[#allocation2 + $0x38c] sm:$0xf] %v1276
        %1356 = vst [vmem:[#allocation2 + $0x3b0] sm:$0xf] %v1280
        %1357 = vst [vmem:[#allocation2 + $0x3d4] sm:$0xf] %v1283
        %1358 = vst [vmem:[#allocation2 + $0x3f8] sm:$0xf] %v1287
        %1359 = vst [vmem:[#allocation2 + $0x41c] sm:$0xf] %v1290
        %1360 = vst [vmem:[#allocation2 + $0x440] sm:$0xf] %v1294
        %1361 = vst [vmem:[#allocation2 + $0x464] sm:$0xf] %v1297
        %s1362 = scalar_lea.vmem %s389, 12
        %v1363 = vld [vmem:[%s1362] sm:$0xf]
        %v1364 = vld [vmem:[%s1362 + $0x4] sm:$0xf]
        %v1365 = vld [vmem:[%s1362 + $0xc] sm:$0xf]
        %v1366 = vld [vmem:[%s1362 + $0x10] sm:$0xf]
        %v1367 = vld [vmem:[%s1362 + $0x18] sm:$0xf]
        %v1368 = vld [vmem:[%s1362 + $0x1c] sm:$0xf]
        %v1369 = vld [vmem:[%s1362 + $0x24] sm:$0xf]
        %v1370 = vld [vmem:[%s1362 + $0x28] sm:$0xf]
        %v1371 = vld [vmem:[%s1362 + $0x30] sm:$0xf]
        %v1372 = vld [vmem:[%s1362 + $0x34] sm:$0xf]
        %v1373 = vld [vmem:[%s1362 + $0x3c] sm:$0xf]
        %v1374 = vld [vmem:[%s1362 + $0x40] sm:$0xf]
        %v1375 = vld [vmem:[%s1362 + $0x48] sm:$0xf]
        %v1376 = vld [vmem:[%s1362 + $0x4c] sm:$0xf]
        %v1377 = vld [vmem:[%s1362 + $0x54] sm:$0xf]
        %v1378 = vld [vmem:[%s1362 + $0x58] sm:$0xf]
        %v1379 = vld [vmem:[%s1362 + $0x60] sm:$0xf]
        %v1380 = vld [vmem:[%s1362 + $0x64] sm:$0xf]
        %v1381 = vld [vmem:[%s1362 + $0x6c] sm:$0xf]
        %v1382 = vld [vmem:[%s1362 + $0x70] sm:$0xf]
        %v1383 = vld [vmem:[%s1362 + $0x78] sm:$0xf]
        %v1384 = vld [vmem:[%s1362 + $0x7c] sm:$0xf]
        %v1385 = vld [vmem:[%s1362 + $0x84] sm:$0xf]
        %v1386 = vld [vmem:[%s1362 + $0x88] sm:$0xf]
        %v1387 = vld [vmem:[%s1362 + $0x90] sm:$0xf]
        %v1388 = vld [vmem:[%s1362 + $0x94] sm:$0xf]
        %v1389 = vld [vmem:[%s1362 + $0x9c] sm:$0xf]
        %v1390 = vld [vmem:[%s1362 + $0xa0] sm:$0xf]
        %v1391 = vld [vmem:[%s1362 + $0xa8] sm:$0xf]
        %v1392 = vld [vmem:[%s1362 + $0xac] sm:$0xf]
        %v1393 = vld [vmem:[%s1362 + $0xb4] sm:$0xf]
        %v1394 = vld [vmem:[%s1362 + $0xb8] sm:$0xf]
        %1395 = vst [vmem:[#allocation2 + $0xc] sm:$0xf] %v1363
        %1396 = vst [vmem:[#allocation2 + $0x30] sm:$0xf] %v1364
        %1397 = vst [vmem:[#allocation2 + $0x54] sm:$0xf] %v1365
        %1398 = vst [vmem:[#allocation2 + $0x78] sm:$0xf] %v1366
        %1399 = vst [vmem:[#allocation2 + $0x9c] sm:$0xf] %v1367
        %1400 = vst [vmem:[#allocation2 + $0xc0] sm:$0xf] %v1368
        %1401 = vst [vmem:[#allocation2 + $0xe4] sm:$0xf] %v1369
        %1402 = vst [vmem:[#allocation2 + $0x108] sm:$0xf] %v1370
        %1403 = vst [vmem:[#allocation2 + $0x12c] sm:$0xf] %v1371
        %1404 = vst [vmem:[#allocation2 + $0x150] sm:$0xf] %v1372
        %1405 = vst [vmem:[#allocation2 + $0x174] sm:$0xf] %v1373
        %1406 = vst [vmem:[#allocation2 + $0x198] sm:$0xf] %v1374
        %1407 = vst [vmem:[#allocation2 + $0x1bc] sm:$0xf] %v1375
        %1408 = vst [vmem:[#allocation2 + $0x1e0] sm:$0xf] %v1376
        %1409 = vst [vmem:[#allocation2 + $0x204] sm:$0xf] %v1377
        %1410 = vst [vmem:[#allocation2 + $0x228] sm:$0xf] %v1378
        %1411 = vst [vmem:[#allocation2 + $0x24c] sm:$0xf] %v1379
        %1412 = vst [vmem:[#allocation2 + $0x270] sm:$0xf] %v1380
        %1413 = vst [vmem:[#allocation2 + $0x294] sm:$0xf] %v1381
        %1414 = vst [vmem:[#allocation2 + $0x2b8] sm:$0xf] %v1382
        %1415 = vst [vmem:[#allocation2 + $0x2dc] sm:$0xf] %v1383
        %1416 = vst [vmem:[#allocation2 + $0x300] sm:$0xf] %v1384
        %1417 = vst [vmem:[#allocation2 + $0x324] sm:$0xf] %v1385
        %1418 = vst [vmem:[#allocation2 + $0x348] sm:$0xf] %v1386
        %1419 = vst [vmem:[#allocation2 + $0x36c] sm:$0xf] %v1387
        %1420 = vst [vmem:[#allocation2 + $0x390] sm:$0xf] %v1388
        %1421 = vst [vmem:[#allocation2 + $0x3b4] sm:$0xf] %v1389
        %1422 = vst [vmem:[#allocation2 + $0x3d8] sm:$0xf] %v1390
        %1423 = vst [vmem:[#allocation2 + $0x3fc] sm:$0xf] %v1391
        %1424 = vst [vmem:[#allocation2 + $0x420] sm:$0xf] %v1392
        %1425 = vst [vmem:[#allocation2 + $0x444] sm:$0xf] %v1393
        %1426 = vst [vmem:[#allocation2 + $0x468] sm:$0xf] %v1394
        %v1427 = vld [vmem:[%s1362] sm:$0xf]
        %v1428 = vld [vmem:[%s1362 + $0x4] sm:$0xf]
        %v1429 = vld [vmem:[%s1362 + $0x8] sm:$0x1]
        %v1430 = vld [vmem:[%s1362 + $0xc] sm:$0xf]
        %v1431 = vld [vmem:[%s1362 + $0x10] sm:$0xf]
        %v1432 = vld [vmem:[%s1362 + $0x14] sm:$0x1]
        %v1433 = vld [vmem:[%s1362 + $0x18] sm:$0xf]
        %v1434 = vld [vmem:[%s1362 + $0x1c] sm:$0xf]
        %v1435 = vld [vmem:[%s1362 + $0x20] sm:$0x1]
        %v1436 = vld [vmem:[%s1362 + $0x24] sm:$0xf]
        %v1437 = vld [vmem:[%s1362 + $0x28] sm:$0xf]
        %v1438 = vld [vmem:[%s1362 + $0x2c] sm:$0x1]
        %v1439 = vld [vmem:[%s1362 + $0x30] sm:$0xf]
        %v1440 = vld [vmem:[%s1362 + $0x34] sm:$0xf]
        %v1441 = vld [vmem:[%s1362 + $0x38] sm:$0x1]
        %v1442 = vld [vmem:[%s1362 + $0x3c] sm:$0xf]
        %v1443 = vld [vmem:[%s1362 + $0x40] sm:$0xf]
        %v1444 = vld [vmem:[%s1362 + $0x44] sm:$0x1]
        %v1445 = vld [vmem:[%s1362 + $0x48] sm:$0xf]
        %v1446 = vld [vmem:[%s1362 + $0x4c] sm:$0xf]
        %v1447 = vld [vmem:[%s1362 + $0x50] sm:$0x1]
        %v1448 = vld [vmem:[%s1362 + $0x54] sm:$0xf]
        %v1449 = vld [vmem:[%s1362 + $0x58] sm:$0xf]
        %v1450 = vld [vmem:[%s1362 + $0x5c] sm:$0x1]
        %v1451 = vld [vmem:[%s1362 + $0x60] sm:$0xf]
        %v1452 = vld [vmem:[%s1362 + $0x64] sm:$0xf]
        %v1453 = vld [vmem:[%s1362 + $0x68] sm:$0x1]
        %v1454 = vld [vmem:[%s1362 + $0x6c] sm:$0xf]
        %v1455 = vld [vmem:[%s1362 + $0x70] sm:$0xf]
        %v1456 = vld [vmem:[%s1362 + $0x74] sm:$0x1]
        %v1457 = vld [vmem:[%s1362 + $0x78] sm:$0xf]
        %v1458 = vld [vmem:[%s1362 + $0x7c] sm:$0xf]
        %v1459 = vld [vmem:[%s1362 + $0x80] sm:$0x1]
        %v1460 = vld [vmem:[%s1362 + $0x84] sm:$0xf]
        %v1461 = vld [vmem:[%s1362 + $0x88] sm:$0xf]
        %v1462 = vld [vmem:[%s1362 + $0x8c] sm:$0x1]
        %v1463 = vld [vmem:[%s1362 + $0x90] sm:$0xf]
        %v1464 = vld [vmem:[%s1362 + $0x94] sm:$0xf]
        %v1465 = vld [vmem:[%s1362 + $0x98] sm:$0x1]
        %v1466 = vld [vmem:[%s1362 + $0x9c] sm:$0xf]
        %v1467 = vld [vmem:[%s1362 + $0xa0] sm:$0xf]
        %v1468 = vld [vmem:[%s1362 + $0xa4] sm:$0x1]
        %v1469 = vld [vmem:[%s1362 + $0xa8] sm:$0xf]
        %v1470 = vld [vmem:[%s1362 + $0xac] sm:$0xf]
        %v1471 = vld [vmem:[%s1362 + $0xb0] sm:$0x1]
        %v1472 = vld [vmem:[%s1362 + $0xb4] sm:$0xf]
        %v1473 = vld [vmem:[%s1362 + $0xb8] sm:$0xf]
        %v1474 = vld [vmem:[%s1362 + $0xbc] sm:$0x1]
        %v1476 = vshrl.u32 %v1427, 16
        %v1478 = vrot.slane %v1476, 4
        %v1479 = vshll.u32 %v1427, 16
        %v1481 = vrot.slane %v1479, 5
        %v1482 = vor.u32 %v1478, %v1481
        %v1483 = vrot.slane %v1482, 4
        %v1485 = vshll.u32 %v1428, 16
        %v1487 = vrot.slane %v1485, 5
        %v1488 = vsel %vm638, %v1483, %v1487
        %v1489 = vshrl.u32 %v1428, 16
        %v1491 = vrot.slane %v1489, 4
        %v1492 = vor.u32 %v1491, %v1487
        %v1493 = vrot.slane %v1492, 4
        %v1495 = vshll.u32 %v1429, 16
        %v1497 = vrot.slane %v1495, 5
        %v1498 = vsel %vm638, %v1493, %v1497
        %v1500 = vshrl.u32 %v1430, 16
        %v1502 = vrot.slane %v1500, 4
        %v1503 = vshll.u32 %v1430, 16
        %v1505 = vrot.slane %v1503, 5
        %v1506 = vor.u32 %v1502, %v1505
        %v1507 = vrot.slane %v1506, 4
        %v1509 = vshll.u32 %v1431, 16
        %v1511 = vrot.slane %v1509, 5
        %v1512 = vsel %vm638, %v1507, %v1511
        %v1513 = vshrl.u32 %v1431, 16
        %v1515 = vrot.slane %v1513, 4
        %v1516 = vor.u32 %v1515, %v1511
        %v1517 = vrot.slane %v1516, 4
        %v1519 = vshll.u32 %v1432, 16
        %v1521 = vrot.slane %v1519, 5
        %v1522 = vsel %vm638, %v1517, %v1521
        %v1524 = vshrl.u32 %v1433, 16
        %v1526 = vrot.slane %v1524, 4
        %v1527 = vshll.u32 %v1433, 16
        %v1529 = vrot.slane %v1527, 5
        %v1530 = vor.u32 %v1526, %v1529
        %v1531 = vrot.slane %v1530, 4
        %v1533 = vshll.u32 %v1434, 16
        %v1535 = vrot.slane %v1533, 5
        %v1536 = vsel %vm638, %v1531, %v1535
        %v1537 = vshrl.u32 %v1434, 16
        %v1539 = vrot.slane %v1537, 4
        %v1540 = vor.u32 %v1539, %v1535
        %v1541 = vrot.slane %v1540, 4
        %v1543 = vshll.u32 %v1435, 16
        %v1545 = vrot.slane %v1543, 5
        %v1546 = vsel %vm638, %v1541, %v1545
        %v1548 = vshrl.u32 %v1436, 16
        %v1550 = vrot.slane %v1548, 4
        %v1551 = vshll.u32 %v1436, 16
        %v1553 = vrot.slane %v1551, 5
        %v1554 = vor.u32 %v1550, %v1553
        %v1555 = vrot.slane %v1554, 4
        %v1557 = vshll.u32 %v1437, 16
        %v1559 = vrot.slane %v1557, 5
        %v1560 = vsel %vm638, %v1555, %v1559
        %v1561 = vshrl.u32 %v1437, 16
        %v1563 = vrot.slane %v1561, 4
        %v1564 = vor.u32 %v1563, %v1559
        %v1565 = vrot.slane %v1564, 4
        %v1567 = vshll.u32 %v1438, 16
        %v1569 = vrot.slane %v1567, 5
        %v1570 = vsel %vm638, %v1565, %v1569
        %v1572 = vshrl.u32 %v1439, 16
        %v1574 = vrot.slane %v1572, 4
        %v1575 = vshll.u32 %v1439, 16
        %v1577 = vrot.slane %v1575, 5
        %v1578 = vor.u32 %v1574, %v1577
        %v1579 = vrot.slane %v1578, 4
        %v1581 = vshll.u32 %v1440, 16
        %v1583 = vrot.slane %v1581, 5
        %v1584 = vsel %vm638, %v1579, %v1583
        %v1585 = vshrl.u32 %v1440, 16
        %v1587 = vrot.slane %v1585, 4
        %v1588 = vor.u32 %v1587, %v1583
        %v1589 = vrot.slane %v1588, 4
        %v1591 = vshll.u32 %v1441, 16
        %v1593 = vrot.slane %v1591, 5
        %v1594 = vsel %vm638, %v1589, %v1593
        %v1596 = vshrl.u32 %v1442, 16
        %v1598 = vrot.slane %v1596, 4
        %v1599 = vshll.u32 %v1442, 16
        %v1601 = vrot.slane %v1599, 5
        %v1602 = vor.u32 %v1598, %v1601
        %v1603 = vrot.slane %v1602, 4
        %v1605 = vshll.u32 %v1443, 16
        %v1607 = vrot.slane %v1605, 5
        %v1608 = vsel %vm638, %v1603, %v1607
        %v1609 = vshrl.u32 %v1443, 16
        %v1611 = vrot.slane %v1609, 4
        %v1612 = vor.u32 %v1611, %v1607
        %v1613 = vrot.slane %v1612, 4
        %v1615 = vshll.u32 %v1444, 16
        %v1617 = vrot.slane %v1615, 5
        %v1618 = vsel %vm638, %v1613, %v1617
        %v1620 = vshrl.u32 %v1445, 16
        %v1622 = vrot.slane %v1620, 4
        %v1623 = vshll.u32 %v1445, 16
        %v1625 = vrot.slane %v1623, 5
        %v1626 = vor.u32 %v1622, %v1625
        %v1627 = vrot.slane %v1626, 4
        %v1629 = vshll.u32 %v1446, 16
        %v1631 = vrot.slane %v1629, 5
        %v1632 = vsel %vm638, %v1627, %v1631
        %v1633 = vshrl.u32 %v1446, 16
        %v1635 = vrot.slane %v1633, 4
        %v1636 = vor.u32 %v1635, %v1631
        %v1637 = vrot.slane %v1636, 4
        %v1639 = vshll.u32 %v1447, 16
        %v1641 = vrot.slane %v1639, 5
        %v1642 = vsel %vm638, %v1637, %v1641
        %v1644 = vshrl.u32 %v1448, 16
        %v1646 = vrot.slane %v1644, 4
        %v1647 = vshll.u32 %v1448, 16
        %v1649 = vrot.slane %v1647, 5
        %v1650 = vor.u32 %v1646, %v1649
        %v1651 = vrot.slane %v1650, 4
        %v1653 = vshll.u32 %v1449, 16
        %v1655 = vrot.slane %v1653, 5
        %v1656 = vsel %vm638, %v1651, %v1655
        %v1657 = vshrl.u32 %v1449, 16
        %v1659 = vrot.slane %v1657, 4
        %v1660 = vor.u32 %v1659, %v1655
        %v1661 = vrot.slane %v1660, 4
        %v1663 = vshll.u32 %v1450, 16
        %v1665 = vrot.slane %v1663, 5
        %v1666 = vsel %vm638, %v1661, %v1665
        %v1668 = vshrl.u32 %v1451, 16
        %v1670 = vrot.slane %v1668, 4
        %v1671 = vshll.u32 %v1451, 16
        %v1673 = vrot.slane %v1671, 5
        %v1674 = vor.u32 %v1670, %v1673
        %v1675 = vrot.slane %v1674, 4
        %v1677 = vshll.u32 %v1452, 16
        %v1679 = vrot.slane %v1677, 5
        %v1680 = vsel %vm638, %v1675, %v1679
        %v1681 = vshrl.u32 %v1452, 16
        %v1683 = vrot.slane %v1681, 4
        %v1684 = vor.u32 %v1683, %v1679
        %v1685 = vrot.slane %v1684, 4
        %v1687 = vshll.u32 %v1453, 16
        %v1689 = vrot.slane %v1687, 5
        %v1690 = vsel %vm638, %v1685, %v1689
        %v1692 = vshrl.u32 %v1454, 16
        %v1694 = vrot.slane %v1692, 4
        %v1695 = vshll.u32 %v1454, 16
        %v1697 = vrot.slane %v1695, 5
        %v1698 = vor.u32 %v1694, %v1697
        %v1699 = vrot.slane %v1698, 4
        %v1701 = vshll.u32 %v1455, 16
        %v1703 = vrot.slane %v1701, 5
        %v1704 = vsel %vm638, %v1699, %v1703
        %v1705 = vshrl.u32 %v1455, 16
        %v1707 = vrot.slane %v1705, 4
        %v1708 = vor.u32 %v1707, %v1703
        %v1709 = vrot.slane %v1708, 4
        %v1711 = vshll.u32 %v1456, 16
        %v1713 = vrot.slane %v1711, 5
        %v1714 = vsel %vm638, %v1709, %v1713
        %v1716 = vshrl.u32 %v1457, 16
        %v1718 = vrot.slane %v1716, 4
        %v1719 = vshll.u32 %v1457, 16
        %v1721 = vrot.slane %v1719, 5
        %v1722 = vor.u32 %v1718, %v1721
        %v1723 = vrot.slane %v1722, 4
        %v1725 = vshll.u32 %v1458, 16
        %v1727 = vrot.slane %v1725, 5
        %v1728 = vsel %vm638, %v1723, %v1727
        %v1729 = vshrl.u32 %v1458, 16
        %v1731 = vrot.slane %v1729, 4
        %v1732 = vor.u32 %v1731, %v1727
        %v1733 = vrot.slane %v1732, 4
        %v1735 = vshll.u32 %v1459, 16
        %v1737 = vrot.slane %v1735, 5
        %v1738 = vsel %vm638, %v1733, %v1737
        %v1740 = vshrl.u32 %v1460, 16
        %v1742 = vrot.slane %v1740, 4
        %v1743 = vshll.u32 %v1460, 16
        %v1745 = vrot.slane %v1743, 5
        %v1746 = vor.u32 %v1742, %v1745
        %v1747 = vrot.slane %v1746, 4
        %v1749 = vshll.u32 %v1461, 16
        %v1751 = vrot.slane %v1749, 5
        %v1752 = vsel %vm638, %v1747, %v1751
        %v1753 = vshrl.u32 %v1461, 16
        %v1755 = vrot.slane %v1753, 4
        %v1756 = vor.u32 %v1755, %v1751
        %v1757 = vrot.slane %v1756, 4
        %v1759 = vshll.u32 %v1462, 16
        %v1761 = vrot.slane %v1759, 5
        %v1762 = vsel %vm638, %v1757, %v1761
        %v1764 = vshrl.u32 %v1463, 16
        %v1766 = vrot.slane %v1764, 4
        %v1767 = vshll.u32 %v1463, 16
        %v1769 = vrot.slane %v1767, 5
        %v1770 = vor.u32 %v1766, %v1769
        %v1771 = vrot.slane %v1770, 4
        %v1773 = vshll.u32 %v1464, 16
        %v1775 = vrot.slane %v1773, 5
        %v1776 = vsel %vm638, %v1771, %v1775
        %v1777 = vshrl.u32 %v1464, 16
        %v1779 = vrot.slane %v1777, 4
        %v1780 = vor.u32 %v1779, %v1775
        %v1781 = vrot.slane %v1780, 4
        %v1783 = vshll.u32 %v1465, 16
        %v1785 = vrot.slane %v1783, 5
        %v1786 = vsel %vm638, %v1781, %v1785
        %v1788 = vshrl.u32 %v1466, 16
        %v1790 = vrot.slane %v1788, 4
        %v1791 = vshll.u32 %v1466, 16
        %v1793 = vrot.slane %v1791, 5
        %v1794 = vor.u32 %v1790, %v1793
        %v1795 = vrot.slane %v1794, 4
        %v1797 = vshll.u32 %v1467, 16
        %v1799 = vrot.slane %v1797, 5
        %v1800 = vsel %vm638, %v1795, %v1799
        %v1801 = vshrl.u32 %v1467, 16
        %v1803 = vrot.slane %v1801, 4
        %v1804 = vor.u32 %v1803, %v1799
        %v1805 = vrot.slane %v1804, 4
        %v1807 = vshll.u32 %v1468, 16
        %v1809 = vrot.slane %v1807, 5
        %v1810 = vsel %vm638, %v1805, %v1809
        %v1812 = vshrl.u32 %v1469, 16
        %v1814 = vrot.slane %v1812, 4
        %v1815 = vshll.u32 %v1469, 16
        %v1817 = vrot.slane %v1815, 5
        %v1818 = vor.u32 %v1814, %v1817
        %v1819 = vrot.slane %v1818, 4
        %v1821 = vshll.u32 %v1470, 16
        %v1823 = vrot.slane %v1821, 5
        %v1824 = vsel %vm638, %v1819, %v1823
        %v1825 = vshrl.u32 %v1470, 16
        %v1827 = vrot.slane %v1825, 4
        %v1828 = vor.u32 %v1827, %v1823
        %v1829 = vrot.slane %v1828, 4
        %v1831 = vshll.u32 %v1471, 16
        %v1833 = vrot.slane %v1831, 5
        %v1834 = vsel %vm638, %v1829, %v1833
        %v1836 = vshrl.u32 %v1472, 16
        %v1838 = vrot.slane %v1836, 4
        %v1839 = vshll.u32 %v1472, 16
        %v1841 = vrot.slane %v1839, 5
        %v1842 = vor.u32 %v1838, %v1841
        %v1843 = vrot.slane %v1842, 4
        %v1845 = vshll.u32 %v1473, 16
        %v1847 = vrot.slane %v1845, 5
        %v1848 = vsel %vm638, %v1843, %v1847
        %v1849 = vshrl.u32 %v1473, 16
        %v1851 = vrot.slane %v1849, 4
        %v1852 = vor.u32 %v1851, %v1847
        %v1853 = vrot.slane %v1852, 4
        %v1855 = vshll.u32 %v1474, 16
        %v1857 = vrot.slane %v1855, 5
        %v1858 = vsel %vm638, %v1853, %v1857
        %1891 = vst [vmem:[#allocation2 + $0x10] sm:$0xf] %v1488
        %1892 = vst [vmem:[#allocation2 + $0x34] sm:$0xf] %v1498
        %1893 = vst [vmem:[#allocation2 + $0x58] sm:$0xf] %v1512
        %1894 = vst [vmem:[#allocation2 + $0x7c] sm:$0xf] %v1522
        %1895 = vst [vmem:[#allocation2 + $0xa0] sm:$0xf] %v1536
        %1896 = vst [vmem:[#allocation2 + $0xc4] sm:$0xf] %v1546
        %1897 = vst [vmem:[#allocation2 + $0xe8] sm:$0xf] %v1560
        %1898 = vst [vmem:[#allocation2 + $0x10c] sm:$0xf] %v1570
        %1899 = vst [vmem:[#allocation2 + $0x130] sm:$0xf] %v1584
        %1900 = vst [vmem:[#allocation2 + $0x154] sm:$0xf] %v1594
        %1901 = vst [vmem:[#allocation2 + $0x178] sm:$0xf] %v1608
        %1902 = vst [vmem:[#allocation2 + $0x19c] sm:$0xf] %v1618
        %1903 = vst [vmem:[#allocation2 + $0x1c0] sm:$0xf] %v1632
        %1904 = vst [vmem:[#allocation2 + $0x1e4] sm:$0xf] %v1642
        %1905 = vst [vmem:[#allocation2 + $0x208] sm:$0xf] %v1656
        %1906 = vst [vmem:[#allocation2 + $0x22c] sm:$0xf] %v1666
        %1907 = vst [vmem:[#allocation2 + $0x250] sm:$0xf] %v1680
        %1908 = vst [vmem:[#allocation2 + $0x274] sm:$0xf] %v1690
        %1909 = vst [vmem:[#allocation2 + $0x298] sm:$0xf] %v1704
        %1910 = vst [vmem:[#allocation2 + $0x2bc] sm:$0xf] %v1714
        %1911 = vst [vmem:[#allocation2 + $0x2e0] sm:$0xf] %v1728
        %1912 = vst [vmem:[#allocation2 + $0x304] sm:$0xf] %v1738
        %1913 = vst [vmem:[#allocation2 + $0x328] sm:$0xf] %v1752
        %1914 = vst [vmem:[#allocation2 + $0x34c] sm:$0xf] %v1762
        %1915 = vst [vmem:[#allocation2 + $0x370] sm:$0xf] %v1776
        %1916 = vst [vmem:[#allocation2 + $0x394] sm:$0xf] %v1786
        %1917 = vst [vmem:[#allocation2 + $0x3b8] sm:$0xf] %v1800
        %1918 = vst [vmem:[#allocation2 + $0x3dc] sm:$0xf] %v1810
        %1919 = vst [vmem:[#allocation2 + $0x400] sm:$0xf] %v1824
        %1920 = vst [vmem:[#allocation2 + $0x424] sm:$0xf] %v1834
        %1921 = vst [vmem:[#allocation2 + $0x448] sm:$0xf] %v1848
        %1922 = vst [vmem:[#allocation2 + $0x46c] sm:$0xf] %v1858
        %v1923 = vld [vmem:[%s1362] sm:$0xe]
        %v1924 = vld [vmem:[%s1362 + $0x4] sm:$0xf]
        %v1925 = vld [vmem:[%s1362 + $0x8] sm:$0x1]
        %v1926 = vld [vmem:[%s1362 + $0xc] sm:$0xe]
        %v1927 = vld [vmem:[%s1362 + $0x10] sm:$0xf]
        %v1928 = vld [vmem:[%s1362 + $0x14] sm:$0x1]
        %v1929 = vld [vmem:[%s1362 + $0x18] sm:$0xe]
        %v1930 = vld [vmem:[%s1362 + $0x1c] sm:$0xf]
        %v1931 = vld [vmem:[%s1362 + $0x20] sm:$0x1]
        %v1932 = vld [vmem:[%s1362 + $0x24] sm:$0xe]
        %v1933 = vld [vmem:[%s1362 + $0x28] sm:$0xf]
        %v1934 = vld [vmem:[%s1362 + $0x2c] sm:$0x1]
        %v1935 = vld [vmem:[%s1362 + $0x30] sm:$0xe]
        %v1936 = vld [vmem:[%s1362 + $0x34] sm:$0xf]
        %v1937 = vld [vmem:[%s1362 + $0x38] sm:$0x1]
        %v1938 = vld [vmem:[%s1362 + $0x3c] sm:$0xe]
        %v1939 = vld [vmem:[%s1362 + $0x40] sm:$0xf]
        %v1940 = vld [vmem:[%s1362 + $0x44] sm:$0x1]
        %v1941 = vld [vmem:[%s1362 + $0x48] sm:$0xe]
        %v1942 = vld [vmem:[%s1362 + $0x4c] sm:$0xf]
        %v1943 = vld [vmem:[%s1362 + $0x50] sm:$0x1]
        %v1944 = vld [vmem:[%s1362 + $0x54] sm:$0xe]
        %v1945 = vld [vmem:[%s1362 + $0x58] sm:$0xf]
        %v1946 = vld [vmem:[%s1362 + $0x5c] sm:$0x1]
        %v1947 = vld [vmem:[%s1362 + $0x60] sm:$0xe]
        %v1948 = vld [vmem:[%s1362 + $0x64] sm:$0xf]
        %v1949 = vld [vmem:[%s1362 + $0x68] sm:$0x1]
        %v1950 = vld [vmem:[%s1362 + $0x6c] sm:$0xe]
        %v1951 = vld [vmem:[%s1362 + $0x70] sm:$0xf]
        %v1952 = vld [vmem:[%s1362 + $0x74] sm:$0x1]
        %v1953 = vld [vmem:[%s1362 + $0x78] sm:$0xe]
        %v1954 = vld [vmem:[%s1362 + $0x7c] sm:$0xf]
        %v1955 = vld [vmem:[%s1362 + $0x80] sm:$0x1]
        %v1956 = vld [vmem:[%s1362 + $0x84] sm:$0xe]
        %v1957 = vld [vmem:[%s1362 + $0x88] sm:$0xf]
        %v1958 = vld [vmem:[%s1362 + $0x8c] sm:$0x1]
        %v1959 = vld [vmem:[%s1362 + $0x90] sm:$0xe]
        %v1960 = vld [vmem:[%s1362 + $0x94] sm:$0xf]
        %v1961 = vld [vmem:[%s1362 + $0x98] sm:$0x1]
        %v1962 = vld [vmem:[%s1362 + $0x9c] sm:$0xe]
        %v1963 = vld [vmem:[%s1362 + $0xa0] sm:$0xf]
        %v1964 = vld [vmem:[%s1362 + $0xa4] sm:$0x1]
        %v1965 = vld [vmem:[%s1362 + $0xa8] sm:$0xe]
        %v1966 = vld [vmem:[%s1362 + $0xac] sm:$0xf]
        %v1967 = vld [vmem:[%s1362 + $0xb0] sm:$0x1]
        %v1968 = vld [vmem:[%s1362 + $0xb4] sm:$0xe]
        %v1969 = vld [vmem:[%s1362 + $0xb8] sm:$0xf]
        %v1970 = vld [vmem:[%s1362 + $0xbc] sm:$0x1]
        %v2019 = vrot.slane %v1923, 5
        %v2020 = vrot.slane %v2019, 4
        %v2021 = vrot.slane %v1924, 5
        %v2022 = vsel %vm1185, %v2020, %v2021
        %v2023 = vrot.slane %v2021, 4
        %v2024 = vrot.slane %v1925, 5
        %v2025 = vsel %vm1185, %v2023, %v2024
        %v2026 = vrot.slane %v1926, 5
        %v2027 = vrot.slane %v2026, 4
        %v2028 = vrot.slane %v1927, 5
        %v2029 = vsel %vm1185, %v2027, %v2028
        %v2030 = vrot.slane %v2028, 4
        %v2031 = vrot.slane %v1928, 5
        %v2032 = vsel %vm1185, %v2030, %v2031
        %v2033 = vrot.slane %v1929, 5
        %v2034 = vrot.slane %v2033, 4
        %v2035 = vrot.slane %v1930, 5
        %v2036 = vsel %vm1185, %v2034, %v2035
        %v2037 = vrot.slane %v2035, 4
        %v2038 = vrot.slane %v1931, 5
        %v2039 = vsel %vm1185, %v2037, %v2038
        %v2040 = vrot.slane %v1932, 5
        %v2041 = vrot.slane %v2040, 4
        %v2042 = vrot.slane %v1933, 5
        %v2043 = vsel %vm1185, %v2041, %v2042
        %v2044 = vrot.slane %v2042, 4
        %v2045 = vrot.slane %v1934, 5
        %v2046 = vsel %vm1185, %v2044, %v2045
        %v2047 = vrot.slane %v1935, 5
        %v2048 = vrot.slane %v2047, 4
        %v2049 = vrot.slane %v1936, 5
        %v2050 = vsel %vm1185, %v2048, %v2049
        %v2051 = vrot.slane %v2049, 4
        %v2052 = vrot.slane %v1937, 5
        %v2053 = vsel %vm1185, %v2051, %v2052
        %v2054 = vrot.slane %v1938, 5
        %v2055 = vrot.slane %v2054, 4
        %v2056 = vrot.slane %v1939, 5
        %v2057 = vsel %vm1185, %v2055, %v2056
        %v2058 = vrot.slane %v2056, 4
        %v2059 = vrot.slane %v1940, 5
        %v2060 = vsel %vm1185, %v2058, %v2059
        %v2061 = vrot.slane %v1941, 5
        %v2062 = vrot.slane %v2061, 4
        %v2063 = vrot.slane %v1942, 5
        %v2064 = vsel %vm1185, %v2062, %v2063
        %v2065 = vrot.slane %v2063, 4
        %v2066 = vrot.slane %v1943, 5
        %v2067 = vsel %vm1185, %v2065, %v2066
        %v2068 = vrot.slane %v1944, 5
        %v2069 = vrot.slane %v2068, 4
        %v2070 = vrot.slane %v1945, 5
        %v2071 = vsel %vm1185, %v2069, %v2070
        %v2072 = vrot.slane %v2070, 4
        %v2073 = vrot.slane %v1946, 5
        %v2074 = vsel %vm1185, %v2072, %v2073
        %v2075 = vrot.slane %v1947, 5
        %v2076 = vrot.slane %v2075, 4
        %v2077 = vrot.slane %v1948, 5
        %v2078 = vsel %vm1185, %v2076, %v2077
        %v2079 = vrot.slane %v2077, 4
        %v2080 = vrot.slane %v1949, 5
        %v2081 = vsel %vm1185, %v2079, %v2080
        %v2082 = vrot.slane %v1950, 5
        %v2083 = vrot.slane %v2082, 4
        %v2084 = vrot.slane %v1951, 5
        %v2085 = vsel %vm1185, %v2083, %v2084
        %v2086 = vrot.slane %v2084, 4
        %v2087 = vrot.slane %v1952, 5
        %v2088 = vsel %vm1185, %v2086, %v2087
        %v2089 = vrot.slane %v1953, 5
        %v2090 = vrot.slane %v2089, 4
        %v2091 = vrot.slane %v1954, 5
        %v2092 = vsel %vm1185, %v2090, %v2091
        %v2093 = vrot.slane %v2091, 4
        %v2094 = vrot.slane %v1955, 5
        %v2095 = vsel %vm1185, %v2093, %v2094
        %v2096 = vrot.slane %v1956, 5
        %v2097 = vrot.slane %v2096, 4
        %v2098 = vrot.slane %v1957, 5
        %v2099 = vsel %vm1185, %v2097, %v2098
        %v2100 = vrot.slane %v2098, 4
        %v2101 = vrot.slane %v1958, 5
        %v2102 = vsel %vm1185, %v2100, %v2101
        %v2103 = vrot.slane %v1959, 5
        %v2104 = vrot.slane %v2103, 4
        %v2105 = vrot.slane %v1960, 5
        %v2106 = vsel %vm1185, %v2104, %v2105
        %v2107 = vrot.slane %v2105, 4
        %v2108 = vrot.slane %v1961, 5
        %v2109 = vsel %vm1185, %v2107, %v2108
        %v2110 = vrot.slane %v1962, 5
        %v2111 = vrot.slane %v2110, 4
        %v2112 = vrot.slane %v1963, 5
        %v2113 = vsel %vm1185, %v2111, %v2112
        %v2114 = vrot.slane %v2112, 4
        %v2115 = vrot.slane %v1964, 5
        %v2116 = vsel %vm1185, %v2114, %v2115
        %v2117 = vrot.slane %v1965, 5
        %v2118 = vrot.slane %v2117, 4
        %v2119 = vrot.slane %v1966, 5
        %v2120 = vsel %vm1185, %v2118, %v2119
        %v2121 = vrot.slane %v2119, 4
        %v2122 = vrot.slane %v1967, 5
        %v2123 = vsel %vm1185, %v2121, %v2122
        %v2124 = vrot.slane %v1968, 5
        %v2125 = vrot.slane %v2124, 4
        %v2126 = vrot.slane %v1969, 5
        %v2127 = vsel %vm1185, %v2125, %v2126
        %v2128 = vrot.slane %v2126, 4
        %v2129 = vrot.slane %v1970, 5
        %v2130 = vsel %vm1185, %v2128, %v2129
        %2163 = vst [vmem:[#allocation2 + $0x14] sm:$0xf] %v2022
        %2164 = vst [vmem:[#allocation2 + $0x38] sm:$0xf] %v2025
        %2165 = vst [vmem:[#allocation2 + $0x5c] sm:$0xf] %v2029
        %2166 = vst [vmem:[#allocation2 + $0x80] sm:$0xf] %v2032
        %2167 = vst [vmem:[#allocation2 + $0xa4] sm:$0xf] %v2036
        %2168 = vst [vmem:[#allocation2 + $0xc8] sm:$0xf] %v2039
        %2169 = vst [vmem:[#allocation2 + $0xec] sm:$0xf] %v2043
        %2170 = vst [vmem:[#allocation2 + $0x110] sm:$0xf] %v2046
        %2171 = vst [vmem:[#allocation2 + $0x134] sm:$0xf] %v2050
        %2172 = vst [vmem:[#allocation2 + $0x158] sm:$0xf] %v2053
        %2173 = vst [vmem:[#allocation2 + $0x17c] sm:$0xf] %v2057
        %2174 = vst [vmem:[#allocation2 + $0x1a0] sm:$0xf] %v2060
        %2175 = vst [vmem:[#allocation2 + $0x1c4] sm:$0xf] %v2064
        %2176 = vst [vmem:[#allocation2 + $0x1e8] sm:$0xf] %v2067
        %2177 = vst [vmem:[#allocation2 + $0x20c] sm:$0xf] %v2071
        %2178 = vst [vmem:[#allocation2 + $0x230] sm:$0xf] %v2074
        %2179 = vst [vmem:[#allocation2 + $0x254] sm:$0xf] %v2078
        %2180 = vst [vmem:[#allocation2 + $0x278] sm:$0xf] %v2081
        %2181 = vst [vmem:[#allocation2 + $0x29c] sm:$0xf] %v2085
        %2182 = vst [vmem:[#allocation2 + $0x2c0] sm:$0xf] %v2088
        %2183 = vst [vmem:[#allocation2 + $0x2e4] sm:$0xf] %v2092
        %2184 = vst [vmem:[#allocation2 + $0x308] sm:$0xf] %v2095
        %2185 = vst [vmem:[#allocation2 + $0x32c] sm:$0xf] %v2099
        %2186 = vst [vmem:[#allocation2 + $0x350] sm:$0xf] %v2102
        %2187 = vst [vmem:[#allocation2 + $0x374] sm:$0xf] %v2106
        %2188 = vst [vmem:[#allocation2 + $0x398] sm:$0xf] %v2109
        %2189 = vst [vmem:[#allocation2 + $0x3bc] sm:$0xf] %v2113
        %2190 = vst [vmem:[#allocation2 + $0x3e0] sm:$0xf] %v2116
        %2191 = vst [vmem:[#allocation2 + $0x404] sm:$0xf] %v2120
        %2192 = vst [vmem:[#allocation2 + $0x428] sm:$0xf] %v2123
        %2193 = vst [vmem:[#allocation2 + $0x44c] sm:$0xf] %v2127
        %2194 = vst [vmem:[#allocation2 + $0x470] sm:$0xf] %v2130
        %s2195 = scalar_lea.vmem %s389, 24
        %v2196 = vld [vmem:[%s2195] sm:$0xf]
        %v2197 = vld [vmem:[%s2195 + $0x4] sm:$0xf]
        %v2198 = vld [vmem:[%s2195 + $0xc] sm:$0xf]
        %v2199 = vld [vmem:[%s2195 + $0x10] sm:$0xf]
        %v2200 = vld [vmem:[%s2195 + $0x18] sm:$0xf]
        %v2201 = vld [vmem:[%s2195 + $0x1c] sm:$0xf]
        %v2202 = vld [vmem:[%s2195 + $0x24] sm:$0xf]
        %v2203 = vld [vmem:[%s2195 + $0x28] sm:$0xf]
        %v2204 = vld [vmem:[%s2195 + $0x30] sm:$0xf]
        %v2205 = vld [vmem:[%s2195 + $0x34] sm:$0xf]
        %v2206 = vld [vmem:[%s2195 + $0x3c] sm:$0xf]
        %v2207 = vld [vmem:[%s2195 + $0x40] sm:$0xf]
        %v2208 = vld [vmem:[%s2195 + $0x48] sm:$0xf]
        %v2209 = vld [vmem:[%s2195 + $0x4c] sm:$0xf]
        %v2210 = vld [vmem:[%s2195 + $0x54] sm:$0xf]
        %v2211 = vld [vmem:[%s2195 + $0x58] sm:$0xf]
        %v2212 = vld [vmem:[%s2195 + $0x60] sm:$0xf]
        %v2213 = vld [vmem:[%s2195 + $0x64] sm:$0xf]
        %v2214 = vld [vmem:[%s2195 + $0x6c] sm:$0xf]
        %v2215 = vld [vmem:[%s2195 + $0x70] sm:$0xf]
        %v2216 = vld [vmem:[%s2195 + $0x78] sm:$0xf]
        %v2217 = vld [vmem:[%s2195 + $0x7c] sm:$0xf]
        %v2218 = vld [vmem:[%s2195 + $0x84] sm:$0xf]
        %v2219 = vld [vmem:[%s2195 + $0x88] sm:$0xf]
        %v2220 = vld [vmem:[%s2195 + $0x90] sm:$0xf]
        %v2221 = vld [vmem:[%s2195 + $0x94] sm:$0xf]
        %v2222 = vld [vmem:[%s2195 + $0x9c] sm:$0xf]
        %v2223 = vld [vmem:[%s2195 + $0xa0] sm:$0xf]
        %v2224 = vld [vmem:[%s2195 + $0xa8] sm:$0xf]
        %v2225 = vld [vmem:[%s2195 + $0xac] sm:$0xf]
        %v2226 = vld [vmem:[%s2195 + $0xb4] sm:$0xf]
        %v2227 = vld [vmem:[%s2195 + $0xb8] sm:$0xf]
        %2228 = vst [vmem:[#allocation2 + $0x18] sm:$0xf] %v2196
        %2229 = vst [vmem:[#allocation2 + $0x3c] sm:$0xf] %v2197
        %2230 = vst [vmem:[#allocation2 + $0x60] sm:$0xf] %v2198
        %2231 = vst [vmem:[#allocation2 + $0x84] sm:$0xf] %v2199
        %2232 = vst [vmem:[#allocation2 + $0xa8] sm:$0xf] %v2200
        %2233 = vst [vmem:[#allocation2 + $0xcc] sm:$0xf] %v2201
        %2234 = vst [vmem:[#allocation2 + $0xf0] sm:$0xf] %v2202
        %2235 = vst [vmem:[#allocation2 + $0x114] sm:$0xf] %v2203
        %2236 = vst [vmem:[#allocation2 + $0x138] sm:$0xf] %v2204
        %2237 = vst [vmem:[#allocation2 + $0x15c] sm:$0xf] %v2205
        %2238 = vst [vmem:[#allocation2 + $0x180] sm:$0xf] %v2206
        %2239 = vst [vmem:[#allocation2 + $0x1a4] sm:$0xf] %v2207
        %2240 = vst [vmem:[#allocation2 + $0x1c8] sm:$0xf] %v2208
        %2241 = vst [vmem:[#allocation2 + $0x1ec] sm:$0xf] %v2209
        %2242 = vst [vmem:[#allocation2 + $0x210] sm:$0xf] %v2210
        %2243 = vst [vmem:[#allocation2 + $0x234] sm:$0xf] %v2211
        %2244 = vst [vmem:[#allocation2 + $0x258] sm:$0xf] %v2212
        %2245 = vst [vmem:[#allocation2 + $0x27c] sm:$0xf] %v2213
        %2246 = vst [vmem:[#allocation2 + $0x2a0] sm:$0xf] %v2214
        %2247 = vst [vmem:[#allocation2 + $0x2c4] sm:$0xf] %v2215
        %2248 = vst [vmem:[#allocation2 + $0x2e8] sm:$0xf] %v2216
        %2249 = vst [vmem:[#allocation2 + $0x30c] sm:$0xf] %v2217
        %2250 = vst [vmem:[#allocation2 + $0x330] sm:$0xf] %v2218
        %2251 = vst [vmem:[#allocation2 + $0x354] sm:$0xf] %v2219
        %2252 = vst [vmem:[#allocation2 + $0x378] sm:$0xf] %v2220
        %2253 = vst [vmem:[#allocation2 + $0x39c] sm:$0xf] %v2221
        %2254 = vst [vmem:[#allocation2 + $0x3c0] sm:$0xf] %v2222
        %2255 = vst [vmem:[#allocation2 + $0x3e4] sm:$0xf] %v2223
        %2256 = vst [vmem:[#allocation2 + $0x408] sm:$0xf] %v2224
        %2257 = vst [vmem:[#allocation2 + $0x42c] sm:$0xf] %v2225
        %2258 = vst [vmem:[#allocation2 + $0x450] sm:$0xf] %v2226
        %2259 = vst [vmem:[#allocation2 + $0x474] sm:$0xf] %v2227
        %v2260 = vld [vmem:[%s2195] sm:$0xf]
        %v2261 = vld [vmem:[%s2195 + $0x4] sm:$0xf]
        %v2262 = vld [vmem:[%s2195 + $0x8] sm:$0x1]
        %v2263 = vld [vmem:[%s2195 + $0xc] sm:$0xf]
        %v2264 = vld [vmem:[%s2195 + $0x10] sm:$0xf]
        %v2265 = vld [vmem:[%s2195 + $0x14] sm:$0x1]
        %v2266 = vld [vmem:[%s2195 + $0x18] sm:$0xf]
        %v2267 = vld [vmem:[%s2195 + $0x1c] sm:$0xf]
        %v2268 = vld [vmem:[%s2195 + $0x20] sm:$0x1]
        %v2269 = vld [vmem:[%s2195 + $0x24] sm:$0xf]
        %v2270 = vld [vmem:[%s2195 + $0x28] sm:$0xf]
        %v2271 = vld [vmem:[%s2195 + $0x2c] sm:$0x1]
        %v2272 = vld [vmem:[%s2195 + $0x30] sm:$0xf]
        %v2273 = vld [vmem:[%s2195 + $0x34] sm:$0xf]
        %v2274 = vld [vmem:[%s2195 + $0x38] sm:$0x1]
        %v2275 = vld [vmem:[%s2195 + $0x3c] sm:$0xf]
        %v2276 = vld [vmem:[%s2195 + $0x40] sm:$0xf]
        %v2277 = vld [vmem:[%s2195 + $0x44] sm:$0x1]
        %v2278 = vld [vmem:[%s2195 + $0x48] sm:$0xf]
        %v2279 = vld [vmem:[%s2195 + $0x4c] sm:$0xf]
        %v2280 = vld [vmem:[%s2195 + $0x50] sm:$0x1]
        %v2281 = vld [vmem:[%s2195 + $0x54] sm:$0xf]
        %v2282 = vld [vmem:[%s2195 + $0x58] sm:$0xf]
        %v2283 = vld [vmem:[%s2195 + $0x5c] sm:$0x1]
        %v2284 = vld [vmem:[%s2195 + $0x60] sm:$0xf]
        %v2285 = vld [vmem:[%s2195 + $0x64] sm:$0xf]
        %v2286 = vld [vmem:[%s2195 + $0x68] sm:$0x1]
        %v2287 = vld [vmem:[%s2195 + $0x6c] sm:$0xf]
        %v2288 = vld [vmem:[%s2195 + $0x70] sm:$0xf]
        %v2289 = vld [vmem:[%s2195 + $0x74] sm:$0x1]
        %v2290 = vld [vmem:[%s2195 + $0x78] sm:$0xf]
        %v2291 = vld [vmem:[%s2195 + $0x7c] sm:$0xf]
        %v2292 = vld [vmem:[%s2195 + $0x80] sm:$0x1]
        %v2293 = vld [vmem:[%s2195 + $0x84] sm:$0xf]
        %v2294 = vld [vmem:[%s2195 + $0x88] sm:$0xf]
        %v2295 = vld [vmem:[%s2195 + $0x8c] sm:$0x1]
        %v2296 = vld [vmem:[%s2195 + $0x90] sm:$0xf]
        %v2297 = vld [vmem:[%s2195 + $0x94] sm:$0xf]
        %v2298 = vld [vmem:[%s2195 + $0x98] sm:$0x1]
        %v2299 = vld [vmem:[%s2195 + $0x9c] sm:$0xf]
        %v2300 = vld [vmem:[%s2195 + $0xa0] sm:$0xf]
        %v2301 = vld [vmem:[%s2195 + $0xa4] sm:$0x1]
        %v2302 = vld [vmem:[%s2195 + $0xa8] sm:$0xf]
        %v2303 = vld [vmem:[%s2195 + $0xac] sm:$0xf]
        %v2304 = vld [vmem:[%s2195 + $0xb0] sm:$0x1]
        %v2305 = vld [vmem:[%s2195 + $0xb4] sm:$0xf]
        %v2306 = vld [vmem:[%s2195 + $0xb8] sm:$0xf]
        %v2307 = vld [vmem:[%s2195 + $0xbc] sm:$0x1]
        %v2309 = vshrl.u32 %v2260, 16
        %v2311 = vrot.slane %v2309, 4
        %v2312 = vshll.u32 %v2260, 16
        %v2314 = vrot.slane %v2312, 5
        %v2315 = vor.u32 %v2311, %v2314
        %v2316 = vrot.slane %v2315, 4
        %v2318 = vshll.u32 %v2261, 16
        %v2320 = vrot.slane %v2318, 5
        %v2321 = vsel %vm638, %v2316, %v2320
        %v2322 = vshrl.u32 %v2261, 16
        %v2324 = vrot.slane %v2322, 4
        %v2325 = vor.u32 %v2324, %v2320
        %v2326 = vrot.slane %v2325, 4
        %v2328 = vshll.u32 %v2262, 16
        %v2330 = vrot.slane %v2328, 5
        %v2331 = vsel %vm638, %v2326, %v2330
        %v2333 = vshrl.u32 %v2263, 16
        %v2335 = vrot.slane %v2333, 4
        %v2336 = vshll.u32 %v2263, 16
        %v2338 = vrot.slane %v2336, 5
        %v2339 = vor.u32 %v2335, %v2338
        %v2340 = vrot.slane %v2339, 4
        %v2342 = vshll.u32 %v2264, 16
        %v2344 = vrot.slane %v2342, 5
        %v2345 = vsel %vm638, %v2340, %v2344
        %v2346 = vshrl.u32 %v2264, 16
        %v2348 = vrot.slane %v2346, 4
        %v2349 = vor.u32 %v2348, %v2344
        %v2350 = vrot.slane %v2349, 4
        %v2352 = vshll.u32 %v2265, 16
        %v2354 = vrot.slane %v2352, 5
        %v2355 = vsel %vm638, %v2350, %v2354
        %v2357 = vshrl.u32 %v2266, 16
        %v2359 = vrot.slane %v2357, 4
        %v2360 = vshll.u32 %v2266, 16
        %v2362 = vrot.slane %v2360, 5
        %v2363 = vor.u32 %v2359, %v2362
        %v2364 = vrot.slane %v2363, 4
        %v2366 = vshll.u32 %v2267, 16
        %v2368 = vrot.slane %v2366, 5
        %v2369 = vsel %vm638, %v2364, %v2368
        %v2370 = vshrl.u32 %v2267, 16
        %v2372 = vrot.slane %v2370, 4
        %v2373 = vor.u32 %v2372, %v2368
        %v2374 = vrot.slane %v2373, 4
        %v2376 = vshll.u32 %v2268, 16
        %v2378 = vrot.slane %v2376, 5
        %v2379 = vsel %vm638, %v2374, %v2378
        %v2381 = vshrl.u32 %v2269, 16
        %v2383 = vrot.slane %v2381, 4
        %v2384 = vshll.u32 %v2269, 16
        %v2386 = vrot.slane %v2384, 5
        %v2387 = vor.u32 %v2383, %v2386
        %v2388 = vrot.slane %v2387, 4
        %v2390 = vshll.u32 %v2270, 16
        %v2392 = vrot.slane %v2390, 5
        %v2393 = vsel %vm638, %v2388, %v2392
        %v2394 = vshrl.u32 %v2270, 16
        %v2396 = vrot.slane %v2394, 4
        %v2397 = vor.u32 %v2396, %v2392
        %v2398 = vrot.slane %v2397, 4
        %v2400 = vshll.u32 %v2271, 16
        %v2402 = vrot.slane %v2400, 5
        %v2403 = vsel %vm638, %v2398, %v2402
        %v2405 = vshrl.u32 %v2272, 16
        %v2407 = vrot.slane %v2405, 4
        %v2408 = vshll.u32 %v2272, 16
        %v2410 = vrot.slane %v2408, 5
        %v2411 = vor.u32 %v2407, %v2410
        %v2412 = vrot.slane %v2411, 4
        %v2414 = vshll.u32 %v2273, 16
        %v2416 = vrot.slane %v2414, 5
        %v2417 = vsel %vm638, %v2412, %v2416
        %v2418 = vshrl.u32 %v2273, 16
        %v2420 = vrot.slane %v2418, 4
        %v2421 = vor.u32 %v2420, %v2416
        %v2422 = vrot.slane %v2421, 4
        %v2424 = vshll.u32 %v2274, 16
        %v2426 = vrot.slane %v2424, 5
        %v2427 = vsel %vm638, %v2422, %v2426
        %v2429 = vshrl.u32 %v2275, 16
        %v2431 = vrot.slane %v2429, 4
        %v2432 = vshll.u32 %v2275, 16
        %v2434 = vrot.slane %v2432, 5
        %v2435 = vor.u32 %v2431, %v2434
        %v2436 = vrot.slane %v2435, 4
        %v2438 = vshll.u32 %v2276, 16
        %v2440 = vrot.slane %v2438, 5
        %v2441 = vsel %vm638, %v2436, %v2440
        %v2442 = vshrl.u32 %v2276, 16
        %v2444 = vrot.slane %v2442, 4
        %v2445 = vor.u32 %v2444, %v2440
        %v2446 = vrot.slane %v2445, 4
        %v2448 = vshll.u32 %v2277, 16
        %v2450 = vrot.slane %v2448, 5
        %v2451 = vsel %vm638, %v2446, %v2450
        %v2453 = vshrl.u32 %v2278, 16
        %v2455 = vrot.slane %v2453, 4
        %v2456 = vshll.u32 %v2278, 16
        %v2458 = vrot.slane %v2456, 5
        %v2459 = vor.u32 %v2455, %v2458
        %v2460 = vrot.slane %v2459, 4
        %v2462 = vshll.u32 %v2279, 16
        %v2464 = vrot.slane %v2462, 5
        %v2465 = vsel %vm638, %v2460, %v2464
        %v2466 = vshrl.u32 %v2279, 16
        %v2468 = vrot.slane %v2466, 4
        %v2469 = vor.u32 %v2468, %v2464
        %v2470 = vrot.slane %v2469, 4
        %v2472 = vshll.u32 %v2280, 16
        %v2474 = vrot.slane %v2472, 5
        %v2475 = vsel %vm638, %v2470, %v2474
        %v2477 = vshrl.u32 %v2281, 16
        %v2479 = vrot.slane %v2477, 4
        %v2480 = vshll.u32 %v2281, 16
        %v2482 = vrot.slane %v2480, 5
        %v2483 = vor.u32 %v2479, %v2482
        %v2484 = vrot.slane %v2483, 4
        %v2486 = vshll.u32 %v2282, 16
        %v2488 = vrot.slane %v2486, 5
        %v2489 = vsel %vm638, %v2484, %v2488
        %v2490 = vshrl.u32 %v2282, 16
        %v2492 = vrot.slane %v2490, 4
        %v2493 = vor.u32 %v2492, %v2488
        %v2494 = vrot.slane %v2493, 4
        %v2496 = vshll.u32 %v2283, 16
        %v2498 = vrot.slane %v2496, 5
        %v2499 = vsel %vm638, %v2494, %v2498
        %v2501 = vshrl.u32 %v2284, 16
        %v2503 = vrot.slane %v2501, 4
        %v2504 = vshll.u32 %v2284, 16
        %v2506 = vrot.slane %v2504, 5
        %v2507 = vor.u32 %v2503, %v2506
        %v2508 = vrot.slane %v2507, 4
        %v2510 = vshll.u32 %v2285, 16
        %v2512 = vrot.slane %v2510, 5
        %v2513 = vsel %vm638, %v2508, %v2512
        %v2514 = vshrl.u32 %v2285, 16
        %v2516 = vrot.slane %v2514, 4
        %v2517 = vor.u32 %v2516, %v2512
        %v2518 = vrot.slane %v2517, 4
        %v2520 = vshll.u32 %v2286, 16
        %v2522 = vrot.slane %v2520, 5
        %v2523 = vsel %vm638, %v2518, %v2522
        %v2525 = vshrl.u32 %v2287, 16
        %v2527 = vrot.slane %v2525, 4
        %v2528 = vshll.u32 %v2287, 16
        %v2530 = vrot.slane %v2528, 5
        %v2531 = vor.u32 %v2527, %v2530
        %v2532 = vrot.slane %v2531, 4
        %v2534 = vshll.u32 %v2288, 16
        %v2536 = vrot.slane %v2534, 5
        %v2537 = vsel %vm638, %v2532, %v2536
        %v2538 = vshrl.u32 %v2288, 16
        %v2540 = vrot.slane %v2538, 4
        %v2541 = vor.u32 %v2540, %v2536
        %v2542 = vrot.slane %v2541, 4
        %v2544 = vshll.u32 %v2289, 16
        %v2546 = vrot.slane %v2544, 5
        %v2547 = vsel %vm638, %v2542, %v2546
        %v2549 = vshrl.u32 %v2290, 16
        %v2551 = vrot.slane %v2549, 4
        %v2552 = vshll.u32 %v2290, 16
        %v2554 = vrot.slane %v2552, 5
        %v2555 = vor.u32 %v2551, %v2554
        %v2556 = vrot.slane %v2555, 4
        %v2558 = vshll.u32 %v2291, 16
        %v2560 = vrot.slane %v2558, 5
        %v2561 = vsel %vm638, %v2556, %v2560
        %v2562 = vshrl.u32 %v2291, 16
        %v2564 = vrot.slane %v2562, 4
        %v2565 = vor.u32 %v2564, %v2560
        %v2566 = vrot.slane %v2565, 4
        %v2568 = vshll.u32 %v2292, 16
        %v2570 = vrot.slane %v2568, 5
        %v2571 = vsel %vm638, %v2566, %v2570
        %v2573 = vshrl.u32 %v2293, 16
        %v2575 = vrot.slane %v2573, 4
        %v2576 = vshll.u32 %v2293, 16
        %v2578 = vrot.slane %v2576, 5
        %v2579 = vor.u32 %v2575, %v2578
        %v2580 = vrot.slane %v2579, 4
        %v2582 = vshll.u32 %v2294, 16
        %v2584 = vrot.slane %v2582, 5
        %v2585 = vsel %vm638, %v2580, %v2584
        %v2586 = vshrl.u32 %v2294, 16
        %v2588 = vrot.slane %v2586, 4
        %v2589 = vor.u32 %v2588, %v2584
        %v2590 = vrot.slane %v2589, 4
        %v2592 = vshll.u32 %v2295, 16
        %v2594 = vrot.slane %v2592, 5
        %v2595 = vsel %vm638, %v2590, %v2594
        %v2597 = vshrl.u32 %v2296, 16
        %v2599 = vrot.slane %v2597, 4
        %v2600 = vshll.u32 %v2296, 16
        %v2602 = vrot.slane %v2600, 5
        %v2603 = vor.u32 %v2599, %v2602
        %v2604 = vrot.slane %v2603, 4
        %v2606 = vshll.u32 %v2297, 16
        %v2608 = vrot.slane %v2606, 5
        %v2609 = vsel %vm638, %v2604, %v2608
        %v2610 = vshrl.u32 %v2297, 16
        %v2612 = vrot.slane %v2610, 4
        %v2613 = vor.u32 %v2612, %v2608
        %v2614 = vrot.slane %v2613, 4
        %v2616 = vshll.u32 %v2298, 16
        %v2618 = vrot.slane %v2616, 5
        %v2619 = vsel %vm638, %v2614, %v2618
        %v2621 = vshrl.u32 %v2299, 16
        %v2623 = vrot.slane %v2621, 4
        %v2624 = vshll.u32 %v2299, 16
        %v2626 = vrot.slane %v2624, 5
        %v2627 = vor.u32 %v2623, %v2626
        %v2628 = vrot.slane %v2627, 4
        %v2630 = vshll.u32 %v2300, 16
        %v2632 = vrot.slane %v2630, 5
        %v2633 = vsel %vm638, %v2628, %v2632
        %v2634 = vshrl.u32 %v2300, 16
        %v2636 = vrot.slane %v2634, 4
        %v2637 = vor.u32 %v2636, %v2632
        %v2638 = vrot.slane %v2637, 4
        %v2640 = vshll.u32 %v2301, 16
        %v2642 = vrot.slane %v2640, 5
        %v2643 = vsel %vm638, %v2638, %v2642
        %v2645 = vshrl.u32 %v2302, 16
        %v2647 = vrot.slane %v2645, 4
        %v2648 = vshll.u32 %v2302, 16
        %v2650 = vrot.slane %v2648, 5
        %v2651 = vor.u32 %v2647, %v2650
        %v2652 = vrot.slane %v2651, 4
        %v2654 = vshll.u32 %v2303, 16
        %v2656 = vrot.slane %v2654, 5
        %v2657 = vsel %vm638, %v2652, %v2656
        %v2658 = vshrl.u32 %v2303, 16
        %v2660 = vrot.slane %v2658, 4
        %v2661 = vor.u32 %v2660, %v2656
        %v2662 = vrot.slane %v2661, 4
        %v2664 = vshll.u32 %v2304, 16
        %v2666 = vrot.slane %v2664, 5
        %v2667 = vsel %vm638, %v2662, %v2666
        %v2669 = vshrl.u32 %v2305, 16
        %v2671 = vrot.slane %v2669, 4
        %v2672 = vshll.u32 %v2305, 16
        %v2674 = vrot.slane %v2672, 5
        %v2675 = vor.u32 %v2671, %v2674
        %v2676 = vrot.slane %v2675, 4
        %v2678 = vshll.u32 %v2306, 16
        %v2680 = vrot.slane %v2678, 5
        %v2681 = vsel %vm638, %v2676, %v2680
        %v2682 = vshrl.u32 %v2306, 16
        %v2684 = vrot.slane %v2682, 4
        %v2685 = vor.u32 %v2684, %v2680
        %v2686 = vrot.slane %v2685, 4
        %v2688 = vshll.u32 %v2307, 16
        %v2690 = vrot.slane %v2688, 5
        %v2691 = vsel %vm638, %v2686, %v2690
        %2724 = vst [vmem:[#allocation2 + $0x1c] sm:$0xf] %v2321
        %2725 = vst [vmem:[#allocation2 + $0x40] sm:$0xf] %v2331
        %2726 = vst [vmem:[#allocation2 + $0x64] sm:$0xf] %v2345
        %2727 = vst [vmem:[#allocation2 + $0x88] sm:$0xf] %v2355
        %2728 = vst [vmem:[#allocation2 + $0xac] sm:$0xf] %v2369
        %2729 = vst [vmem:[#allocation2 + $0xd0] sm:$0xf] %v2379
        %2730 = vst [vmem:[#allocation2 + $0xf4] sm:$0xf] %v2393
        %2731 = vst [vmem:[#allocation2 + $0x118] sm:$0xf] %v2403
        %2732 = vst [vmem:[#allocation2 + $0x13c] sm:$0xf] %v2417
        %2733 = vst [vmem:[#allocation2 + $0x160] sm:$0xf] %v2427
        %2734 = vst [vmem:[#allocation2 + $0x184] sm:$0xf] %v2441
        %2735 = vst [vmem:[#allocation2 + $0x1a8] sm:$0xf] %v2451
        %2736 = vst [vmem:[#allocation2 + $0x1cc] sm:$0xf] %v2465
        %2737 = vst [vmem:[#allocation2 + $0x1f0] sm:$0xf] %v2475
        %2738 = vst [vmem:[#allocation2 + $0x214] sm:$0xf] %v2489
        %2739 = vst [vmem:[#allocation2 + $0x238] sm:$0xf] %v2499
        %2740 = vst [vmem:[#allocation2 + $0x25c] sm:$0xf] %v2513
        %2741 = vst [vmem:[#allocation2 + $0x280] sm:$0xf] %v2523
        %2742 = vst [vmem:[#allocation2 + $0x2a4] sm:$0xf] %v2537
        %2743 = vst [vmem:[#allocation2 + $0x2c8] sm:$0xf] %v2547
        %2744 = vst [vmem:[#allocation2 + $0x2ec] sm:$0xf] %v2561
        %2745 = vst [vmem:[#allocation2 + $0x310] sm:$0xf] %v2571
        %2746 = vst [vmem:[#allocation2 + $0x334] sm:$0xf] %v2585
        %2747 = vst [vmem:[#allocation2 + $0x358] sm:$0xf] %v2595
        %2748 = vst [vmem:[#allocation2 + $0x37c] sm:$0xf] %v2609
        %2749 = vst [vmem:[#allocation2 + $0x3a0] sm:$0xf] %v2619
        %2750 = vst [vmem:[#allocation2 + $0x3c4] sm:$0xf] %v2633
        %2751 = vst [vmem:[#allocation2 + $0x3e8] sm:$0xf] %v2643
        %2752 = vst [vmem:[#allocation2 + $0x40c] sm:$0xf] %v2657
        %2753 = vst [vmem:[#allocation2 + $0x430] sm:$0xf] %v2667
        %2754 = vst [vmem:[#allocation2 + $0x454] sm:$0xf] %v2681
        %2755 = vst [vmem:[#allocation2 + $0x478] sm:$0xf] %v2691
        %v2756 = vld [vmem:[%s2195] sm:$0xe]
        %v2757 = vld [vmem:[%s2195 + $0x4] sm:$0xf]
        %v2758 = vld [vmem:[%s2195 + $0x8] sm:$0x1]
        %v2759 = vld [vmem:[%s2195 + $0xc] sm:$0xe]
        %v2760 = vld [vmem:[%s2195 + $0x10] sm:$0xf]
        %v2761 = vld [vmem:[%s2195 + $0x14] sm:$0x1]
        %v2762 = vld [vmem:[%s2195 + $0x18] sm:$0xe]
        %v2763 = vld [vmem:[%s2195 + $0x1c] sm:$0xf]
        %v2764 = vld [vmem:[%s2195 + $0x20] sm:$0x1]
        %v2765 = vld [vmem:[%s2195 + $0x24] sm:$0xe]
        %v2766 = vld [vmem:[%s2195 + $0x28] sm:$0xf]
        %v2767 = vld [vmem:[%s2195 + $0x2c] sm:$0x1]
        %v2768 = vld [vmem:[%s2195 + $0x30] sm:$0xe]
        %v2769 = vld [vmem:[%s2195 + $0x34] sm:$0xf]
        %v2770 = vld [vmem:[%s2195 + $0x38] sm:$0x1]
        %v2771 = vld [vmem:[%s2195 + $0x3c] sm:$0xe]
        %v2772 = vld [vmem:[%s2195 + $0x40] sm:$0xf]
        %v2773 = vld [vmem:[%s2195 + $0x44] sm:$0x1]
        %v2774 = vld [vmem:[%s2195 + $0x48] sm:$0xe]
        %v2775 = vld [vmem:[%s2195 + $0x4c] sm:$0xf]
        %v2776 = vld [vmem:[%s2195 + $0x50] sm:$0x1]
        %v2777 = vld [vmem:[%s2195 + $0x54] sm:$0xe]
        %v2778 = vld [vmem:[%s2195 + $0x58] sm:$0xf]
        %v2779 = vld [vmem:[%s2195 + $0x5c] sm:$0x1]
        %v2780 = vld [vmem:[%s2195 + $0x60] sm:$0xe]
        %v2781 = vld [vmem:[%s2195 + $0x64] sm:$0xf]
        %v2782 = vld [vmem:[%s2195 + $0x68] sm:$0x1]
        %v2783 = vld [vmem:[%s2195 + $0x6c] sm:$0xe]
        %v2784 = vld [vmem:[%s2195 + $0x70] sm:$0xf]
        %v2785 = vld [vmem:[%s2195 + $0x74] sm:$0x1]
        %v2786 = vld [vmem:[%s2195 + $0x78] sm:$0xe]
        %v2787 = vld [vmem:[%s2195 + $0x7c] sm:$0xf]
        %v2788 = vld [vmem:[%s2195 + $0x80] sm:$0x1]
        %v2789 = vld [vmem:[%s2195 + $0x84] sm:$0xe]
        %v2790 = vld [vmem:[%s2195 + $0x88] sm:$0xf]
        %v2791 = vld [vmem:[%s2195 + $0x8c] sm:$0x1]
        %v2792 = vld [vmem:[%s2195 + $0x90] sm:$0xe]
        %v2793 = vld [vmem:[%s2195 + $0x94] sm:$0xf]
        %v2794 = vld [vmem:[%s2195 + $0x98] sm:$0x1]
        %v2795 = vld [vmem:[%s2195 + $0x9c] sm:$0xe]
        %v2796 = vld [vmem:[%s2195 + $0xa0] sm:$0xf]
        %v2797 = vld [vmem:[%s2195 + $0xa4] sm:$0x1]
        %v2798 = vld [vmem:[%s2195 + $0xa8] sm:$0xe]
        %v2799 = vld [vmem:[%s2195 + $0xac] sm:$0xf]
        %v2800 = vld [vmem:[%s2195 + $0xb0] sm:$0x1]
        %v2801 = vld [vmem:[%s2195 + $0xb4] sm:$0xe]
        %v2802 = vld [vmem:[%s2195 + $0xb8] sm:$0xf]
        %v2803 = vld [vmem:[%s2195 + $0xbc] sm:$0x1]
        %v2852 = vrot.slane %v2756, 5
        %v2853 = vrot.slane %v2852, 4
        %v2854 = vrot.slane %v2757, 5
        %v2855 = vsel %vm1185, %v2853, %v2854
        %v2856 = vrot.slane %v2854, 4
        %v2857 = vrot.slane %v2758, 5
        %v2858 = vsel %vm1185, %v2856, %v2857
        %v2859 = vrot.slane %v2759, 5
        %v2860 = vrot.slane %v2859, 4
        %v2861 = vrot.slane %v2760, 5
        %v2862 = vsel %vm1185, %v2860, %v2861
        %v2863 = vrot.slane %v2861, 4
        %v2864 = vrot.slane %v2761, 5
        %v2865 = vsel %vm1185, %v2863, %v2864
        %v2866 = vrot.slane %v2762, 5
        %v2867 = vrot.slane %v2866, 4
        %v2868 = vrot.slane %v2763, 5
        %v2869 = vsel %vm1185, %v2867, %v2868
        %v2870 = vrot.slane %v2868, 4
        %v2871 = vrot.slane %v2764, 5
        %v2872 = vsel %vm1185, %v2870, %v2871
        %v2873 = vrot.slane %v2765, 5
        %v2874 = vrot.slane %v2873, 4
        %v2875 = vrot.slane %v2766, 5
        %v2876 = vsel %vm1185, %v2874, %v2875
        %v2877 = vrot.slane %v2875, 4
        %v2878 = vrot.slane %v2767, 5
        %v2879 = vsel %vm1185, %v2877, %v2878
        %v2880 = vrot.slane %v2768, 5
        %v2881 = vrot.slane %v2880, 4
        %v2882 = vrot.slane %v2769, 5
        %v2883 = vsel %vm1185, %v2881, %v2882
        %v2884 = vrot.slane %v2882, 4
        %v2885 = vrot.slane %v2770, 5
        %v2886 = vsel %vm1185, %v2884, %v2885
        %v2887 = vrot.slane %v2771, 5
        %v2888 = vrot.slane %v2887, 4
        %v2889 = vrot.slane %v2772, 5
        %v2890 = vsel %vm1185, %v2888, %v2889
        %v2891 = vrot.slane %v2889, 4
        %v2892 = vrot.slane %v2773, 5
        %v2893 = vsel %vm1185, %v2891, %v2892
        %v2894 = vrot.slane %v2774, 5
        %v2895 = vrot.slane %v2894, 4
        %v2896 = vrot.slane %v2775, 5
        %v2897 = vsel %vm1185, %v2895, %v2896
        %v2898 = vrot.slane %v2896, 4
        %v2899 = vrot.slane %v2776, 5
        %v2900 = vsel %vm1185, %v2898, %v2899
        %v2901 = vrot.slane %v2777, 5
        %v2902 = vrot.slane %v2901, 4
        %v2903 = vrot.slane %v2778, 5
        %v2904 = vsel %vm1185, %v2902, %v2903
        %v2905 = vrot.slane %v2903, 4
        %v2906 = vrot.slane %v2779, 5
        %v2907 = vsel %vm1185, %v2905, %v2906
        %v2908 = vrot.slane %v2780, 5
        %v2909 = vrot.slane %v2908, 4
        %v2910 = vrot.slane %v2781, 5
        %v2911 = vsel %vm1185, %v2909, %v2910
        %v2912 = vrot.slane %v2910, 4
        %v2913 = vrot.slane %v2782, 5
        %v2914 = vsel %vm1185, %v2912, %v2913
        %v2915 = vrot.slane %v2783, 5
        %v2916 = vrot.slane %v2915, 4
        %v2917 = vrot.slane %v2784, 5
        %v2918 = vsel %vm1185, %v2916, %v2917
        %v2919 = vrot.slane %v2917, 4
        %v2920 = vrot.slane %v2785, 5
        %v2921 = vsel %vm1185, %v2919, %v2920
        %v2922 = vrot.slane %v2786, 5
        %v2923 = vrot.slane %v2922, 4
        %v2924 = vrot.slane %v2787, 5
        %v2925 = vsel %vm1185, %v2923, %v2924
        %v2926 = vrot.slane %v2924, 4
        %v2927 = vrot.slane %v2788, 5
        %v2928 = vsel %vm1185, %v2926, %v2927
        %v2929 = vrot.slane %v2789, 5
        %v2930 = vrot.slane %v2929, 4
        %v2931 = vrot.slane %v2790, 5
        %v2932 = vsel %vm1185, %v2930, %v2931
        %v2933 = vrot.slane %v2931, 4
        %v2934 = vrot.slane %v2791, 5
        %v2935 = vsel %vm1185, %v2933, %v2934
        %v2936 = vrot.slane %v2792, 5
        %v2937 = vrot.slane %v2936, 4
        %v2938 = vrot.slane %v2793, 5
        %v2939 = vsel %vm1185, %v2937, %v2938
        %v2940 = vrot.slane %v2938, 4
        %v2941 = vrot.slane %v2794, 5
        %v2942 = vsel %vm1185, %v2940, %v2941
        %v2943 = vrot.slane %v2795, 5
        %v2944 = vrot.slane %v2943, 4
        %v2945 = vrot.slane %v2796, 5
        %v2946 = vsel %vm1185, %v2944, %v2945
        %v2947 = vrot.slane %v2945, 4
        %v2948 = vrot.slane %v2797, 5
        %v2949 = vsel %vm1185, %v2947, %v2948
        %v2950 = vrot.slane %v2798, 5
        %v2951 = vrot.slane %v2950, 4
        %v2952 = vrot.slane %v2799, 5
        %v2953 = vsel %vm1185, %v2951, %v2952
        %v2954 = vrot.slane %v2952, 4
        %v2955 = vrot.slane %v2800, 5
        %v2956 = vsel %vm1185, %v2954, %v2955
        %v2957 = vrot.slane %v2801, 5
        %v2958 = vrot.slane %v2957, 4
        %v2959 = vrot.slane %v2802, 5
        %v2960 = vsel %vm1185, %v2958, %v2959
        %v2961 = vrot.slane %v2959, 4
        %v2962 = vrot.slane %v2803, 5
        %v2963 = vsel %vm1185, %v2961, %v2962
        %2996 = vst [vmem:[#allocation2 + $0x20] sm:$0xf] %v2855
        %2997 = vst [vmem:[#allocation2 + $0x44] sm:$0xf] %v2858
        %2998 = vst [vmem:[#allocation2 + $0x68] sm:$0xf] %v2862
        %2999 = vst [vmem:[#allocation2 + $0x8c] sm:$0xf] %v2865
        %3000 = vst [vmem:[#allocation2 + $0xb0] sm:$0xf] %v2869
        %3001 = vst [vmem:[#allocation2 + $0xd4] sm:$0xf] %v2872
        %3002 = vst [vmem:[#allocation2 + $0xf8] sm:$0xf] %v2876
        %3003 = vst [vmem:[#allocation2 + $0x11c] sm:$0xf] %v2879
        %3004 = vst [vmem:[#allocation2 + $0x140] sm:$0xf] %v2883
        %3005 = vst [vmem:[#allocation2 + $0x164] sm:$0xf] %v2886
        %3006 = vst [vmem:[#allocation2 + $0x188] sm:$0xf] %v2890
        %3007 = vst [vmem:[#allocation2 + $0x1ac] sm:$0xf] %v2893
        %3008 = vst [vmem:[#allocation2 + $0x1d0] sm:$0xf] %v2897
        %3009 = vst [vmem:[#allocation2 + $0x1f4] sm:$0xf] %v2900
        %3010 = vst [vmem:[#allocation2 + $0x218] sm:$0xf] %v2904
        %3011 = vst [vmem:[#allocation2 + $0x23c] sm:$0xf] %v2907
        %3012 = vst [vmem:[#allocation2 + $0x260] sm:$0xf] %v2911
        %3013 = vst [vmem:[#allocation2 + $0x284] sm:$0xf] %v2914
        %3014 = vst [vmem:[#allocation2 + $0x2a8] sm:$0xf] %v2918
        %3015 = vst [vmem:[#allocation2 + $0x2cc] sm:$0xf] %v2921
        %3016 = vst [vmem:[#allocation2 + $0x2f0] sm:$0xf] %v2925
        %3017 = vst [vmem:[#allocation2 + $0x314] sm:$0xf] %v2928
        %3018 = vst [vmem:[#allocation2 + $0x338] sm:$0xf] %v2932
        %3019 = vst [vmem:[#allocation2 + $0x35c] sm:$0xf] %v2935
        %3020 = vst [vmem:[#allocation2 + $0x380] sm:$0xf] %v2939
        %3021 = vst [vmem:[#allocation2 + $0x3a4] sm:$0xf] %v2942
        %3022 = vst [vmem:[#allocation2 + $0x3c8] sm:$0xf] %v2946
        %3023 = vst [vmem:[#allocation2 + $0x3ec] sm:$0xf] %v2949
        %3024 = vst [vmem:[#allocation2 + $0x410] sm:$0xf] %v2953
        %3025 = vst [vmem:[#allocation2 + $0x434] sm:$0xf] %v2956
        %3026 = vst [vmem:[#allocation2 + $0x458] sm:$0xf] %v2960
        %3027 = vst [vmem:[#allocation2 + $0x47c] sm:$0xf] %v2963
        %v3028 = vld [vmem:[#allocation3] sm:$0xff]
        %v3029 = vld [vmem:[#allocation3 + $0x8] sm:$0xff]
        %v3030 = vld [vmem:[#allocation3 + $0x10] sm:$0xff]
        %v3031 = vld [vmem:[#allocation3 + $0x18] sm:$0xff]
        %v3032 = vld [vmem:[#allocation3 + $0x20] sm:$0xff]
        %v3033 = vld [vmem:[#allocation3 + $0x28] sm:$0xff]
        %v3034 = vld [vmem:[#allocation3 + $0x30] sm:$0xff]
        %v3035 = vld [vmem:[#allocation3 + $0x38] sm:$0xff]
        %v3036 = vld [vmem:[#allocation3 + $0x40] sm:$0xff]
        %v3037 = vld [vmem:[#allocation3 + $0x48] sm:$0xff]
        %v3038 = vld [vmem:[#allocation3 + $0x50] sm:$0xff]
        %v3039 = vld [vmem:[#allocation3 + $0x58] sm:$0xff]
        %v3040 = vld [vmem:[#allocation3 + $0x60] sm:$0xff]
        %v3041 = vld [vmem:[#allocation3 + $0x68] sm:$0xff]
        %v3042 = vld [vmem:[#allocation3 + $0x70] sm:$0xff]
        %v3043 = vld [vmem:[#allocation3 + $0x78] sm:$0xff]
        %v3044 = vld [vmem:[#allocation3 + $0x80] sm:$0xff]
        %v3045 = vld [vmem:[#allocation3 + $0x88] sm:$0xff]
        %v3046 = vld [vmem:[#allocation3 + $0x90] sm:$0xff]
        %v3047 = vld [vmem:[#allocation3 + $0x98] sm:$0xff]
        %v3048 = vld [vmem:[#allocation3 + $0xa0] sm:$0xff]
        %v3049 = vld [vmem:[#allocation3 + $0xa8] sm:$0xff]
        %v3050 = vld [vmem:[#allocation3 + $0xb0] sm:$0xff]
        %v3051 = vld [vmem:[#allocation3 + $0xb8] sm:$0xff]
        %v3052 = vld [vmem:[#allocation3 + $0xc0] sm:$0xff]
        %v3053 = vld [vmem:[#allocation3 + $0xc8] sm:$0xff]
        %v3054 = vld [vmem:[#allocation3 + $0xd0] sm:$0xff]
        %v3055 = vld [vmem:[#allocation3 + $0xd8] sm:$0xff]
        %v3056 = vld [vmem:[#allocation3 + $0xe0] sm:$0xff]
        %v3057 = vld [vmem:[#allocation3 + $0xe8] sm:$0xff]
        %v3058 = vld [vmem:[#allocation3 + $0xf0] sm:$0xff]
        %v3059 = vld [vmem:[#allocation3 + $0xf8] sm:$0xff]
        %v3060 = vld [vmem:[#allocation3 + $0x100] sm:$0xff]
        %v3061 = vld [vmem:[#allocation3 + $0x108] sm:$0xff]
        %v3062 = vld [vmem:[#allocation3 + $0x110] sm:$0xff]
        %v3063 = vld [vmem:[#allocation3 + $0x118] sm:$0xff]
        %v3064 = vld [vmem:[#allocation3 + $0x120] sm:$0xff]
        %v3065 = vld [vmem:[#allocation3 + $0x128] sm:$0xff]
        %v3066 = vld [vmem:[#allocation3 + $0x130] sm:$0xff]
        %v3067 = vld [vmem:[#allocation3 + $0x138] sm:$0xff]
        %v3068 = vld [vmem:[#allocation3 + $0x140] sm:$0xff]
        %v3069 = vld [vmem:[#allocation3 + $0x148] sm:$0xff]
        %v3070 = vld [vmem:[#allocation3 + $0x150] sm:$0xff]
        %v3071 = vld [vmem:[#allocation3 + $0x158] sm:$0xff]
        %v3072 = vld [vmem:[#allocation3 + $0x160] sm:$0xff]
        %v3073 = vld [vmem:[#allocation3 + $0x168] sm:$0xff]
        %v3074 = vld [vmem:[#allocation3 + $0x170] sm:$0xff]
        %v3075 = vld [vmem:[#allocation3 + $0x178] sm:$0xff]
        %v3076 = vld [vmem:[#allocation3 + $0x180] sm:$0xff]
        %v3077 = vld [vmem:[#allocation3 + $0x188] sm:$0xff]
        %v3078 = vld [vmem:[#allocation3 + $0x190] sm:$0xff]
        %v3079 = vld [vmem:[#allocation3 + $0x198] sm:$0xff]
        %v3080 = vld [vmem:[#allocation3 + $0x1a0] sm:$0xff]
        %v3081 = vld [vmem:[#allocation3 + $0x1a8] sm:$0xff]
        %v3082 = vld [vmem:[#allocation3 + $0x1b0] sm:$0xff]
        %v3083 = vld [vmem:[#allocation3 + $0x1b8] sm:$0xff]
        %v3084 = vld [vmem:[#allocation3 + $0x1c0] sm:$0xff]
        %v3085 = vld [vmem:[#allocation3 + $0x1c8] sm:$0xff]
        %v3086 = vld [vmem:[#allocation3 + $0x1d0] sm:$0xff]
        %v3087 = vld [vmem:[#allocation3 + $0x1d8] sm:$0xff]
        %v3088 = vld [vmem:[#allocation3 + $0x1e0] sm:$0xff]
        %v3089 = vld [vmem:[#allocation3 + $0x1e8] sm:$0xff]
        %v3090 = vld [vmem:[#allocation3 + $0x1f0] sm:$0xff]
        %v3091 = vld [vmem:[#allocation3 + $0x1f8] sm:$0xff]
        %v3092 = vld [vmem:[#allocation3 + $0x200] sm:$0xff]
        %v3093 = vld [vmem:[#allocation3 + $0x208] sm:$0xff]
        %v3094 = vld [vmem:[#allocation3 + $0x210] sm:$0xff]
        %v3095 = vld [vmem:[#allocation3 + $0x218] sm:$0xff]
        %v3096 = vld [vmem:[#allocation3 + $0x220] sm:$0xff]
        %v3097 = vld [vmem:[#allocation3 + $0x228] sm:$0xff]
        %v3098 = vld [vmem:[#allocation3 + $0x230] sm:$0xff]
        %v3099 = vld [vmem:[#allocation3 + $0x238] sm:$0xff]
        %v3100 = vld [vmem:[#allocation3 + $0x240] sm:$0xff]
        %v3101 = vld [vmem:[#allocation3 + $0x248] sm:$0xff]
        %v3102 = vld [vmem:[#allocation3 + $0x250] sm:$0xff]
        %v3103 = vld [vmem:[#allocation3 + $0x258] sm:$0xff]
        %v3104 = vld [vmem:[#allocation3 + $0x260] sm:$0xff]
        %v3105 = vld [vmem:[#allocation3 + $0x268] sm:$0xff]
        %v3106 = vld [vmem:[#allocation3 + $0x270] sm:$0xff]
        %v3107 = vld [vmem:[#allocation3 + $0x278] sm:$0xff]
        %v3108 = vld [vmem:[#allocation3 + $0x280] sm:$0xff]
        %v3109 = vld [vmem:[#allocation3 + $0x288] sm:$0xff]
        %v3110 = vld [vmem:[#allocation3 + $0x290] sm:$0xff]
        %v3111 = vld [vmem:[#allocation3 + $0x298] sm:$0xff]
        %v3112 = vld [vmem:[#allocation3 + $0x2a0] sm:$0xff]
        %v3113 = vld [vmem:[#allocation3 + $0x2a8] sm:$0xff]
        %v3114 = vld [vmem:[#allocation3 + $0x2b0] sm:$0xff]
        %v3115 = vld [vmem:[#allocation3 + $0x2b8] sm:$0xff]
        %v3116 = vld [vmem:[#allocation3 + $0x2c0] sm:$0xff]
        %v3117 = vld [vmem:[#allocation3 + $0x2c8] sm:$0xff]
        %v3118 = vld [vmem:[#allocation3 + $0x2d0] sm:$0xff]
        %v3119 = vld [vmem:[#allocation3 + $0x2d8] sm:$0xff]
        %v3120 = vld [vmem:[#allocation3 + $0x2e0] sm:$0xff]
        %v3121 = vld [vmem:[#allocation3 + $0x2e8] sm:$0xff]
        %v3122 = vld [vmem:[#allocation3 + $0x2f0] sm:$0xff]
        %v3123 = vld [vmem:[#allocation3 + $0x2f8] sm:$0xff]
        %v3124 = vld [vmem:[#allocation3 + $0x300] sm:$0xff]
        %v3125 = vld [vmem:[#allocation3 + $0x308] sm:$0xff]
        %v3126 = vld [vmem:[#allocation3 + $0x310] sm:$0xff]
        %v3127 = vld [vmem:[#allocation3 + $0x318] sm:$0xff]
        %v3128 = vld [vmem:[#allocation3 + $0x320] sm:$0xff]
        %v3129 = vld [vmem:[#allocation3 + $0x328] sm:$0xff]
        %v3130 = vld [vmem:[#allocation3 + $0x330] sm:$0xff]
        %v3131 = vld [vmem:[#allocation3 + $0x338] sm:$0xff]
        %v3132 = vld [vmem:[#allocation3 + $0x340] sm:$0xff]
        %v3133 = vld [vmem:[#allocation3 + $0x348] sm:$0xff]
        %v3134 = vld [vmem:[#allocation3 + $0x350] sm:$0xff]
        %v3135 = vld [vmem:[#allocation3 + $0x358] sm:$0xff]
        %v3136 = vld [vmem:[#allocation3 + $0x360] sm:$0xff]
        %v3137 = vld [vmem:[#allocation3 + $0x368] sm:$0xff]
        %v3138 = vld [vmem:[#allocation3 + $0x370] sm:$0xff]
        %v3139 = vld [vmem:[#allocation3 + $0x378] sm:$0xff]
        %v3140 = vld [vmem:[#allocation3 + $0x380] sm:$0xff]
        %v3141 = vld [vmem:[#allocation3 + $0x388] sm:$0xff]
        %v3142 = vld [vmem:[#allocation3 + $0x390] sm:$0xff]
        %v3143 = vld [vmem:[#allocation3 + $0x398] sm:$0xff]
        %v3144 = vld [vmem:[#allocation3 + $0x3a0] sm:$0xff]
        %v3145 = vld [vmem:[#allocation3 + $0x3a8] sm:$0xff]
        %v3146 = vld [vmem:[#allocation3 + $0x3b0] sm:$0xff]
        %v3147 = vld [vmem:[#allocation3 + $0x3b8] sm:$0xff]
        %v3148 = vld [vmem:[#allocation3 + $0x3c0] sm:$0xff]
        %v3149 = vld [vmem:[#allocation3 + $0x3c8] sm:$0xff]
        %v3150 = vld [vmem:[#allocation3 + $0x3d0] sm:$0xff]
        %v3151 = vld [vmem:[#allocation3 + $0x3d8] sm:$0xff]
        %v3152 = vld [vmem:[#allocation3 + $0x3e0] sm:$0xff]
        %v3153 = vld [vmem:[#allocation3 + $0x3e8] sm:$0xff]
        %v3154 = vld [vmem:[#allocation3 + $0x3f0] sm:$0xff]
        %v3155 = vld [vmem:[#allocation3 + $0x3f8] sm:$0xff]
        %v3156 = vld [vmem:[#allocation2] sm:$0xff]
        %v3157 = vld [vmem:[#allocation2 + $0x8] sm:$0xff]
        %v3158 = vld [vmem:[#allocation2 + $0x10] sm:$0xff]
        %v3159 = vld [vmem:[#allocation2 + $0x18] sm:$0xff]
        %v3160 = vld [vmem:[#allocation2 + $0x20] sm:$0xf]
        %v3161 = vld [vmem:[#allocation2 + $0x24] sm:$0xff]
        %v3162 = vld [vmem:[#allocation2 + $0x2c] sm:$0xff]
        %v3163 = vld [vmem:[#allocation2 + $0x34] sm:$0xff]
        %v3164 = vld [vmem:[#allocation2 + $0x3c] sm:$0xff]
        %v3165 = vld [vmem:[#allocation2 + $0x44] sm:$0xf]
        %v3166 = vld [vmem:[#allocation2 + $0x48] sm:$0xff]
        %v3167 = vld [vmem:[#allocation2 + $0x50] sm:$0xff]
        %v3168 = vld [vmem:[#allocation2 + $0x58] sm:$0xff]
        %v3169 = vld [vmem:[#allocation2 + $0x60] sm:$0xff]
        %v3170 = vld [vmem:[#allocation2 + $0x68] sm:$0xf]
        %v3171 = vld [vmem:[#allocation2 + $0x6c] sm:$0xff]
        %v3172 = vld [vmem:[#allocation2 + $0x74] sm:$0xff]
        %v3173 = vld [vmem:[#allocation2 + $0x7c] sm:$0xff]
        %v3174 = vld [vmem:[#allocation2 + $0x84] sm:$0xff]
        %v3175 = vld [vmem:[#allocation2 + $0x8c] sm:$0xf]
        %v3176 = vld [vmem:[#allocation2 + $0x90] sm:$0xff]
        %v3177 = vld [vmem:[#allocation2 + $0x98] sm:$0xff]
        %v3178 = vld [vmem:[#allocation2 + $0xa0] sm:$0xff]
        %v3179 = vld [vmem:[#allocation2 + $0xa8] sm:$0xff]
        %v3180 = vld [vmem:[#allocation2 + $0xb0] sm:$0xf]
        %v3181 = vld [vmem:[#allocation2 + $0xb4] sm:$0xff]
        %v3182 = vld [vmem:[#allocation2 + $0xbc] sm:$0xff]
        %v3183 = vld [vmem:[#allocation2 + $0xc4] sm:$0xff]
        %v3184 = vld [vmem:[#allocation2 + $0xcc] sm:$0xff]
        %v3185 = vld [vmem:[#allocation2 + $0xd4] sm:$0xf]
        %v3186 = vld [vmem:[#allocation2 + $0xd8] sm:$0xff]
        %v3187 = vld [vmem:[#allocation2 + $0xe0] sm:$0xff]
        %v3188 = vld [vmem:[#allocation2 + $0xe8] sm:$0xff]
        %v3189 = vld [vmem:[#allocation2 + $0xf0] sm:$0xff]
        %v3190 = vld [vmem:[#allocation2 + $0xf8] sm:$0xf]
        %v3191 = vld [vmem:[#allocation2 + $0xfc] sm:$0xff]
        %v3192 = vld [vmem:[#allocation2 + $0x104] sm:$0xff]
        %v3193 = vld [vmem:[#allocation2 + $0x10c] sm:$0xff]
        %v3194 = vld [vmem:[#allocation2 + $0x114] sm:$0xff]
        %v3195 = vld [vmem:[#allocation2 + $0x11c] sm:$0xf]
        %v3196 = vld [vmem:[#allocation2 + $0x120] sm:$0xff]
        %v3197 = vld [vmem:[#allocation2 + $0x128] sm:$0xff]
        %v3198 = vld [vmem:[#allocation2 + $0x130] sm:$0xff]
        %v3199 = vld [vmem:[#allocation2 + $0x138] sm:$0xff]
        %v3200 = vld [vmem:[#allocation2 + $0x140] sm:$0xf]
        %v3201 = vld [vmem:[#allocation2 + $0x144] sm:$0xff]
        %v3202 = vld [vmem:[#allocation2 + $0x14c] sm:$0xff]
        %v3203 = vld [vmem:[#allocation2 + $0x154] sm:$0xff]
        %v3204 = vld [vmem:[#allocation2 + $0x15c] sm:$0xff]
        %v3205 = vld [vmem:[#allocation2 + $0x164] sm:$0xf]
        %v3206 = vld [vmem:[#allocation2 + $0x168] sm:$0xff]
        %v3207 = vld [vmem:[#allocation2 + $0x170] sm:$0xff]
        %v3208 = vld [vmem:[#allocation2 + $0x178] sm:$0xff]
        %v3209 = vld [vmem:[#allocation2 + $0x180] sm:$0xff]
        %v3210 = vld [vmem:[#allocation2 + $0x188] sm:$0xf]
        %v3211 = vld [vmem:[#allocation2 + $0x18c] sm:$0xff]
        %v3212 = vld [vmem:[#allocation2 + $0x194] sm:$0xff]
        %v3213 = vld [vmem:[#allocation2 + $0x19c] sm:$0xff]
        %v3214 = vld [vmem:[#allocation2 + $0x1a4] sm:$0xff]
        %v3215 = vld [vmem:[#allocation2 + $0x1ac] sm:$0xf]
        %v3216 = vld [vmem:[#allocation2 + $0x1b0] sm:$0xff]
        %v3217 = vld [vmem:[#allocation2 + $0x1b8] sm:$0xff]
        %v3218 = vld [vmem:[#allocation2 + $0x1c0] sm:$0xff]
        %v3219 = vld [vmem:[#allocation2 + $0x1c8] sm:$0xff]
        %v3220 = vld [vmem:[#allocation2 + $0x1d0] sm:$0xf]
        %v3221 = vld [vmem:[#allocation2 + $0x1d4] sm:$0xff]
        %v3222 = vld [vmem:[#allocation2 + $0x1dc] sm:$0xff]
        %v3223 = vld [vmem:[#allocation2 + $0x1e4] sm:$0xff]
        %v3224 = vld [vmem:[#allocation2 + $0x1ec] sm:$0xff]
        %v3225 = vld [vmem:[#allocation2 + $0x1f4] sm:$0xf]
        %v3226 = vld [vmem:[#allocation2 + $0x1f8] sm:$0xff]
        %v3227 = vld [vmem:[#allocation2 + $0x200] sm:$0xff]
        %v3228 = vld [vmem:[#allocation2 + $0x208] sm:$0xff]
        %v3229 = vld [vmem:[#allocation2 + $0x210] sm:$0xff]
        %v3230 = vld [vmem:[#allocation2 + $0x218] sm:$0xf]
        %v3231 = vld [vmem:[#allocation2 + $0x21c] sm:$0xff]
        %v3232 = vld [vmem:[#allocation2 + $0x224] sm:$0xff]
        %v3233 = vld [vmem:[#allocation2 + $0x22c] sm:$0xff]
        %v3234 = vld [vmem:[#allocation2 + $0x234] sm:$0xff]
        %v3235 = vld [vmem:[#allocation2 + $0x23c] sm:$0xf]
        %v3236 = vld [vmem:[#allocation2 + $0x240] sm:$0xff]
        %v3237 = vld [vmem:[#allocation2 + $0x248] sm:$0xff]
        %v3238 = vld [vmem:[#allocation2 + $0x250] sm:$0xff]
        %v3239 = vld [vmem:[#allocation2 + $0x258] sm:$0xff]
        %v3240 = vld [vmem:[#allocation2 + $0x260] sm:$0xf]
        %v3241 = vld [vmem:[#allocation2 + $0x264] sm:$0xff]
        %v3242 = vld [vmem:[#allocation2 + $0x26c] sm:$0xff]
        %v3243 = vld [vmem:[#allocation2 + $0x274] sm:$0xff]
        %v3244 = vld [vmem:[#allocation2 + $0x27c] sm:$0xff]
        %v3245 = vld [vmem:[#allocation2 + $0x284] sm:$0xf]
        %v3246 = vld [vmem:[#allocation2 + $0x288] sm:$0xff]
        %v3247 = vld [vmem:[#allocation2 + $0x290] sm:$0xff]
        %v3248 = vld [vmem:[#allocation2 + $0x298] sm:$0xff]
        %v3249 = vld [vmem:[#allocation2 + $0x2a0] sm:$0xff]
        %v3250 = vld [vmem:[#allocation2 + $0x2a8] sm:$0xf]
        %v3251 = vld [vmem:[#allocation2 + $0x2ac] sm:$0xff]
        %v3252 = vld [vmem:[#allocation2 + $0x2b4] sm:$0xff]
        %v3253 = vld [vmem:[#allocation2 + $0x2bc] sm:$0xff]
        %v3254 = vld [vmem:[#allocation2 + $0x2c4] sm:$0xff]
        %v3255 = vld [vmem:[#allocation2 + $0x2cc] sm:$0xf]
        %v3256 = vld [vmem:[#allocation2 + $0x2d0] sm:$0xff]
        %v3257 = vld [vmem:[#allocation2 + $0x2d8] sm:$0xff]
        %v3258 = vld [vmem:[#allocation2 + $0x2e0] sm:$0xff]
        %v3259 = vld [vmem:[#allocation2 + $0x2e8] sm:$0xff]
        %v3260 = vld [vmem:[#allocation2 + $0x2f0] sm:$0xf]
        %v3261 = vld [vmem:[#allocation2 + $0x2f4] sm:$0xff]
        %v3262 = vld [vmem:[#allocation2 + $0x2fc] sm:$0xff]
        %v3263 = vld [vmem:[#allocation2 + $0x304] sm:$0xff]
        %v3264 = vld [vmem:[#allocation2 + $0x30c] sm:$0xff]
        %v3265 = vld [vmem:[#allocation2 + $0x314] sm:$0xf]
        %v3266 = vld [vmem:[#allocation2 + $0x318] sm:$0xff]
        %v3267 = vld [vmem:[#allocation2 + $0x320] sm:$0xff]
        %v3268 = vld [vmem:[#allocation2 + $0x328] sm:$0xff]
        %v3269 = vld [vmem:[#allocation2 + $0x330] sm:$0xff]
        %v3270 = vld [vmem:[#allocation2 + $0x338] sm:$0xf]
        %v3271 = vld [vmem:[#allocation2 + $0x33c] sm:$0xff]
        %v3272 = vld [vmem:[#allocation2 + $0x344] sm:$0xff]
        %v3273 = vld [vmem:[#allocation2 + $0x34c] sm:$0xff]
        %v3274 = vld [vmem:[#allocation2 + $0x354] sm:$0xff]
        %v3275 = vld [vmem:[#allocation2 + $0x35c] sm:$0xf]
        %v3276 = vld [vmem:[#allocation2 + $0x360] sm:$0xff]
        %v3277 = vld [vmem:[#allocation2 + $0x368] sm:$0xff]
        %v3278 = vld [vmem:[#allocation2 + $0x370] sm:$0xff]
        %v3279 = vld [vmem:[#allocation2 + $0x378] sm:$0xff]
        %v3280 = vld [vmem:[#allocation2 + $0x380] sm:$0xf]
        %v3281 = vld [vmem:[#allocation2 + $0x384] sm:$0xff]
        %v3282 = vld [vmem:[#allocation2 + $0x38c] sm:$0xff]
        %v3283 = vld [vmem:[#allocation2 + $0x394] sm:$0xff]
        %v3284 = vld [vmem:[#allocation2 + $0x39c] sm:$0xff]
        %v3285 = vld [vmem:[#allocation2 + $0x3a4] sm:$0xf]
        %v3286 = vld [vmem:[#allocation2 + $0x3a8] sm:$0xff]
        %v3287 = vld [vmem:[#allocation2 + $0x3b0] sm:$0xff]
        %v3288 = vld [vmem:[#allocation2 + $0x3b8] sm:$0xff]
        %v3289 = vld [vmem:[#allocation2 + $0x3c0] sm:$0xff]
        %v3290 = vld [vmem:[#allocation2 + $0x3c8] sm:$0xf]
        %v3291 = vld [vmem:[#allocation2 + $0x3cc] sm:$0xff]
        %v3292 = vld [vmem:[#allocation2 + $0x3d4] sm:$0xff]
        %v3293 = vld [vmem:[#allocation2 + $0x3dc] sm:$0xff]
        %v3294 = vld [vmem:[#allocation2 + $0x3e4] sm:$0xff]
        %v3295 = vld [vmem:[#allocation2 + $0x3ec] sm:$0xf]
        %v3296 = vld [vmem:[#allocation2 + $0x3f0] sm:$0xff]
        %v3297 = vld [vmem:[#allocation2 + $0x3f8] sm:$0xff]
        %v3298 = vld [vmem:[#allocation2 + $0x400] sm:$0xff]
        %v3299 = vld [vmem:[#allocation2 + $0x408] sm:$0xff]
        %v3300 = vld [vmem:[#allocation2 + $0x410] sm:$0xf]
        %v3301 = vld [vmem:[#allocation2 + $0x414] sm:$0xff]
        %v3302 = vld [vmem:[#allocation2 + $0x41c] sm:$0xff]
        %v3303 = vld [vmem:[#allocation2 + $0x424] sm:$0xff]
        %v3304 = vld [vmem:[#allocation2 + $0x42c] sm:$0xff]
        %v3305 = vld [vmem:[#allocation2 + $0x434] sm:$0xf]
        %v3306 = vld [vmem:[#allocation2 + $0x438] sm:$0xff]
        %v3307 = vld [vmem:[#allocation2 + $0x440] sm:$0xff]
        %v3308 = vld [vmem:[#allocation2 + $0x448] sm:$0xff]
        %v3309 = vld [vmem:[#allocation2 + $0x450] sm:$0xff]
        %v3310 = vld [vmem:[#allocation2 + $0x458] sm:$0xf]
        %v3311 = vld [vmem:[#allocation2 + $0x45c] sm:$0xff]
        %v3312 = vld [vmem:[#allocation2 + $0x464] sm:$0xff]
        %v3313 = vld [vmem:[#allocation2 + $0x46c] sm:$0xff]
        %v3314 = vld [vmem:[#allocation2 + $0x474] sm:$0xff]
        %v3315 = vld [vmem:[#allocation2 + $0x47c] sm:$0xf]
        %v3316 = vld [vmem:[#allocation4] sm:$0xff]
        %v3317 = vld [vmem:[#allocation4 + $0x8] sm:$0xff]
        %v3318 = vld [vmem:[#allocation4 + $0x10] sm:$0xff]
        %v3319 = vld [vmem:[#allocation4 + $0x18] sm:$0xff]
        %v3320 = vld [vmem:[#allocation4 + $0x20] sm:$0xff]
        %v3321 = vld [vmem:[#allocation4 + $0x28] sm:$0xff]
        %v3322 = vld [vmem:[#allocation4 + $0x30] sm:$0xff]
        %v3323 = vld [vmem:[#allocation4 + $0x38] sm:$0xff]
        %v3324 = vld [vmem:[#allocation4 + $0x40] sm:$0xff]
        %v3325 = vld [vmem:[#allocation4 + $0x48] sm:$0xff]
        %v3326 = vld [vmem:[#allocation4 + $0x50] sm:$0xff]
        %v3327 = vld [vmem:[#allocation4 + $0x58] sm:$0xff]
        %v3328 = vld [vmem:[#allocation4 + $0x60] sm:$0xff]
        %v3329 = vld [vmem:[#allocation4 + $0x68] sm:$0xff]
        %v3330 = vld [vmem:[#allocation4 + $0x70] sm:$0xff]
        %v3331 = vld [vmem:[#allocation4 + $0x78] sm:$0xff]
        %v3332 = vld [vmem:[#allocation4 + $0x80] sm:$0xff]
        %v3333 = vld [vmem:[#allocation4 + $0x88] sm:$0xff]
        %v3334 = vld [vmem:[#allocation4 + $0x90] sm:$0xff]
        %v3335 = vld [vmem:[#allocation4 + $0x98] sm:$0xff]
        %v3336 = vld [vmem:[#allocation4 + $0xa0] sm:$0xff]
        %v3337 = vld [vmem:[#allocation4 + $0xa8] sm:$0xff]
        %v3338 = vld [vmem:[#allocation4 + $0xb0] sm:$0xff]
        %v3339 = vld [vmem:[#allocation4 + $0xb8] sm:$0xff]
        %v3340 = vld [vmem:[#allocation4 + $0xc0] sm:$0xff]
        %v3341 = vld [vmem:[#allocation4 + $0xc8] sm:$0xff]
        %v3342 = vld [vmem:[#allocation4 + $0xd0] sm:$0xff]
        %v3343 = vld [vmem:[#allocation4 + $0xd8] sm:$0xff]
        %v3344 = vld [vmem:[#allocation4 + $0xe0] sm:$0xff]
        %v3345 = vld [vmem:[#allocation4 + $0xe8] sm:$0xff]
        %v3346 = vld [vmem:[#allocation4 + $0xf0] sm:$0xff]
        %v3347 = vld [vmem:[#allocation4 + $0xf8] sm:$0xff]
        %v3348 = vld [vmem:[#allocation4 + $0x100] sm:$0xff]
        %v3349 = vld [vmem:[#allocation4 + $0x108] sm:$0xff]
        %v3350 = vld [vmem:[#allocation4 + $0x110] sm:$0xff]
        %v3351 = vld [vmem:[#allocation4 + $0x118] sm:$0xff]
        %v3352 = vld [vmem:[#allocation4 + $0x120] sm:$0xff]
        %v3353 = vld [vmem:[#allocation4 + $0x128] sm:$0xff]
        %v3354 = vld [vmem:[#allocation4 + $0x130] sm:$0xff]
        %v3355 = vld [vmem:[#allocation4 + $0x138] sm:$0xff]
        %v3356 = vld [vmem:[#allocation4 + $0x140] sm:$0xff]
        %v3357 = vld [vmem:[#allocation4 + $0x148] sm:$0xff]
        %v3358 = vld [vmem:[#allocation4 + $0x150] sm:$0xff]
        %v3359 = vld [vmem:[#allocation4 + $0x158] sm:$0xff]
        %v3360 = vld [vmem:[#allocation4 + $0x160] sm:$0xff]
        %v3361 = vld [vmem:[#allocation4 + $0x168] sm:$0xff]
        %v3362 = vld [vmem:[#allocation4 + $0x170] sm:$0xff]
        %v3363 = vld [vmem:[#allocation4 + $0x178] sm:$0xff]
        %v3364 = vld [vmem:[#allocation4 + $0x180] sm:$0xff]
        %v3365 = vld [vmem:[#allocation4 + $0x188] sm:$0xff]
        %v3366 = vld [vmem:[#allocation4 + $0x190] sm:$0xff]
        %v3367 = vld [vmem:[#allocation4 + $0x198] sm:$0xff]
        %v3368 = vld [vmem:[#allocation4 + $0x1a0] sm:$0xff]
        %v3369 = vld [vmem:[#allocation4 + $0x1a8] sm:$0xff]
        %v3370 = vld [vmem:[#allocation4 + $0x1b0] sm:$0xff]
        %v3371 = vld [vmem:[#allocation4 + $0x1b8] sm:$0xff]
        %v3372 = vld [vmem:[#allocation4 + $0x1c0] sm:$0xff]
        %v3373 = vld [vmem:[#allocation4 + $0x1c8] sm:$0xff]
        %v3374 = vld [vmem:[#allocation4 + $0x1d0] sm:$0xff]
        %v3375 = vld [vmem:[#allocation4 + $0x1d8] sm:$0xff]
        %v3376 = vld [vmem:[#allocation4 + $0x1e0] sm:$0xff]
        %v3377 = vld [vmem:[#allocation4 + $0x1e8] sm:$0xff]
        %v3378 = vld [vmem:[#allocation4 + $0x1f0] sm:$0xff]
        %v3379 = vld [vmem:[#allocation4 + $0x1f8] sm:$0xff]
        %v3380 = vld [vmem:[#allocation4 + $0x200] sm:$0xff]
        %v3381 = vld [vmem:[#allocation4 + $0x208] sm:$0xff]
        %v3382 = vld [vmem:[#allocation4 + $0x210] sm:$0xff]
        %v3383 = vld [vmem:[#allocation4 + $0x218] sm:$0xff]
        %v3384 = vld [vmem:[#allocation4 + $0x220] sm:$0xff]
        %v3385 = vld [vmem:[#allocation4 + $0x228] sm:$0xff]
        %v3386 = vld [vmem:[#allocation4 + $0x230] sm:$0xff]
        %v3387 = vld [vmem:[#allocation4 + $0x238] sm:$0xff]
        %v3388 = vld [vmem:[#allocation4 + $0x240] sm:$0xff]
        %v3389 = vld [vmem:[#allocation4 + $0x248] sm:$0xff]
        %v3390 = vld [vmem:[#allocation4 + $0x250] sm:$0xff]
        %v3391 = vld [vmem:[#allocation4 + $0x258] sm:$0xff]
        %v3392 = vld [vmem:[#allocation4 + $0x260] sm:$0xff]
        %v3393 = vld [vmem:[#allocation4 + $0x268] sm:$0xff]
        %v3394 = vld [vmem:[#allocation4 + $0x270] sm:$0xff]
        %v3395 = vld [vmem:[#allocation4 + $0x278] sm:$0xff]
        %v3396 = vld [vmem:[#allocation4 + $0x280] sm:$0xff]
        %v3397 = vld [vmem:[#allocation4 + $0x288] sm:$0xff]
        %v3398 = vld [vmem:[#allocation4 + $0x290] sm:$0xff]
        %v3399 = vld [vmem:[#allocation4 + $0x298] sm:$0xff]
        %v3400 = vld [vmem:[#allocation4 + $0x2a0] sm:$0xff]
        %v3401 = vld [vmem:[#allocation4 + $0x2a8] sm:$0xff]
        %v3402 = vld [vmem:[#allocation4 + $0x2b0] sm:$0xff]
        %v3403 = vld [vmem:[#allocation4 + $0x2b8] sm:$0xff]
        %v3404 = vld [vmem:[#allocation4 + $0x2c0] sm:$0xff]
        %v3405 = vld [vmem:[#allocation4 + $0x2c8] sm:$0xff]
        %v3406 = vld [vmem:[#allocation4 + $0x2d0] sm:$0xff]
        %v3407 = vld [vmem:[#allocation4 + $0x2d8] sm:$0xff]
        %v3408 = vld [vmem:[#allocation4 + $0x2e0] sm:$0xff]
        %v3409 = vld [vmem:[#allocation4 + $0x2e8] sm:$0xff]
        %v3410 = vld [vmem:[#allocation4 + $0x2f0] sm:$0xff]
        %v3411 = vld [vmem:[#allocation4 + $0x2f8] sm:$0xff]
        %v3412 = vld [vmem:[#allocation4 + $0x300] sm:$0xff]
        %v3413 = vld [vmem:[#allocation4 + $0x308] sm:$0xff]
        %v3414 = vld [vmem:[#allocation4 + $0x310] sm:$0xff]
        %v3415 = vld [vmem:[#allocation4 + $0x318] sm:$0xff]
        %v3416 = vld [vmem:[#allocation4 + $0x320] sm:$0xff]
        %v3417 = vld [vmem:[#allocation4 + $0x328] sm:$0xff]
        %v3418 = vld [vmem:[#allocation4 + $0x330] sm:$0xff]
        %v3419 = vld [vmem:[#allocation4 + $0x338] sm:$0xff]
        %v3420 = vld [vmem:[#allocation4 + $0x340] sm:$0xff]
        %v3421 = vld [vmem:[#allocation4 + $0x348] sm:$0xff]
        %v3422 = vld [vmem:[#allocation4 + $0x350] sm:$0xff]
        %v3423 = vld [vmem:[#allocation4 + $0x358] sm:$0xff]
        %v3424 = vld [vmem:[#allocation4 + $0x360] sm:$0xff]
        %v3425 = vld [vmem:[#allocation4 + $0x368] sm:$0xff]
        %v3426 = vld [vmem:[#allocation4 + $0x370] sm:$0xff]
        %v3427 = vld [vmem:[#allocation4 + $0x378] sm:$0xff]
        %v3428 = vld [vmem:[#allocation4 + $0x380] sm:$0xff]
        %v3429 = vld [vmem:[#allocation4 + $0x388] sm:$0xff]
        %v3430 = vld [vmem:[#allocation4 + $0x390] sm:$0xff]
        %v3431 = vld [vmem:[#allocation4 + $0x398] sm:$0xff]
        %v3432 = vld [vmem:[#allocation4 + $0x3a0] sm:$0xff]
        %v3433 = vld [vmem:[#allocation4 + $0x3a8] sm:$0xff]
        %v3434 = vld [vmem:[#allocation4 + $0x3b0] sm:$0xff]
        %v3435 = vld [vmem:[#allocation4 + $0x3b8] sm:$0xff]
        %v3436 = vld [vmem:[#allocation4 + $0x3c0] sm:$0xff]
        %v3437 = vld [vmem:[#allocation4 + $0x3c8] sm:$0xff]
        %v3438 = vld [vmem:[#allocation4 + $0x3d0] sm:$0xff]
        %v3439 = vld [vmem:[#allocation4 + $0x3d8] sm:$0xff]
        %v3440 = vld [vmem:[#allocation4 + $0x3e0] sm:$0xff]
        %v3441 = vld [vmem:[#allocation4 + $0x3e8] sm:$0xff]
        %v3442 = vld [vmem:[#allocation4 + $0x3f0] sm:$0xff]
        %v3443 = vld [vmem:[#allocation4 + $0x3f8] sm:$0xff]
        %v3444 = vld [vmem:[#allocation4 + $0x400] sm:$0xff]
        %v3445 = vld [vmem:[#allocation4 + $0x408] sm:$0xff]
        %v3446 = vld [vmem:[#allocation4 + $0x410] sm:$0xff]
        %v3447 = vld [vmem:[#allocation4 + $0x418] sm:$0xff]
        %v3448 = vld [vmem:[#allocation4 + $0x420] sm:$0xff]
        %v3449 = vld [vmem:[#allocation4 + $0x428] sm:$0xff]
        %v3450 = vld [vmem:[#allocation4 + $0x430] sm:$0xff]
        %v3451 = vld [vmem:[#allocation4 + $0x438] sm:$0xff]
        %v3452 = vld [vmem:[#allocation4 + $0x440] sm:$0xff]
        %v3453 = vld [vmem:[#allocation4 + $0x448] sm:$0xff]
        %v3454 = vld [vmem:[#allocation4 + $0x450] sm:$0xff]
        %v3455 = vld [vmem:[#allocation4 + $0x458] sm:$0xff]
        %v3456 = vld [vmem:[#allocation4 + $0x460] sm:$0xff]
        %v3457 = vld [vmem:[#allocation4 + $0x468] sm:$0xff]
        %v3458 = vld [vmem:[#allocation4 + $0x470] sm:$0xff]
        %v3459 = vld [vmem:[#allocation4 + $0x478] sm:$0xff]
        %v3460 = vld [vmem:[#allocation4 + $0x480] sm:$0xff]
        %v3461 = vld [vmem:[#allocation4 + $0x488] sm:$0xff]
        %v3462 = vld [vmem:[#allocation4 + $0x490] sm:$0xff]
        %v3463 = vld [vmem:[#allocation4 + $0x498] sm:$0xff]
        %v3464 = vld [vmem:[#allocation4 + $0x4a0] sm:$0xff]
        %v3465 = vld [vmem:[#allocation4 + $0x4a8] sm:$0xff]
        %v3466 = vld [vmem:[#allocation4 + $0x4b0] sm:$0xff]
        %v3467 = vld [vmem:[#allocation4 + $0x4b8] sm:$0xff]
        %v3468 = vld [vmem:[#allocation4 + $0x4c0] sm:$0xff]
        %v3469 = vld [vmem:[#allocation4 + $0x4c8] sm:$0xff]
        %v3470 = vld [vmem:[#allocation4 + $0x4d0] sm:$0xff]
        %v3471 = vld [vmem:[#allocation4 + $0x4d8] sm:$0xff]
        %v3472 = vld [vmem:[#allocation4 + $0x4e0] sm:$0xff]
        %v3473 = vld [vmem:[#allocation4 + $0x4e8] sm:$0xff]
        %v3474 = vld [vmem:[#allocation4 + $0x4f0] sm:$0xff]
        %v3475 = vld [vmem:[#allocation4 + $0x4f8] sm:$0xff]
        %v3476 = vld [vmem:[#allocation4 + $0x500] sm:$0xff]
        %v3477 = vld [vmem:[#allocation4 + $0x508] sm:$0xff]
        %v3478 = vld [vmem:[#allocation4 + $0x510] sm:$0xff]
        %v3479 = vld [vmem:[#allocation4 + $0x518] sm:$0xff]
        %v3480 = vld [vmem:[#allocation4 + $0x520] sm:$0xff]
        %v3481 = vld [vmem:[#allocation4 + $0x528] sm:$0xff]
        %v3482 = vld [vmem:[#allocation4 + $0x530] sm:$0xff]
        %v3483 = vld [vmem:[#allocation4 + $0x538] sm:$0xff]
        %v3484 = vld [vmem:[#allocation4 + $0x540] sm:$0xff]
        %v3485 = vld [vmem:[#allocation4 + $0x548] sm:$0xff]
        %v3486 = vld [vmem:[#allocation4 + $0x550] sm:$0xff]
        %v3487 = vld [vmem:[#allocation4 + $0x558] sm:$0xff]
        %v3488 = vld [vmem:[#allocation4 + $0x560] sm:$0xff]
        %v3489 = vld [vmem:[#allocation4 + $0x568] sm:$0xff]
        %v3490 = vld [vmem:[#allocation4 + $0x570] sm:$0xff]
        %v3491 = vld [vmem:[#allocation4 + $0x578] sm:$0xff]
        %v3492 = vld [vmem:[#allocation4 + $0x580] sm:$0xff]
        %v3493 = vld [vmem:[#allocation4 + $0x588] sm:$0xff]
        %v3494 = vld [vmem:[#allocation4 + $0x590] sm:$0xff]
        %v3495 = vld [vmem:[#allocation4 + $0x598] sm:$0xff]
        %v3496 = vld [vmem:[#allocation4 + $0x5a0] sm:$0xff]
        %v3497 = vld [vmem:[#allocation4 + $0x5a8] sm:$0xff]
        %v3498 = vld [vmem:[#allocation4 + $0x5b0] sm:$0xff]
        %v3499 = vld [vmem:[#allocation4 + $0x5b8] sm:$0xff]
        %v3500 = vld [vmem:[#allocation4 + $0x5c0] sm:$0xff]
        %v3501 = vld [vmem:[#allocation4 + $0x5c8] sm:$0xff]
        %v3502 = vld [vmem:[#allocation4 + $0x5d0] sm:$0xff]
        %v3503 = vld [vmem:[#allocation4 + $0x5d8] sm:$0xff]
        %v3504 = vld [vmem:[#allocation4 + $0x5e0] sm:$0xff]
        %v3505 = vld [vmem:[#allocation4 + $0x5e8] sm:$0xff]
        %v3506 = vld [vmem:[#allocation4 + $0x5f0] sm:$0xff]
        %v3507 = vld [vmem:[#allocation4 + $0x5f8] sm:$0xff]
        %v3508 = vld [vmem:[#allocation4 + $0x600] sm:$0xff]
        %v3509 = vld [vmem:[#allocation4 + $0x608] sm:$0xff]
        %v3510 = vld [vmem:[#allocation4 + $0x610] sm:$0xff]
        %v3511 = vld [vmem:[#allocation4 + $0x618] sm:$0xff]
        %v3512 = vld [vmem:[#allocation4 + $0x620] sm:$0xff]
        %v3513 = vld [vmem:[#allocation4 + $0x628] sm:$0xff]
        %v3514 = vld [vmem:[#allocation4 + $0x630] sm:$0xff]
        %v3515 = vld [vmem:[#allocation4 + $0x638] sm:$0xff]
        %v3516 = vld [vmem:[#allocation4 + $0x640] sm:$0xff]
        %v3517 = vld [vmem:[#allocation4 + $0x648] sm:$0xff]
        %v3518 = vld [vmem:[#allocation4 + $0x650] sm:$0xff]
        %v3519 = vld [vmem:[#allocation4 + $0x658] sm:$0xff]
        %v3520 = vld [vmem:[#allocation4 + $0x660] sm:$0xff]
        %v3521 = vld [vmem:[#allocation4 + $0x668] sm:$0xff]
        %v3522 = vld [vmem:[#allocation4 + $0x670] sm:$0xff]
        %v3523 = vld [vmem:[#allocation4 + $0x678] sm:$0xff]
        %v3524 = vld [vmem:[#allocation4 + $0x680] sm:$0xff]
        %v3525 = vld [vmem:[#allocation4 + $0x688] sm:$0xff]
        %v3526 = vld [vmem:[#allocation4 + $0x690] sm:$0xff]
        %v3527 = vld [vmem:[#allocation4 + $0x698] sm:$0xff]
        %v3528 = vld [vmem:[#allocation4 + $0x6a0] sm:$0xff]
        %v3529 = vld [vmem:[#allocation4 + $0x6a8] sm:$0xff]
        %v3530 = vld [vmem:[#allocation4 + $0x6b0] sm:$0xff]
        %v3531 = vld [vmem:[#allocation4 + $0x6b8] sm:$0xff]
        %v3532 = vld [vmem:[#allocation4 + $0x6c0] sm:$0xff]
        %v3533 = vld [vmem:[#allocation4 + $0x6c8] sm:$0xff]
        %v3534 = vld [vmem:[#allocation4 + $0x6d0] sm:$0xff]
        %v3535 = vld [vmem:[#allocation4 + $0x6d8] sm:$0xff]
        %v3536 = vld [vmem:[#allocation4 + $0x6e0] sm:$0xff]
        %v3537 = vld [vmem:[#allocation4 + $0x6e8] sm:$0xff]
        %v3538 = vld [vmem:[#allocation4 + $0x6f0] sm:$0xff]
        %v3539 = vld [vmem:[#allocation4 + $0x6f8] sm:$0xff]
        %v3540 = vld [vmem:[#allocation4 + $0x700] sm:$0xff]
        %v3541 = vld [vmem:[#allocation4 + $0x708] sm:$0xff]
        %v3542 = vld [vmem:[#allocation4 + $0x710] sm:$0xff]
        %v3543 = vld [vmem:[#allocation4 + $0x718] sm:$0xff]
        %v3544 = vld [vmem:[#allocation4 + $0x720] sm:$0xff]
        %v3545 = vld [vmem:[#allocation4 + $0x728] sm:$0xff]
        %v3546 = vld [vmem:[#allocation4 + $0x730] sm:$0xff]
        %v3547 = vld [vmem:[#allocation4 + $0x738] sm:$0xff]
        %v3548 = vld [vmem:[#allocation4 + $0x740] sm:$0xff]
        %v3549 = vld [vmem:[#allocation4 + $0x748] sm:$0xff]
        %v3550 = vld [vmem:[#allocation4 + $0x750] sm:$0xff]
        %v3551 = vld [vmem:[#allocation4 + $0x758] sm:$0xff]
        %v3552 = vld [vmem:[#allocation4 + $0x760] sm:$0xff]
        %v3553 = vld [vmem:[#allocation4 + $0x768] sm:$0xff]
        %v3554 = vld [vmem:[#allocation4 + $0x770] sm:$0xff]
        %v3555 = vld [vmem:[#allocation4 + $0x778] sm:$0xff]
        %v3556 = vld [vmem:[#allocation4 + $0x780] sm:$0xff]
        %v3557 = vld [vmem:[#allocation4 + $0x788] sm:$0xff]
        %v3558 = vld [vmem:[#allocation4 + $0x790] sm:$0xff]
        %v3559 = vld [vmem:[#allocation4 + $0x798] sm:$0xff]
        %v3560 = vld [vmem:[#allocation4 + $0x7a0] sm:$0xff]
        %v3561 = vld [vmem:[#allocation4 + $0x7a8] sm:$0xff]
        %v3562 = vld [vmem:[#allocation4 + $0x7b0] sm:$0xff]
        %v3563 = vld [vmem:[#allocation4 + $0x7b8] sm:$0xff]
        %v3564 = vld [vmem:[#allocation4 + $0x7c0] sm:$0xff]
        %v3565 = vld [vmem:[#allocation4 + $0x7c8] sm:$0xff]
        %v3566 = vld [vmem:[#allocation4 + $0x7d0] sm:$0xff]
        %v3567 = vld [vmem:[#allocation4 + $0x7d8] sm:$0xff]
        %v3568 = vld [vmem:[#allocation4 + $0x7e0] sm:$0xff]
        %v3569 = vld [vmem:[#allocation4 + $0x7e8] sm:$0xff]
        %v3570 = vld [vmem:[#allocation4 + $0x7f0] sm:$0xff]
        %v3571 = vld [vmem:[#allocation4 + $0x7f8] sm:$0xff]
        %v3572 = vld [vmem:[#allocation4 + $0x800] sm:$0xff]
        %v3573 = vld [vmem:[#allocation4 + $0x808] sm:$0xff]
        %v3574 = vld [vmem:[#allocation4 + $0x810] sm:$0xff]
        %v3575 = vld [vmem:[#allocation4 + $0x818] sm:$0xff]
        %v3576 = vld [vmem:[#allocation4 + $0x820] sm:$0xff]
        %v3577 = vld [vmem:[#allocation4 + $0x828] sm:$0xff]
        %v3578 = vld [vmem:[#allocation4 + $0x830] sm:$0xff]
        %v3579 = vld [vmem:[#allocation4 + $0x838] sm:$0xff]
        %v3580 = vld [vmem:[#allocation4 + $0x840] sm:$0xff]
        %v3581 = vld [vmem:[#allocation4 + $0x848] sm:$0xff]
        %v3582 = vld [vmem:[#allocation4 + $0x850] sm:$0xff]
        %v3583 = vld [vmem:[#allocation4 + $0x858] sm:$0xff]
        %v3584 = vld [vmem:[#allocation4 + $0x860] sm:$0xff]
        %v3585 = vld [vmem:[#allocation4 + $0x868] sm:$0xff]
        %v3586 = vld [vmem:[#allocation4 + $0x870] sm:$0xff]
        %v3587 = vld [vmem:[#allocation4 + $0x878] sm:$0xff]
        %v3588 = vld [vmem:[#allocation4 + $0x880] sm:$0xff]
        %v3589 = vld [vmem:[#allocation4 + $0x888] sm:$0xff]
        %v3590 = vld [vmem:[#allocation4 + $0x890] sm:$0xff]
        %v3591 = vld [vmem:[#allocation4 + $0x898] sm:$0xff]
        %v3592 = vld [vmem:[#allocation4 + $0x8a0] sm:$0xff]
        %v3593 = vld [vmem:[#allocation4 + $0x8a8] sm:$0xff]
        %v3594 = vld [vmem:[#allocation4 + $0x8b0] sm:$0xff]
        %v3595 = vld [vmem:[#allocation4 + $0x8b8] sm:$0xff]
        %v3596 = vld [vmem:[#allocation4 + $0x8c0] sm:$0xff]
        %v3597 = vld [vmem:[#allocation4 + $0x8c8] sm:$0xff]
        %v3598 = vld [vmem:[#allocation4 + $0x8d0] sm:$0xff]
        %v3599 = vld [vmem:[#allocation4 + $0x8d8] sm:$0xff]
        %v3600 = vld [vmem:[#allocation4 + $0x8e0] sm:$0xff]
        %v3601 = vld [vmem:[#allocation4 + $0x8e8] sm:$0xff]
        %v3602 = vld [vmem:[#allocation4 + $0x8f0] sm:$0xff]
        %v3603 = vld [vmem:[#allocation4 + $0x8f8] sm:$0xff]
        %v3764 = vunpack.c.l.b16 %v3156
        %v3765 = vunpack.c.h.b16 %v3156
        %v3766 = vunpack.c.l.b16 %v3157
        %v3767 = vunpack.c.h.b16 %v3157
        %v3768 = vunpack.c.l.b16 %v3158
        %v3769 = vunpack.c.h.b16 %v3158
        %v3770 = vunpack.c.l.b16 %v3159
        %v3771 = vunpack.c.h.b16 %v3159
        %v3772 = vunpack.c.l.b16 %v3160
        %v3773 = vunpack.c.l.b16 %v3161
        %v3774 = vunpack.c.h.b16 %v3161
        %v3775 = vunpack.c.l.b16 %v3162
        %v3776 = vunpack.c.h.b16 %v3162
        %v3777 = vunpack.c.l.b16 %v3163
        %v3778 = vunpack.c.h.b16 %v3163
        %v3779 = vunpack.c.l.b16 %v3164
        %v3780 = vunpack.c.h.b16 %v3164
        %v3781 = vunpack.c.l.b16 %v3165
        %v3782 = vunpack.c.l.b16 %v3166
        %v3783 = vunpack.c.h.b16 %v3166
        %v3784 = vunpack.c.l.b16 %v3167
        %v3785 = vunpack.c.h.b16 %v3167
        %v3786 = vunpack.c.l.b16 %v3168
        %v3787 = vunpack.c.h.b16 %v3168
        %v3788 = vunpack.c.l.b16 %v3169
        %v3789 = vunpack.c.h.b16 %v3169
        %v3790 = vunpack.c.l.b16 %v3170
        %v3791 = vunpack.c.l.b16 %v3171
        %v3792 = vunpack.c.h.b16 %v3171
        %v3793 = vunpack.c.l.b16 %v3172
        %v3794 = vunpack.c.h.b16 %v3172
        %v3795 = vunpack.c.l.b16 %v3173
        %v3796 = vunpack.c.h.b16 %v3173
        %v3797 = vunpack.c.l.b16 %v3174
        %v3798 = vunpack.c.h.b16 %v3174
        %v3799 = vunpack.c.l.b16 %v3175
        %v3800 = vunpack.c.l.b16 %v3176
        %v3801 = vunpack.c.h.b16 %v3176
        %v3802 = vunpack.c.l.b16 %v3177
        %v3803 = vunpack.c.h.b16 %v3177
        %v3804 = vunpack.c.l.b16 %v3178
        %v3805 = vunpack.c.h.b16 %v3178
        %v3806 = vunpack.c.l.b16 %v3179
        %v3807 = vunpack.c.h.b16 %v3179
        %v3808 = vunpack.c.l.b16 %v3180
        %v3809 = vunpack.c.l.b16 %v3181
        %v3810 = vunpack.c.h.b16 %v3181
        %v3811 = vunpack.c.l.b16 %v3182
        %v3812 = vunpack.c.h.b16 %v3182
        %v3813 = vunpack.c.l.b16 %v3183
        %v3814 = vunpack.c.h.b16 %v3183
        %v3815 = vunpack.c.l.b16 %v3184
        %v3816 = vunpack.c.h.b16 %v3184
        %v3817 = vunpack.c.l.b16 %v3185
        %v3818 = vunpack.c.l.b16 %v3186
        %v3819 = vunpack.c.h.b16 %v3186
        %v3820 = vunpack.c.l.b16 %v3187
        %v3821 = vunpack.c.h.b16 %v3187
        %v3822 = vunpack.c.l.b16 %v3188
        %v3823 = vunpack.c.h.b16 %v3188
        %v3824 = vunpack.c.l.b16 %v3189
        %v3825 = vunpack.c.h.b16 %v3189
        %v3826 = vunpack.c.l.b16 %v3190
        %v3827 = vunpack.c.l.b16 %v3191
        %v3828 = vunpack.c.h.b16 %v3191
        %v3829 = vunpack.c.l.b16 %v3192
        %v3830 = vunpack.c.h.b16 %v3192
        %v3831 = vunpack.c.l.b16 %v3193
        %v3832 = vunpack.c.h.b16 %v3193
        %v3833 = vunpack.c.l.b16 %v3194
        %v3834 = vunpack.c.h.b16 %v3194
        %v3835 = vunpack.c.l.b16 %v3195
        %v3836 = vunpack.c.l.b16 %v3196
        %v3837 = vunpack.c.h.b16 %v3196
        %v3838 = vunpack.c.l.b16 %v3197
        %v3839 = vunpack.c.h.b16 %v3197
        %v3840 = vunpack.c.l.b16 %v3198
        %v3841 = vunpack.c.h.b16 %v3198
        %v3842 = vunpack.c.l.b16 %v3199
        %v3843 = vunpack.c.h.b16 %v3199
        %v3844 = vunpack.c.l.b16 %v3200
        %v3845 = vunpack.c.l.b16 %v3201
        %v3846 = vunpack.c.h.b16 %v3201
        %v3847 = vunpack.c.l.b16 %v3202
        %v3848 = vunpack.c.h.b16 %v3202
        %v3849 = vunpack.c.l.b16 %v3203
        %v3850 = vunpack.c.h.b16 %v3203
        %v3851 = vunpack.c.l.b16 %v3204
        %v3852 = vunpack.c.h.b16 %v3204
        %v3853 = vunpack.c.l.b16 %v3205
        %v3854 = vunpack.c.l.b16 %v3206
        %v3855 = vunpack.c.h.b16 %v3206
        %v3856 = vunpack.c.l.b16 %v3207
        %v3857 = vunpack.c.h.b16 %v3207
        %v3858 = vunpack.c.l.b16 %v3208
        %v3859 = vunpack.c.h.b16 %v3208
        %v3860 = vunpack.c.l.b16 %v3209
        %v3861 = vunpack.c.h.b16 %v3209
        %v3862 = vunpack.c.l.b16 %v3210
        %v3863 = vunpack.c.l.b16 %v3211
        %v3864 = vunpack.c.h.b16 %v3211
        %v3865 = vunpack.c.l.b16 %v3212
        %v3866 = vunpack.c.h.b16 %v3212
        %v3867 = vunpack.c.l.b16 %v3213
        %v3868 = vunpack.c.h.b16 %v3213
        %v3869 = vunpack.c.l.b16 %v3214
        %v3870 = vunpack.c.h.b16 %v3214
        %v3871 = vunpack.c.l.b16 %v3215
        %v3872 = vunpack.c.l.b16 %v3216
        %v3873 = vunpack.c.h.b16 %v3216
        %v3874 = vunpack.c.l.b16 %v3217
        %v3875 = vunpack.c.h.b16 %v3217
        %v3876 = vunpack.c.l.b16 %v3218
        %v3877 = vunpack.c.h.b16 %v3218
        %v3878 = vunpack.c.l.b16 %v3219
        %v3879 = vunpack.c.h.b16 %v3219
        %v3880 = vunpack.c.l.b16 %v3220
        %v3881 = vunpack.c.l.b16 %v3221
        %v3882 = vunpack.c.h.b16 %v3221
        %v3883 = vunpack.c.l.b16 %v3222
        %v3884 = vunpack.c.h.b16 %v3222
        %v3885 = vunpack.c.l.b16 %v3223
        %v3886 = vunpack.c.h.b16 %v3223
        %v3887 = vunpack.c.l.b16 %v3224
        %v3888 = vunpack.c.h.b16 %v3224
        %v3889 = vunpack.c.l.b16 %v3225
        %v3890 = vunpack.c.l.b16 %v3226
        %v3891 = vunpack.c.h.b16 %v3226
        %v3892 = vunpack.c.l.b16 %v3227
        %v3893 = vunpack.c.h.b16 %v3227
        %v3894 = vunpack.c.l.b16 %v3228
        %v3895 = vunpack.c.h.b16 %v3228
        %v3896 = vunpack.c.l.b16 %v3229
        %v3897 = vunpack.c.h.b16 %v3229
        %v3898 = vunpack.c.l.b16 %v3230
        %v3899 = vunpack.c.l.b16 %v3231
        %v3900 = vunpack.c.h.b16 %v3231
        %v3901 = vunpack.c.l.b16 %v3232
        %v3902 = vunpack.c.h.b16 %v3232
        %v3903 = vunpack.c.l.b16 %v3233
        %v3904 = vunpack.c.h.b16 %v3233
        %v3905 = vunpack.c.l.b16 %v3234
        %v3906 = vunpack.c.h.b16 %v3234
        %v3907 = vunpack.c.l.b16 %v3235
        %v3908 = vunpack.c.l.b16 %v3236
        %v3909 = vunpack.c.h.b16 %v3236
        %v3910 = vunpack.c.l.b16 %v3237
        %v3911 = vunpack.c.h.b16 %v3237
        %v3912 = vunpack.c.l.b16 %v3238
        %v3913 = vunpack.c.h.b16 %v3238
        %v3914 = vunpack.c.l.b16 %v3239
        %v3915 = vunpack.c.h.b16 %v3239
        %v3916 = vunpack.c.l.b16 %v3240
        %v3917 = vunpack.c.l.b16 %v3241
        %v3918 = vunpack.c.h.b16 %v3241
        %v3919 = vunpack.c.l.b16 %v3242
        %v3920 = vunpack.c.h.b16 %v3242
        %v3921 = vunpack.c.l.b16 %v3243
        %v3922 = vunpack.c.h.b16 %v3243
        %v3923 = vunpack.c.l.b16 %v3244
        %v3924 = vunpack.c.h.b16 %v3244
        %v3925 = vunpack.c.l.b16 %v3245
        %v3926 = vunpack.c.l.b16 %v3246
        %v3927 = vunpack.c.h.b16 %v3246
        %v3928 = vunpack.c.l.b16 %v3247
        %v3929 = vunpack.c.h.b16 %v3247
        %v3930 = vunpack.c.l.b16 %v3248
        %v3931 = vunpack.c.h.b16 %v3248
        %v3932 = vunpack.c.l.b16 %v3249
        %v3933 = vunpack.c.h.b16 %v3249
        %v3934 = vunpack.c.l.b16 %v3250
        %v3935 = vunpack.c.l.b16 %v3251
        %v3936 = vunpack.c.h.b16 %v3251
        %v3937 = vunpack.c.l.b16 %v3252
        %v3938 = vunpack.c.h.b16 %v3252
        %v3939 = vunpack.c.l.b16 %v3253
        %v3940 = vunpack.c.h.b16 %v3253
        %v3941 = vunpack.c.l.b16 %v3254
        %v3942 = vunpack.c.h.b16 %v3254
        %v3943 = vunpack.c.l.b16 %v3255
        %v3944 = vunpack.c.l.b16 %v3256
        %v3945 = vunpack.c.h.b16 %v3256
        %v3946 = vunpack.c.l.b16 %v3257
        %v3947 = vunpack.c.h.b16 %v3257
        %v3948 = vunpack.c.l.b16 %v3258
        %v3949 = vunpack.c.h.b16 %v3258
        %v3950 = vunpack.c.l.b16 %v3259
        %v3951 = vunpack.c.h.b16 %v3259
        %v3952 = vunpack.c.l.b16 %v3260
        %v3953 = vunpack.c.l.b16 %v3261
        %v3954 = vunpack.c.h.b16 %v3261
        %v3955 = vunpack.c.l.b16 %v3262
        %v3956 = vunpack.c.h.b16 %v3262
        %v3957 = vunpack.c.l.b16 %v3263
        %v3958 = vunpack.c.h.b16 %v3263
        %v3959 = vunpack.c.l.b16 %v3264
        %v3960 = vunpack.c.h.b16 %v3264
        %v3961 = vunpack.c.l.b16 %v3265
        %v3962 = vunpack.c.l.b16 %v3266
        %v3963 = vunpack.c.h.b16 %v3266
        %v3964 = vunpack.c.l.b16 %v3267
        %v3965 = vunpack.c.h.b16 %v3267
        %v3966 = vunpack.c.l.b16 %v3268
        %v3967 = vunpack.c.h.b16 %v3268
        %v3968 = vunpack.c.l.b16 %v3269
        %v3969 = vunpack.c.h.b16 %v3269
        %v3970 = vunpack.c.l.b16 %v3270
        %v3971 = vunpack.c.l.b16 %v3271
        %v3972 = vunpack.c.h.b16 %v3271
        %v3973 = vunpack.c.l.b16 %v3272
        %v3974 = vunpack.c.h.b16 %v3272
        %v3975 = vunpack.c.l.b16 %v3273
        %v3976 = vunpack.c.h.b16 %v3273
        %v3977 = vunpack.c.l.b16 %v3274
        %v3978 = vunpack.c.h.b16 %v3274
        %v3979 = vunpack.c.l.b16 %v3275
        %v3980 = vunpack.c.l.b16 %v3276
        %v3981 = vunpack.c.h.b16 %v3276
        %v3982 = vunpack.c.l.b16 %v3277
        %v3983 = vunpack.c.h.b16 %v3277
        %v3984 = vunpack.c.l.b16 %v3278
        %v3985 = vunpack.c.h.b16 %v3278
        %v3986 = vunpack.c.l.b16 %v3279
        %v3987 = vunpack.c.h.b16 %v3279
        %v3988 = vunpack.c.l.b16 %v3280
        %v3989 = vunpack.c.l.b16 %v3281
        %v3990 = vunpack.c.h.b16 %v3281
        %v3991 = vunpack.c.l.b16 %v3282
        %v3992 = vunpack.c.h.b16 %v3282
        %v3993 = vunpack.c.l.b16 %v3283
        %v3994 = vunpack.c.h.b16 %v3283
        %v3995 = vunpack.c.l.b16 %v3284
        %v3996 = vunpack.c.h.b16 %v3284
        %v3997 = vunpack.c.l.b16 %v3285
        %v3998 = vunpack.c.l.b16 %v3286
        %v3999 = vunpack.c.h.b16 %v3286
        %v4000 = vunpack.c.l.b16 %v3287
        %v4001 = vunpack.c.h.b16 %v3287
        %v4002 = vunpack.c.l.b16 %v3288
        %v4003 = vunpack.c.h.b16 %v3288
        %v4004 = vunpack.c.l.b16 %v3289
        %v4005 = vunpack.c.h.b16 %v3289
        %v4006 = vunpack.c.l.b16 %v3290
        %v4007 = vunpack.c.l.b16 %v3291
        %v4008 = vunpack.c.h.b16 %v3291
        %v4009 = vunpack.c.l.b16 %v3292
        %v4010 = vunpack.c.h.b16 %v3292
        %v4011 = vunpack.c.l.b16 %v3293
        %v4012 = vunpack.c.h.b16 %v3293
        %v4013 = vunpack.c.l.b16 %v3294
        %v4014 = vunpack.c.h.b16 %v3294
        %v4015 = vunpack.c.l.b16 %v3295
        %v4016 = vunpack.c.l.b16 %v3296
        %v4017 = vunpack.c.h.b16 %v3296
        %v4018 = vunpack.c.l.b16 %v3297
        %v4019 = vunpack.c.h.b16 %v3297
        %v4020 = vunpack.c.l.b16 %v3298
        %v4021 = vunpack.c.h.b16 %v3298
        %v4022 = vunpack.c.l.b16 %v3299
        %v4023 = vunpack.c.h.b16 %v3299
        %v4024 = vunpack.c.l.b16 %v3300
        %v4025 = vunpack.c.l.b16 %v3301
        %v4026 = vunpack.c.h.b16 %v3301
        %v4027 = vunpack.c.l.b16 %v3302
        %v4028 = vunpack.c.h.b16 %v3302
        %v4029 = vunpack.c.l.b16 %v3303
        %v4030 = vunpack.c.h.b16 %v3303
        %v4031 = vunpack.c.l.b16 %v3304
        %v4032 = vunpack.c.h.b16 %v3304
        %v4033 = vunpack.c.l.b16 %v3305
        %v4034 = vunpack.c.l.b16 %v3306
        %v4035 = vunpack.c.h.b16 %v3306
        %v4036 = vunpack.c.l.b16 %v3307
        %v4037 = vunpack.c.h.b16 %v3307
        %v4038 = vunpack.c.l.b16 %v3308
        %v4039 = vunpack.c.h.b16 %v3308
        %v4040 = vunpack.c.l.b16 %v3309
        %v4041 = vunpack.c.h.b16 %v3309
        %v4042 = vunpack.c.l.b16 %v3310
        %v4043 = vunpack.c.l.b16 %v3311
        %v4044 = vunpack.c.h.b16 %v3311
        %v4045 = vunpack.c.l.b16 %v3312
        %v4046 = vunpack.c.h.b16 %v3312
        %v4047 = vunpack.c.l.b16 %v3313
        %v4048 = vunpack.c.h.b16 %v3313
        %v4049 = vunpack.c.l.b16 %v3314
        %v4050 = vunpack.c.h.b16 %v3314
        %v4051 = vunpack.c.l.b16 %v3315
        %v4052 = vpack.c.b16 %v3773, %v3764
        %v4053 = vpack.c.b16 %v3774, %v3765
        %v4054 = vpack.c.b16 %v3775, %v3766
        %v4055 = vpack.c.b16 %v3776, %v3767
        %v4056 = vpack.c.b16 %v3777, %v3768
        %v4057 = vpack.c.b16 %v3778, %v3769
        %v4058 = vpack.c.b16 %v3779, %v3770
        %v4059 = vpack.c.b16 %v3780, %v3771
        %v4060 = vpack.c.b16 %v3781, %v3772
        %v4061 = vpack.c.b16 %v3791, %v3782
        %v4062 = vpack.c.b16 %v3792, %v3783
        %v4063 = vpack.c.b16 %v3793, %v3784
        %v4064 = vpack.c.b16 %v3794, %v3785
        %v4065 = vpack.c.b16 %v3795, %v3786
        %v4066 = vpack.c.b16 %v3796, %v3787
        %v4067 = vpack.c.b16 %v3797, %v3788
        %v4068 = vpack.c.b16 %v3798, %v3789
        %v4069 = vpack.c.b16 %v3799, %v3790
        %v4070 = vpack.c.b16 %v3809, %v3800
        %v4071 = vpack.c.b16 %v3810, %v3801
        %v4072 = vpack.c.b16 %v3811, %v3802
        %v4073 = vpack.c.b16 %v3812, %v3803
        %v4074 = vpack.c.b16 %v3813, %v3804
        %v4075 = vpack.c.b16 %v3814, %v3805
        %v4076 = vpack.c.b16 %v3815, %v3806
        %v4077 = vpack.c.b16 %v3816, %v3807
        %v4078 = vpack.c.b16 %v3817, %v3808
        %v4079 = vpack.c.b16 %v3827, %v3818
        %v4080 = vpack.c.b16 %v3828, %v3819
        %v4081 = vpack.c.b16 %v3829, %v3820
        %v4082 = vpack.c.b16 %v3830, %v3821
        %v4083 = vpack.c.b16 %v3831, %v3822
        %v4084 = vpack.c.b16 %v3832, %v3823
        %v4085 = vpack.c.b16 %v3833, %v3824
        %v4086 = vpack.c.b16 %v3834, %v3825
        %v4087 = vpack.c.b16 %v3835, %v3826
        %v4088 = vpack.c.b16 %v3845, %v3836
        %v4089 = vpack.c.b16 %v3846, %v3837
        %v4090 = vpack.c.b16 %v3847, %v3838
        %v4091 = vpack.c.b16 %v3848, %v3839
        %v4092 = vpack.c.b16 %v3849, %v3840
        %v4093 = vpack.c.b16 %v3850, %v3841
        %v4094 = vpack.c.b16 %v3851, %v3842
        %v4095 = vpack.c.b16 %v3852, %v3843
        %v4096 = vpack.c.b16 %v3853, %v3844
        %v4097 = vpack.c.b16 %v3863, %v3854
        %v4098 = vpack.c.b16 %v3864, %v3855
        %v4099 = vpack.c.b16 %v3865, %v3856
        %v4100 = vpack.c.b16 %v3866, %v3857
        %v4101 = vpack.c.b16 %v3867, %v3858
        %v4102 = vpack.c.b16 %v3868, %v3859
        %v4103 = vpack.c.b16 %v3869, %v3860
        %v4104 = vpack.c.b16 %v3870, %v3861
        %v4105 = vpack.c.b16 %v3871, %v3862
        %v4106 = vpack.c.b16 %v3881, %v3872
        %v4107 = vpack.c.b16 %v3882, %v3873
        %v4108 = vpack.c.b16 %v3883, %v3874
        %v4109 = vpack.c.b16 %v3884, %v3875
        %v4110 = vpack.c.b16 %v3885, %v3876
        %v4111 = vpack.c.b16 %v3886, %v3877
        %v4112 = vpack.c.b16 %v3887, %v3878
        %v4113 = vpack.c.b16 %v3888, %v3879
        %v4114 = vpack.c.b16 %v3889, %v3880
        %v4115 = vpack.c.b16 %v3899, %v3890
        %v4116 = vpack.c.b16 %v3900, %v3891
        %v4117 = vpack.c.b16 %v3901, %v3892
        %v4118 = vpack.c.b16 %v3902, %v3893
        %v4119 = vpack.c.b16 %v3903, %v3894
        %v4120 = vpack.c.b16 %v3904, %v3895
        %v4121 = vpack.c.b16 %v3905, %v3896
        %v4122 = vpack.c.b16 %v3906, %v3897
        %v4123 = vpack.c.b16 %v3907, %v3898
        %v4124 = vpack.c.b16 %v3917, %v3908
        %v4125 = vpack.c.b16 %v3918, %v3909
        %v4126 = vpack.c.b16 %v3919, %v3910
        %v4127 = vpack.c.b16 %v3920, %v3911
        %v4128 = vpack.c.b16 %v3921, %v3912
        %v4129 = vpack.c.b16 %v3922, %v3913
        %v4130 = vpack.c.b16 %v3923, %v3914
        %v4131 = vpack.c.b16 %v3924, %v3915
        %v4132 = vpack.c.b16 %v3925, %v3916
        %v4133 = vpack.c.b16 %v3935, %v3926
        %v4134 = vpack.c.b16 %v3936, %v3927
        %v4135 = vpack.c.b16 %v3937, %v3928
        %v4136 = vpack.c.b16 %v3938, %v3929
        %v4137 = vpack.c.b16 %v3939, %v3930
        %v4138 = vpack.c.b16 %v3940, %v3931
        %v4139 = vpack.c.b16 %v3941, %v3932
        %v4140 = vpack.c.b16 %v3942, %v3933
        %v4141 = vpack.c.b16 %v3943, %v3934
        %v4142 = vpack.c.b16 %v3953, %v3944
        %v4143 = vpack.c.b16 %v3954, %v3945
        %v4144 = vpack.c.b16 %v3955, %v3946
        %v4145 = vpack.c.b16 %v3956, %v3947
        %v4146 = vpack.c.b16 %v3957, %v3948
        %v4147 = vpack.c.b16 %v3958, %v3949
        %v4148 = vpack.c.b16 %v3959, %v3950
        %v4149 = vpack.c.b16 %v3960, %v3951
        %v4150 = vpack.c.b16 %v3961, %v3952
        %v4151 = vpack.c.b16 %v3971, %v3962
        %v4152 = vpack.c.b16 %v3972, %v3963
        %v4153 = vpack.c.b16 %v3973, %v3964
        %v4154 = vpack.c.b16 %v3974, %v3965
        %v4155 = vpack.c.b16 %v3975, %v3966
        %v4156 = vpack.c.b16 %v3976, %v3967
        %v4157 = vpack.c.b16 %v3977, %v3968
        %v4158 = vpack.c.b16 %v3978, %v3969
        %v4159 = vpack.c.b16 %v3979, %v3970
        %v4160 = vpack.c.b16 %v3989, %v3980
        %v4161 = vpack.c.b16 %v3990, %v3981
        %v4162 = vpack.c.b16 %v3991, %v3982
        %v4163 = vpack.c.b16 %v3992, %v3983
        %v4164 = vpack.c.b16 %v3993, %v3984
        %v4165 = vpack.c.b16 %v3994, %v3985
        %v4166 = vpack.c.b16 %v3995, %v3986
        %v4167 = vpack.c.b16 %v3996, %v3987
        %v4168 = vpack.c.b16 %v3997, %v3988
        %v4169 = vpack.c.b16 %v4007, %v3998
        %v4170 = vpack.c.b16 %v4008, %v3999
        %v4171 = vpack.c.b16 %v4009, %v4000
        %v4172 = vpack.c.b16 %v4010, %v4001
        %v4173 = vpack.c.b16 %v4011, %v4002
        %v4174 = vpack.c.b16 %v4012, %v4003
        %v4175 = vpack.c.b16 %v4013, %v4004
        %v4176 = vpack.c.b16 %v4014, %v4005
        %v4177 = vpack.c.b16 %v4015, %v4006
        %v4178 = vpack.c.b16 %v4025, %v4016
        %v4179 = vpack.c.b16 %v4026, %v4017
        %v4180 = vpack.c.b16 %v4027, %v4018
        %v4181 = vpack.c.b16 %v4028, %v4019
        %v4182 = vpack.c.b16 %v4029, %v4020
        %v4183 = vpack.c.b16 %v4030, %v4021
        %v4184 = vpack.c.b16 %v4031, %v4022
        %v4185 = vpack.c.b16 %v4032, %v4023
        %v4186 = vpack.c.b16 %v4033, %v4024
        %v4187 = vpack.c.b16 %v4043, %v4034
        %v4188 = vpack.c.b16 %v4044, %v4035
        %v4189 = vpack.c.b16 %v4045, %v4036
        %v4190 = vpack.c.b16 %v4046, %v4037
        %v4191 = vpack.c.b16 %v4047, %v4038
        %v4192 = vpack.c.b16 %v4048, %v4039
        %v4193 = vpack.c.b16 %v4049, %v4040
        %v4194 = vpack.c.b16 %v4050, %v4041
        %v4195 = vpack.c.b16 %v4051, %v4042
        %v4628 = vunpack.c.l.b16 %v3316
        %v4629 = vunpack.c.h.b16 %v3316
        %v4630 = vunpack.c.l.b16 %v3317
        %v4631 = vunpack.c.h.b16 %v3317
        %v4632 = vunpack.c.l.b16 %v3318
        %v4633 = vunpack.c.h.b16 %v3318
        %v4634 = vunpack.c.l.b16 %v3319
        %v4635 = vunpack.c.h.b16 %v3319
        %v4636 = vunpack.c.l.b16 %v3320
        %v4637 = vunpack.c.h.b16 %v3320
        %v4638 = vunpack.c.l.b16 %v3321
        %v4639 = vunpack.c.h.b16 %v3321
        %v4640 = vunpack.c.l.b16 %v3322
        %v4641 = vunpack.c.h.b16 %v3322
        %v4642 = vunpack.c.l.b16 %v3323
        %v4643 = vunpack.c.h.b16 %v3323
        %v4644 = vunpack.c.l.b16 %v3324
        %v4645 = vunpack.c.h.b16 %v3324
        %v4646 = vunpack.c.l.b16 %v3325
        %v4647 = vunpack.c.h.b16 %v3325
        %v4648 = vunpack.c.l.b16 %v3326
        %v4649 = vunpack.c.h.b16 %v3326
        %v4650 = vunpack.c.l.b16 %v3327
        %v4651 = vunpack.c.h.b16 %v3327
        %v4652 = vunpack.c.l.b16 %v3328
        %v4653 = vunpack.c.h.b16 %v3328
        %v4654 = vunpack.c.l.b16 %v3329
        %v4655 = vunpack.c.h.b16 %v3329
        %v4656 = vunpack.c.l.b16 %v3330
        %v4657 = vunpack.c.h.b16 %v3330
        %v4658 = vunpack.c.l.b16 %v3331
        %v4659 = vunpack.c.h.b16 %v3331
        %v4660 = vunpack.c.l.b16 %v3332
        %v4661 = vunpack.c.h.b16 %v3332
        %v4662 = vunpack.c.l.b16 %v3333
        %v4663 = vunpack.c.h.b16 %v3333
        %v4664 = vunpack.c.l.b16 %v3334
        %v4665 = vunpack.c.h.b16 %v3334
        %v4666 = vunpack.c.l.b16 %v3335
        %v4667 = vunpack.c.h.b16 %v3335
        %v4668 = vunpack.c.l.b16 %v3336
        %v4669 = vunpack.c.h.b16 %v3336
        %v4670 = vunpack.c.l.b16 %v3337
        %v4671 = vunpack.c.h.b16 %v3337
        %v4672 = vunpack.c.l.b16 %v3338
        %v4673 = vunpack.c.h.b16 %v3338
        %v4674 = vunpack.c.l.b16 %v3339
        %v4675 = vunpack.c.h.b16 %v3339
        %v4676 = vunpack.c.l.b16 %v3340
        %v4677 = vunpack.c.h.b16 %v3340
        %v4678 = vunpack.c.l.b16 %v3341
        %v4679 = vunpack.c.h.b16 %v3341
        %v4680 = vunpack.c.l.b16 %v3342
        %v4681 = vunpack.c.h.b16 %v3342
        %v4682 = vunpack.c.l.b16 %v3343
        %v4683 = vunpack.c.h.b16 %v3343
        %v4684 = vunpack.c.l.b16 %v3344
        %v4685 = vunpack.c.h.b16 %v3344
        %v4686 = vunpack.c.l.b16 %v3345
        %v4687 = vunpack.c.h.b16 %v3345
        %v4688 = vunpack.c.l.b16 %v3346
        %v4689 = vunpack.c.h.b16 %v3346
        %v4690 = vunpack.c.l.b16 %v3347
        %v4691 = vunpack.c.h.b16 %v3347
        %v4692 = vunpack.c.l.b16 %v3348
        %v4693 = vunpack.c.h.b16 %v3348
        %v4694 = vunpack.c.l.b16 %v3349
        %v4695 = vunpack.c.h.b16 %v3349
        %v4696 = vunpack.c.l.b16 %v3350
        %v4697 = vunpack.c.h.b16 %v3350
        %v4698 = vunpack.c.l.b16 %v3351
        %v4699 = vunpack.c.h.b16 %v3351
        %v4700 = vunpack.c.l.b16 %v3352
        %v4701 = vunpack.c.h.b16 %v3352
        %v4702 = vunpack.c.l.b16 %v3353
        %v4703 = vunpack.c.h.b16 %v3353
        %v4704 = vunpack.c.l.b16 %v3354
        %v4705 = vunpack.c.h.b16 %v3354
        %v4706 = vunpack.c.l.b16 %v3355
        %v4707 = vunpack.c.h.b16 %v3355
        %v4708 = vunpack.c.l.b16 %v3356
        %v4709 = vunpack.c.h.b16 %v3356
        %v4710 = vunpack.c.l.b16 %v3357
        %v4711 = vunpack.c.h.b16 %v3357
        %v4712 = vunpack.c.l.b16 %v3358
        %v4713 = vunpack.c.h.b16 %v3358
        %v4714 = vunpack.c.l.b16 %v3359
        %v4715 = vunpack.c.h.b16 %v3359
        %v4716 = vunpack.c.l.b16 %v3360
        %v4717 = vunpack.c.h.b16 %v3360
        %v4718 = vunpack.c.l.b16 %v3361
        %v4719 = vunpack.c.h.b16 %v3361
        %v4720 = vunpack.c.l.b16 %v3362
        %v4721 = vunpack.c.h.b16 %v3362
        %v4722 = vunpack.c.l.b16 %v3363
        %v4723 = vunpack.c.h.b16 %v3363
        %v4724 = vunpack.c.l.b16 %v3364
        %v4725 = vunpack.c.h.b16 %v3364
        %v4726 = vunpack.c.l.b16 %v3365
        %v4727 = vunpack.c.h.b16 %v3365
        %v4728 = vunpack.c.l.b16 %v3366
        %v4729 = vunpack.c.h.b16 %v3366
        %v4730 = vunpack.c.l.b16 %v3367
        %v4731 = vunpack.c.h.b16 %v3367
        %v4732 = vunpack.c.l.b16 %v3368
        %v4733 = vunpack.c.h.b16 %v3368
        %v4734 = vunpack.c.l.b16 %v3369
        %v4735 = vunpack.c.h.b16 %v3369
        %v4736 = vunpack.c.l.b16 %v3370
        %v4737 = vunpack.c.h.b16 %v3370
        %v4738 = vunpack.c.l.b16 %v3371
        %v4739 = vunpack.c.h.b16 %v3371
        %v4740 = vunpack.c.l.b16 %v3372
        %v4741 = vunpack.c.h.b16 %v3372
        %v4742 = vunpack.c.l.b16 %v3373
        %v4743 = vunpack.c.h.b16 %v3373
        %v4744 = vunpack.c.l.b16 %v3374
        %v4745 = vunpack.c.h.b16 %v3374
        %v4746 = vunpack.c.l.b16 %v3375
        %v4747 = vunpack.c.h.b16 %v3375
        %v4748 = vunpack.c.l.b16 %v3376
        %v4749 = vunpack.c.h.b16 %v3376
        %v4750 = vunpack.c.l.b16 %v3377
        %v4751 = vunpack.c.h.b16 %v3377
        %v4752 = vunpack.c.l.b16 %v3378
        %v4753 = vunpack.c.h.b16 %v3378
        %v4754 = vunpack.c.l.b16 %v3379
        %v4755 = vunpack.c.h.b16 %v3379
        %v4756 = vunpack.c.l.b16 %v3380
        %v4757 = vunpack.c.h.b16 %v3380
        %v4758 = vunpack.c.l.b16 %v3381
        %v4759 = vunpack.c.h.b16 %v3381
        %v4760 = vunpack.c.l.b16 %v3382
        %v4761 = vunpack.c.h.b16 %v3382
        %v4762 = vunpack.c.l.b16 %v3383
        %v4763 = vunpack.c.h.b16 %v3383
        %v4764 = vunpack.c.l.b16 %v3384
        %v4765 = vunpack.c.h.b16 %v3384
        %v4766 = vunpack.c.l.b16 %v3385
        %v4767 = vunpack.c.h.b16 %v3385
        %v4768 = vunpack.c.l.b16 %v3386
        %v4769 = vunpack.c.h.b16 %v3386
        %v4770 = vunpack.c.l.b16 %v3387
        %v4771 = vunpack.c.h.b16 %v3387
        %v4772 = vunpack.c.l.b16 %v3388
        %v4773 = vunpack.c.h.b16 %v3388
        %v4774 = vunpack.c.l.b16 %v3389
        %v4775 = vunpack.c.h.b16 %v3389
        %v4776 = vunpack.c.l.b16 %v3390
        %v4777 = vunpack.c.h.b16 %v3390
        %v4778 = vunpack.c.l.b16 %v3391
        %v4779 = vunpack.c.h.b16 %v3391
        %v4780 = vunpack.c.l.b16 %v3392
        %v4781 = vunpack.c.h.b16 %v3392
        %v4782 = vunpack.c.l.b16 %v3393
        %v4783 = vunpack.c.h.b16 %v3393
        %v4784 = vunpack.c.l.b16 %v3394
        %v4785 = vunpack.c.h.b16 %v3394
        %v4786 = vunpack.c.l.b16 %v3395
        %v4787 = vunpack.c.h.b16 %v3395
        %v4788 = vunpack.c.l.b16 %v3396
        %v4789 = vunpack.c.h.b16 %v3396
        %v4790 = vunpack.c.l.b16 %v3397
        %v4791 = vunpack.c.h.b16 %v3397
        %v4792 = vunpack.c.l.b16 %v3398
        %v4793 = vunpack.c.h.b16 %v3398
        %v4794 = vunpack.c.l.b16 %v3399
        %v4795 = vunpack.c.h.b16 %v3399
        %v4796 = vunpack.c.l.b16 %v3400
        %v4797 = vunpack.c.h.b16 %v3400
        %v4798 = vunpack.c.l.b16 %v3401
        %v4799 = vunpack.c.h.b16 %v3401
        %v4800 = vunpack.c.l.b16 %v3402
        %v4801 = vunpack.c.h.b16 %v3402
        %v4802 = vunpack.c.l.b16 %v3403
        %v4803 = vunpack.c.h.b16 %v3403
        %v4804 = vunpack.c.l.b16 %v3404
        %v4805 = vunpack.c.h.b16 %v3404
        %v4806 = vunpack.c.l.b16 %v3405
        %v4807 = vunpack.c.h.b16 %v3405
        %v4808 = vunpack.c.l.b16 %v3406
        %v4809 = vunpack.c.h.b16 %v3406
        %v4810 = vunpack.c.l.b16 %v3407
        %v4811 = vunpack.c.h.b16 %v3407
        %v4812 = vunpack.c.l.b16 %v3408
        %v4813 = vunpack.c.h.b16 %v3408
        %v4814 = vunpack.c.l.b16 %v3409
        %v4815 = vunpack.c.h.b16 %v3409
        %v4816 = vunpack.c.l.b16 %v3410
        %v4817 = vunpack.c.h.b16 %v3410
        %v4818 = vunpack.c.l.b16 %v3411
        %v4819 = vunpack.c.h.b16 %v3411
        %v4820 = vunpack.c.l.b16 %v3412
        %v4821 = vunpack.c.h.b16 %v3412
        %v4822 = vunpack.c.l.b16 %v3413
        %v4823 = vunpack.c.h.b16 %v3413
        %v4824 = vunpack.c.l.b16 %v3414
        %v4825 = vunpack.c.h.b16 %v3414
        %v4826 = vunpack.c.l.b16 %v3415
        %v4827 = vunpack.c.h.b16 %v3415
        %v4828 = vunpack.c.l.b16 %v3416
        %v4829 = vunpack.c.h.b16 %v3416
        %v4830 = vunpack.c.l.b16 %v3417
        %v4831 = vunpack.c.h.b16 %v3417
        %v4832 = vunpack.c.l.b16 %v3418
        %v4833 = vunpack.c.h.b16 %v3418
        %v4834 = vunpack.c.l.b16 %v3419
        %v4835 = vunpack.c.h.b16 %v3419
        %v4836 = vunpack.c.l.b16 %v3420
        %v4837 = vunpack.c.h.b16 %v3420
        %v4838 = vunpack.c.l.b16 %v3421
        %v4839 = vunpack.c.h.b16 %v3421
        %v4840 = vunpack.c.l.b16 %v3422
        %v4841 = vunpack.c.h.b16 %v3422
        %v4842 = vunpack.c.l.b16 %v3423
        %v4843 = vunpack.c.h.b16 %v3423
        %v4844 = vunpack.c.l.b16 %v3424
        %v4845 = vunpack.c.h.b16 %v3424
        %v4846 = vunpack.c.l.b16 %v3425
        %v4847 = vunpack.c.h.b16 %v3425
        %v4848 = vunpack.c.l.b16 %v3426
        %v4849 = vunpack.c.h.b16 %v3426
        %v4850 = vunpack.c.l.b16 %v3427
        %v4851 = vunpack.c.h.b16 %v3427
        %v4852 = vunpack.c.l.b16 %v3428
        %v4853 = vunpack.c.h.b16 %v3428
        %v4854 = vunpack.c.l.b16 %v3429
        %v4855 = vunpack.c.h.b16 %v3429
        %v4856 = vunpack.c.l.b16 %v3430
        %v4857 = vunpack.c.h.b16 %v3430
        %v4858 = vunpack.c.l.b16 %v3431
        %v4859 = vunpack.c.h.b16 %v3431
        %v4860 = vunpack.c.l.b16 %v3432
        %v4861 = vunpack.c.h.b16 %v3432
        %v4862 = vunpack.c.l.b16 %v3433
        %v4863 = vunpack.c.h.b16 %v3433
        %v4864 = vunpack.c.l.b16 %v3434
        %v4865 = vunpack.c.h.b16 %v3434
        %v4866 = vunpack.c.l.b16 %v3435
        %v4867 = vunpack.c.h.b16 %v3435
        %v4868 = vunpack.c.l.b16 %v3436
        %v4869 = vunpack.c.h.b16 %v3436
        %v4870 = vunpack.c.l.b16 %v3437
        %v4871 = vunpack.c.h.b16 %v3437
        %v4872 = vunpack.c.l.b16 %v3438
        %v4873 = vunpack.c.h.b16 %v3438
        %v4874 = vunpack.c.l.b16 %v3439
        %v4875 = vunpack.c.h.b16 %v3439
        %v4876 = vunpack.c.l.b16 %v3440
        %v4877 = vunpack.c.h.b16 %v3440
        %v4878 = vunpack.c.l.b16 %v3441
        %v4879 = vunpack.c.h.b16 %v3441
        %v4880 = vunpack.c.l.b16 %v3442
        %v4881 = vunpack.c.h.b16 %v3442
        %v4882 = vunpack.c.l.b16 %v3443
        %v4883 = vunpack.c.h.b16 %v3443
        %v4884 = vunpack.c.l.b16 %v3444
        %v4885 = vunpack.c.h.b16 %v3444
        %v4886 = vunpack.c.l.b16 %v3445
        %v4887 = vunpack.c.h.b16 %v3445
        %v4888 = vunpack.c.l.b16 %v3446
        %v4889 = vunpack.c.h.b16 %v3446
        %v4890 = vunpack.c.l.b16 %v3447
        %v4891 = vunpack.c.h.b16 %v3447
        %v4892 = vunpack.c.l.b16 %v3448
        %v4893 = vunpack.c.h.b16 %v3448
        %v4894 = vunpack.c.l.b16 %v3449
        %v4895 = vunpack.c.h.b16 %v3449
        %v4896 = vunpack.c.l.b16 %v3450
        %v4897 = vunpack.c.h.b16 %v3450
        %v4898 = vunpack.c.l.b16 %v3451
        %v4899 = vunpack.c.h.b16 %v3451
        %v4900 = vunpack.c.l.b16 %v3452
        %v4901 = vunpack.c.h.b16 %v3452
        %v4902 = vunpack.c.l.b16 %v3453
        %v4903 = vunpack.c.h.b16 %v3453
        %v4904 = vunpack.c.l.b16 %v3454
        %v4905 = vunpack.c.h.b16 %v3454
        %v4906 = vunpack.c.l.b16 %v3455
        %v4907 = vunpack.c.h.b16 %v3455
        %v4908 = vunpack.c.l.b16 %v3456
        %v4909 = vunpack.c.h.b16 %v3456
        %v4910 = vunpack.c.l.b16 %v3457
        %v4911 = vunpack.c.h.b16 %v3457
        %v4912 = vunpack.c.l.b16 %v3458
        %v4913 = vunpack.c.h.b16 %v3458
        %v4914 = vunpack.c.l.b16 %v3459
        %v4915 = vunpack.c.h.b16 %v3459
        %v4916 = vunpack.c.l.b16 %v3460
        %v4917 = vunpack.c.h.b16 %v3460
        %v4918 = vunpack.c.l.b16 %v3461
        %v4919 = vunpack.c.h.b16 %v3461
        %v4920 = vunpack.c.l.b16 %v3462
        %v4921 = vunpack.c.h.b16 %v3462
        %v4922 = vunpack.c.l.b16 %v3463
        %v4923 = vunpack.c.h.b16 %v3463
        %v4924 = vunpack.c.l.b16 %v3464
        %v4925 = vunpack.c.h.b16 %v3464
        %v4926 = vunpack.c.l.b16 %v3465
        %v4927 = vunpack.c.h.b16 %v3465
        %v4928 = vunpack.c.l.b16 %v3466
        %v4929 = vunpack.c.h.b16 %v3466
        %v4930 = vunpack.c.l.b16 %v3467
        %v4931 = vunpack.c.h.b16 %v3467
        %v4932 = vunpack.c.l.b16 %v3468
        %v4933 = vunpack.c.h.b16 %v3468
        %v4934 = vunpack.c.l.b16 %v3469
        %v4935 = vunpack.c.h.b16 %v3469
        %v4936 = vunpack.c.l.b16 %v3470
        %v4937 = vunpack.c.h.b16 %v3470
        %v4938 = vunpack.c.l.b16 %v3471
        %v4939 = vunpack.c.h.b16 %v3471
        %v4940 = vunpack.c.l.b16 %v3472
        %v4941 = vunpack.c.h.b16 %v3472
        %v4942 = vunpack.c.l.b16 %v3473
        %v4943 = vunpack.c.h.b16 %v3473
        %v4944 = vunpack.c.l.b16 %v3474
        %v4945 = vunpack.c.h.b16 %v3474
        %v4946 = vunpack.c.l.b16 %v3475
        %v4947 = vunpack.c.h.b16 %v3475
        %v4948 = vunpack.c.l.b16 %v3476
        %v4949 = vunpack.c.h.b16 %v3476
        %v4950 = vunpack.c.l.b16 %v3477
        %v4951 = vunpack.c.h.b16 %v3477
        %v4952 = vunpack.c.l.b16 %v3478
        %v4953 = vunpack.c.h.b16 %v3478
        %v4954 = vunpack.c.l.b16 %v3479
        %v4955 = vunpack.c.h.b16 %v3479
        %v4956 = vunpack.c.l.b16 %v3480
        %v4957 = vunpack.c.h.b16 %v3480
        %v4958 = vunpack.c.l.b16 %v3481
        %v4959 = vunpack.c.h.b16 %v3481
        %v4960 = vunpack.c.l.b16 %v3482
        %v4961 = vunpack.c.h.b16 %v3482
        %v4962 = vunpack.c.l.b16 %v3483
        %v4963 = vunpack.c.h.b16 %v3483
        %v4964 = vunpack.c.l.b16 %v3484
        %v4965 = vunpack.c.h.b16 %v3484
        %v4966 = vunpack.c.l.b16 %v3485
        %v4967 = vunpack.c.h.b16 %v3485
        %v4968 = vunpack.c.l.b16 %v3486
        %v4969 = vunpack.c.h.b16 %v3486
        %v4970 = vunpack.c.l.b16 %v3487
        %v4971 = vunpack.c.h.b16 %v3487
        %v4972 = vunpack.c.l.b16 %v3488
        %v4973 = vunpack.c.h.b16 %v3488
        %v4974 = vunpack.c.l.b16 %v3489
        %v4975 = vunpack.c.h.b16 %v3489
        %v4976 = vunpack.c.l.b16 %v3490
        %v4977 = vunpack.c.h.b16 %v3490
        %v4978 = vunpack.c.l.b16 %v3491
        %v4979 = vunpack.c.h.b16 %v3491
        %v4980 = vunpack.c.l.b16 %v3492
        %v4981 = vunpack.c.h.b16 %v3492
        %v4982 = vunpack.c.l.b16 %v3493
        %v4983 = vunpack.c.h.b16 %v3493
        %v4984 = vunpack.c.l.b16 %v3494
        %v4985 = vunpack.c.h.b16 %v3494
        %v4986 = vunpack.c.l.b16 %v3495
        %v4987 = vunpack.c.h.b16 %v3495
        %v4988 = vunpack.c.l.b16 %v3496
        %v4989 = vunpack.c.h.b16 %v3496
        %v4990 = vunpack.c.l.b16 %v3497
        %v4991 = vunpack.c.h.b16 %v3497
        %v4992 = vunpack.c.l.b16 %v3498
        %v4993 = vunpack.c.h.b16 %v3498
        %v4994 = vunpack.c.l.b16 %v3499
        %v4995 = vunpack.c.h.b16 %v3499
        %v4996 = vunpack.c.l.b16 %v3500
        %v4997 = vunpack.c.h.b16 %v3500
        %v4998 = vunpack.c.l.b16 %v3501
        %v4999 = vunpack.c.h.b16 %v3501
        %v5000 = vunpack.c.l.b16 %v3502
        %v5001 = vunpack.c.h.b16 %v3502
        %v5002 = vunpack.c.l.b16 %v3503
        %v5003 = vunpack.c.h.b16 %v3503
        %v5004 = vunpack.c.l.b16 %v3504
        %v5005 = vunpack.c.h.b16 %v3504
        %v5006 = vunpack.c.l.b16 %v3505
        %v5007 = vunpack.c.h.b16 %v3505
        %v5008 = vunpack.c.l.b16 %v3506
        %v5009 = vunpack.c.h.b16 %v3506
        %v5010 = vunpack.c.l.b16 %v3507
        %v5011 = vunpack.c.h.b16 %v3507
        %v5012 = vunpack.c.l.b16 %v3508
        %v5013 = vunpack.c.h.b16 %v3508
        %v5014 = vunpack.c.l.b16 %v3509
        %v5015 = vunpack.c.h.b16 %v3509
        %v5016 = vunpack.c.l.b16 %v3510
        %v5017 = vunpack.c.h.b16 %v3510
        %v5018 = vunpack.c.l.b16 %v3511
        %v5019 = vunpack.c.h.b16 %v3511
        %v5020 = vunpack.c.l.b16 %v3512
        %v5021 = vunpack.c.h.b16 %v3512
        %v5022 = vunpack.c.l.b16 %v3513
        %v5023 = vunpack.c.h.b16 %v3513
        %v5024 = vunpack.c.l.b16 %v3514
        %v5025 = vunpack.c.h.b16 %v3514
        %v5026 = vunpack.c.l.b16 %v3515
        %v5027 = vunpack.c.h.b16 %v3515
        %v5028 = vunpack.c.l.b16 %v3516
        %v5029 = vunpack.c.h.b16 %v3516
        %v5030 = vunpack.c.l.b16 %v3517
        %v5031 = vunpack.c.h.b16 %v3517
        %v5032 = vunpack.c.l.b16 %v3518
        %v5033 = vunpack.c.h.b16 %v3518
        %v5034 = vunpack.c.l.b16 %v3519
        %v5035 = vunpack.c.h.b16 %v3519
        %v5036 = vunpack.c.l.b16 %v3520
        %v5037 = vunpack.c.h.b16 %v3520
        %v5038 = vunpack.c.l.b16 %v3521
        %v5039 = vunpack.c.h.b16 %v3521
        %v5040 = vunpack.c.l.b16 %v3522
        %v5041 = vunpack.c.h.b16 %v3522
        %v5042 = vunpack.c.l.b16 %v3523
        %v5043 = vunpack.c.h.b16 %v3523
        %v5044 = vunpack.c.l.b16 %v3524
        %v5045 = vunpack.c.h.b16 %v3524
        %v5046 = vunpack.c.l.b16 %v3525
        %v5047 = vunpack.c.h.b16 %v3525
        %v5048 = vunpack.c.l.b16 %v3526
        %v5049 = vunpack.c.h.b16 %v3526
        %v5050 = vunpack.c.l.b16 %v3527
        %v5051 = vunpack.c.h.b16 %v3527
        %v5052 = vunpack.c.l.b16 %v3528
        %v5053 = vunpack.c.h.b16 %v3528
        %v5054 = vunpack.c.l.b16 %v3529
        %v5055 = vunpack.c.h.b16 %v3529
        %v5056 = vunpack.c.l.b16 %v3530
        %v5057 = vunpack.c.h.b16 %v3530
        %v5058 = vunpack.c.l.b16 %v3531
        %v5059 = vunpack.c.h.b16 %v3531
        %v5060 = vunpack.c.l.b16 %v3532
        %v5061 = vunpack.c.h.b16 %v3532
        %v5062 = vunpack.c.l.b16 %v3533
        %v5063 = vunpack.c.h.b16 %v3533
        %v5064 = vunpack.c.l.b16 %v3534
        %v5065 = vunpack.c.h.b16 %v3534
        %v5066 = vunpack.c.l.b16 %v3535
        %v5067 = vunpack.c.h.b16 %v3535
        %v5068 = vunpack.c.l.b16 %v3536
        %v5069 = vunpack.c.h.b16 %v3536
        %v5070 = vunpack.c.l.b16 %v3537
        %v5071 = vunpack.c.h.b16 %v3537
        %v5072 = vunpack.c.l.b16 %v3538
        %v5073 = vunpack.c.h.b16 %v3538
        %v5074 = vunpack.c.l.b16 %v3539
        %v5075 = vunpack.c.h.b16 %v3539
        %v5076 = vunpack.c.l.b16 %v3540
        %v5077 = vunpack.c.h.b16 %v3540
        %v5078 = vunpack.c.l.b16 %v3541
        %v5079 = vunpack.c.h.b16 %v3541
        %v5080 = vunpack.c.l.b16 %v3542
        %v5081 = vunpack.c.h.b16 %v3542
        %v5082 = vunpack.c.l.b16 %v3543
        %v5083 = vunpack.c.h.b16 %v3543
        %v5084 = vunpack.c.l.b16 %v3544
        %v5085 = vunpack.c.h.b16 %v3544
        %v5086 = vunpack.c.l.b16 %v3545
        %v5087 = vunpack.c.h.b16 %v3545
        %v5088 = vunpack.c.l.b16 %v3546
        %v5089 = vunpack.c.h.b16 %v3546
        %v5090 = vunpack.c.l.b16 %v3547
        %v5091 = vunpack.c.h.b16 %v3547
        %v5092 = vunpack.c.l.b16 %v3548
        %v5093 = vunpack.c.h.b16 %v3548
        %v5094 = vunpack.c.l.b16 %v3549
        %v5095 = vunpack.c.h.b16 %v3549
        %v5096 = vunpack.c.l.b16 %v3550
        %v5097 = vunpack.c.h.b16 %v3550
        %v5098 = vunpack.c.l.b16 %v3551
        %v5099 = vunpack.c.h.b16 %v3551
        %v5100 = vunpack.c.l.b16 %v3552
        %v5101 = vunpack.c.h.b16 %v3552
        %v5102 = vunpack.c.l.b16 %v3553
        %v5103 = vunpack.c.h.b16 %v3553
        %v5104 = vunpack.c.l.b16 %v3554
        %v5105 = vunpack.c.h.b16 %v3554
        %v5106 = vunpack.c.l.b16 %v3555
        %v5107 = vunpack.c.h.b16 %v3555
        %v5108 = vunpack.c.l.b16 %v3556
        %v5109 = vunpack.c.h.b16 %v3556
        %v5110 = vunpack.c.l.b16 %v3557
        %v5111 = vunpack.c.h.b16 %v3557
        %v5112 = vunpack.c.l.b16 %v3558
        %v5113 = vunpack.c.h.b16 %v3558
        %v5114 = vunpack.c.l.b16 %v3559
        %v5115 = vunpack.c.h.b16 %v3559
        %v5116 = vunpack.c.l.b16 %v3560
        %v5117 = vunpack.c.h.b16 %v3560
        %v5118 = vunpack.c.l.b16 %v3561
        %v5119 = vunpack.c.h.b16 %v3561
        %v5120 = vunpack.c.l.b16 %v3562
        %v5121 = vunpack.c.h.b16 %v3562
        %v5122 = vunpack.c.l.b16 %v3563
        %v5123 = vunpack.c.h.b16 %v3563
        %v5124 = vunpack.c.l.b16 %v3564
        %v5125 = vunpack.c.h.b16 %v3564
        %v5126 = vunpack.c.l.b16 %v3565
        %v5127 = vunpack.c.h.b16 %v3565
        %v5128 = vunpack.c.l.b16 %v3566
        %v5129 = vunpack.c.h.b16 %v3566
        %v5130 = vunpack.c.l.b16 %v3567
        %v5131 = vunpack.c.h.b16 %v3567
        %v5132 = vunpack.c.l.b16 %v3568
        %v5133 = vunpack.c.h.b16 %v3568
        %v5134 = vunpack.c.l.b16 %v3569
        %v5135 = vunpack.c.h.b16 %v3569
        %v5136 = vunpack.c.l.b16 %v3570
        %v5137 = vunpack.c.h.b16 %v3570
        %v5138 = vunpack.c.l.b16 %v3571
        %v5139 = vunpack.c.h.b16 %v3571
        %v5140 = vunpack.c.l.b16 %v3572
        %v5141 = vunpack.c.h.b16 %v3572
        %v5142 = vunpack.c.l.b16 %v3573
        %v5143 = vunpack.c.h.b16 %v3573
        %v5144 = vunpack.c.l.b16 %v3574
        %v5145 = vunpack.c.h.b16 %v3574
        %v5146 = vunpack.c.l.b16 %v3575
        %v5147 = vunpack.c.h.b16 %v3575
        %v5148 = vunpack.c.l.b16 %v3576
        %v5149 = vunpack.c.h.b16 %v3576
        %v5150 = vunpack.c.l.b16 %v3577
        %v5151 = vunpack.c.h.b16 %v3577
        %v5152 = vunpack.c.l.b16 %v3578
        %v5153 = vunpack.c.h.b16 %v3578
        %v5154 = vunpack.c.l.b16 %v3579
        %v5155 = vunpack.c.h.b16 %v3579
        %v5156 = vunpack.c.l.b16 %v3580
        %v5157 = vunpack.c.h.b16 %v3580
        %v5158 = vunpack.c.l.b16 %v3581
        %v5159 = vunpack.c.h.b16 %v3581
        %v5160 = vunpack.c.l.b16 %v3582
        %v5161 = vunpack.c.h.b16 %v3582
        %v5162 = vunpack.c.l.b16 %v3583
        %v5163 = vunpack.c.h.b16 %v3583
        %v5164 = vunpack.c.l.b16 %v3584
        %v5165 = vunpack.c.h.b16 %v3584
        %v5166 = vunpack.c.l.b16 %v3585
        %v5167 = vunpack.c.h.b16 %v3585
        %v5168 = vunpack.c.l.b16 %v3586
        %v5169 = vunpack.c.h.b16 %v3586
        %v5170 = vunpack.c.l.b16 %v3587
        %v5171 = vunpack.c.h.b16 %v3587
        %v5172 = vunpack.c.l.b16 %v3588
        %v5173 = vunpack.c.h.b16 %v3588
        %v5174 = vunpack.c.l.b16 %v3589
        %v5175 = vunpack.c.h.b16 %v3589
        %v5176 = vunpack.c.l.b16 %v3590
        %v5177 = vunpack.c.h.b16 %v3590
        %v5178 = vunpack.c.l.b16 %v3591
        %v5179 = vunpack.c.h.b16 %v3591
        %v5180 = vunpack.c.l.b16 %v3592
        %v5181 = vunpack.c.h.b16 %v3592
        %v5182 = vunpack.c.l.b16 %v3593
        %v5183 = vunpack.c.h.b16 %v3593
        %v5184 = vunpack.c.l.b16 %v3594
        %v5185 = vunpack.c.h.b16 %v3594
        %v5186 = vunpack.c.l.b16 %v3595
        %v5187 = vunpack.c.h.b16 %v3595
        %v5188 = vunpack.c.l.b16 %v3596
        %v5189 = vunpack.c.h.b16 %v3596
        %v5190 = vunpack.c.l.b16 %v3597
        %v5191 = vunpack.c.h.b16 %v3597
        %v5192 = vunpack.c.l.b16 %v3598
        %v5193 = vunpack.c.h.b16 %v3598
        %v5194 = vunpack.c.l.b16 %v3599
        %v5195 = vunpack.c.h.b16 %v3599
        %v5196 = vunpack.c.l.b16 %v3600
        %v5197 = vunpack.c.h.b16 %v3600
        %v5198 = vunpack.c.l.b16 %v3601
        %v5199 = vunpack.c.h.b16 %v3601
        %v5200 = vunpack.c.l.b16 %v3602
        %v5201 = vunpack.c.h.b16 %v3602
        %v5202 = vunpack.c.l.b16 %v3603
        %v5203 = vunpack.c.h.b16 %v3603
        %v5204 = vpack.c.b16 %v4632, %v4628
        %v5205 = vpack.c.b16 %v4633, %v4629
        %v5206 = vpack.c.b16 %v4634, %v4630
        %v5207 = vpack.c.b16 %v4635, %v4631
        %v5208 = vpack.c.b16 %v4640, %v4636
        %v5209 = vpack.c.b16 %v4641, %v4637
        %v5210 = vpack.c.b16 %v4642, %v4638
        %v5211 = vpack.c.b16 %v4643, %v4639
        %v5212 = vpack.c.b16 %v4648, %v4644
        %v5213 = vpack.c.b16 %v4649, %v4645
        %v5214 = vpack.c.b16 %v4650, %v4646
        %v5215 = vpack.c.b16 %v4651, %v4647
        %v5216 = vpack.c.b16 %v4656, %v4652
        %v5217 = vpack.c.b16 %v4657, %v4653
        %v5218 = vpack.c.b16 %v4658, %v4654
        %v5219 = vpack.c.b16 %v4659, %v4655
        %v5220 = vpack.c.b16 %v4664, %v4660
        %v5221 = vpack.c.b16 %v4665, %v4661
        %v5222 = vpack.c.b16 %v4666, %v4662
        %v5223 = vpack.c.b16 %v4667, %v4663
        %v5224 = vpack.c.b16 %v4672, %v4668
        %v5225 = vpack.c.b16 %v4673, %v4669
        %v5226 = vpack.c.b16 %v4674, %v4670
        %v5227 = vpack.c.b16 %v4675, %v4671
        %v5228 = vpack.c.b16 %v4680, %v4676
        %v5229 = vpack.c.b16 %v4681, %v4677
        %v5230 = vpack.c.b16 %v4682, %v4678
        %v5231 = vpack.c.b16 %v4683, %v4679
        %v5232 = vpack.c.b16 %v4688, %v4684
        %v5233 = vpack.c.b16 %v4689, %v4685
        %v5234 = vpack.c.b16 %v4690, %v4686
        %v5235 = vpack.c.b16 %v4691, %v4687
        %v5236 = vpack.c.b16 %v4696, %v4692
        %v5237 = vpack.c.b16 %v4697, %v4693
        %v5238 = vpack.c.b16 %v4698, %v4694
        %v5239 = vpack.c.b16 %v4699, %v4695
        %v5240 = vpack.c.b16 %v4704, %v4700
        %v5241 = vpack.c.b16 %v4705, %v4701
        %v5242 = vpack.c.b16 %v4706, %v4702
        %v5243 = vpack.c.b16 %v4707, %v4703
        %v5244 = vpack.c.b16 %v4712, %v4708
        %v5245 = vpack.c.b16 %v4713, %v4709
        %v5246 = vpack.c.b16 %v4714, %v4710
        %v5247 = vpack.c.b16 %v4715, %v4711
        %v5248 = vpack.c.b16 %v4720, %v4716
        %v5249 = vpack.c.b16 %v4721, %v4717
        %v5250 = vpack.c.b16 %v4722, %v4718
        %v5251 = vpack.c.b16 %v4723, %v4719
        %v5252 = vpack.c.b16 %v4728, %v4724
        %v5253 = vpack.c.b16 %v4729, %v4725
        %v5254 = vpack.c.b16 %v4730, %v4726
        %v5255 = vpack.c.b16 %v4731, %v4727
        %v5256 = vpack.c.b16 %v4736, %v4732
        %v5257 = vpack.c.b16 %v4737, %v4733
        %v5258 = vpack.c.b16 %v4738, %v4734
        %v5259 = vpack.c.b16 %v4739, %v4735
        %v5260 = vpack.c.b16 %v4744, %v4740
        %v5261 = vpack.c.b16 %v4745, %v4741
        %v5262 = vpack.c.b16 %v4746, %v4742
        %v5263 = vpack.c.b16 %v4747, %v4743
        %v5264 = vpack.c.b16 %v4752, %v4748
        %v5265 = vpack.c.b16 %v4753, %v4749
        %v5266 = vpack.c.b16 %v4754, %v4750
        %v5267 = vpack.c.b16 %v4755, %v4751
        %v5268 = vpack.c.b16 %v4760, %v4756
        %v5269 = vpack.c.b16 %v4761, %v4757
        %v5270 = vpack.c.b16 %v4762, %v4758
        %v5271 = vpack.c.b16 %v4763, %v4759
        %v5272 = vpack.c.b16 %v4768, %v4764
        %v5273 = vpack.c.b16 %v4769, %v4765
        %v5274 = vpack.c.b16 %v4770, %v4766
        %v5275 = vpack.c.b16 %v4771, %v4767
        %v5276 = vpack.c.b16 %v4776, %v4772
        %v5277 = vpack.c.b16 %v4777, %v4773
        %v5278 = vpack.c.b16 %v4778, %v4774
        %v5279 = vpack.c.b16 %v4779, %v4775
        %v5280 = vpack.c.b16 %v4784, %v4780
        %v5281 = vpack.c.b16 %v4785, %v4781
        %v5282 = vpack.c.b16 %v4786, %v4782
        %v5283 = vpack.c.b16 %v4787, %v4783
        %v5284 = vpack.c.b16 %v4792, %v4788
        %v5285 = vpack.c.b16 %v4793, %v4789
        %v5286 = vpack.c.b16 %v4794, %v4790
        %v5287 = vpack.c.b16 %v4795, %v4791
        %v5288 = vpack.c.b16 %v4800, %v4796
        %v5289 = vpack.c.b16 %v4801, %v4797
        %v5290 = vpack.c.b16 %v4802, %v4798
        %v5291 = vpack.c.b16 %v4803, %v4799
        %v5292 = vpack.c.b16 %v4808, %v4804
        %v5293 = vpack.c.b16 %v4809, %v4805
        %v5294 = vpack.c.b16 %v4810, %v4806
        %v5295 = vpack.c.b16 %v4811, %v4807
        %v5296 = vpack.c.b16 %v4816, %v4812
        %v5297 = vpack.c.b16 %v4817, %v4813
        %v5298 = vpack.c.b16 %v4818, %v4814
        %v5299 = vpack.c.b16 %v4819, %v4815
        %v5300 = vpack.c.b16 %v4824, %v4820
        %v5301 = vpack.c.b16 %v4825, %v4821
        %v5302 = vpack.c.b16 %v4826, %v4822
        %v5303 = vpack.c.b16 %v4827, %v4823
        %v5304 = vpack.c.b16 %v4832, %v4828
        %v5305 = vpack.c.b16 %v4833, %v4829
        %v5306 = vpack.c.b16 %v4834, %v4830
        %v5307 = vpack.c.b16 %v4835, %v4831
        %v5308 = vpack.c.b16 %v4840, %v4836
        %v5309 = vpack.c.b16 %v4841, %v4837
        %v5310 = vpack.c.b16 %v4842, %v4838
        %v5311 = vpack.c.b16 %v4843, %v4839
        %v5312 = vpack.c.b16 %v4848, %v4844
        %v5313 = vpack.c.b16 %v4849, %v4845
        %v5314 = vpack.c.b16 %v4850, %v4846
        %v5315 = vpack.c.b16 %v4851, %v4847
        %v5316 = vpack.c.b16 %v4856, %v4852
        %v5317 = vpack.c.b16 %v4857, %v4853
        %v5318 = vpack.c.b16 %v4858, %v4854
        %v5319 = vpack.c.b16 %v4859, %v4855
        %v5320 = vpack.c.b16 %v4864, %v4860
        %v5321 = vpack.c.b16 %v4865, %v4861
        %v5322 = vpack.c.b16 %v4866, %v4862
        %v5323 = vpack.c.b16 %v4867, %v4863
        %v5324 = vpack.c.b16 %v4872, %v4868
        %v5325 = vpack.c.b16 %v4873, %v4869
        %v5326 = vpack.c.b16 %v4874, %v4870
        %v5327 = vpack.c.b16 %v4875, %v4871
        %v5328 = vpack.c.b16 %v4880, %v4876
        %v5329 = vpack.c.b16 %v4881, %v4877
        %v5330 = vpack.c.b16 %v4882, %v4878
        %v5331 = vpack.c.b16 %v4883, %v4879
        %v5332 = vpack.c.b16 %v4888, %v4884
        %v5333 = vpack.c.b16 %v4889, %v4885
        %v5334 = vpack.c.b16 %v4890, %v4886
        %v5335 = vpack.c.b16 %v4891, %v4887
        %v5336 = vpack.c.b16 %v4896, %v4892
        %v5337 = vpack.c.b16 %v4897, %v4893
        %v5338 = vpack.c.b16 %v4898, %v4894
        %v5339 = vpack.c.b16 %v4899, %v4895
        %v5340 = vpack.c.b16 %v4904, %v4900
        %v5341 = vpack.c.b16 %v4905, %v4901
        %v5342 = vpack.c.b16 %v4906, %v4902
        %v5343 = vpack.c.b16 %v4907, %v4903
        %v5344 = vpack.c.b16 %v4912, %v4908
        %v5345 = vpack.c.b16 %v4913, %v4909
        %v5346 = vpack.c.b16 %v4914, %v4910
        %v5347 = vpack.c.b16 %v4915, %v4911
        %v5348 = vpack.c.b16 %v4920, %v4916
        %v5349 = vpack.c.b16 %v4921, %v4917
        %v5350 = vpack.c.b16 %v4922, %v4918
        %v5351 = vpack.c.b16 %v4923, %v4919
        %v5352 = vpack.c.b16 %v4928, %v4924
        %v5353 = vpack.c.b16 %v4929, %v4925
        %v5354 = vpack.c.b16 %v4930, %v4926
        %v5355 = vpack.c.b16 %v4931, %v4927
        %v5356 = vpack.c.b16 %v4936, %v4932
        %v5357 = vpack.c.b16 %v4937, %v4933
        %v5358 = vpack.c.b16 %v4938, %v4934
        %v5359 = vpack.c.b16 %v4939, %v4935
        %v5360 = vpack.c.b16 %v4944, %v4940
        %v5361 = vpack.c.b16 %v4945, %v4941
        %v5362 = vpack.c.b16 %v4946, %v4942
        %v5363 = vpack.c.b16 %v4947, %v4943
        %v5364 = vpack.c.b16 %v4952, %v4948
        %v5365 = vpack.c.b16 %v4953, %v4949
        %v5366 = vpack.c.b16 %v4954, %v4950
        %v5367 = vpack.c.b16 %v4955, %v4951
        %v5368 = vpack.c.b16 %v4960, %v4956
        %v5369 = vpack.c.b16 %v4961, %v4957
        %v5370 = vpack.c.b16 %v4962, %v4958
        %v5371 = vpack.c.b16 %v4963, %v4959
        %v5372 = vpack.c.b16 %v4968, %v4964
        %v5373 = vpack.c.b16 %v4969, %v4965
        %v5374 = vpack.c.b16 %v4970, %v4966
        %v5375 = vpack.c.b16 %v4971, %v4967
        %v5376 = vpack.c.b16 %v4976, %v4972
        %v5377 = vpack.c.b16 %v4977, %v4973
        %v5378 = vpack.c.b16 %v4978, %v4974
        %v5379 = vpack.c.b16 %v4979, %v4975
        %v5380 = vpack.c.b16 %v4984, %v4980
        %v5381 = vpack.c.b16 %v4985, %v4981
        %v5382 = vpack.c.b16 %v4986, %v4982
        %v5383 = vpack.c.b16 %v4987, %v4983
        %v5384 = vpack.c.b16 %v4992, %v4988
        %v5385 = vpack.c.b16 %v4993, %v4989
        %v5386 = vpack.c.b16 %v4994, %v4990
        %v5387 = vpack.c.b16 %v4995, %v4991
        %v5388 = vpack.c.b16 %v5000, %v4996
        %v5389 = vpack.c.b16 %v5001, %v4997
        %v5390 = vpack.c.b16 %v5002, %v4998
        %v5391 = vpack.c.b16 %v5003, %v4999
        %v5392 = vpack.c.b16 %v5008, %v5004
        %v5393 = vpack.c.b16 %v5009, %v5005
        %v5394 = vpack.c.b16 %v5010, %v5006
        %v5395 = vpack.c.b16 %v5011, %v5007
        %v5396 = vpack.c.b16 %v5016, %v5012
        %v5397 = vpack.c.b16 %v5017, %v5013
        %v5398 = vpack.c.b16 %v5018, %v5014
        %v5399 = vpack.c.b16 %v5019, %v5015
        %v5400 = vpack.c.b16 %v5024, %v5020
        %v5401 = vpack.c.b16 %v5025, %v5021
        %v5402 = vpack.c.b16 %v5026, %v5022
        %v5403 = vpack.c.b16 %v5027, %v5023
        %v5404 = vpack.c.b16 %v5032, %v5028
        %v5405 = vpack.c.b16 %v5033, %v5029
        %v5406 = vpack.c.b16 %v5034, %v5030
        %v5407 = vpack.c.b16 %v5035, %v5031
        %v5408 = vpack.c.b16 %v5040, %v5036
        %v5409 = vpack.c.b16 %v5041, %v5037
        %v5410 = vpack.c.b16 %v5042, %v5038
        %v5411 = vpack.c.b16 %v5043, %v5039
        %v5412 = vpack.c.b16 %v5048, %v5044
        %v5413 = vpack.c.b16 %v5049, %v5045
        %v5414 = vpack.c.b16 %v5050, %v5046
        %v5415 = vpack.c.b16 %v5051, %v5047
        %v5416 = vpack.c.b16 %v5056, %v5052
        %v5417 = vpack.c.b16 %v5057, %v5053
        %v5418 = vpack.c.b16 %v5058, %v5054
        %v5419 = vpack.c.b16 %v5059, %v5055
        %v5420 = vpack.c.b16 %v5064, %v5060
        %v5421 = vpack.c.b16 %v5065, %v5061
        %v5422 = vpack.c.b16 %v5066, %v5062
        %v5423 = vpack.c.b16 %v5067, %v5063
        %v5424 = vpack.c.b16 %v5072, %v5068
        %v5425 = vpack.c.b16 %v5073, %v5069
        %v5426 = vpack.c.b16 %v5074, %v5070
        %v5427 = vpack.c.b16 %v5075, %v5071
        %v5428 = vpack.c.b16 %v5080, %v5076
        %v5429 = vpack.c.b16 %v5081, %v5077
        %v5430 = vpack.c.b16 %v5082, %v5078
        %v5431 = vpack.c.b16 %v5083, %v5079
        %v5432 = vpack.c.b16 %v5088, %v5084
        %v5433 = vpack.c.b16 %v5089, %v5085
        %v5434 = vpack.c.b16 %v5090, %v5086
        %v5435 = vpack.c.b16 %v5091, %v5087
        %v5436 = vpack.c.b16 %v5096, %v5092
        %v5437 = vpack.c.b16 %v5097, %v5093
        %v5438 = vpack.c.b16 %v5098, %v5094
        %v5439 = vpack.c.b16 %v5099, %v5095
        %v5440 = vpack.c.b16 %v5104, %v5100
        %v5441 = vpack.c.b16 %v5105, %v5101
        %v5442 = vpack.c.b16 %v5106, %v5102
        %v5443 = vpack.c.b16 %v5107, %v5103
        %v5444 = vpack.c.b16 %v5112, %v5108
        %v5445 = vpack.c.b16 %v5113, %v5109
        %v5446 = vpack.c.b16 %v5114, %v5110
        %v5447 = vpack.c.b16 %v5115, %v5111
        %v5448 = vpack.c.b16 %v5120, %v5116
        %v5449 = vpack.c.b16 %v5121, %v5117
        %v5450 = vpack.c.b16 %v5122, %v5118
        %v5451 = vpack.c.b16 %v5123, %v5119
        %v5452 = vpack.c.b16 %v5128, %v5124
        %v5453 = vpack.c.b16 %v5129, %v5125
        %v5454 = vpack.c.b16 %v5130, %v5126
        %v5455 = vpack.c.b16 %v5131, %v5127
        %v5456 = vpack.c.b16 %v5136, %v5132
        %v5457 = vpack.c.b16 %v5137, %v5133
        %v5458 = vpack.c.b16 %v5138, %v5134
        %v5459 = vpack.c.b16 %v5139, %v5135
        %v5460 = vpack.c.b16 %v5144, %v5140
        %v5461 = vpack.c.b16 %v5145, %v5141
        %v5462 = vpack.c.b16 %v5146, %v5142
        %v5463 = vpack.c.b16 %v5147, %v5143
        %v5464 = vpack.c.b16 %v5152, %v5148
        %v5465 = vpack.c.b16 %v5153, %v5149
        %v5466 = vpack.c.b16 %v5154, %v5150
        %v5467 = vpack.c.b16 %v5155, %v5151
        %v5468 = vpack.c.b16 %v5160, %v5156
        %v5469 = vpack.c.b16 %v5161, %v5157
        %v5470 = vpack.c.b16 %v5162, %v5158
        %v5471 = vpack.c.b16 %v5163, %v5159
        %v5472 = vpack.c.b16 %v5168, %v5164
        %v5473 = vpack.c.b16 %v5169, %v5165
        %v5474 = vpack.c.b16 %v5170, %v5166
        %v5475 = vpack.c.b16 %v5171, %v5167
        %v5476 = vpack.c.b16 %v5176, %v5172
        %v5477 = vpack.c.b16 %v5177, %v5173
        %v5478 = vpack.c.b16 %v5178, %v5174
        %v5479 = vpack.c.b16 %v5179, %v5175
        %v5480 = vpack.c.b16 %v5184, %v5180
        %v5481 = vpack.c.b16 %v5185, %v5181
        %v5482 = vpack.c.b16 %v5186, %v5182
        %v5483 = vpack.c.b16 %v5187, %v5183
        %v5484 = vpack.c.b16 %v5192, %v5188
        %v5485 = vpack.c.b16 %v5193, %v5189
        %v5486 = vpack.c.b16 %v5194, %v5190
        %v5487 = vpack.c.b16 %v5195, %v5191
        %v5488 = vpack.c.b16 %v5200, %v5196
        %v5489 = vpack.c.b16 %v5201, %v5197
        %v5490 = vpack.c.b16 %v5202, %v5198
        %v5491 = vpack.c.b16 %v5203, %v5199
        %5780 = vmatprep.subr.bf16.mxu0 %v5233
        %5781 = vmatpush1.bf16.msra.mxu0 %v5232
        %5782 = vmatprep.subr.bf16.mxu0 %v5229
        %5783 = vmatpush1.bf16.msra.mxu0 %v5228
        %5784 = vmatprep.subr.bf16.mxu0 %v5225
        %5785 = vmatpush1.bf16.msra.mxu0 %v5224
        %5786 = vmatprep.subr.bf16.mxu0 %v5221
        %5787 = vmatpush1.bf16.msra.mxu0 %v5220
        %5788 = vmatprep.subr.bf16.mxu0 %v5217
        %5789 = vmatpush1.bf16.msra.mxu0 %v5216
        %5790 = vmatprep.subr.bf16.mxu0 %v5213
        %5791 = vmatpush1.bf16.msra.mxu0 %v5212
        %5792 = vmatprep.subr.bf16.mxu0 %v5209
        %5793 = vmatpush1.bf16.msra.mxu0 %v5208
        %5794 = vmatprep.subr.bf16.mxu0 %v5205
        %5795 = vmatpush1.bf16.msra.mxu0 %v5204
        %5796 = vmatprep.subr.bf16.mxu0 %v5265
        %5797 = vmatpush2.bf16.msra.mxu0 %v5264
        %5798 = vmatprep.subr.bf16.mxu0 %v5261
        %5799 = vmatpush2.bf16.msra.mxu0 %v5260
        %5800 = vmatprep.subr.bf16.mxu0 %v5257
        %5801 = vmatpush2.bf16.msra.mxu0 %v5256
        %5802 = vmatprep.subr.bf16.mxu0 %v5253
        %5803 = vmatpush2.bf16.msra.mxu0 %v5252
        %5804 = vmatprep.subr.bf16.mxu0 %v5249
        %5805 = vmatpush2.bf16.msra.mxu0 %v5248
        %5806 = vmatprep.subr.bf16.mxu0 %v5245
        %5807 = vmatpush2.bf16.msra.mxu0 %v5244
        %5808 = vmatprep.subr.bf16.mxu0 %v5241
        %5809 = vmatpush2.bf16.msra.mxu0 %v5240
        %5810 = vmatprep.subr.bf16.mxu0 %v5237
        %5811 = vmatpush2.bf16.msra.mxu0 %v5236
        %5812 = vmatprep.mubr.bf16.mxu0 %v4053
        %5813 = vmatmul.mubr.bf16.gmra.mxu0 %v4052
        %v5814 = vpop.f32.mrf.mxu0
        %v5815 = vadd.f32 0.0, %v5814
        %v5816 = vpop.f32.mrf.mxu0
        %v5817 = vadd.f32 0.0, %v5816
        %v5818 = vpop.f32.mrf.mxu0
        %v5819 = vadd.f32 0.0, %v5818
        %v5820 = vpop.f32.mrf.mxu0
        %v5821 = vadd.f32 0.0, %v5820
        %5822 = vmatprep.mubr.bf16.mxu0 %v4062
        %5823 = vmatmul.mubr.bf16.gmra.mxu0 %v4061
        %v5824 = vpop.f32.mrf.mxu0
        %v5825 = vadd.f32 0.0, %v5824
        %v5826 = vpop.f32.mrf.mxu0
        %v5827 = vadd.f32 0.0, %v5826
        %v5828 = vpop.f32.mrf.mxu0
        %v5829 = vadd.f32 0.0, %v5828
        %v5830 = vpop.f32.mrf.mxu0
        %v5831 = vadd.f32 0.0, %v5830
        %5832 = vmatprep.mubr.bf16.mxu0 %v4071
        %5833 = vmatmul.mubr.bf16.gmra.mxu0 %v4070
        %v5834 = vpop.f32.mrf.mxu0
        %v5835 = vadd.f32 0.0, %v5834
        %v5836 = vpop.f32.mrf.mxu0
        %v5837 = vadd.f32 0.0, %v5836
        %v5838 = vpop.f32.mrf.mxu0
        %v5839 = vadd.f32 0.0, %v5838
        %v5840 = vpop.f32.mrf.mxu0
        %v5841 = vadd.f32 0.0, %v5840
        %5842 = vmatprep.mubr.bf16.mxu0 %v4080
        %5843 = vmatmul.mubr.bf16.gmra.mxu0 %v4079
        %v5844 = vpop.f32.mrf.mxu0
        %v5845 = vadd.f32 0.0, %v5844
        %v5846 = vpop.f32.mrf.mxu0
        %v5847 = vadd.f32 0.0, %v5846
        %v5848 = vpop.f32.mrf.mxu0
        %v5849 = vadd.f32 0.0, %v5848
        %v5850 = vpop.f32.mrf.mxu0
        %v5851 = vadd.f32 0.0, %v5850
        %5852 = vmatprep.mubr.bf16.mxu0 %v4089
        %5853 = vmatmul.mubr.bf16.gmra.mxu0 %v4088
        %v5854 = vpop.f32.mrf.mxu0
        %v5855 = vadd.f32 0.0, %v5854
        %v5856 = vpop.f32.mrf.mxu0
        %v5857 = vadd.f32 0.0, %v5856
        %v5858 = vpop.f32.mrf.mxu0
        %v5859 = vadd.f32 0.0, %v5858
        %v5860 = vpop.f32.mrf.mxu0
        %v5861 = vadd.f32 0.0, %v5860
        %5862 = vmatprep.mubr.bf16.mxu0 %v4098
        %5863 = vmatmul.mubr.bf16.gmra.mxu0 %v4097
        %v5864 = vpop.f32.mrf.mxu0
        %v5865 = vadd.f32 0.0, %v5864
        %v5866 = vpop.f32.mrf.mxu0
        %v5867 = vadd.f32 0.0, %v5866
        %v5868 = vpop.f32.mrf.mxu0
        %v5869 = vadd.f32 0.0, %v5868
        %v5870 = vpop.f32.mrf.mxu0
        %v5871 = vadd.f32 0.0, %v5870
        %5872 = vmatprep.mubr.bf16.mxu0 %v4107
        %5873 = vmatmul.mubr.bf16.gmra.mxu0 %v4106
        %v5874 = vpop.f32.mrf.mxu0
        %v5875 = vadd.f32 0.0, %v5874
        %v5876 = vpop.f32.mrf.mxu0
        %v5877 = vadd.f32 0.0, %v5876
        %v5878 = vpop.f32.mrf.mxu0
        %v5879 = vadd.f32 0.0, %v5878
        %v5880 = vpop.f32.mrf.mxu0
        %v5881 = vadd.f32 0.0, %v5880
        %5882 = vmatprep.mubr.bf16.mxu0 %v4116
        %5883 = vmatmul.mubr.bf16.gmra.mxu0 %v4115
        %v5884 = vpop.f32.mrf.mxu0
        %v5885 = vadd.f32 0.0, %v5884
        %v5886 = vpop.f32.mrf.mxu0
        %v5887 = vadd.f32 0.0, %v5886
        %v5888 = vpop.f32.mrf.mxu0
        %v5889 = vadd.f32 0.0, %v5888
        %v5890 = vpop.f32.mrf.mxu0
        %v5891 = vadd.f32 0.0, %v5890
        %5892 = vmatprep.mubr.bf16.mxu0 %v4125
        %5893 = vmatmul.mubr.bf16.gmra.mxu0 %v4124
        %v5894 = vpop.f32.mrf.mxu0
        %v5895 = vadd.f32 0.0, %v5894
        %v5896 = vpop.f32.mrf.mxu0
        %v5897 = vadd.f32 0.0, %v5896
        %v5898 = vpop.f32.mrf.mxu0
        %v5899 = vadd.f32 0.0, %v5898
        %v5900 = vpop.f32.mrf.mxu0
        %v5901 = vadd.f32 0.0, %v5900
        %5902 = vmatprep.mubr.bf16.mxu0 %v4134
        %5903 = vmatmul.mubr.bf16.gmra.mxu0 %v4133
        %v5904 = vpop.f32.mrf.mxu0
        %v5905 = vadd.f32 0.0, %v5904
        %v5906 = vpop.f32.mrf.mxu0
        %v5907 = vadd.f32 0.0, %v5906
        %v5908 = vpop.f32.mrf.mxu0
        %v5909 = vadd.f32 0.0, %v5908
        %v5910 = vpop.f32.mrf.mxu0
        %v5911 = vadd.f32 0.0, %v5910
        %5912 = vmatprep.mubr.bf16.mxu0 %v4143
        %5913 = vmatmul.mubr.bf16.gmra.mxu0 %v4142
        %v5914 = vpop.f32.mrf.mxu0
        %v5915 = vadd.f32 0.0, %v5914
        %v5916 = vpop.f32.mrf.mxu0
        %v5917 = vadd.f32 0.0, %v5916
        %v5918 = vpop.f32.mrf.mxu0
        %v5919 = vadd.f32 0.0, %v5918
        %v5920 = vpop.f32.mrf.mxu0
        %v5921 = vadd.f32 0.0, %v5920
        %5922 = vmatprep.mubr.bf16.mxu0 %v4152
        %5923 = vmatmul.mubr.bf16.gmra.mxu0 %v4151
        %v5924 = vpop.f32.mrf.mxu0
        %v5925 = vadd.f32 0.0, %v5924
        %v5926 = vpop.f32.mrf.mxu0
        %v5927 = vadd.f32 0.0, %v5926
        %v5928 = vpop.f32.mrf.mxu0
        %v5929 = vadd.f32 0.0, %v5928
        %v5930 = vpop.f32.mrf.mxu0
        %v5931 = vadd.f32 0.0, %v5930
        %5932 = vmatprep.mubr.bf16.mxu0 %v4161
        %5933 = vmatmul.mubr.bf16.gmra.mxu0 %v4160
        %v5934 = vpop.f32.mrf.mxu0
        %v5935 = vadd.f32 0.0, %v5934
        %v5936 = vpop.f32.mrf.mxu0
        %v5937 = vadd.f32 0.0, %v5936
        %v5938 = vpop.f32.mrf.mxu0
        %v5939 = vadd.f32 0.0, %v5938
        %v5940 = vpop.f32.mrf.mxu0
        %v5941 = vadd.f32 0.0, %v5940
        %5942 = vmatprep.mubr.bf16.mxu0 %v4170
        %5943 = vmatmul.mubr.bf16.gmra.mxu0 %v4169
        %v5944 = vpop.f32.mrf.mxu0
        %v5945 = vadd.f32 0.0, %v5944
        %v5946 = vpop.f32.mrf.mxu0
        %v5947 = vadd.f32 0.0, %v5946
        %v5948 = vpop.f32.mrf.mxu0
        %v5949 = vadd.f32 0.0, %v5948
        %v5950 = vpop.f32.mrf.mxu0
        %v5951 = vadd.f32 0.0, %v5950
        %5952 = vmatprep.mubr.bf16.mxu0 %v4179
        %5953 = vmatmul.mubr.bf16.gmra.mxu0 %v4178
        %v5954 = vpop.f32.mrf.mxu0
        %v5955 = vadd.f32 0.0, %v5954
        %v5956 = vpop.f32.mrf.mxu0
        %v5957 = vadd.f32 0.0, %v5956
        %v5958 = vpop.f32.mrf.mxu0
        %v5959 = vadd.f32 0.0, %v5958
        %v5960 = vpop.f32.mrf.mxu0
        %v5961 = vadd.f32 0.0, %v5960
        %5962 = vmatprep.mubr.bf16.mxu0 %v4188
        %5963 = vmatmul.mubr.bf16.gmra.mxu0 %v4187
        %v5964 = vpop.f32.mrf.mxu0
        %v5965 = vadd.f32 0.0, %v5964
        %v5966 = vpop.f32.mrf.mxu0
        %v5967 = vadd.f32 0.0, %v5966
        %v5968 = vpop.f32.mrf.mxu0
        %v5969 = vadd.f32 0.0, %v5968
        %v5970 = vpop.f32.mrf.mxu0
        %v5971 = vadd.f32 0.0, %v5970
        %5972 = vdwg.mxu0
        %5973 = vmatprep.subr.bf16.mxu0 %v5297
        %5974 = vmatpush1.bf16.msra.mxu0 %v5296
        %5975 = vmatprep.subr.bf16.mxu0 %v5293
        %5976 = vmatpush1.bf16.msra.mxu0 %v5292
        %5977 = vmatprep.subr.bf16.mxu0 %v5289
        %5978 = vmatpush1.bf16.msra.mxu0 %v5288
        %5979 = vmatprep.subr.bf16.mxu0 %v5285
        %5980 = vmatpush1.bf16.msra.mxu0 %v5284
        %5981 = vmatprep.subr.bf16.mxu0 %v5281
        %5982 = vmatpush1.bf16.msra.mxu0 %v5280
        %5983 = vmatprep.subr.bf16.mxu0 %v5277
        %5984 = vmatpush1.bf16.msra.mxu0 %v5276
        %5985 = vmatprep.subr.bf16.mxu0 %v5273
        %5986 = vmatpush1.bf16.msra.mxu0 %v5272
        %5987 = vmatprep.subr.bf16.mxu0 %v5269
        %5988 = vmatpush1.bf16.msra.mxu0 %v5268
        %5989 = vmatprep.subr.bf16.mxu0 %v5329
        %5990 = vmatpush2.bf16.msra.mxu0 %v5328
        %5991 = vmatprep.subr.bf16.mxu0 %v5325
        %5992 = vmatpush2.bf16.msra.mxu0 %v5324
        %5993 = vmatprep.subr.bf16.mxu0 %v5321
        %5994 = vmatpush2.bf16.msra.mxu0 %v5320
        %5995 = vmatprep.subr.bf16.mxu0 %v5317
        %5996 = vmatpush2.bf16.msra.mxu0 %v5316
        %5997 = vmatprep.subr.bf16.mxu0 %v5313
        %5998 = vmatpush2.bf16.msra.mxu0 %v5312
        %5999 = vmatprep.subr.bf16.mxu0 %v5309
        %6000 = vmatpush2.bf16.msra.mxu0 %v5308
        %6001 = vmatprep.subr.bf16.mxu0 %v5305
        %6002 = vmatpush2.bf16.msra.mxu0 %v5304
        %6003 = vmatprep.subr.bf16.mxu0 %v5301
        %6004 = vmatpush2.bf16.msra.mxu0 %v5300
        %6005 = vmatprep.mubr.bf16.mxu0 %v4055
        %6006 = vmatmul.mubr.bf16.gmra.mxu0 %v4054
        %v6007 = vpop.f32.mrf.mxu0
        %v6008 = vadd.f32 %v5815, %v6007
        %v6009 = vpop.f32.mrf.mxu0
        %v6010 = vadd.f32 %v5817, %v6009
        %v6011 = vpop.f32.mrf.mxu0
        %v6012 = vadd.f32 %v5819, %v6011
        %v6013 = vpop.f32.mrf.mxu0
        %v6014 = vadd.f32 %v5821, %v6013
        %6015 = vmatprep.mubr.bf16.mxu0 %v4064
        %6016 = vmatmul.mubr.bf16.gmra.mxu0 %v4063
        %v6017 = vpop.f32.mrf.mxu0
        %v6018 = vadd.f32 %v5825, %v6017
        %v6019 = vpop.f32.mrf.mxu0
        %v6020 = vadd.f32 %v5827, %v6019
        %v6021 = vpop.f32.mrf.mxu0
        %v6022 = vadd.f32 %v5829, %v6021
        %v6023 = vpop.f32.mrf.mxu0
        %v6024 = vadd.f32 %v5831, %v6023
        %6025 = vmatprep.mubr.bf16.mxu0 %v4073
        %6026 = vmatmul.mubr.bf16.gmra.mxu0 %v4072
        %v6027 = vpop.f32.mrf.mxu0
        %v6028 = vadd.f32 %v5835, %v6027
        %v6029 = vpop.f32.mrf.mxu0
        %v6030 = vadd.f32 %v5837, %v6029
        %v6031 = vpop.f32.mrf.mxu0
        %v6032 = vadd.f32 %v5839, %v6031
        %v6033 = vpop.f32.mrf.mxu0
        %v6034 = vadd.f32 %v5841, %v6033
        %6035 = vmatprep.mubr.bf16.mxu0 %v4082
        %6036 = vmatmul.mubr.bf16.gmra.mxu0 %v4081
        %v6037 = vpop.f32.mrf.mxu0
        %v6038 = vadd.f32 %v5845, %v6037
        %v6039 = vpop.f32.mrf.mxu0
        %v6040 = vadd.f32 %v5847, %v6039
        %v6041 = vpop.f32.mrf.mxu0
        %v6042 = vadd.f32 %v5849, %v6041
        %v6043 = vpop.f32.mrf.mxu0
        %v6044 = vadd.f32 %v5851, %v6043
        %6045 = vmatprep.mubr.bf16.mxu0 %v4091
        %6046 = vmatmul.mubr.bf16.gmra.mxu0 %v4090
        %v6047 = vpop.f32.mrf.mxu0
        %v6048 = vadd.f32 %v5855, %v6047
        %v6049 = vpop.f32.mrf.mxu0
        %v6050 = vadd.f32 %v5857, %v6049
        %v6051 = vpop.f32.mrf.mxu0
        %v6052 = vadd.f32 %v5859, %v6051
        %v6053 = vpop.f32.mrf.mxu0
        %v6054 = vadd.f32 %v5861, %v6053
        %6055 = vmatprep.mubr.bf16.mxu0 %v4100
        %6056 = vmatmul.mubr.bf16.gmra.mxu0 %v4099
        %v6057 = vpop.f32.mrf.mxu0
        %v6058 = vadd.f32 %v5865, %v6057
        %v6059 = vpop.f32.mrf.mxu0
        %v6060 = vadd.f32 %v5867, %v6059
        %v6061 = vpop.f32.mrf.mxu0
        %v6062 = vadd.f32 %v5869, %v6061
        %v6063 = vpop.f32.mrf.mxu0
        %v6064 = vadd.f32 %v5871, %v6063
        %6065 = vmatprep.mubr.bf16.mxu0 %v4109
        %6066 = vmatmul.mubr.bf16.gmra.mxu0 %v4108
        %v6067 = vpop.f32.mrf.mxu0
        %v6068 = vadd.f32 %v5875, %v6067
        %v6069 = vpop.f32.mrf.mxu0
        %v6070 = vadd.f32 %v5877, %v6069
        %v6071 = vpop.f32.mrf.mxu0
        %v6072 = vadd.f32 %v5879, %v6071
        %v6073 = vpop.f32.mrf.mxu0
        %v6074 = vadd.f32 %v5881, %v6073
        %6075 = vmatprep.mubr.bf16.mxu0 %v4118
        %6076 = vmatmul.mubr.bf16.gmra.mxu0 %v4117
        %v6077 = vpop.f32.mrf.mxu0
        %v6078 = vadd.f32 %v5885, %v6077
        %v6079 = vpop.f32.mrf.mxu0
        %v6080 = vadd.f32 %v5887, %v6079
        %v6081 = vpop.f32.mrf.mxu0
        %v6082 = vadd.f32 %v5889, %v6081
        %v6083 = vpop.f32.mrf.mxu0
        %v6084 = vadd.f32 %v5891, %v6083
        %6085 = vmatprep.mubr.bf16.mxu0 %v4127
        %6086 = vmatmul.mubr.bf16.gmra.mxu0 %v4126
        %v6087 = vpop.f32.mrf.mxu0
        %v6088 = vadd.f32 %v5895, %v6087
        %v6089 = vpop.f32.mrf.mxu0
        %v6090 = vadd.f32 %v5897, %v6089
        %v6091 = vpop.f32.mrf.mxu0
        %v6092 = vadd.f32 %v5899, %v6091
        %v6093 = vpop.f32.mrf.mxu0
        %v6094 = vadd.f32 %v5901, %v6093
        %6095 = vmatprep.mubr.bf16.mxu0 %v4136
        %6096 = vmatmul.mubr.bf16.gmra.mxu0 %v4135
        %v6097 = vpop.f32.mrf.mxu0
        %v6098 = vadd.f32 %v5905, %v6097
        %v6099 = vpop.f32.mrf.mxu0
        %v6100 = vadd.f32 %v5907, %v6099
        %v6101 = vpop.f32.mrf.mxu0
        %v6102 = vadd.f32 %v5909, %v6101
        %v6103 = vpop.f32.mrf.mxu0
        %v6104 = vadd.f32 %v5911, %v6103
        %6105 = vmatprep.mubr.bf16.mxu0 %v4145
        %6106 = vmatmul.mubr.bf16.gmra.mxu0 %v4144
        %v6107 = vpop.f32.mrf.mxu0
        %v6108 = vadd.f32 %v5915, %v6107
        %v6109 = vpop.f32.mrf.mxu0
        %v6110 = vadd.f32 %v5917, %v6109
        %v6111 = vpop.f32.mrf.mxu0
        %v6112 = vadd.f32 %v5919, %v6111
        %v6113 = vpop.f32.mrf.mxu0
        %v6114 = vadd.f32 %v5921, %v6113
        %6115 = vmatprep.mubr.bf16.mxu0 %v4154
        %6116 = vmatmul.mubr.bf16.gmra.mxu0 %v4153
        %v6117 = vpop.f32.mrf.mxu0
        %v6118 = vadd.f32 %v5925, %v6117
        %v6119 = vpop.f32.mrf.mxu0
        %v6120 = vadd.f32 %v5927, %v6119
        %v6121 = vpop.f32.mrf.mxu0
        %v6122 = vadd.f32 %v5929, %v6121
        %v6123 = vpop.f32.mrf.mxu0
        %v6124 = vadd.f32 %v5931, %v6123
        %6125 = vmatprep.mubr.bf16.mxu0 %v4163
        %6126 = vmatmul.mubr.bf16.gmra.mxu0 %v4162
        %v6127 = vpop.f32.mrf.mxu0
        %v6128 = vadd.f32 %v5935, %v6127
        %v6129 = vpop.f32.mrf.mxu0
        %v6130 = vadd.f32 %v5937, %v6129
        %v6131 = vpop.f32.mrf.mxu0
        %v6132 = vadd.f32 %v5939, %v6131
        %v6133 = vpop.f32.mrf.mxu0
        %v6134 = vadd.f32 %v5941, %v6133
        %6135 = vmatprep.mubr.bf16.mxu0 %v4172
        %6136 = vmatmul.mubr.bf16.gmra.mxu0 %v4171
        %v6137 = vpop.f32.mrf.mxu0
        %v6138 = vadd.f32 %v5945, %v6137
        %v6139 = vpop.f32.mrf.mxu0
        %v6140 = vadd.f32 %v5947, %v6139
        %v6141 = vpop.f32.mrf.mxu0
        %v6142 = vadd.f32 %v5949, %v6141
        %v6143 = vpop.f32.mrf.mxu0
        %v6144 = vadd.f32 %v5951, %v6143
        %6145 = vmatprep.mubr.bf16.mxu0 %v4181
        %6146 = vmatmul.mubr.bf16.gmra.mxu0 %v4180
        %v6147 = vpop.f32.mrf.mxu0
        %v6148 = vadd.f32 %v5955, %v6147
        %v6149 = vpop.f32.mrf.mxu0
        %v6150 = vadd.f32 %v5957, %v6149
        %v6151 = vpop.f32.mrf.mxu0
        %v6152 = vadd.f32 %v5959, %v6151
        %v6153 = vpop.f32.mrf.mxu0
        %v6154 = vadd.f32 %v5961, %v6153
        %6155 = vmatprep.mubr.bf16.mxu0 %v4190
        %6156 = vmatmul.mubr.bf16.gmra.mxu0 %v4189
        %v6157 = vpop.f32.mrf.mxu0
        %v6158 = vadd.f32 %v5965, %v6157
        %v6159 = vpop.f32.mrf.mxu0
        %v6160 = vadd.f32 %v5967, %v6159
        %v6161 = vpop.f32.mrf.mxu0
        %v6162 = vadd.f32 %v5969, %v6161
        %v6163 = vpop.f32.mrf.mxu0
        %v6164 = vadd.f32 %v5971, %v6163
        %6165 = vdwg.mxu0
        %6166 = vmatprep.subr.bf16.mxu0 %v5361
        %6167 = vmatpush1.bf16.msra.mxu0 %v5360
        %6168 = vmatprep.subr.bf16.mxu0 %v5357
        %6169 = vmatpush1.bf16.msra.mxu0 %v5356
        %6170 = vmatprep.subr.bf16.mxu0 %v5353
        %6171 = vmatpush1.bf16.msra.mxu0 %v5352
        %6172 = vmatprep.subr.bf16.mxu0 %v5349
        %6173 = vmatpush1.bf16.msra.mxu0 %v5348
        %6174 = vmatprep.subr.bf16.mxu0 %v5345
        %6175 = vmatpush1.bf16.msra.mxu0 %v5344
        %6176 = vmatprep.subr.bf16.mxu0 %v5341
        %6177 = vmatpush1.bf16.msra.mxu0 %v5340
        %6178 = vmatprep.subr.bf16.mxu0 %v5337
        %6179 = vmatpush1.bf16.msra.mxu0 %v5336
        %6180 = vmatprep.subr.bf16.mxu0 %v5333
        %6181 = vmatpush1.bf16.msra.mxu0 %v5332
        %6182 = vmatprep.subr.bf16.mxu0 %v5393
        %6183 = vmatpush2.bf16.msra.mxu0 %v5392
        %6184 = vmatprep.subr.bf16.mxu0 %v5389
        %6185 = vmatpush2.bf16.msra.mxu0 %v5388
        %6186 = vmatprep.subr.bf16.mxu0 %v5385
        %6187 = vmatpush2.bf16.msra.mxu0 %v5384
        %6188 = vmatprep.subr.bf16.mxu0 %v5381
        %6189 = vmatpush2.bf16.msra.mxu0 %v5380
        %6190 = vmatprep.subr.bf16.mxu0 %v5377
        %6191 = vmatpush2.bf16.msra.mxu0 %v5376
        %6192 = vmatprep.subr.bf16.mxu0 %v5373
        %6193 = vmatpush2.bf16.msra.mxu0 %v5372
        %6194 = vmatprep.subr.bf16.mxu0 %v5369
        %6195 = vmatpush2.bf16.msra.mxu0 %v5368
        %6196 = vmatprep.subr.bf16.mxu0 %v5365
        %6197 = vmatpush2.bf16.msra.mxu0 %v5364
        %6198 = vmatprep.mubr.bf16.mxu0 %v4057
        %6199 = vmatmul.mubr.bf16.gmra.mxu0 %v4056
        %v6200 = vpop.f32.mrf.mxu0
        %v6201 = vadd.f32 %v6008, %v6200
        %v6202 = vpop.f32.mrf.mxu0
        %v6203 = vadd.f32 %v6010, %v6202
        %v6204 = vpop.f32.mrf.mxu0
        %v6205 = vadd.f32 %v6012, %v6204
        %v6206 = vpop.f32.mrf.mxu0
        %v6207 = vadd.f32 %v6014, %v6206
        %6208 = vmatprep.mubr.bf16.mxu0 %v4066
        %6209 = vmatmul.mubr.bf16.gmra.mxu0 %v4065
        %v6210 = vpop.f32.mrf.mxu0
        %v6211 = vadd.f32 %v6018, %v6210
        %v6212 = vpop.f32.mrf.mxu0
        %v6213 = vadd.f32 %v6020, %v6212
        %v6214 = vpop.f32.mrf.mxu0
        %v6215 = vadd.f32 %v6022, %v6214
        %v6216 = vpop.f32.mrf.mxu0
        %v6217 = vadd.f32 %v6024, %v6216
        %6218 = vmatprep.mubr.bf16.mxu0 %v4075
        %6219 = vmatmul.mubr.bf16.gmra.mxu0 %v4074
        %v6220 = vpop.f32.mrf.mxu0
        %v6221 = vadd.f32 %v6028, %v6220
        %v6222 = vpop.f32.mrf.mxu0
        %v6223 = vadd.f32 %v6030, %v6222
        %v6224 = vpop.f32.mrf.mxu0
        %v6225 = vadd.f32 %v6032, %v6224
        %v6226 = vpop.f32.mrf.mxu0
        %v6227 = vadd.f32 %v6034, %v6226
        %6228 = vmatprep.mubr.bf16.mxu0 %v4084
        %6229 = vmatmul.mubr.bf16.gmra.mxu0 %v4083
        %v6230 = vpop.f32.mrf.mxu0
        %v6231 = vadd.f32 %v6038, %v6230
        %v6232 = vpop.f32.mrf.mxu0
        %v6233 = vadd.f32 %v6040, %v6232
        %v6234 = vpop.f32.mrf.mxu0
        %v6235 = vadd.f32 %v6042, %v6234
        %v6236 = vpop.f32.mrf.mxu0
        %v6237 = vadd.f32 %v6044, %v6236
        %6238 = vmatprep.mubr.bf16.mxu0 %v4093
        %6239 = vmatmul.mubr.bf16.gmra.mxu0 %v4092
        %v6240 = vpop.f32.mrf.mxu0
        %v6241 = vadd.f32 %v6048, %v6240
        %v6242 = vpop.f32.mrf.mxu0
        %v6243 = vadd.f32 %v6050, %v6242
        %v6244 = vpop.f32.mrf.mxu0
        %v6245 = vadd.f32 %v6052, %v6244
        %v6246 = vpop.f32.mrf.mxu0
        %v6247 = vadd.f32 %v6054, %v6246
        %6248 = vmatprep.mubr.bf16.mxu0 %v4102
        %6249 = vmatmul.mubr.bf16.gmra.mxu0 %v4101
        %v6250 = vpop.f32.mrf.mxu0
        %v6251 = vadd.f32 %v6058, %v6250
        %v6252 = vpop.f32.mrf.mxu0
        %v6253 = vadd.f32 %v6060, %v6252
        %v6254 = vpop.f32.mrf.mxu0
        %v6255 = vadd.f32 %v6062, %v6254
        %v6256 = vpop.f32.mrf.mxu0
        %v6257 = vadd.f32 %v6064, %v6256
        %6258 = vmatprep.mubr.bf16.mxu0 %v4111
        %6259 = vmatmul.mubr.bf16.gmra.mxu0 %v4110
        %v6260 = vpop.f32.mrf.mxu0
        %v6261 = vadd.f32 %v6068, %v6260
        %v6262 = vpop.f32.mrf.mxu0
        %v6263 = vadd.f32 %v6070, %v6262
        %v6264 = vpop.f32.mrf.mxu0
        %v6265 = vadd.f32 %v6072, %v6264
        %v6266 = vpop.f32.mrf.mxu0
        %v6267 = vadd.f32 %v6074, %v6266
        %6268 = vmatprep.mubr.bf16.mxu0 %v4120
        %6269 = vmatmul.mubr.bf16.gmra.mxu0 %v4119
        %v6270 = vpop.f32.mrf.mxu0
        %v6271 = vadd.f32 %v6078, %v6270
        %v6272 = vpop.f32.mrf.mxu0
        %v6273 = vadd.f32 %v6080, %v6272
        %v6274 = vpop.f32.mrf.mxu0
        %v6275 = vadd.f32 %v6082, %v6274
        %v6276 = vpop.f32.mrf.mxu0
        %v6277 = vadd.f32 %v6084, %v6276
        %6278 = vmatprep.mubr.bf16.mxu0 %v4129
        %6279 = vmatmul.mubr.bf16.gmra.mxu0 %v4128
        %v6280 = vpop.f32.mrf.mxu0
        %v6281 = vadd.f32 %v6088, %v6280
        %v6282 = vpop.f32.mrf.mxu0
        %v6283 = vadd.f32 %v6090, %v6282
        %v6284 = vpop.f32.mrf.mxu0
        %v6285 = vadd.f32 %v6092, %v6284
        %v6286 = vpop.f32.mrf.mxu0
        %v6287 = vadd.f32 %v6094, %v6286
        %6288 = vmatprep.mubr.bf16.mxu0 %v4138
        %6289 = vmatmul.mubr.bf16.gmra.mxu0 %v4137
        %v6290 = vpop.f32.mrf.mxu0
        %v6291 = vadd.f32 %v6098, %v6290
        %v6292 = vpop.f32.mrf.mxu0
        %v6293 = vadd.f32 %v6100, %v6292
        %v6294 = vpop.f32.mrf.mxu0
        %v6295 = vadd.f32 %v6102, %v6294
        %v6296 = vpop.f32.mrf.mxu0
        %v6297 = vadd.f32 %v6104, %v6296
        %6298 = vmatprep.mubr.bf16.mxu0 %v4147
        %6299 = vmatmul.mubr.bf16.gmra.mxu0 %v4146
        %v6300 = vpop.f32.mrf.mxu0
        %v6301 = vadd.f32 %v6108, %v6300
        %v6302 = vpop.f32.mrf.mxu0
        %v6303 = vadd.f32 %v6110, %v6302
        %v6304 = vpop.f32.mrf.mxu0
        %v6305 = vadd.f32 %v6112, %v6304
        %v6306 = vpop.f32.mrf.mxu0
        %v6307 = vadd.f32 %v6114, %v6306
        %6308 = vmatprep.mubr.bf16.mxu0 %v4156
        %6309 = vmatmul.mubr.bf16.gmra.mxu0 %v4155
        %v6310 = vpop.f32.mrf.mxu0
        %v6311 = vadd.f32 %v6118, %v6310
        %v6312 = vpop.f32.mrf.mxu0
        %v6313 = vadd.f32 %v6120, %v6312
        %v6314 = vpop.f32.mrf.mxu0
        %v6315 = vadd.f32 %v6122, %v6314
        %v6316 = vpop.f32.mrf.mxu0
        %v6317 = vadd.f32 %v6124, %v6316
        %6318 = vmatprep.mubr.bf16.mxu0 %v4165
        %6319 = vmatmul.mubr.bf16.gmra.mxu0 %v4164
        %v6320 = vpop.f32.mrf.mxu0
        %v6321 = vadd.f32 %v6128, %v6320
        %v6322 = vpop.f32.mrf.mxu0
        %v6323 = vadd.f32 %v6130, %v6322
        %v6324 = vpop.f32.mrf.mxu0
        %v6325 = vadd.f32 %v6132, %v6324
        %v6326 = vpop.f32.mrf.mxu0
        %v6327 = vadd.f32 %v6134, %v6326
        %6328 = vmatprep.mubr.bf16.mxu0 %v4174
        %6329 = vmatmul.mubr.bf16.gmra.mxu0 %v4173
        %v6330 = vpop.f32.mrf.mxu0
        %v6331 = vadd.f32 %v6138, %v6330
        %v6332 = vpop.f32.mrf.mxu0
        %v6333 = vadd.f32 %v6140, %v6332
        %v6334 = vpop.f32.mrf.mxu0
        %v6335 = vadd.f32 %v6142, %v6334
        %v6336 = vpop.f32.mrf.mxu0
        %v6337 = vadd.f32 %v6144, %v6336
        %6338 = vmatprep.mubr.bf16.mxu0 %v4183
        %6339 = vmatmul.mubr.bf16.gmra.mxu0 %v4182
        %v6340 = vpop.f32.mrf.mxu0
        %v6341 = vadd.f32 %v6148, %v6340
        %v6342 = vpop.f32.mrf.mxu0
        %v6343 = vadd.f32 %v6150, %v6342
        %v6344 = vpop.f32.mrf.mxu0
        %v6345 = vadd.f32 %v6152, %v6344
        %v6346 = vpop.f32.mrf.mxu0
        %v6347 = vadd.f32 %v6154, %v6346
        %6348 = vmatprep.mubr.bf16.mxu0 %v4192
        %6349 = vmatmul.mubr.bf16.gmra.mxu0 %v4191
        %v6350 = vpop.f32.mrf.mxu0
        %v6351 = vadd.f32 %v6158, %v6350
        %v6352 = vpop.f32.mrf.mxu0
        %v6353 = vadd.f32 %v6160, %v6352
        %v6354 = vpop.f32.mrf.mxu0
        %v6355 = vadd.f32 %v6162, %v6354
        %v6356 = vpop.f32.mrf.mxu0
        %v6357 = vadd.f32 %v6164, %v6356
        %6358 = vdwg.mxu0
        %6359 = vmatprep.subr.bf16.mxu0 %v5425
        %6360 = vmatpush1.bf16.msra.mxu0 %v5424
        %6361 = vmatprep.subr.bf16.mxu0 %v5421
        %6362 = vmatpush1.bf16.msra.mxu0 %v5420
        %6363 = vmatprep.subr.bf16.mxu0 %v5417
        %6364 = vmatpush1.bf16.msra.mxu0 %v5416
        %6365 = vmatprep.subr.bf16.mxu0 %v5413
        %6366 = vmatpush1.bf16.msra.mxu0 %v5412
        %6367 = vmatprep.subr.bf16.mxu0 %v5409
        %6368 = vmatpush1.bf16.msra.mxu0 %v5408
        %6369 = vmatprep.subr.bf16.mxu0 %v5405
        %6370 = vmatpush1.bf16.msra.mxu0 %v5404
        %6371 = vmatprep.subr.bf16.mxu0 %v5401
        %6372 = vmatpush1.bf16.msra.mxu0 %v5400
        %6373 = vmatprep.subr.bf16.mxu0 %v5397
        %6374 = vmatpush1.bf16.msra.mxu0 %v5396
        %6375 = vmatprep.subr.bf16.mxu0 %v5457
        %6376 = vmatpush2.bf16.msra.mxu0 %v5456
        %6377 = vmatprep.subr.bf16.mxu0 %v5453
        %6378 = vmatpush2.bf16.msra.mxu0 %v5452
        %6379 = vmatprep.subr.bf16.mxu0 %v5449
        %6380 = vmatpush2.bf16.msra.mxu0 %v5448
        %6381 = vmatprep.subr.bf16.mxu0 %v5445
        %6382 = vmatpush2.bf16.msra.mxu0 %v5444
        %6383 = vmatprep.subr.bf16.mxu0 %v5441
        %6384 = vmatpush2.bf16.msra.mxu0 %v5440
        %6385 = vmatprep.subr.bf16.mxu0 %v5437
        %6386 = vmatpush2.bf16.msra.mxu0 %v5436
        %6387 = vmatprep.subr.bf16.mxu0 %v5433
        %6388 = vmatpush2.bf16.msra.mxu0 %v5432
        %6389 = vmatprep.subr.bf16.mxu0 %v5429
        %6390 = vmatpush2.bf16.msra.mxu0 %v5428
        %6391 = vmatprep.mubr.bf16.mxu0 %v4059
        %6392 = vmatmul.mubr.bf16.gmra.mxu0 %v4058
        %v6393 = vpop.f32.mrf.mxu0
        %v6394 = vadd.f32 %v6201, %v6393
        %v6395 = vpop.f32.mrf.mxu0
        %v6396 = vadd.f32 %v6203, %v6395
        %v6397 = vpop.f32.mrf.mxu0
        %v6398 = vadd.f32 %v6205, %v6397
        %v6399 = vpop.f32.mrf.mxu0
        %v6400 = vadd.f32 %v6207, %v6399
        %6401 = vmatprep.mubr.bf16.mxu0 %v4068
        %6402 = vmatmul.mubr.bf16.gmra.mxu0 %v4067
        %v6403 = vpop.f32.mrf.mxu0
        %v6404 = vadd.f32 %v6211, %v6403
        %v6405 = vpop.f32.mrf.mxu0
        %v6406 = vadd.f32 %v6213, %v6405
        %v6407 = vpop.f32.mrf.mxu0
        %v6408 = vadd.f32 %v6215, %v6407
        %v6409 = vpop.f32.mrf.mxu0
        %v6410 = vadd.f32 %v6217, %v6409
        %6411 = vmatprep.mubr.bf16.mxu0 %v4077
        %6412 = vmatmul.mubr.bf16.gmra.mxu0 %v4076
        %v6413 = vpop.f32.mrf.mxu0
        %v6414 = vadd.f32 %v6221, %v6413
        %v6415 = vpop.f32.mrf.mxu0
        %v6416 = vadd.f32 %v6223, %v6415
        %v6417 = vpop.f32.mrf.mxu0
        %v6418 = vadd.f32 %v6225, %v6417
        %v6419 = vpop.f32.mrf.mxu0
        %v6420 = vadd.f32 %v6227, %v6419
        %6421 = vmatprep.mubr.bf16.mxu0 %v4086
        %6422 = vmatmul.mubr.bf16.gmra.mxu0 %v4085
        %v6423 = vpop.f32.mrf.mxu0
        %v6424 = vadd.f32 %v6231, %v6423
        %v6425 = vpop.f32.mrf.mxu0
        %v6426 = vadd.f32 %v6233, %v6425
        %v6427 = vpop.f32.mrf.mxu0
        %v6428 = vadd.f32 %v6235, %v6427
        %v6429 = vpop.f32.mrf.mxu0
        %v6430 = vadd.f32 %v6237, %v6429
        %6431 = vmatprep.mubr.bf16.mxu0 %v4095
        %6432 = vmatmul.mubr.bf16.gmra.mxu0 %v4094
        %v6433 = vpop.f32.mrf.mxu0
        %v6434 = vadd.f32 %v6241, %v6433
        %v6435 = vpop.f32.mrf.mxu0
        %v6436 = vadd.f32 %v6243, %v6435
        %v6437 = vpop.f32.mrf.mxu0
        %v6438 = vadd.f32 %v6245, %v6437
        %v6439 = vpop.f32.mrf.mxu0
        %v6440 = vadd.f32 %v6247, %v6439
        %6441 = vmatprep.mubr.bf16.mxu0 %v4104
        %6442 = vmatmul.mubr.bf16.gmra.mxu0 %v4103
        %v6443 = vpop.f32.mrf.mxu0
        %v6444 = vadd.f32 %v6251, %v6443
        %v6445 = vpop.f32.mrf.mxu0
        %v6446 = vadd.f32 %v6253, %v6445
        %v6447 = vpop.f32.mrf.mxu0
        %v6448 = vadd.f32 %v6255, %v6447
        %v6449 = vpop.f32.mrf.mxu0
        %v6450 = vadd.f32 %v6257, %v6449
        %6451 = vmatprep.mubr.bf16.mxu0 %v4113
        %6452 = vmatmul.mubr.bf16.gmra.mxu0 %v4112
        %v6453 = vpop.f32.mrf.mxu0
        %v6454 = vadd.f32 %v6261, %v6453
        %v6455 = vpop.f32.mrf.mxu0
        %v6456 = vadd.f32 %v6263, %v6455
        %v6457 = vpop.f32.mrf.mxu0
        %v6458 = vadd.f32 %v6265, %v6457
        %v6459 = vpop.f32.mrf.mxu0
        %v6460 = vadd.f32 %v6267, %v6459
        %6461 = vmatprep.mubr.bf16.mxu0 %v4122
        %6462 = vmatmul.mubr.bf16.gmra.mxu0 %v4121
        %v6463 = vpop.f32.mrf.mxu0
        %v6464 = vadd.f32 %v6271, %v6463
        %v6465 = vpop.f32.mrf.mxu0
        %v6466 = vadd.f32 %v6273, %v6465
        %v6467 = vpop.f32.mrf.mxu0
        %v6468 = vadd.f32 %v6275, %v6467
        %v6469 = vpop.f32.mrf.mxu0
        %v6470 = vadd.f32 %v6277, %v6469
        %6471 = vmatprep.mubr.bf16.mxu0 %v4131
        %6472 = vmatmul.mubr.bf16.gmra.mxu0 %v4130
        %v6473 = vpop.f32.mrf.mxu0
        %v6474 = vadd.f32 %v6281, %v6473
        %v6475 = vpop.f32.mrf.mxu0
        %v6476 = vadd.f32 %v6283, %v6475
        %v6477 = vpop.f32.mrf.mxu0
        %v6478 = vadd.f32 %v6285, %v6477
        %v6479 = vpop.f32.mrf.mxu0
        %v6480 = vadd.f32 %v6287, %v6479
        %6481 = vmatprep.mubr.bf16.mxu0 %v4140
        %6482 = vmatmul.mubr.bf16.gmra.mxu0 %v4139
        %v6483 = vpop.f32.mrf.mxu0
        %v6484 = vadd.f32 %v6291, %v6483
        %v6485 = vpop.f32.mrf.mxu0
        %v6486 = vadd.f32 %v6293, %v6485
        %v6487 = vpop.f32.mrf.mxu0
        %v6488 = vadd.f32 %v6295, %v6487
        %v6489 = vpop.f32.mrf.mxu0
        %v6490 = vadd.f32 %v6297, %v6489
        %6491 = vmatprep.mubr.bf16.mxu0 %v4149
        %6492 = vmatmul.mubr.bf16.gmra.mxu0 %v4148
        %v6493 = vpop.f32.mrf.mxu0
        %v6494 = vadd.f32 %v6301, %v6493
        %v6495 = vpop.f32.mrf.mxu0
        %v6496 = vadd.f32 %v6303, %v6495
        %v6497 = vpop.f32.mrf.mxu0
        %v6498 = vadd.f32 %v6305, %v6497
        %v6499 = vpop.f32.mrf.mxu0
        %v6500 = vadd.f32 %v6307, %v6499
        %6501 = vmatprep.mubr.bf16.mxu0 %v4158
        %6502 = vmatmul.mubr.bf16.gmra.mxu0 %v4157
        %v6503 = vpop.f32.mrf.mxu0
        %v6504 = vadd.f32 %v6311, %v6503
        %v6505 = vpop.f32.mrf.mxu0
        %v6506 = vadd.f32 %v6313, %v6505
        %v6507 = vpop.f32.mrf.mxu0
        %v6508 = vadd.f32 %v6315, %v6507
        %v6509 = vpop.f32.mrf.mxu0
        %v6510 = vadd.f32 %v6317, %v6509
        %6511 = vmatprep.mubr.bf16.mxu0 %v4167
        %6512 = vmatmul.mubr.bf16.gmra.mxu0 %v4166
        %v6513 = vpop.f32.mrf.mxu0
        %v6514 = vadd.f32 %v6321, %v6513
        %v6515 = vpop.f32.mrf.mxu0
        %v6516 = vadd.f32 %v6323, %v6515
        %v6517 = vpop.f32.mrf.mxu0
        %v6518 = vadd.f32 %v6325, %v6517
        %v6519 = vpop.f32.mrf.mxu0
        %v6520 = vadd.f32 %v6327, %v6519
        %6521 = vmatprep.mubr.bf16.mxu0 %v4176
        %6522 = vmatmul.mubr.bf16.gmra.mxu0 %v4175
        %v6523 = vpop.f32.mrf.mxu0
        %v6524 = vadd.f32 %v6331, %v6523
        %v6525 = vpop.f32.mrf.mxu0
        %v6526 = vadd.f32 %v6333, %v6525
        %v6527 = vpop.f32.mrf.mxu0
        %v6528 = vadd.f32 %v6335, %v6527
        %v6529 = vpop.f32.mrf.mxu0
        %v6530 = vadd.f32 %v6337, %v6529
        %6531 = vmatprep.mubr.bf16.mxu0 %v4185
        %6532 = vmatmul.mubr.bf16.gmra.mxu0 %v4184
        %v6533 = vpop.f32.mrf.mxu0
        %v6534 = vadd.f32 %v6341, %v6533
        %v6535 = vpop.f32.mrf.mxu0
        %v6536 = vadd.f32 %v6343, %v6535
        %v6537 = vpop.f32.mrf.mxu0
        %v6538 = vadd.f32 %v6345, %v6537
        %v6539 = vpop.f32.mrf.mxu0
        %v6540 = vadd.f32 %v6347, %v6539
        %6541 = vmatprep.mubr.bf16.mxu0 %v4194
        %6542 = vmatmul.mubr.bf16.gmra.mxu0 %v4193
        %v6543 = vpop.f32.mrf.mxu0
        %v6544 = vadd.f32 %v6351, %v6543
        %v6545 = vpop.f32.mrf.mxu0
        %v6546 = vadd.f32 %v6353, %v6545
        %v6547 = vpop.f32.mrf.mxu0
        %v6548 = vadd.f32 %v6355, %v6547
        %v6549 = vpop.f32.mrf.mxu0
        %v6550 = vadd.f32 %v6357, %v6549
        %6551 = vdwg.mxu0
        %6552 = vmatprep.subr.bf16.mxu0 %v5489
        %6553 = vmatpush1.bf16.msra.mxu0 %v5488
        %6554 = vmatprep.subr.bf16.mxu0 %v5485
        %6555 = vmatpush1.bf16.msra.mxu0 %v5484
        %6556 = vmatprep.subr.bf16.mxu0 %v5481
        %6557 = vmatpush1.bf16.msra.mxu0 %v5480
        %6558 = vmatprep.subr.bf16.mxu0 %v5477
        %6559 = vmatpush1.bf16.msra.mxu0 %v5476
        %6560 = vmatprep.subr.bf16.mxu0 %v5473
        %6561 = vmatpush1.bf16.msra.mxu0 %v5472
        %6562 = vmatprep.subr.bf16.mxu0 %v5469
        %6563 = vmatpush1.bf16.msra.mxu0 %v5468
        %6564 = vmatprep.subr.bf16.mxu0 %v5465
        %6565 = vmatpush1.bf16.msra.mxu0 %v5464
        %6566 = vmatprep.subr.bf16.mxu0 %v5461
        %6567 = vmatpush1.bf16.msra.mxu0 %v5460
        %6568 = vmatprep.subr.bf16.mxu0 0
        %6569 = vmatpush2.bf16.msra.mxu0 0
        %6570 = vmatprep.subr.bf16.mxu0 0
        %6571 = vmatpush2.bf16.msra.mxu0 0
        %6572 = vmatprep.subr.bf16.mxu0 0
        %6573 = vmatpush2.bf16.msra.mxu0 0
        %6574 = vmatprep.subr.bf16.mxu0 0
        %6575 = vmatpush2.bf16.msra.mxu0 0
        %6576 = vmatprep.subr.bf16.mxu0 0
        %6577 = vmatpush2.bf16.msra.mxu0 0
        %6578 = vmatprep.subr.bf16.mxu0 0
        %6579 = vmatpush2.bf16.msra.mxu0 0
        %6580 = vmatprep.subr.bf16.mxu0 0
        %6581 = vmatpush2.bf16.msra.mxu0 0
        %6582 = vmatprep.subr.bf16.mxu0 0
        %6583 = vmatpush2.bf16.msra.mxu0 0
        %6584 = vmatprep.mubr.bf16.mxu0 0
        %6585 = vmatmul.mubr.bf16.gmra.mxu0 %v4060
        %v6586 = vpop.f32.mrf.mxu0
        %v6587 = vadd.f32 %v6394, %v6586
        %v6588 = vpop.f32.mrf.mxu0
        %v6589 = vadd.f32 %v6396, %v6588
        %v6590 = vpop.f32.mrf.mxu0
        %v6591 = vadd.f32 %v6398, %v6590
        %v6592 = vpop.f32.mrf.mxu0
        %v6593 = vadd.f32 %v6400, %v6592
        %6594 = vmatprep.mubr.bf16.mxu0 0
        %6595 = vmatmul.mubr.bf16.gmra.mxu0 %v4069
        %v6596 = vpop.f32.mrf.mxu0
        %v6597 = vadd.f32 %v6404, %v6596
        %v6598 = vpop.f32.mrf.mxu0
        %v6599 = vadd.f32 %v6406, %v6598
        %v6600 = vpop.f32.mrf.mxu0
        %v6601 = vadd.f32 %v6408, %v6600
        %v6602 = vpop.f32.mrf.mxu0
        %v6603 = vadd.f32 %v6410, %v6602
        %6604 = vmatprep.mubr.bf16.mxu0 0
        %6605 = vmatmul.mubr.bf16.gmra.mxu0 %v4078
        %v6606 = vpop.f32.mrf.mxu0
        %v6607 = vadd.f32 %v6414, %v6606
        %v6608 = vpop.f32.mrf.mxu0
        %v6609 = vadd.f32 %v6416, %v6608
        %v6610 = vpop.f32.mrf.mxu0
        %v6611 = vadd.f32 %v6418, %v6610
        %v6612 = vpop.f32.mrf.mxu0
        %v6613 = vadd.f32 %v6420, %v6612
        %6614 = vmatprep.mubr.bf16.mxu0 0
        %6615 = vmatmul.mubr.bf16.gmra.mxu0 %v4087
        %v6616 = vpop.f32.mrf.mxu0
        %v6617 = vadd.f32 %v6424, %v6616
        %v6618 = vpop.f32.mrf.mxu0
        %v6619 = vadd.f32 %v6426, %v6618
        %v6620 = vpop.f32.mrf.mxu0
        %v6621 = vadd.f32 %v6428, %v6620
        %v6622 = vpop.f32.mrf.mxu0
        %v6623 = vadd.f32 %v6430, %v6622
        %6624 = vmatprep.mubr.bf16.mxu0 0
        %6625 = vmatmul.mubr.bf16.gmra.mxu0 %v4096
        %v6626 = vpop.f32.mrf.mxu0
        %v6627 = vadd.f32 %v6434, %v6626
        %v6628 = vpop.f32.mrf.mxu0
        %v6629 = vadd.f32 %v6436, %v6628
        %v6630 = vpop.f32.mrf.mxu0
        %v6631 = vadd.f32 %v6438, %v6630
        %v6632 = vpop.f32.mrf.mxu0
        %v6633 = vadd.f32 %v6440, %v6632
        %6634 = vmatprep.mubr.bf16.mxu0 0
        %6635 = vmatmul.mubr.bf16.gmra.mxu0 %v4105
        %v6636 = vpop.f32.mrf.mxu0
        %v6637 = vadd.f32 %v6444, %v6636
        %v6638 = vpop.f32.mrf.mxu0
        %v6639 = vadd.f32 %v6446, %v6638
        %v6640 = vpop.f32.mrf.mxu0
        %v6641 = vadd.f32 %v6448, %v6640
        %v6642 = vpop.f32.mrf.mxu0
        %v6643 = vadd.f32 %v6450, %v6642
        %6644 = vmatprep.mubr.bf16.mxu0 0
        %6645 = vmatmul.mubr.bf16.gmra.mxu0 %v4114
        %v6646 = vpop.f32.mrf.mxu0
        %v6647 = vadd.f32 %v6454, %v6646
        %v6648 = vpop.f32.mrf.mxu0
        %v6649 = vadd.f32 %v6456, %v6648
        %v6650 = vpop.f32.mrf.mxu0
        %v6651 = vadd.f32 %v6458, %v6650
        %v6652 = vpop.f32.mrf.mxu0
        %v6653 = vadd.f32 %v6460, %v6652
        %6654 = vmatprep.mubr.bf16.mxu0 0
        %6655 = vmatmul.mubr.bf16.gmra.mxu0 %v4123
        %v6656 = vpop.f32.mrf.mxu0
        %v6657 = vadd.f32 %v6464, %v6656
        %v6658 = vpop.f32.mrf.mxu0
        %v6659 = vadd.f32 %v6466, %v6658
        %v6660 = vpop.f32.mrf.mxu0
        %v6661 = vadd.f32 %v6468, %v6660
        %v6662 = vpop.f32.mrf.mxu0
        %v6663 = vadd.f32 %v6470, %v6662
        %6664 = vmatprep.mubr.bf16.mxu0 0
        %6665 = vmatmul.mubr.bf16.gmra.mxu0 %v4132
        %v6666 = vpop.f32.mrf.mxu0
        %v6667 = vadd.f32 %v6474, %v6666
        %v6668 = vpop.f32.mrf.mxu0
        %v6669 = vadd.f32 %v6476, %v6668
        %v6670 = vpop.f32.mrf.mxu0
        %v6671 = vadd.f32 %v6478, %v6670
        %v6672 = vpop.f32.mrf.mxu0
        %v6673 = vadd.f32 %v6480, %v6672
        %6674 = vmatprep.mubr.bf16.mxu0 0
        %6675 = vmatmul.mubr.bf16.gmra.mxu0 %v4141
        %v6676 = vpop.f32.mrf.mxu0
        %v6677 = vadd.f32 %v6484, %v6676
        %v6678 = vpop.f32.mrf.mxu0
        %v6679 = vadd.f32 %v6486, %v6678
        %v6680 = vpop.f32.mrf.mxu0
        %v6681 = vadd.f32 %v6488, %v6680
        %v6682 = vpop.f32.mrf.mxu0
        %v6683 = vadd.f32 %v6490, %v6682
        %6684 = vmatprep.mubr.bf16.mxu0 0
        %6685 = vmatmul.mubr.bf16.gmra.mxu0 %v4150
        %v6686 = vpop.f32.mrf.mxu0
        %v6687 = vadd.f32 %v6494, %v6686
        %v6688 = vpop.f32.mrf.mxu0
        %v6689 = vadd.f32 %v6496, %v6688
        %v6690 = vpop.f32.mrf.mxu0
        %v6691 = vadd.f32 %v6498, %v6690
        %v6692 = vpop.f32.mrf.mxu0
        %v6693 = vadd.f32 %v6500, %v6692
        %6694 = vmatprep.mubr.bf16.mxu0 0
        %6695 = vmatmul.mubr.bf16.gmra.mxu0 %v4159
        %v6696 = vpop.f32.mrf.mxu0
        %v6697 = vadd.f32 %v6504, %v6696
        %v6698 = vpop.f32.mrf.mxu0
        %v6699 = vadd.f32 %v6506, %v6698
        %v6700 = vpop.f32.mrf.mxu0
        %v6701 = vadd.f32 %v6508, %v6700
        %v6702 = vpop.f32.mrf.mxu0
        %v6703 = vadd.f32 %v6510, %v6702
        %6704 = vmatprep.mubr.bf16.mxu0 0
        %6705 = vmatmul.mubr.bf16.gmra.mxu0 %v4168
        %v6706 = vpop.f32.mrf.mxu0
        %v6707 = vadd.f32 %v6514, %v6706
        %v6708 = vpop.f32.mrf.mxu0
        %v6709 = vadd.f32 %v6516, %v6708
        %v6710 = vpop.f32.mrf.mxu0
        %v6711 = vadd.f32 %v6518, %v6710
        %v6712 = vpop.f32.mrf.mxu0
        %v6713 = vadd.f32 %v6520, %v6712
        %6714 = vmatprep.mubr.bf16.mxu0 0
        %6715 = vmatmul.mubr.bf16.gmra.mxu0 %v4177
        %v6716 = vpop.f32.mrf.mxu0
        %v6717 = vadd.f32 %v6524, %v6716
        %v6718 = vpop.f32.mrf.mxu0
        %v6719 = vadd.f32 %v6526, %v6718
        %v6720 = vpop.f32.mrf.mxu0
        %v6721 = vadd.f32 %v6528, %v6720
        %v6722 = vpop.f32.mrf.mxu0
        %v6723 = vadd.f32 %v6530, %v6722
        %6724 = vmatprep.mubr.bf16.mxu0 0
        %6725 = vmatmul.mubr.bf16.gmra.mxu0 %v4186
        %v6726 = vpop.f32.mrf.mxu0
        %v6727 = vadd.f32 %v6534, %v6726
        %v6728 = vpop.f32.mrf.mxu0
        %v6729 = vadd.f32 %v6536, %v6728
        %v6730 = vpop.f32.mrf.mxu0
        %v6731 = vadd.f32 %v6538, %v6730
        %v6732 = vpop.f32.mrf.mxu0
        %v6733 = vadd.f32 %v6540, %v6732
        %6734 = vmatprep.mubr.bf16.mxu0 0
        %6735 = vmatmul.mubr.bf16.gmra.mxu0 %v4195
        %v6736 = vpop.f32.mrf.mxu0
        %v6737 = vadd.f32 %v6544, %v6736
        %v6738 = vpop.f32.mrf.mxu0
        %v6739 = vadd.f32 %v6546, %v6738
        %v6740 = vpop.f32.mrf.mxu0
        %v6741 = vadd.f32 %v6548, %v6740
        %v6742 = vpop.f32.mrf.mxu0
        %v6743 = vadd.f32 %v6550, %v6742
        %6744 = vdwg.mxu0
        %6745 = vmatprep.subr.bf16.mxu0 %v5235
        %6746 = vmatpush1.bf16.msra.mxu0 %v5234
        %6747 = vmatprep.subr.bf16.mxu0 %v5231
        %6748 = vmatpush1.bf16.msra.mxu0 %v5230
        %6749 = vmatprep.subr.bf16.mxu0 %v5227
        %6750 = vmatpush1.bf16.msra.mxu0 %v5226
        %6751 = vmatprep.subr.bf16.mxu0 %v5223
        %6752 = vmatpush1.bf16.msra.mxu0 %v5222
        %6753 = vmatprep.subr.bf16.mxu0 %v5219
        %6754 = vmatpush1.bf16.msra.mxu0 %v5218
        %6755 = vmatprep.subr.bf16.mxu0 %v5215
        %6756 = vmatpush1.bf16.msra.mxu0 %v5214
        %6757 = vmatprep.subr.bf16.mxu0 %v5211
        %6758 = vmatpush1.bf16.msra.mxu0 %v5210
        %6759 = vmatprep.subr.bf16.mxu0 %v5207
        %6760 = vmatpush1.bf16.msra.mxu0 %v5206
        %6761 = vmatprep.subr.bf16.mxu0 %v5267
        %6762 = vmatpush2.bf16.msra.mxu0 %v5266
        %6763 = vmatprep.subr.bf16.mxu0 %v5263
        %6764 = vmatpush2.bf16.msra.mxu0 %v5262
        %6765 = vmatprep.subr.bf16.mxu0 %v5259
        %6766 = vmatpush2.bf16.msra.mxu0 %v5258
        %6767 = vmatprep.subr.bf16.mxu0 %v5255
        %6768 = vmatpush2.bf16.msra.mxu0 %v5254
        %6769 = vmatprep.subr.bf16.mxu0 %v5251
        %6770 = vmatpush2.bf16.msra.mxu0 %v5250
        %6771 = vmatprep.subr.bf16.mxu0 %v5247
        %6772 = vmatpush2.bf16.msra.mxu0 %v5246
        %6773 = vmatprep.subr.bf16.mxu0 %v5243
        %6774 = vmatpush2.bf16.msra.mxu0 %v5242
        %6775 = vmatprep.subr.bf16.mxu0 %v5239
        %6776 = vmatpush2.bf16.msra.mxu0 %v5238
        %6777 = vmatprep.mubr.bf16.mxu0 %v4053
        %6778 = vmatmul.mubr.bf16.gmra.mxu0 %v4052
        %v6779 = vpop.f32.mrf.mxu0
        %v6780 = vadd.f32 0.0, %v6779
        %v6781 = vpop.f32.mrf.mxu0
        %v6782 = vadd.f32 0.0, %v6781
        %v6783 = vpop.f32.mrf.mxu0
        %v6784 = vadd.f32 0.0, %v6783
        %v6785 = vpop.f32.mrf.mxu0
        %v6786 = vadd.f32 0.0, %v6785
        %6787 = vmatprep.mubr.bf16.mxu0 %v4062
        %6788 = vmatmul.mubr.bf16.gmra.mxu0 %v4061
        %v6789 = vpop.f32.mrf.mxu0
        %v6790 = vadd.f32 0.0, %v6789
        %v6791 = vpop.f32.mrf.mxu0
        %v6792 = vadd.f32 0.0, %v6791
        %v6793 = vpop.f32.mrf.mxu0
        %v6794 = vadd.f32 0.0, %v6793
        %v6795 = vpop.f32.mrf.mxu0
        %v6796 = vadd.f32 0.0, %v6795
        %6797 = vmatprep.mubr.bf16.mxu0 %v4071
        %6798 = vmatmul.mubr.bf16.gmra.mxu0 %v4070
        %v6799 = vpop.f32.mrf.mxu0
        %v6800 = vadd.f32 0.0, %v6799
        %v6801 = vpop.f32.mrf.mxu0
        %v6802 = vadd.f32 0.0, %v6801
        %v6803 = vpop.f32.mrf.mxu0
        %v6804 = vadd.f32 0.0, %v6803
        %v6805 = vpop.f32.mrf.mxu0
        %v6806 = vadd.f32 0.0, %v6805
        %6807 = vmatprep.mubr.bf16.mxu0 %v4080
        %6808 = vmatmul.mubr.bf16.gmra.mxu0 %v4079
        %v6809 = vpop.f32.mrf.mxu0
        %v6810 = vadd.f32 0.0, %v6809
        %v6811 = vpop.f32.mrf.mxu0
        %v6812 = vadd.f32 0.0, %v6811
        %v6813 = vpop.f32.mrf.mxu0
        %v6814 = vadd.f32 0.0, %v6813
        %v6815 = vpop.f32.mrf.mxu0
        %v6816 = vadd.f32 0.0, %v6815
        %6817 = vmatprep.mubr.bf16.mxu0 %v4089
        %6818 = vmatmul.mubr.bf16.gmra.mxu0 %v4088
        %v6819 = vpop.f32.mrf.mxu0
        %v6820 = vadd.f32 0.0, %v6819
        %v6821 = vpop.f32.mrf.mxu0
        %v6822 = vadd.f32 0.0, %v6821
        %v6823 = vpop.f32.mrf.mxu0
        %v6824 = vadd.f32 0.0, %v6823
        %v6825 = vpop.f32.mrf.mxu0
        %v6826 = vadd.f32 0.0, %v6825
        %6827 = vmatprep.mubr.bf16.mxu0 %v4098
        %6828 = vmatmul.mubr.bf16.gmra.mxu0 %v4097
        %v6829 = vpop.f32.mrf.mxu0
        %v6830 = vadd.f32 0.0, %v6829
        %v6831 = vpop.f32.mrf.mxu0
        %v6832 = vadd.f32 0.0, %v6831
        %v6833 = vpop.f32.mrf.mxu0
        %v6834 = vadd.f32 0.0, %v6833
        %v6835 = vpop.f32.mrf.mxu0
        %v6836 = vadd.f32 0.0, %v6835
        %6837 = vmatprep.mubr.bf16.mxu0 %v4107
        %6838 = vmatmul.mubr.bf16.gmra.mxu0 %v4106
        %v6839 = vpop.f32.mrf.mxu0
        %v6840 = vadd.f32 0.0, %v6839
        %v6841 = vpop.f32.mrf.mxu0
        %v6842 = vadd.f32 0.0, %v6841
        %v6843 = vpop.f32.mrf.mxu0
        %v6844 = vadd.f32 0.0, %v6843
        %v6845 = vpop.f32.mrf.mxu0
        %v6846 = vadd.f32 0.0, %v6845
        %6847 = vmatprep.mubr.bf16.mxu0 %v4116
        %6848 = vmatmul.mubr.bf16.gmra.mxu0 %v4115
        %v6849 = vpop.f32.mrf.mxu0
        %v6850 = vadd.f32 0.0, %v6849
        %v6851 = vpop.f32.mrf.mxu0
        %v6852 = vadd.f32 0.0, %v6851
        %v6853 = vpop.f32.mrf.mxu0
        %v6854 = vadd.f32 0.0, %v6853
        %v6855 = vpop.f32.mrf.mxu0
        %v6856 = vadd.f32 0.0, %v6855
        %6857 = vmatprep.mubr.bf16.mxu0 %v4125
        %6858 = vmatmul.mubr.bf16.gmra.mxu0 %v4124
        %v6859 = vpop.f32.mrf.mxu0
        %v6860 = vadd.f32 0.0, %v6859
        %v6861 = vpop.f32.mrf.mxu0
        %v6862 = vadd.f32 0.0, %v6861
        %v6863 = vpop.f32.mrf.mxu0
        %v6864 = vadd.f32 0.0, %v6863
        %v6865 = vpop.f32.mrf.mxu0
        %v6866 = vadd.f32 0.0, %v6865
        %6867 = vmatprep.mubr.bf16.mxu0 %v4134
        %6868 = vmatmul.mubr.bf16.gmra.mxu0 %v4133
        %v6869 = vpop.f32.mrf.mxu0
        %v6870 = vadd.f32 0.0, %v6869
        %v6871 = vpop.f32.mrf.mxu0
        %v6872 = vadd.f32 0.0, %v6871
        %v6873 = vpop.f32.mrf.mxu0
        %v6874 = vadd.f32 0.0, %v6873
        %v6875 = vpop.f32.mrf.mxu0
        %v6876 = vadd.f32 0.0, %v6875
        %6877 = vmatprep.mubr.bf16.mxu0 %v4143
        %6878 = vmatmul.mubr.bf16.gmra.mxu0 %v4142
        %v6879 = vpop.f32.mrf.mxu0
        %v6880 = vadd.f32 0.0, %v6879
        %v6881 = vpop.f32.mrf.mxu0
        %v6882 = vadd.f32 0.0, %v6881
        %v6883 = vpop.f32.mrf.mxu0
        %v6884 = vadd.f32 0.0, %v6883
        %v6885 = vpop.f32.mrf.mxu0
        %v6886 = vadd.f32 0.0, %v6885
        %6887 = vmatprep.mubr.bf16.mxu0 %v4152
        %6888 = vmatmul.mubr.bf16.gmra.mxu0 %v4151
        %v6889 = vpop.f32.mrf.mxu0
        %v6890 = vadd.f32 0.0, %v6889
        %v6891 = vpop.f32.mrf.mxu0
        %v6892 = vadd.f32 0.0, %v6891
        %v6893 = vpop.f32.mrf.mxu0
        %v6894 = vadd.f32 0.0, %v6893
        %v6895 = vpop.f32.mrf.mxu0
        %v6896 = vadd.f32 0.0, %v6895
        %6897 = vmatprep.mubr.bf16.mxu0 %v4161
        %6898 = vmatmul.mubr.bf16.gmra.mxu0 %v4160
        %v6899 = vpop.f32.mrf.mxu0
        %v6900 = vadd.f32 0.0, %v6899
        %v6901 = vpop.f32.mrf.mxu0
        %v6902 = vadd.f32 0.0, %v6901
        %v6903 = vpop.f32.mrf.mxu0
        %v6904 = vadd.f32 0.0, %v6903
        %v6905 = vpop.f32.mrf.mxu0
        %v6906 = vadd.f32 0.0, %v6905
        %6907 = vmatprep.mubr.bf16.mxu0 %v4170
        %6908 = vmatmul.mubr.bf16.gmra.mxu0 %v4169
        %v6909 = vpop.f32.mrf.mxu0
        %v6910 = vadd.f32 0.0, %v6909
        %v6911 = vpop.f32.mrf.mxu0
        %v6912 = vadd.f32 0.0, %v6911
        %v6913 = vpop.f32.mrf.mxu0
        %v6914 = vadd.f32 0.0, %v6913
        %v6915 = vpop.f32.mrf.mxu0
        %v6916 = vadd.f32 0.0, %v6915
        %6917 = vmatprep.mubr.bf16.mxu0 %v4179
        %6918 = vmatmul.mubr.bf16.gmra.mxu0 %v4178
        %v6919 = vpop.f32.mrf.mxu0
        %v6920 = vadd.f32 0.0, %v6919
        %v6921 = vpop.f32.mrf.mxu0
        %v6922 = vadd.f32 0.0, %v6921
        %v6923 = vpop.f32.mrf.mxu0
        %v6924 = vadd.f32 0.0, %v6923
        %v6925 = vpop.f32.mrf.mxu0
        %v6926 = vadd.f32 0.0, %v6925
        %6927 = vmatprep.mubr.bf16.mxu0 %v4188
        %6928 = vmatmul.mubr.bf16.gmra.mxu0 %v4187
        %v6929 = vpop.f32.mrf.mxu0
        %v6930 = vadd.f32 0.0, %v6929
        %v6931 = vpop.f32.mrf.mxu0
        %v6932 = vadd.f32 0.0, %v6931
        %v6933 = vpop.f32.mrf.mxu0
        %v6934 = vadd.f32 0.0, %v6933
        %v6935 = vpop.f32.mrf.mxu0
        %v6936 = vadd.f32 0.0, %v6935
        %6937 = vdwg.mxu0
        %6938 = vmatprep.subr.bf16.mxu0 %v5299
        %6939 = vmatpush1.bf16.msra.mxu0 %v5298
        %6940 = vmatprep.subr.bf16.mxu0 %v5295
        %6941 = vmatpush1.bf16.msra.mxu0 %v5294
        %6942 = vmatprep.subr.bf16.mxu0 %v5291
        %6943 = vmatpush1.bf16.msra.mxu0 %v5290
        %6944 = vmatprep.subr.bf16.mxu0 %v5287
        %6945 = vmatpush1.bf16.msra.mxu0 %v5286
        %6946 = vmatprep.subr.bf16.mxu0 %v5283
        %6947 = vmatpush1.bf16.msra.mxu0 %v5282
        %6948 = vmatprep.subr.bf16.mxu0 %v5279
        %6949 = vmatpush1.bf16.msra.mxu0 %v5278
        %6950 = vmatprep.subr.bf16.mxu0 %v5275
        %6951 = vmatpush1.bf16.msra.mxu0 %v5274
        %6952 = vmatprep.subr.bf16.mxu0 %v5271
        %6953 = vmatpush1.bf16.msra.mxu0 %v5270
        %6954 = vmatprep.subr.bf16.mxu0 %v5331
        %6955 = vmatpush2.bf16.msra.mxu0 %v5330
        %6956 = vmatprep.subr.bf16.mxu0 %v5327
        %6957 = vmatpush2.bf16.msra.mxu0 %v5326
        %6958 = vmatprep.subr.bf16.mxu0 %v5323
        %6959 = vmatpush2.bf16.msra.mxu0 %v5322
        %6960 = vmatprep.subr.bf16.mxu0 %v5319
        %6961 = vmatpush2.bf16.msra.mxu0 %v5318
        %6962 = vmatprep.subr.bf16.mxu0 %v5315
        %6963 = vmatpush2.bf16.msra.mxu0 %v5314
        %6964 = vmatprep.subr.bf16.mxu0 %v5311
        %6965 = vmatpush2.bf16.msra.mxu0 %v5310
        %6966 = vmatprep.subr.bf16.mxu0 %v5307
        %6967 = vmatpush2.bf16.msra.mxu0 %v5306
        %6968 = vmatprep.subr.bf16.mxu0 %v5303
        %6969 = vmatpush2.bf16.msra.mxu0 %v5302
        %6970 = vmatprep.mubr.bf16.mxu0 %v4055
        %6971 = vmatmul.mubr.bf16.gmra.mxu0 %v4054
        %v6972 = vpop.f32.mrf.mxu0
        %v6973 = vadd.f32 %v6780, %v6972
        %v6974 = vpop.f32.mrf.mxu0
        %v6975 = vadd.f32 %v6782, %v6974
        %v6976 = vpop.f32.mrf.mxu0
        %v6977 = vadd.f32 %v6784, %v6976
        %v6978 = vpop.f32.mrf.mxu0
        %v6979 = vadd.f32 %v6786, %v6978
        %6980 = vmatprep.mubr.bf16.mxu0 %v4064
        %6981 = vmatmul.mubr.bf16.gmra.mxu0 %v4063
        %v6982 = vpop.f32.mrf.mxu0
        %v6983 = vadd.f32 %v6790, %v6982
        %v6984 = vpop.f32.mrf.mxu0
        %v6985 = vadd.f32 %v6792, %v6984
        %v6986 = vpop.f32.mrf.mxu0
        %v6987 = vadd.f32 %v6794, %v6986
        %v6988 = vpop.f32.mrf.mxu0
        %v6989 = vadd.f32 %v6796, %v6988
        %6990 = vmatprep.mubr.bf16.mxu0 %v4073
        %6991 = vmatmul.mubr.bf16.gmra.mxu0 %v4072
        %v6992 = vpop.f32.mrf.mxu0
        %v6993 = vadd.f32 %v6800, %v6992
        %v6994 = vpop.f32.mrf.mxu0
        %v6995 = vadd.f32 %v6802, %v6994
        %v6996 = vpop.f32.mrf.mxu0
        %v6997 = vadd.f32 %v6804, %v6996
        %v6998 = vpop.f32.mrf.mxu0
        %v6999 = vadd.f32 %v6806, %v6998
        %7000 = vmatprep.mubr.bf16.mxu0 %v4082
        %7001 = vmatmul.mubr.bf16.gmra.mxu0 %v4081
        %v7002 = vpop.f32.mrf.mxu0
        %v7003 = vadd.f32 %v6810, %v7002
        %v7004 = vpop.f32.mrf.mxu0
        %v7005 = vadd.f32 %v6812, %v7004
        %v7006 = vpop.f32.mrf.mxu0
        %v7007 = vadd.f32 %v6814, %v7006
        %v7008 = vpop.f32.mrf.mxu0
        %v7009 = vadd.f32 %v6816, %v7008
        %7010 = vmatprep.mubr.bf16.mxu0 %v4091
        %7011 = vmatmul.mubr.bf16.gmra.mxu0 %v4090
        %v7012 = vpop.f32.mrf.mxu0
        %v7013 = vadd.f32 %v6820, %v7012
        %v7014 = vpop.f32.mrf.mxu0
        %v7015 = vadd.f32 %v6822, %v7014
        %v7016 = vpop.f32.mrf.mxu0
        %v7017 = vadd.f32 %v6824, %v7016
        %v7018 = vpop.f32.mrf.mxu0
        %v7019 = vadd.f32 %v6826, %v7018
        %7020 = vmatprep.mubr.bf16.mxu0 %v4100
        %7021 = vmatmul.mubr.bf16.gmra.mxu0 %v4099
        %v7022 = vpop.f32.mrf.mxu0
        %v7023 = vadd.f32 %v6830, %v7022
        %v7024 = vpop.f32.mrf.mxu0
        %v7025 = vadd.f32 %v6832, %v7024
        %v7026 = vpop.f32.mrf.mxu0
        %v7027 = vadd.f32 %v6834, %v7026
        %v7028 = vpop.f32.mrf.mxu0
        %v7029 = vadd.f32 %v6836, %v7028
        %7030 = vmatprep.mubr.bf16.mxu0 %v4109
        %7031 = vmatmul.mubr.bf16.gmra.mxu0 %v4108
        %v7032 = vpop.f32.mrf.mxu0
        %v7033 = vadd.f32 %v6840, %v7032
        %v7034 = vpop.f32.mrf.mxu0
        %v7035 = vadd.f32 %v6842, %v7034
        %v7036 = vpop.f32.mrf.mxu0
        %v7037 = vadd.f32 %v6844, %v7036
        %v7038 = vpop.f32.mrf.mxu0
        %v7039 = vadd.f32 %v6846, %v7038
        %7040 = vmatprep.mubr.bf16.mxu0 %v4118
        %7041 = vmatmul.mubr.bf16.gmra.mxu0 %v4117
        %v7042 = vpop.f32.mrf.mxu0
        %v7043 = vadd.f32 %v6850, %v7042
        %v7044 = vpop.f32.mrf.mxu0
        %v7045 = vadd.f32 %v6852, %v7044
        %v7046 = vpop.f32.mrf.mxu0
        %v7047 = vadd.f32 %v6854, %v7046
        %v7048 = vpop.f32.mrf.mxu0
        %v7049 = vadd.f32 %v6856, %v7048
        %7050 = vmatprep.mubr.bf16.mxu0 %v4127
        %7051 = vmatmul.mubr.bf16.gmra.mxu0 %v4126
        %v7052 = vpop.f32.mrf.mxu0
        %v7053 = vadd.f32 %v6860, %v7052
        %v7054 = vpop.f32.mrf.mxu0
        %v7055 = vadd.f32 %v6862, %v7054
        %v7056 = vpop.f32.mrf.mxu0
        %v7057 = vadd.f32 %v6864, %v7056
        %v7058 = vpop.f32.mrf.mxu0
        %v7059 = vadd.f32 %v6866, %v7058
        %7060 = vmatprep.mubr.bf16.mxu0 %v4136
        %7061 = vmatmul.mubr.bf16.gmra.mxu0 %v4135
        %v7062 = vpop.f32.mrf.mxu0
        %v7063 = vadd.f32 %v6870, %v7062
        %v7064 = vpop.f32.mrf.mxu0
        %v7065 = vadd.f32 %v6872, %v7064
        %v7066 = vpop.f32.mrf.mxu0
        %v7067 = vadd.f32 %v6874, %v7066
        %v7068 = vpop.f32.mrf.mxu0
        %v7069 = vadd.f32 %v6876, %v7068
        %7070 = vmatprep.mubr.bf16.mxu0 %v4145
        %7071 = vmatmul.mubr.bf16.gmra.mxu0 %v4144
        %v7072 = vpop.f32.mrf.mxu0
        %v7073 = vadd.f32 %v6880, %v7072
        %v7074 = vpop.f32.mrf.mxu0
        %v7075 = vadd.f32 %v6882, %v7074
        %v7076 = vpop.f32.mrf.mxu0
        %v7077 = vadd.f32 %v6884, %v7076
        %v7078 = vpop.f32.mrf.mxu0
        %v7079 = vadd.f32 %v6886, %v7078
        %7080 = vmatprep.mubr.bf16.mxu0 %v4154
        %7081 = vmatmul.mubr.bf16.gmra.mxu0 %v4153
        %v7082 = vpop.f32.mrf.mxu0
        %v7083 = vadd.f32 %v6890, %v7082
        %v7084 = vpop.f32.mrf.mxu0
        %v7085 = vadd.f32 %v6892, %v7084
        %v7086 = vpop.f32.mrf.mxu0
        %v7087 = vadd.f32 %v6894, %v7086
        %v7088 = vpop.f32.mrf.mxu0
        %v7089 = vadd.f32 %v6896, %v7088
        %7090 = vmatprep.mubr.bf16.mxu0 %v4163
        %7091 = vmatmul.mubr.bf16.gmra.mxu0 %v4162
        %v7092 = vpop.f32.mrf.mxu0
        %v7093 = vadd.f32 %v6900, %v7092
        %v7094 = vpop.f32.mrf.mxu0
        %v7095 = vadd.f32 %v6902, %v7094
        %v7096 = vpop.f32.mrf.mxu0
        %v7097 = vadd.f32 %v6904, %v7096
        %v7098 = vpop.f32.mrf.mxu0
        %v7099 = vadd.f32 %v6906, %v7098
        %7100 = vmatprep.mubr.bf16.mxu0 %v4172
        %7101 = vmatmul.mubr.bf16.gmra.mxu0 %v4171
        %v7102 = vpop.f32.mrf.mxu0
        %v7103 = vadd.f32 %v6910, %v7102
        %v7104 = vpop.f32.mrf.mxu0
        %v7105 = vadd.f32 %v6912, %v7104
        %v7106 = vpop.f32.mrf.mxu0
        %v7107 = vadd.f32 %v6914, %v7106
        %v7108 = vpop.f32.mrf.mxu0
        %v7109 = vadd.f32 %v6916, %v7108
        %7110 = vmatprep.mubr.bf16.mxu0 %v4181
        %7111 = vmatmul.mubr.bf16.gmra.mxu0 %v4180
        %v7112 = vpop.f32.mrf.mxu0
        %v7113 = vadd.f32 %v6920, %v7112
        %v7114 = vpop.f32.mrf.mxu0
        %v7115 = vadd.f32 %v6922, %v7114
        %v7116 = vpop.f32.mrf.mxu0
        %v7117 = vadd.f32 %v6924, %v7116
        %v7118 = vpop.f32.mrf.mxu0
        %v7119 = vadd.f32 %v6926, %v7118
        %7120 = vmatprep.mubr.bf16.mxu0 %v4190
        %7121 = vmatmul.mubr.bf16.gmra.mxu0 %v4189
        %v7122 = vpop.f32.mrf.mxu0
        %v7123 = vadd.f32 %v6930, %v7122
        %v7124 = vpop.f32.mrf.mxu0
        %v7125 = vadd.f32 %v6932, %v7124
        %v7126 = vpop.f32.mrf.mxu0
        %v7127 = vadd.f32 %v6934, %v7126
        %v7128 = vpop.f32.mrf.mxu0
        %v7129 = vadd.f32 %v6936, %v7128
        %7130 = vdwg.mxu0
        %7131 = vmatprep.subr.bf16.mxu0 %v5363
        %7132 = vmatpush1.bf16.msra.mxu0 %v5362
        %7133 = vmatprep.subr.bf16.mxu0 %v5359
        %7134 = vmatpush1.bf16.msra.mxu0 %v5358
        %7135 = vmatprep.subr.bf16.mxu0 %v5355
        %7136 = vmatpush1.bf16.msra.mxu0 %v5354
        %7137 = vmatprep.subr.bf16.mxu0 %v5351
        %7138 = vmatpush1.bf16.msra.mxu0 %v5350
        %7139 = vmatprep.subr.bf16.mxu0 %v5347
        %7140 = vmatpush1.bf16.msra.mxu0 %v5346
        %7141 = vmatprep.subr.bf16.mxu0 %v5343
        %7142 = vmatpush1.bf16.msra.mxu0 %v5342
        %7143 = vmatprep.subr.bf16.mxu0 %v5339
        %7144 = vmatpush1.bf16.msra.mxu0 %v5338
        %7145 = vmatprep.subr.bf16.mxu0 %v5335
        %7146 = vmatpush1.bf16.msra.mxu0 %v5334
        %7147 = vmatprep.subr.bf16.mxu0 %v5395
        %7148 = vmatpush2.bf16.msra.mxu0 %v5394
        %7149 = vmatprep.subr.bf16.mxu0 %v5391
        %7150 = vmatpush2.bf16.msra.mxu0 %v5390
        %7151 = vmatprep.subr.bf16.mxu0 %v5387
        %7152 = vmatpush2.bf16.msra.mxu0 %v5386
        %7153 = vmatprep.subr.bf16.mxu0 %v5383
        %7154 = vmatpush2.bf16.msra.mxu0 %v5382
        %7155 = vmatprep.subr.bf16.mxu0 %v5379
        %7156 = vmatpush2.bf16.msra.mxu0 %v5378
        %7157 = vmatprep.subr.bf16.mxu0 %v5375
        %7158 = vmatpush2.bf16.msra.mxu0 %v5374
        %7159 = vmatprep.subr.bf16.mxu0 %v5371
        %7160 = vmatpush2.bf16.msra.mxu0 %v5370
        %7161 = vmatprep.subr.bf16.mxu0 %v5367
        %7162 = vmatpush2.bf16.msra.mxu0 %v5366
        %7163 = vmatprep.mubr.bf16.mxu0 %v4057
        %7164 = vmatmul.mubr.bf16.gmra.mxu0 %v4056
        %v7165 = vpop.f32.mrf.mxu0
        %v7166 = vadd.f32 %v6973, %v7165
        %v7167 = vpop.f32.mrf.mxu0
        %v7168 = vadd.f32 %v6975, %v7167
        %v7169 = vpop.f32.mrf.mxu0
        %v7170 = vadd.f32 %v6977, %v7169
        %v7171 = vpop.f32.mrf.mxu0
        %v7172 = vadd.f32 %v6979, %v7171
        %7173 = vmatprep.mubr.bf16.mxu0 %v4066
        %7174 = vmatmul.mubr.bf16.gmra.mxu0 %v4065
        %v7175 = vpop.f32.mrf.mxu0
        %v7176 = vadd.f32 %v6983, %v7175
        %v7177 = vpop.f32.mrf.mxu0
        %v7178 = vadd.f32 %v6985, %v7177
        %v7179 = vpop.f32.mrf.mxu0
        %v7180 = vadd.f32 %v6987, %v7179
        %v7181 = vpop.f32.mrf.mxu0
        %v7182 = vadd.f32 %v6989, %v7181
        %7183 = vmatprep.mubr.bf16.mxu0 %v4075
        %7184 = vmatmul.mubr.bf16.gmra.mxu0 %v4074
        %v7185 = vpop.f32.mrf.mxu0
        %v7186 = vadd.f32 %v6993, %v7185
        %v7187 = vpop.f32.mrf.mxu0
        %v7188 = vadd.f32 %v6995, %v7187
        %v7189 = vpop.f32.mrf.mxu0
        %v7190 = vadd.f32 %v6997, %v7189
        %v7191 = vpop.f32.mrf.mxu0
        %v7192 = vadd.f32 %v6999, %v7191
        %7193 = vmatprep.mubr.bf16.mxu0 %v4084
        %7194 = vmatmul.mubr.bf16.gmra.mxu0 %v4083
        %v7195 = vpop.f32.mrf.mxu0
        %v7196 = vadd.f32 %v7003, %v7195
        %v7197 = vpop.f32.mrf.mxu0
        %v7198 = vadd.f32 %v7005, %v7197
        %v7199 = vpop.f32.mrf.mxu0
        %v7200 = vadd.f32 %v7007, %v7199
        %v7201 = vpop.f32.mrf.mxu0
        %v7202 = vadd.f32 %v7009, %v7201
        %7203 = vmatprep.mubr.bf16.mxu0 %v4093
        %7204 = vmatmul.mubr.bf16.gmra.mxu0 %v4092
        %v7205 = vpop.f32.mrf.mxu0
        %v7206 = vadd.f32 %v7013, %v7205
        %v7207 = vpop.f32.mrf.mxu0
        %v7208 = vadd.f32 %v7015, %v7207
        %v7209 = vpop.f32.mrf.mxu0
        %v7210 = vadd.f32 %v7017, %v7209
        %v7211 = vpop.f32.mrf.mxu0
        %v7212 = vadd.f32 %v7019, %v7211
        %7213 = vmatprep.mubr.bf16.mxu0 %v4102
        %7214 = vmatmul.mubr.bf16.gmra.mxu0 %v4101
        %v7215 = vpop.f32.mrf.mxu0
        %v7216 = vadd.f32 %v7023, %v7215
        %v7217 = vpop.f32.mrf.mxu0
        %v7218 = vadd.f32 %v7025, %v7217
        %v7219 = vpop.f32.mrf.mxu0
        %v7220 = vadd.f32 %v7027, %v7219
        %v7221 = vpop.f32.mrf.mxu0
        %v7222 = vadd.f32 %v7029, %v7221
        %7223 = vmatprep.mubr.bf16.mxu0 %v4111
        %7224 = vmatmul.mubr.bf16.gmra.mxu0 %v4110
        %v7225 = vpop.f32.mrf.mxu0
        %v7226 = vadd.f32 %v7033, %v7225
        %v7227 = vpop.f32.mrf.mxu0
        %v7228 = vadd.f32 %v7035, %v7227
        %v7229 = vpop.f32.mrf.mxu0
        %v7230 = vadd.f32 %v7037, %v7229
        %v7231 = vpop.f32.mrf.mxu0
        %v7232 = vadd.f32 %v7039, %v7231
        %7233 = vmatprep.mubr.bf16.mxu0 %v4120
        %7234 = vmatmul.mubr.bf16.gmra.mxu0 %v4119
        %v7235 = vpop.f32.mrf.mxu0
        %v7236 = vadd.f32 %v7043, %v7235
        %v7237 = vpop.f32.mrf.mxu0
        %v7238 = vadd.f32 %v7045, %v7237
        %v7239 = vpop.f32.mrf.mxu0
        %v7240 = vadd.f32 %v7047, %v7239
        %v7241 = vpop.f32.mrf.mxu0
        %v7242 = vadd.f32 %v7049, %v7241
        %7243 = vmatprep.mubr.bf16.mxu0 %v4129
        %7244 = vmatmul.mubr.bf16.gmra.mxu0 %v4128
        %v7245 = vpop.f32.mrf.mxu0
        %v7246 = vadd.f32 %v7053, %v7245
        %v7247 = vpop.f32.mrf.mxu0
        %v7248 = vadd.f32 %v7055, %v7247
        %v7249 = vpop.f32.mrf.mxu0
        %v7250 = vadd.f32 %v7057, %v7249
        %v7251 = vpop.f32.mrf.mxu0
        %v7252 = vadd.f32 %v7059, %v7251
        %7253 = vmatprep.mubr.bf16.mxu0 %v4138
        %7254 = vmatmul.mubr.bf16.gmra.mxu0 %v4137
        %v7255 = vpop.f32.mrf.mxu0
        %v7256 = vadd.f32 %v7063, %v7255
        %v7257 = vpop.f32.mrf.mxu0
        %v7258 = vadd.f32 %v7065, %v7257
        %v7259 = vpop.f32.mrf.mxu0
        %v7260 = vadd.f32 %v7067, %v7259
        %v7261 = vpop.f32.mrf.mxu0
        %v7262 = vadd.f32 %v7069, %v7261
        %7263 = vmatprep.mubr.bf16.mxu0 %v4147
        %7264 = vmatmul.mubr.bf16.gmra.mxu0 %v4146
        %v7265 = vpop.f32.mrf.mxu0
        %v7266 = vadd.f32 %v7073, %v7265
        %v7267 = vpop.f32.mrf.mxu0
        %v7268 = vadd.f32 %v7075, %v7267
        %v7269 = vpop.f32.mrf.mxu0
        %v7270 = vadd.f32 %v7077, %v7269
        %v7271 = vpop.f32.mrf.mxu0
        %v7272 = vadd.f32 %v7079, %v7271
        %7273 = vmatprep.mubr.bf16.mxu0 %v4156
        %7274 = vmatmul.mubr.bf16.gmra.mxu0 %v4155
        %v7275 = vpop.f32.mrf.mxu0
        %v7276 = vadd.f32 %v7083, %v7275
        %v7277 = vpop.f32.mrf.mxu0
        %v7278 = vadd.f32 %v7085, %v7277
        %v7279 = vpop.f32.mrf.mxu0
        %v7280 = vadd.f32 %v7087, %v7279
        %v7281 = vpop.f32.mrf.mxu0
        %v7282 = vadd.f32 %v7089, %v7281
        %7283 = vmatprep.mubr.bf16.mxu0 %v4165
        %7284 = vmatmul.mubr.bf16.gmra.mxu0 %v4164
        %v7285 = vpop.f32.mrf.mxu0
        %v7286 = vadd.f32 %v7093, %v7285
        %v7287 = vpop.f32.mrf.mxu0
        %v7288 = vadd.f32 %v7095, %v7287
        %v7289 = vpop.f32.mrf.mxu0
        %v7290 = vadd.f32 %v7097, %v7289
        %v7291 = vpop.f32.mrf.mxu0
        %v7292 = vadd.f32 %v7099, %v7291
        %7293 = vmatprep.mubr.bf16.mxu0 %v4174
        %7294 = vmatmul.mubr.bf16.gmra.mxu0 %v4173
        %v7295 = vpop.f32.mrf.mxu0
        %v7296 = vadd.f32 %v7103, %v7295
        %v7297 = vpop.f32.mrf.mxu0
        %v7298 = vadd.f32 %v7105, %v7297
        %v7299 = vpop.f32.mrf.mxu0
        %v7300 = vadd.f32 %v7107, %v7299
        %v7301 = vpop.f32.mrf.mxu0
        %v7302 = vadd.f32 %v7109, %v7301
        %7303 = vmatprep.mubr.bf16.mxu0 %v4183
        %7304 = vmatmul.mubr.bf16.gmra.mxu0 %v4182
        %v7305 = vpop.f32.mrf.mxu0
        %v7306 = vadd.f32 %v7113, %v7305
        %v7307 = vpop.f32.mrf.mxu0
        %v7308 = vadd.f32 %v7115, %v7307
        %v7309 = vpop.f32.mrf.mxu0
        %v7310 = vadd.f32 %v7117, %v7309
        %v7311 = vpop.f32.mrf.mxu0
        %v7312 = vadd.f32 %v7119, %v7311
        %7313 = vmatprep.mubr.bf16.mxu0 %v4192
        %7314 = vmatmul.mubr.bf16.gmra.mxu0 %v4191
        %v7315 = vpop.f32.mrf.mxu0
        %v7316 = vadd.f32 %v7123, %v7315
        %v7317 = vpop.f32.mrf.mxu0
        %v7318 = vadd.f32 %v7125, %v7317
        %v7319 = vpop.f32.mrf.mxu0
        %v7320 = vadd.f32 %v7127, %v7319
        %v7321 = vpop.f32.mrf.mxu0
        %v7322 = vadd.f32 %v7129, %v7321
        %7323 = vdwg.mxu0
        %7324 = vmatprep.subr.bf16.mxu0 %v5427
        %7325 = vmatpush1.bf16.msra.mxu0 %v5426
        %7326 = vmatprep.subr.bf16.mxu0 %v5423
        %7327 = vmatpush1.bf16.msra.mxu0 %v5422
        %7328 = vmatprep.subr.bf16.mxu0 %v5419
        %7329 = vmatpush1.bf16.msra.mxu0 %v5418
        %7330 = vmatprep.subr.bf16.mxu0 %v5415
        %7331 = vmatpush1.bf16.msra.mxu0 %v5414
        %7332 = vmatprep.subr.bf16.mxu0 %v5411
        %7333 = vmatpush1.bf16.msra.mxu0 %v5410
        %7334 = vmatprep.subr.bf16.mxu0 %v5407
        %7335 = vmatpush1.bf16.msra.mxu0 %v5406
        %7336 = vmatprep.subr.bf16.mxu0 %v5403
        %7337 = vmatpush1.bf16.msra.mxu0 %v5402
        %7338 = vmatprep.subr.bf16.mxu0 %v5399
        %7339 = vmatpush1.bf16.msra.mxu0 %v5398
        %7340 = vmatprep.subr.bf16.mxu0 %v5459
        %7341 = vmatpush2.bf16.msra.mxu0 %v5458
        %7342 = vmatprep.subr.bf16.mxu0 %v5455
        %7343 = vmatpush2.bf16.msra.mxu0 %v5454
        %7344 = vmatprep.subr.bf16.mxu0 %v5451
        %7345 = vmatpush2.bf16.msra.mxu0 %v5450
        %7346 = vmatprep.subr.bf16.mxu0 %v5447
        %7347 = vmatpush2.bf16.msra.mxu0 %v5446
        %7348 = vmatprep.subr.bf16.mxu0 %v5443
        %7349 = vmatpush2.bf16.msra.mxu0 %v5442
        %7350 = vmatprep.subr.bf16.mxu0 %v5439
        %7351 = vmatpush2.bf16.msra.mxu0 %v5438
        %7352 = vmatprep.subr.bf16.mxu0 %v5435
        %7353 = vmatpush2.bf16.msra.mxu0 %v5434
        %7354 = vmatprep.subr.bf16.mxu0 %v5431
        %7355 = vmatpush2.bf16.msra.mxu0 %v5430
        %7356 = vmatprep.mubr.bf16.mxu0 %v4059
        %7357 = vmatmul.mubr.bf16.gmra.mxu0 %v4058
        %v7358 = vpop.f32.mrf.mxu0
        %v7359 = vadd.f32 %v7166, %v7358
        %v7360 = vpop.f32.mrf.mxu0
        %v7361 = vadd.f32 %v7168, %v7360
        %v7362 = vpop.f32.mrf.mxu0
        %v7363 = vadd.f32 %v7170, %v7362
        %v7364 = vpop.f32.mrf.mxu0
        %v7365 = vadd.f32 %v7172, %v7364
        %7366 = vmatprep.mubr.bf16.mxu0 %v4068
        %7367 = vmatmul.mubr.bf16.gmra.mxu0 %v4067
        %v7368 = vpop.f32.mrf.mxu0
        %v7369 = vadd.f32 %v7176, %v7368
        %v7370 = vpop.f32.mrf.mxu0
        %v7371 = vadd.f32 %v7178, %v7370
        %v7372 = vpop.f32.mrf.mxu0
        %v7373 = vadd.f32 %v7180, %v7372
        %v7374 = vpop.f32.mrf.mxu0
        %v7375 = vadd.f32 %v7182, %v7374
        %7376 = vmatprep.mubr.bf16.mxu0 %v4077
        %7377 = vmatmul.mubr.bf16.gmra.mxu0 %v4076
        %v7378 = vpop.f32.mrf.mxu0
        %v7379 = vadd.f32 %v7186, %v7378
        %v7380 = vpop.f32.mrf.mxu0
        %v7381 = vadd.f32 %v7188, %v7380
        %v7382 = vpop.f32.mrf.mxu0
        %v7383 = vadd.f32 %v7190, %v7382
        %v7384 = vpop.f32.mrf.mxu0
        %v7385 = vadd.f32 %v7192, %v7384
        %7386 = vmatprep.mubr.bf16.mxu0 %v4086
        %7387 = vmatmul.mubr.bf16.gmra.mxu0 %v4085
        %v7388 = vpop.f32.mrf.mxu0
        %v7389 = vadd.f32 %v7196, %v7388
        %v7390 = vpop.f32.mrf.mxu0
        %v7391 = vadd.f32 %v7198, %v7390
        %v7392 = vpop.f32.mrf.mxu0
        %v7393 = vadd.f32 %v7200, %v7392
        %v7394 = vpop.f32.mrf.mxu0
        %v7395 = vadd.f32 %v7202, %v7394
        %7396 = vmatprep.mubr.bf16.mxu0 %v4095
        %7397 = vmatmul.mubr.bf16.gmra.mxu0 %v4094
        %v7398 = vpop.f32.mrf.mxu0
        %v7399 = vadd.f32 %v7206, %v7398
        %v7400 = vpop.f32.mrf.mxu0
        %v7401 = vadd.f32 %v7208, %v7400
        %v7402 = vpop.f32.mrf.mxu0
        %v7403 = vadd.f32 %v7210, %v7402
        %v7404 = vpop.f32.mrf.mxu0
        %v7405 = vadd.f32 %v7212, %v7404
        %7406 = vmatprep.mubr.bf16.mxu0 %v4104
        %7407 = vmatmul.mubr.bf16.gmra.mxu0 %v4103
        %v7408 = vpop.f32.mrf.mxu0
        %v7409 = vadd.f32 %v7216, %v7408
        %v7410 = vpop.f32.mrf.mxu0
        %v7411 = vadd.f32 %v7218, %v7410
        %v7412 = vpop.f32.mrf.mxu0
        %v7413 = vadd.f32 %v7220, %v7412
        %v7414 = vpop.f32.mrf.mxu0
        %v7415 = vadd.f32 %v7222, %v7414
        %7416 = vmatprep.mubr.bf16.mxu0 %v4113
        %7417 = vmatmul.mubr.bf16.gmra.mxu0 %v4112
        %v7418 = vpop.f32.mrf.mxu0
        %v7419 = vadd.f32 %v7226, %v7418
        %v7420 = vpop.f32.mrf.mxu0
        %v7421 = vadd.f32 %v7228, %v7420
        %v7422 = vpop.f32.mrf.mxu0
        %v7423 = vadd.f32 %v7230, %v7422
        %v7424 = vpop.f32.mrf.mxu0
        %v7425 = vadd.f32 %v7232, %v7424
        %7426 = vmatprep.mubr.bf16.mxu0 %v4122
        %7427 = vmatmul.mubr.bf16.gmra.mxu0 %v4121
        %v7428 = vpop.f32.mrf.mxu0
        %v7429 = vadd.f32 %v7236, %v7428
        %v7430 = vpop.f32.mrf.mxu0
        %v7431 = vadd.f32 %v7238, %v7430
        %v7432 = vpop.f32.mrf.mxu0
        %v7433 = vadd.f32 %v7240, %v7432
        %v7434 = vpop.f32.mrf.mxu0
        %v7435 = vadd.f32 %v7242, %v7434
        %7436 = vmatprep.mubr.bf16.mxu0 %v4131
        %7437 = vmatmul.mubr.bf16.gmra.mxu0 %v4130
        %v7438 = vpop.f32.mrf.mxu0
        %v7439 = vadd.f32 %v7246, %v7438
        %v7440 = vpop.f32.mrf.mxu0
        %v7441 = vadd.f32 %v7248, %v7440
        %v7442 = vpop.f32.mrf.mxu0
        %v7443 = vadd.f32 %v7250, %v7442
        %v7444 = vpop.f32.mrf.mxu0
        %v7445 = vadd.f32 %v7252, %v7444
        %7446 = vmatprep.mubr.bf16.mxu0 %v4140
        %7447 = vmatmul.mubr.bf16.gmra.mxu0 %v4139
        %v7448 = vpop.f32.mrf.mxu0
        %v7449 = vadd.f32 %v7256, %v7448
        %v7450 = vpop.f32.mrf.mxu0
        %v7451 = vadd.f32 %v7258, %v7450
        %v7452 = vpop.f32.mrf.mxu0
        %v7453 = vadd.f32 %v7260, %v7452
        %v7454 = vpop.f32.mrf.mxu0
        %v7455 = vadd.f32 %v7262, %v7454
        %7456 = vmatprep.mubr.bf16.mxu0 %v4149
        %7457 = vmatmul.mubr.bf16.gmra.mxu0 %v4148
        %v7458 = vpop.f32.mrf.mxu0
        %v7459 = vadd.f32 %v7266, %v7458
        %v7460 = vpop.f32.mrf.mxu0
        %v7461 = vadd.f32 %v7268, %v7460
        %v7462 = vpop.f32.mrf.mxu0
        %v7463 = vadd.f32 %v7270, %v7462
        %v7464 = vpop.f32.mrf.mxu0
        %v7465 = vadd.f32 %v7272, %v7464
        %7466 = vmatprep.mubr.bf16.mxu0 %v4158
        %7467 = vmatmul.mubr.bf16.gmra.mxu0 %v4157
        %v7468 = vpop.f32.mrf.mxu0
        %v7469 = vadd.f32 %v7276, %v7468
        %v7470 = vpop.f32.mrf.mxu0
        %v7471 = vadd.f32 %v7278, %v7470
        %v7472 = vpop.f32.mrf.mxu0
        %v7473 = vadd.f32 %v7280, %v7472
        %v7474 = vpop.f32.mrf.mxu0
        %v7475 = vadd.f32 %v7282, %v7474
        %7476 = vmatprep.mubr.bf16.mxu0 %v4167
        %7477 = vmatmul.mubr.bf16.gmra.mxu0 %v4166
        %v7478 = vpop.f32.mrf.mxu0
        %v7479 = vadd.f32 %v7286, %v7478
        %v7480 = vpop.f32.mrf.mxu0
        %v7481 = vadd.f32 %v7288, %v7480
        %v7482 = vpop.f32.mrf.mxu0
        %v7483 = vadd.f32 %v7290, %v7482
        %v7484 = vpop.f32.mrf.mxu0
        %v7485 = vadd.f32 %v7292, %v7484
        %7486 = vmatprep.mubr.bf16.mxu0 %v4176
        %7487 = vmatmul.mubr.bf16.gmra.mxu0 %v4175
        %v7488 = vpop.f32.mrf.mxu0
        %v7489 = vadd.f32 %v7296, %v7488
        %v7490 = vpop.f32.mrf.mxu0
        %v7491 = vadd.f32 %v7298, %v7490
        %v7492 = vpop.f32.mrf.mxu0
        %v7493 = vadd.f32 %v7300, %v7492
        %v7494 = vpop.f32.mrf.mxu0
        %v7495 = vadd.f32 %v7302, %v7494
        %7496 = vmatprep.mubr.bf16.mxu0 %v4185
        %7497 = vmatmul.mubr.bf16.gmra.mxu0 %v4184
        %v7498 = vpop.f32.mrf.mxu0
        %v7499 = vadd.f32 %v7306, %v7498
        %v7500 = vpop.f32.mrf.mxu0
        %v7501 = vadd.f32 %v7308, %v7500
        %v7502 = vpop.f32.mrf.mxu0
        %v7503 = vadd.f32 %v7310, %v7502
        %v7504 = vpop.f32.mrf.mxu0
        %v7505 = vadd.f32 %v7312, %v7504
        %7506 = vmatprep.mubr.bf16.mxu0 %v4194
        %7507 = vmatmul.mubr.bf16.gmra.mxu0 %v4193
        %v7508 = vpop.f32.mrf.mxu0
        %v7509 = vadd.f32 %v7316, %v7508
        %v7510 = vpop.f32.mrf.mxu0
        %v7511 = vadd.f32 %v7318, %v7510
        %v7512 = vpop.f32.mrf.mxu0
        %v7513 = vadd.f32 %v7320, %v7512
        %v7514 = vpop.f32.mrf.mxu0
        %v7515 = vadd.f32 %v7322, %v7514
        %7516 = vdwg.mxu0
        %7517 = vmatprep.subr.bf16.mxu0 %v5491
        %7518 = vmatpush1.bf16.msra.mxu0 %v5490
        %7519 = vmatprep.subr.bf16.mxu0 %v5487
        %7520 = vmatpush1.bf16.msra.mxu0 %v5486
        %7521 = vmatprep.subr.bf16.mxu0 %v5483
        %7522 = vmatpush1.bf16.msra.mxu0 %v5482
        %7523 = vmatprep.subr.bf16.mxu0 %v5479
        %7524 = vmatpush1.bf16.msra.mxu0 %v5478
        %7525 = vmatprep.subr.bf16.mxu0 %v5475
        %7526 = vmatpush1.bf16.msra.mxu0 %v5474
        %7527 = vmatprep.subr.bf16.mxu0 %v5471
        %7528 = vmatpush1.bf16.msra.mxu0 %v5470
        %7529 = vmatprep.subr.bf16.mxu0 %v5467
        %7530 = vmatpush1.bf16.msra.mxu0 %v5466
        %7531 = vmatprep.subr.bf16.mxu0 %v5463
        %7532 = vmatpush1.bf16.msra.mxu0 %v5462
        %7533 = vmatprep.subr.bf16.mxu0 0
        %7534 = vmatpush2.bf16.msra.mxu0 0
        %7535 = vmatprep.subr.bf16.mxu0 0
        %7536 = vmatpush2.bf16.msra.mxu0 0
        %7537 = vmatprep.subr.bf16.mxu0 0
        %7538 = vmatpush2.bf16.msra.mxu0 0
        %7539 = vmatprep.subr.bf16.mxu0 0
        %7540 = vmatpush2.bf16.msra.mxu0 0
        %7541 = vmatprep.subr.bf16.mxu0 0
        %7542 = vmatpush2.bf16.msra.mxu0 0
        %7543 = vmatprep.subr.bf16.mxu0 0
        %7544 = vmatpush2.bf16.msra.mxu0 0
        %7545 = vmatprep.subr.bf16.mxu0 0
        %7546 = vmatpush2.bf16.msra.mxu0 0
        %7547 = vmatprep.subr.bf16.mxu0 0
        %7548 = vmatpush2.bf16.msra.mxu0 0
        %7549 = vmatprep.mubr.bf16.mxu0 0
        %7550 = vmatmul.mubr.bf16.gmra.mxu0 %v4060
        %v7551 = vpop.f32.mrf.mxu0
        %v7552 = vadd.f32 %v7359, %v7551
        %v7553 = vpop.f32.mrf.mxu0
        %v7554 = vadd.f32 %v7361, %v7553
        %v7555 = vpop.f32.mrf.mxu0
        %v7556 = vadd.f32 %v7363, %v7555
        %v7557 = vpop.f32.mrf.mxu0
        %v7558 = vadd.f32 %v7365, %v7557
        %7559 = vmatprep.mubr.bf16.mxu0 0
        %7560 = vmatmul.mubr.bf16.gmra.mxu0 %v4069
        %v7561 = vpop.f32.mrf.mxu0
        %v7562 = vadd.f32 %v7369, %v7561
        %v7563 = vpop.f32.mrf.mxu0
        %v7564 = vadd.f32 %v7371, %v7563
        %v7565 = vpop.f32.mrf.mxu0
        %v7566 = vadd.f32 %v7373, %v7565
        %v7567 = vpop.f32.mrf.mxu0
        %v7568 = vadd.f32 %v7375, %v7567
        %7569 = vmatprep.mubr.bf16.mxu0 0
        %7570 = vmatmul.mubr.bf16.gmra.mxu0 %v4078
        %v7571 = vpop.f32.mrf.mxu0
        %v7572 = vadd.f32 %v7379, %v7571
        %v7573 = vpop.f32.mrf.mxu0
        %v7574 = vadd.f32 %v7381, %v7573
        %v7575 = vpop.f32.mrf.mxu0
        %v7576 = vadd.f32 %v7383, %v7575
        %v7577 = vpop.f32.mrf.mxu0
        %v7578 = vadd.f32 %v7385, %v7577
        %7579 = vmatprep.mubr.bf16.mxu0 0
        %7580 = vmatmul.mubr.bf16.gmra.mxu0 %v4087
        %v7581 = vpop.f32.mrf.mxu0
        %v7582 = vadd.f32 %v7389, %v7581
        %v7583 = vpop.f32.mrf.mxu0
        %v7584 = vadd.f32 %v7391, %v7583
        %v7585 = vpop.f32.mrf.mxu0
        %v7586 = vadd.f32 %v7393, %v7585
        %v7587 = vpop.f32.mrf.mxu0
        %v7588 = vadd.f32 %v7395, %v7587
        %7589 = vmatprep.mubr.bf16.mxu0 0
        %7590 = vmatmul.mubr.bf16.gmra.mxu0 %v4096
        %v7591 = vpop.f32.mrf.mxu0
        %v7592 = vadd.f32 %v7399, %v7591
        %v7593 = vpop.f32.mrf.mxu0
        %v7594 = vadd.f32 %v7401, %v7593
        %v7595 = vpop.f32.mrf.mxu0
        %v7596 = vadd.f32 %v7403, %v7595
        %v7597 = vpop.f32.mrf.mxu0
        %v7598 = vadd.f32 %v7405, %v7597
        %7599 = vmatprep.mubr.bf16.mxu0 0
        %7600 = vmatmul.mubr.bf16.gmra.mxu0 %v4105
        %v7601 = vpop.f32.mrf.mxu0
        %v7602 = vadd.f32 %v7409, %v7601
        %v7603 = vpop.f32.mrf.mxu0
        %v7604 = vadd.f32 %v7411, %v7603
        %v7605 = vpop.f32.mrf.mxu0
        %v7606 = vadd.f32 %v7413, %v7605
        %v7607 = vpop.f32.mrf.mxu0
        %v7608 = vadd.f32 %v7415, %v7607
        %7609 = vmatprep.mubr.bf16.mxu0 0
        %7610 = vmatmul.mubr.bf16.gmra.mxu0 %v4114
        %v7611 = vpop.f32.mrf.mxu0
        %v7612 = vadd.f32 %v7419, %v7611
        %v7613 = vpop.f32.mrf.mxu0
        %v7614 = vadd.f32 %v7421, %v7613
        %v7615 = vpop.f32.mrf.mxu0
        %v7616 = vadd.f32 %v7423, %v7615
        %v7617 = vpop.f32.mrf.mxu0
        %v7618 = vadd.f32 %v7425, %v7617
        %7619 = vmatprep.mubr.bf16.mxu0 0
        %7620 = vmatmul.mubr.bf16.gmra.mxu0 %v4123
        %v7621 = vpop.f32.mrf.mxu0
        %v7622 = vadd.f32 %v7429, %v7621
        %v7623 = vpop.f32.mrf.mxu0
        %v7624 = vadd.f32 %v7431, %v7623
        %v7625 = vpop.f32.mrf.mxu0
        %v7626 = vadd.f32 %v7433, %v7625
        %v7627 = vpop.f32.mrf.mxu0
        %v7628 = vadd.f32 %v7435, %v7627
        %7629 = vmatprep.mubr.bf16.mxu0 0
        %7630 = vmatmul.mubr.bf16.gmra.mxu0 %v4132
        %v7631 = vpop.f32.mrf.mxu0
        %v7632 = vadd.f32 %v7439, %v7631
        %v7633 = vpop.f32.mrf.mxu0
        %v7634 = vadd.f32 %v7441, %v7633
        %v7635 = vpop.f32.mrf.mxu0
        %v7636 = vadd.f32 %v7443, %v7635
        %v7637 = vpop.f32.mrf.mxu0
        %v7638 = vadd.f32 %v7445, %v7637
        %7639 = vmatprep.mubr.bf16.mxu0 0
        %7640 = vmatmul.mubr.bf16.gmra.mxu0 %v4141
        %v7641 = vpop.f32.mrf.mxu0
        %v7642 = vadd.f32 %v7449, %v7641
        %v7643 = vpop.f32.mrf.mxu0
        %v7644 = vadd.f32 %v7451, %v7643
        %v7645 = vpop.f32.mrf.mxu0
        %v7646 = vadd.f32 %v7453, %v7645
        %v7647 = vpop.f32.mrf.mxu0
        %v7648 = vadd.f32 %v7455, %v7647
        %7649 = vmatprep.mubr.bf16.mxu0 0
        %7650 = vmatmul.mubr.bf16.gmra.mxu0 %v4150
        %v7651 = vpop.f32.mrf.mxu0
        %v7652 = vadd.f32 %v7459, %v7651
        %v7653 = vpop.f32.mrf.mxu0
        %v7654 = vadd.f32 %v7461, %v7653
        %v7655 = vpop.f32.mrf.mxu0
        %v7656 = vadd.f32 %v7463, %v7655
        %v7657 = vpop.f32.mrf.mxu0
        %v7658 = vadd.f32 %v7465, %v7657
        %7659 = vmatprep.mubr.bf16.mxu0 0
        %7660 = vmatmul.mubr.bf16.gmra.mxu0 %v4159
        %v7661 = vpop.f32.mrf.mxu0
        %v7662 = vadd.f32 %v7469, %v7661
        %v7663 = vpop.f32.mrf.mxu0
        %v7664 = vadd.f32 %v7471, %v7663
        %v7665 = vpop.f32.mrf.mxu0
        %v7666 = vadd.f32 %v7473, %v7665
        %v7667 = vpop.f32.mrf.mxu0
        %v7668 = vadd.f32 %v7475, %v7667
        %7669 = vmatprep.mubr.bf16.mxu0 0
        %7670 = vmatmul.mubr.bf16.gmra.mxu0 %v4168
        %v7671 = vpop.f32.mrf.mxu0
        %v7672 = vadd.f32 %v7479, %v7671
        %v7673 = vpop.f32.mrf.mxu0
        %v7674 = vadd.f32 %v7481, %v7673
        %v7675 = vpop.f32.mrf.mxu0
        %v7676 = vadd.f32 %v7483, %v7675
        %v7677 = vpop.f32.mrf.mxu0
        %v7678 = vadd.f32 %v7485, %v7677
        %7679 = vmatprep.mubr.bf16.mxu0 0
        %7680 = vmatmul.mubr.bf16.gmra.mxu0 %v4177
        %v7681 = vpop.f32.mrf.mxu0
        %v7682 = vadd.f32 %v7489, %v7681
        %v7683 = vpop.f32.mrf.mxu0
        %v7684 = vadd.f32 %v7491, %v7683
        %v7685 = vpop.f32.mrf.mxu0
        %v7686 = vadd.f32 %v7493, %v7685
        %v7687 = vpop.f32.mrf.mxu0
        %v7688 = vadd.f32 %v7495, %v7687
        %7689 = vmatprep.mubr.bf16.mxu0 0
        %7690 = vmatmul.mubr.bf16.gmra.mxu0 %v4186
        %v7691 = vpop.f32.mrf.mxu0
        %v7692 = vadd.f32 %v7499, %v7691
        %v7693 = vpop.f32.mrf.mxu0
        %v7694 = vadd.f32 %v7501, %v7693
        %v7695 = vpop.f32.mrf.mxu0
        %v7696 = vadd.f32 %v7503, %v7695
        %v7697 = vpop.f32.mrf.mxu0
        %v7698 = vadd.f32 %v7505, %v7697
        %7699 = vmatprep.mubr.bf16.mxu0 0
        %7700 = vmatmul.mubr.bf16.gmra.mxu0 %v4195
        %v7701 = vpop.f32.mrf.mxu0
        %v7702 = vadd.f32 %v7509, %v7701
        %v7703 = vpop.f32.mrf.mxu0
        %v7704 = vadd.f32 %v7511, %v7703
        %v7705 = vpop.f32.mrf.mxu0
        %v7706 = vadd.f32 %v7513, %v7705
        %v7707 = vpop.f32.mrf.mxu0
        %v7708 = vadd.f32 %v7515, %v7707
        %7709 = vdwg.mxu0
        %v7710 = vadd.f32 %v3028, %v6587
        %v7711 = vadd.f32 %v3029, %v6589
        %v7712 = vadd.f32 %v3030, %v7552
        %v7713 = vadd.f32 %v3031, %v7554
        %v7714 = vadd.f32 %v3032, %v6591
        %v7715 = vadd.f32 %v3033, %v6593
        %v7716 = vadd.f32 %v3034, %v7556
        %v7717 = vadd.f32 %v3035, %v7558
        %v7718 = vadd.f32 %v3036, %v6597
        %v7719 = vadd.f32 %v3037, %v6599
        %v7720 = vadd.f32 %v3038, %v7562
        %v7721 = vadd.f32 %v3039, %v7564
        %v7722 = vadd.f32 %v3040, %v6601
        %v7723 = vadd.f32 %v3041, %v6603
        %v7724 = vadd.f32 %v3042, %v7566
        %v7725 = vadd.f32 %v3043, %v7568
        %v7726 = vadd.f32 %v3044, %v6607
        %v7727 = vadd.f32 %v3045, %v6609
        %v7728 = vadd.f32 %v3046, %v7572
        %v7729 = vadd.f32 %v3047, %v7574
        %v7730 = vadd.f32 %v3048, %v6611
        %v7731 = vadd.f32 %v3049, %v6613
        %v7732 = vadd.f32 %v3050, %v7576
        %v7733 = vadd.f32 %v3051, %v7578
        %v7734 = vadd.f32 %v3052, %v6617
        %v7735 = vadd.f32 %v3053, %v6619
        %v7736 = vadd.f32 %v3054, %v7582
        %v7737 = vadd.f32 %v3055, %v7584
        %v7738 = vadd.f32 %v3056, %v6621
        %v7739 = vadd.f32 %v3057, %v6623
        %v7740 = vadd.f32 %v3058, %v7586
        %v7741 = vadd.f32 %v3059, %v7588
        %v7742 = vadd.f32 %v3060, %v6627
        %v7743 = vadd.f32 %v3061, %v6629
        %v7744 = vadd.f32 %v3062, %v7592
        %v7745 = vadd.f32 %v3063, %v7594
        %v7746 = vadd.f32 %v3064, %v6631
        %v7747 = vadd.f32 %v3065, %v6633
        %v7748 = vadd.f32 %v3066, %v7596
        %v7749 = vadd.f32 %v3067, %v7598
        %v7750 = vadd.f32 %v3068, %v6637
        %v7751 = vadd.f32 %v3069, %v6639
        %v7752 = vadd.f32 %v3070, %v7602
        %v7753 = vadd.f32 %v3071, %v7604
        %v7754 = vadd.f32 %v3072, %v6641
        %v7755 = vadd.f32 %v3073, %v6643
        %v7756 = vadd.f32 %v3074, %v7606
        %v7757 = vadd.f32 %v3075, %v7608
        %v7758 = vadd.f32 %v3076, %v6647
        %v7759 = vadd.f32 %v3077, %v6649
        %v7760 = vadd.f32 %v3078, %v7612
        %v7761 = vadd.f32 %v3079, %v7614
        %v7762 = vadd.f32 %v3080, %v6651
        %v7763 = vadd.f32 %v3081, %v6653
        %v7764 = vadd.f32 %v3082, %v7616
        %v7765 = vadd.f32 %v3083, %v7618
        %v7766 = vadd.f32 %v3084, %v6657
        %v7767 = vadd.f32 %v3085, %v6659
        %v7768 = vadd.f32 %v3086, %v7622
        %v7769 = vadd.f32 %v3087, %v7624
        %v7770 = vadd.f32 %v3088, %v6661
        %v7771 = vadd.f32 %v3089, %v6663
        %v7772 = vadd.f32 %v3090, %v7626
        %v7773 = vadd.f32 %v3091, %v7628
        %v7774 = vadd.f32 %v3092, %v6667
        %v7775 = vadd.f32 %v3093, %v6669
        %v7776 = vadd.f32 %v3094, %v7632
        %v7777 = vadd.f32 %v3095, %v7634
        %v7778 = vadd.f32 %v3096, %v6671
        %v7779 = vadd.f32 %v3097, %v6673
        %v7780 = vadd.f32 %v3098, %v7636
        %v7781 = vadd.f32 %v3099, %v7638
        %v7782 = vadd.f32 %v3100, %v6677
        %v7783 = vadd.f32 %v3101, %v6679
        %v7784 = vadd.f32 %v3102, %v7642
        %v7785 = vadd.f32 %v3103, %v7644
        %v7786 = vadd.f32 %v3104, %v6681
        %v7787 = vadd.f32 %v3105, %v6683
        %v7788 = vadd.f32 %v3106, %v7646
        %v7789 = vadd.f32 %v3107, %v7648
        %v7790 = vadd.f32 %v3108, %v6687
        %v7791 = vadd.f32 %v3109, %v6689
        %v7792 = vadd.f32 %v3110, %v7652
        %v7793 = vadd.f32 %v3111, %v7654
        %v7794 = vadd.f32 %v3112, %v6691
        %v7795 = vadd.f32 %v3113, %v6693
        %v7796 = vadd.f32 %v3114, %v7656
        %v7797 = vadd.f32 %v3115, %v7658
        %v7798 = vadd.f32 %v3116, %v6697
        %v7799 = vadd.f32 %v3117, %v6699
        %v7800 = vadd.f32 %v3118, %v7662
        %v7801 = vadd.f32 %v3119, %v7664
        %v7802 = vadd.f32 %v3120, %v6701
        %v7803 = vadd.f32 %v3121, %v6703
        %v7804 = vadd.f32 %v3122, %v7666
        %v7805 = vadd.f32 %v3123, %v7668
        %v7806 = vadd.f32 %v3124, %v6707
        %v7807 = vadd.f32 %v3125, %v6709
        %v7808 = vadd.f32 %v3126, %v7672
        %v7809 = vadd.f32 %v3127, %v7674
        %v7810 = vadd.f32 %v3128, %v6711
        %v7811 = vadd.f32 %v3129, %v6713
        %v7812 = vadd.f32 %v3130, %v7676
        %v7813 = vadd.f32 %v3131, %v7678
        %v7814 = vadd.f32 %v3132, %v6717
        %v7815 = vadd.f32 %v3133, %v6719
        %v7816 = vadd.f32 %v3134, %v7682
        %v7817 = vadd.f32 %v3135, %v7684
        %v7818 = vadd.f32 %v3136, %v6721
        %v7819 = vadd.f32 %v3137, %v6723
        %v7820 = vadd.f32 %v3138, %v7686
        %v7821 = vadd.f32 %v3139, %v7688
        %v7822 = vadd.f32 %v3140, %v6727
        %v7823 = vadd.f32 %v3141, %v6729
        %v7824 = vadd.f32 %v3142, %v7692
        %v7825 = vadd.f32 %v3143, %v7694
        %v7826 = vadd.f32 %v3144, %v6731
        %v7827 = vadd.f32 %v3145, %v6733
        %v7828 = vadd.f32 %v3146, %v7696
        %v7829 = vadd.f32 %v3147, %v7698
        %v7830 = vadd.f32 %v3148, %v6737
        %v7831 = vadd.f32 %v3149, %v6739
        %v7832 = vadd.f32 %v3150, %v7702
        %v7833 = vadd.f32 %v3151, %v7704
        %v7834 = vadd.f32 %v3152, %v6741
        %v7835 = vadd.f32 %v3153, %v6743
        %v7836 = vadd.f32 %v3154, %v7706
        %v7837 = vadd.f32 %v3155, %v7708
        %7838 = vst [vmem:[#allocation3] sm:$0xff] %v7710
        %7839 = vst [vmem:[#allocation3 + $0x8] sm:$0xff] %v7711
        %7840 = vst [vmem:[#allocation3 + $0x10] sm:$0xff] %v7712
        %7841 = vst [vmem:[#allocation3 + $0x18] sm:$0xff] %v7713
        %7842 = vst [vmem:[#allocation3 + $0x20] sm:$0xff] %v7714
        %7843 = vst [vmem:[#allocation3 + $0x28] sm:$0xff] %v7715
        %7844 = vst [vmem:[#allocation3 + $0x30] sm:$0xff] %v7716
        %7845 = vst [vmem:[#allocation3 + $0x38] sm:$0xff] %v7717
        %7846 = vst [vmem:[#allocation3 + $0x40] sm:$0xff] %v7718
        %7847 = vst [vmem:[#allocation3 + $0x48] sm:$0xff] %v7719
        %7848 = vst [vmem:[#allocation3 + $0x50] sm:$0xff] %v7720
        %7849 = vst [vmem:[#allocation3 + $0x58] sm:$0xff] %v7721
        %7850 = vst [vmem:[#allocation3 + $0x60] sm:$0xff] %v7722
        %7851 = vst [vmem:[#allocation3 + $0x68] sm:$0xff] %v7723
        %7852 = vst [vmem:[#allocation3 + $0x70] sm:$0xff] %v7724
        %7853 = vst [vmem:[#allocation3 + $0x78] sm:$0xff] %v7725
        %7854 = vst [vmem:[#allocation3 + $0x80] sm:$0xff] %v7726
        %7855 = vst [vmem:[#allocation3 + $0x88] sm:$0xff] %v7727
        %7856 = vst [vmem:[#allocation3 + $0x90] sm:$0xff] %v7728
        %7857 = vst [vmem:[#allocation3 + $0x98] sm:$0xff] %v7729
        %7858 = vst [vmem:[#allocation3 + $0xa0] sm:$0xff] %v7730
        %7859 = vst [vmem:[#allocation3 + $0xa8] sm:$0xff] %v7731
        %7860 = vst [vmem:[#allocation3 + $0xb0] sm:$0xff] %v7732
        %7861 = vst [vmem:[#allocation3 + $0xb8] sm:$0xff] %v7733
        %7862 = vst [vmem:[#allocation3 + $0xc0] sm:$0xff] %v7734
        %7863 = vst [vmem:[#allocation3 + $0xc8] sm:$0xff] %v7735
        %7864 = vst [vmem:[#allocation3 + $0xd0] sm:$0xff] %v7736
        %7865 = vst [vmem:[#allocation3 + $0xd8] sm:$0xff] %v7737
        %7866 = vst [vmem:[#allocation3 + $0xe0] sm:$0xff] %v7738
        %7867 = vst [vmem:[#allocation3 + $0xe8] sm:$0xff] %v7739
        %7868 = vst [vmem:[#allocation3 + $0xf0] sm:$0xff] %v7740
        %7869 = vst [vmem:[#allocation3 + $0xf8] sm:$0xff] %v7741
        %7870 = vst [vmem:[#allocation3 + $0x100] sm:$0xff] %v7742
        %7871 = vst [vmem:[#allocation3 + $0x108] sm:$0xff] %v7743
        %7872 = vst [vmem:[#allocation3 + $0x110] sm:$0xff] %v7744
        %7873 = vst [vmem:[#allocation3 + $0x118] sm:$0xff] %v7745
        %7874 = vst [vmem:[#allocation3 + $0x120] sm:$0xff] %v7746
        %7875 = vst [vmem:[#allocation3 + $0x128] sm:$0xff] %v7747
        %7876 = vst [vmem:[#allocation3 + $0x130] sm:$0xff] %v7748
        %7877 = vst [vmem:[#allocation3 + $0x138] sm:$0xff] %v7749
        %7878 = vst [vmem:[#allocation3 + $0x140] sm:$0xff] %v7750
        %7879 = vst [vmem:[#allocation3 + $0x148] sm:$0xff] %v7751
        %7880 = vst [vmem:[#allocation3 + $0x150] sm:$0xff] %v7752
        %7881 = vst [vmem:[#allocation3 + $0x158] sm:$0xff] %v7753
        %7882 = vst [vmem:[#allocation3 + $0x160] sm:$0xff] %v7754
        %7883 = vst [vmem:[#allocation3 + $0x168] sm:$0xff] %v7755
        %7884 = vst [vmem:[#allocation3 + $0x170] sm:$0xff] %v7756
        %7885 = vst [vmem:[#allocation3 + $0x178] sm:$0xff] %v7757
        %7886 = vst [vmem:[#allocation3 + $0x180] sm:$0xff] %v7758
        %7887 = vst [vmem:[#allocation3 + $0x188] sm:$0xff] %v7759
        %7888 = vst [vmem:[#allocation3 + $0x190] sm:$0xff] %v7760
        %7889 = vst [vmem:[#allocation3 + $0x198] sm:$0xff] %v7761
        %7890 = vst [vmem:[#allocation3 + $0x1a0] sm:$0xff] %v7762
        %7891 = vst [vmem:[#allocation3 + $0x1a8] sm:$0xff] %v7763
        %7892 = vst [vmem:[#allocation3 + $0x1b0] sm:$0xff] %v7764
        %7893 = vst [vmem:[#allocation3 + $0x1b8] sm:$0xff] %v7765
        %7894 = vst [vmem:[#allocation3 + $0x1c0] sm:$0xff] %v7766
        %7895 = vst [vmem:[#allocation3 + $0x1c8] sm:$0xff] %v7767
        %7896 = vst [vmem:[#allocation3 + $0x1d0] sm:$0xff] %v7768
        %7897 = vst [vmem:[#allocation3 + $0x1d8] sm:$0xff] %v7769
        %7898 = vst [vmem:[#allocation3 + $0x1e0] sm:$0xff] %v7770
        %7899 = vst [vmem:[#allocation3 + $0x1e8] sm:$0xff] %v7771
        %7900 = vst [vmem:[#allocation3 + $0x1f0] sm:$0xff] %v7772
        %7901 = vst [vmem:[#allocation3 + $0x1f8] sm:$0xff] %v7773
        %7902 = vst [vmem:[#allocation3 + $0x200] sm:$0xff] %v7774
        %7903 = vst [vmem:[#allocation3 + $0x208] sm:$0xff] %v7775
        %7904 = vst [vmem:[#allocation3 + $0x210] sm:$0xff] %v7776
        %7905 = vst [vmem:[#allocation3 + $0x218] sm:$0xff] %v7777
        %7906 = vst [vmem:[#allocation3 + $0x220] sm:$0xff] %v7778
        %7907 = vst [vmem:[#allocation3 + $0x228] sm:$0xff] %v7779
        %7908 = vst [vmem:[#allocation3 + $0x230] sm:$0xff] %v7780
        %7909 = vst [vmem:[#allocation3 + $0x238] sm:$0xff] %v7781
        %7910 = vst [vmem:[#allocation3 + $0x240] sm:$0xff] %v7782
        %7911 = vst [vmem:[#allocation3 + $0x248] sm:$0xff] %v7783
        %7912 = vst [vmem:[#allocation3 + $0x250] sm:$0xff] %v7784
        %7913 = vst [vmem:[#allocation3 + $0x258] sm:$0xff] %v7785
        %7914 = vst [vmem:[#allocation3 + $0x260] sm:$0xff] %v7786
        %7915 = vst [vmem:[#allocation3 + $0x268] sm:$0xff] %v7787
        %7916 = vst [vmem:[#allocation3 + $0x270] sm:$0xff] %v7788
        %7917 = vst [vmem:[#allocation3 + $0x278] sm:$0xff] %v7789
        %7918 = vst [vmem:[#allocation3 + $0x280] sm:$0xff] %v7790
        %7919 = vst [vmem:[#allocation3 + $0x288] sm:$0xff] %v7791
        %7920 = vst [vmem:[#allocation3 + $0x290] sm:$0xff] %v7792
        %7921 = vst [vmem:[#allocation3 + $0x298] sm:$0xff] %v7793
        %7922 = vst [vmem:[#allocation3 + $0x2a0] sm:$0xff] %v7794
        %7923 = vst [vmem:[#allocation3 + $0x2a8] sm:$0xff] %v7795
        %7924 = vst [vmem:[#allocation3 + $0x2b0] sm:$0xff] %v7796
        %7925 = vst [vmem:[#allocation3 + $0x2b8] sm:$0xff] %v7797
        %7926 = vst [vmem:[#allocation3 + $0x2c0] sm:$0xff] %v7798
        %7927 = vst [vmem:[#allocation3 + $0x2c8] sm:$0xff] %v7799
        %7928 = vst [vmem:[#allocation3 + $0x2d0] sm:$0xff] %v7800
        %7929 = vst [vmem:[#allocation3 + $0x2d8] sm:$0xff] %v7801
        %7930 = vst [vmem:[#allocation3 + $0x2e0] sm:$0xff] %v7802
        %7931 = vst [vmem:[#allocation3 + $0x2e8] sm:$0xff] %v7803
        %7932 = vst [vmem:[#allocation3 + $0x2f0] sm:$0xff] %v7804
        %7933 = vst [vmem:[#allocation3 + $0x2f8] sm:$0xff] %v7805
        %7934 = vst [vmem:[#allocation3 + $0x300] sm:$0xff] %v7806
        %7935 = vst [vmem:[#allocation3 + $0x308] sm:$0xff] %v7807
        %7936 = vst [vmem:[#allocation3 + $0x310] sm:$0xff] %v7808
        %7937 = vst [vmem:[#allocation3 + $0x318] sm:$0xff] %v7809
        %7938 = vst [vmem:[#allocation3 + $0x320] sm:$0xff] %v7810
        %7939 = vst [vmem:[#allocation3 + $0x328] sm:$0xff] %v7811
        %7940 = vst [vmem:[#allocation3 + $0x330] sm:$0xff] %v7812
        %7941 = vst [vmem:[#allocation3 + $0x338] sm:$0xff] %v7813
        %7942 = vst [vmem:[#allocation3 + $0x340] sm:$0xff] %v7814
        %7943 = vst [vmem:[#allocation3 + $0x348] sm:$0xff] %v7815
        %7944 = vst [vmem:[#allocation3 + $0x350] sm:$0xff] %v7816
        %7945 = vst [vmem:[#allocation3 + $0x358] sm:$0xff] %v7817
        %7946 = vst [vmem:[#allocation3 + $0x360] sm:$0xff] %v7818
        %7947 = vst [vmem:[#allocation3 + $0x368] sm:$0xff] %v7819
        %7948 = vst [vmem:[#allocation3 + $0x370] sm:$0xff] %v7820
        %7949 = vst [vmem:[#allocation3 + $0x378] sm:$0xff] %v7821
        %7950 = vst [vmem:[#allocation3 + $0x380] sm:$0xff] %v7822
        %7951 = vst [vmem:[#allocation3 + $0x388] sm:$0xff] %v7823
        %7952 = vst [vmem:[#allocation3 + $0x390] sm:$0xff] %v7824
        %7953 = vst [vmem:[#allocation3 + $0x398] sm:$0xff] %v7825
        %7954 = vst [vmem:[#allocation3 + $0x3a0] sm:$0xff] %v7826
        %7955 = vst [vmem:[#allocation3 + $0x3a8] sm:$0xff] %v7827
        %7956 = vst [vmem:[#allocation3 + $0x3b0] sm:$0xff] %v7828
        %7957 = vst [vmem:[#allocation3 + $0x3b8] sm:$0xff] %v7829
        %7958 = vst [vmem:[#allocation3 + $0x3c0] sm:$0xff] %v7830
        %7959 = vst [vmem:[#allocation3 + $0x3c8] sm:$0xff] %v7831
        %7960 = vst [vmem:[#allocation3 + $0x3d0] sm:$0xff] %v7832
        %7961 = vst [vmem:[#allocation3 + $0x3d8] sm:$0xff] %v7833
        %7962 = vst [vmem:[#allocation3 + $0x3e0] sm:$0xff] %v7834
        %7963 = vst [vmem:[#allocation3 + $0x3e8] sm:$0xff] %v7835
        %7964 = vst [vmem:[#allocation3 + $0x3f0] sm:$0xff] %v7836
        %7965 = vst [vmem:[#allocation3 + $0x3f8] sm:$0xff] %v7837
        // Predicated region
        $region77: #{tpu_custom_call.1} parent=47 // pred_check
          %p7966 = pneg %p392
        $region78: #{tpu_custom_call.1} parent=47 // pred_check_branch
          %7968 = sbr.rel (%p7966) target = $region80
        $region79: #{tpu_custom_call.1} parent=47 // pred_region
          %v7969 = vld [vmem:[#allocation3] sm:$0xff]
          %v7970 = vld [vmem:[#allocation3 + $0x8] sm:$0xff]
          %v7971 = vld [vmem:[#allocation3 + $0x10] sm:$0xff]
          %v7972 = vld [vmem:[#allocation3 + $0x18] sm:$0xff]
          %v7973 = vld [vmem:[#allocation3 + $0x20] sm:$0xff]
          %v7974 = vld [vmem:[#allocation3 + $0x28] sm:$0xff]
          %v7975 = vld [vmem:[#allocation3 + $0x30] sm:$0xff]
          %v7976 = vld [vmem:[#allocation3 + $0x38] sm:$0xff]
          %v7977 = vld [vmem:[#allocation3 + $0x40] sm:$0xff]
          %v7978 = vld [vmem:[#allocation3 + $0x48] sm:$0xff]
          %v7979 = vld [vmem:[#allocation3 + $0x50] sm:$0xff]
          %v7980 = vld [vmem:[#allocation3 + $0x58] sm:$0xff]
          %v7981 = vld [vmem:[#allocation3 + $0x60] sm:$0xff]
          %v7982 = vld [vmem:[#allocation3 + $0x68] sm:$0xff]
          %v7983 = vld [vmem:[#allocation3 + $0x70] sm:$0xff]
          %v7984 = vld [vmem:[#allocation3 + $0x78] sm:$0xff]
          %v7985 = vld [vmem:[#allocation3 + $0x80] sm:$0xff]
          %v7986 = vld [vmem:[#allocation3 + $0x88] sm:$0xff]
          %v7987 = vld [vmem:[#allocation3 + $0x90] sm:$0xff]
          %v7988 = vld [vmem:[#allocation3 + $0x98] sm:$0xff]
          %v7989 = vld [vmem:[#allocation3 + $0xa0] sm:$0xff]
          %v7990 = vld [vmem:[#allocation3 + $0xa8] sm:$0xff]
          %v7991 = vld [vmem:[#allocation3 + $0xb0] sm:$0xff]
          %v7992 = vld [vmem:[#allocation3 + $0xb8] sm:$0xff]
          %v7993 = vld [vmem:[#allocation3 + $0xc0] sm:$0xff]
          %v7994 = vld [vmem:[#allocation3 + $0xc8] sm:$0xff]
          %v7995 = vld [vmem:[#allocation3 + $0xd0] sm:$0xff]
          %v7996 = vld [vmem:[#allocation3 + $0xd8] sm:$0xff]
          %v7997 = vld [vmem:[#allocation3 + $0xe0] sm:$0xff]
          %v7998 = vld [vmem:[#allocation3 + $0xe8] sm:$0xff]
          %v7999 = vld [vmem:[#allocation3 + $0xf0] sm:$0xff]
          %v8000 = vld [vmem:[#allocation3 + $0xf8] sm:$0xff]
          %v8001 = vld [vmem:[#allocation3 + $0x100] sm:$0xff]
          %v8002 = vld [vmem:[#allocation3 + $0x108] sm:$0xff]
          %v8003 = vld [vmem:[#allocation3 + $0x110] sm:$0xff]
          %v8004 = vld [vmem:[#allocation3 + $0x118] sm:$0xff]
          %v8005 = vld [vmem:[#allocation3 + $0x120] sm:$0xff]
          %v8006 = vld [vmem:[#allocation3 + $0x128] sm:$0xff]
          %v8007 = vld [vmem:[#allocation3 + $0x130] sm:$0xff]
          %v8008 = vld [vmem:[#allocation3 + $0x138] sm:$0xff]
          %v8009 = vld [vmem:[#allocation3 + $0x140] sm:$0xff]
          %v8010 = vld [vmem:[#allocation3 + $0x148] sm:$0xff]
          %v8011 = vld [vmem:[#allocation3 + $0x150] sm:$0xff]
          %v8012 = vld [vmem:[#allocation3 + $0x158] sm:$0xff]
          %v8013 = vld [vmem:[#allocation3 + $0x160] sm:$0xff]
          %v8014 = vld [vmem:[#allocation3 + $0x168] sm:$0xff]
          %v8015 = vld [vmem:[#allocation3 + $0x170] sm:$0xff]
          %v8016 = vld [vmem:[#allocation3 + $0x178] sm:$0xff]
          %v8017 = vld [vmem:[#allocation3 + $0x180] sm:$0xff]
          %v8018 = vld [vmem:[#allocation3 + $0x188] sm:$0xff]
          %v8019 = vld [vmem:[#allocation3 + $0x190] sm:$0xff]
          %v8020 = vld [vmem:[#allocation3 + $0x198] sm:$0xff]
          %v8021 = vld [vmem:[#allocation3 + $0x1a0] sm:$0xff]
          %v8022 = vld [vmem:[#allocation3 + $0x1a8] sm:$0xff]
          %v8023 = vld [vmem:[#allocation3 + $0x1b0] sm:$0xff]
          %v8024 = vld [vmem:[#allocation3 + $0x1b8] sm:$0xff]
          %v8025 = vld [vmem:[#allocation3 + $0x1c0] sm:$0xff]
          %v8026 = vld [vmem:[#allocation3 + $0x1c8] sm:$0xff]
          %v8027 = vld [vmem:[#allocation3 + $0x1d0] sm:$0xff]
          %v8028 = vld [vmem:[#allocation3 + $0x1d8] sm:$0xff]
          %v8029 = vld [vmem:[#allocation3 + $0x1e0] sm:$0xff]
          %v8030 = vld [vmem:[#allocation3 + $0x1e8] sm:$0xff]
          %v8031 = vld [vmem:[#allocation3 + $0x1f0] sm:$0xff]
          %v8032 = vld [vmem:[#allocation3 + $0x1f8] sm:$0xff]
          %v8033 = vld [vmem:[#allocation3 + $0x200] sm:$0xff]
          %v8034 = vld [vmem:[#allocation3 + $0x208] sm:$0xff]
          %v8035 = vld [vmem:[#allocation3 + $0x210] sm:$0xff]
          %v8036 = vld [vmem:[#allocation3 + $0x218] sm:$0xff]
          %v8037 = vld [vmem:[#allocation3 + $0x220] sm:$0xff]
          %v8038 = vld [vmem:[#allocation3 + $0x228] sm:$0xff]
          %v8039 = vld [vmem:[#allocation3 + $0x230] sm:$0xff]
          %v8040 = vld [vmem:[#allocation3 + $0x238] sm:$0xff]
          %v8041 = vld [vmem:[#allocation3 + $0x240] sm:$0xff]
          %v8042 = vld [vmem:[#allocation3 + $0x248] sm:$0xff]
          %v8043 = vld [vmem:[#allocation3 + $0x250] sm:$0xff]
          %v8044 = vld [vmem:[#allocation3 + $0x258] sm:$0xff]
          %v8045 = vld [vmem:[#allocation3 + $0x260] sm:$0xff]
          %v8046 = vld [vmem:[#allocation3 + $0x268] sm:$0xff]
          %v8047 = vld [vmem:[#allocation3 + $0x270] sm:$0xff]
          %v8048 = vld [vmem:[#allocation3 + $0x278] sm:$0xff]
          %v8049 = vld [vmem:[#allocation3 + $0x280] sm:$0xff]
          %v8050 = vld [vmem:[#allocation3 + $0x288] sm:$0xff]
          %v8051 = vld [vmem:[#allocation3 + $0x290] sm:$0xff]
          %v8052 = vld [vmem:[#allocation3 + $0x298] sm:$0xff]
          %v8053 = vld [vmem:[#allocation3 + $0x2a0] sm:$0xff]
          %v8054 = vld [vmem:[#allocation3 + $0x2a8] sm:$0xff]
          %v8055 = vld [vmem:[#allocation3 + $0x2b0] sm:$0xff]
          %v8056 = vld [vmem:[#allocation3 + $0x2b8] sm:$0xff]
          %v8057 = vld [vmem:[#allocation3 + $0x2c0] sm:$0xff]
          %v8058 = vld [vmem:[#allocation3 + $0x2c8] sm:$0xff]
          %v8059 = vld [vmem:[#allocation3 + $0x2d0] sm:$0xff]
          %v8060 = vld [vmem:[#allocation3 + $0x2d8] sm:$0xff]
          %v8061 = vld [vmem:[#allocation3 + $0x2e0] sm:$0xff]
          %v8062 = vld [vmem:[#allocation3 + $0x2e8] sm:$0xff]
          %v8063 = vld [vmem:[#allocation3 + $0x2f0] sm:$0xff]
          %v8064 = vld [vmem:[#allocation3 + $0x2f8] sm:$0xff]
          %v8065 = vld [vmem:[#allocation3 + $0x300] sm:$0xff]
          %v8066 = vld [vmem:[#allocation3 + $0x308] sm:$0xff]
          %v8067 = vld [vmem:[#allocation3 + $0x310] sm:$0xff]
          %v8068 = vld [vmem:[#allocation3 + $0x318] sm:$0xff]
          %v8069 = vld [vmem:[#allocation3 + $0x320] sm:$0xff]
          %v8070 = vld [vmem:[#allocation3 + $0x328] sm:$0xff]
          %v8071 = vld [vmem:[#allocation3 + $0x330] sm:$0xff]
          %v8072 = vld [vmem:[#allocation3 + $0x338] sm:$0xff]
          %v8073 = vld [vmem:[#allocation3 + $0x340] sm:$0xff]
          %v8074 = vld [vmem:[#allocation3 + $0x348] sm:$0xff]
          %v8075 = vld [vmem:[#allocation3 + $0x350] sm:$0xff]
          %v8076 = vld [vmem:[#allocation3 + $0x358] sm:$0xff]
          %v8077 = vld [vmem:[#allocation3 + $0x360] sm:$0xff]
          %v8078 = vld [vmem:[#allocation3 + $0x368] sm:$0xff]
          %v8079 = vld [vmem:[#allocation3 + $0x370] sm:$0xff]
          %v8080 = vld [vmem:[#allocation3 + $0x378] sm:$0xff]
          %v8081 = vld [vmem:[#allocation3 + $0x380] sm:$0xff]
          %v8082 = vld [vmem:[#allocation3 + $0x388] sm:$0xff]
          %v8083 = vld [vmem:[#allocation3 + $0x390] sm:$0xff]
          %v8084 = vld [vmem:[#allocation3 + $0x398] sm:$0xff]
          %v8085 = vld [vmem:[#allocation3 + $0x3a0] sm:$0xff]
          %v8086 = vld [vmem:[#allocation3 + $0x3a8] sm:$0xff]
          %v8087 = vld [vmem:[#allocation3 + $0x3b0] sm:$0xff]
          %v8088 = vld [vmem:[#allocation3 + $0x3b8] sm:$0xff]
          %v8089 = vld [vmem:[#allocation3 + $0x3c0] sm:$0xff]
          %v8090 = vld [vmem:[#allocation3 + $0x3c8] sm:$0xff]
          %v8091 = vld [vmem:[#allocation3 + $0x3d0] sm:$0xff]
          %v8092 = vld [vmem:[#allocation3 + $0x3d8] sm:$0xff]
          %v8093 = vld [vmem:[#allocation3 + $0x3e0] sm:$0xff]
          %v8094 = vld [vmem:[#allocation3 + $0x3e8] sm:$0xff]
          %v8095 = vld [vmem:[#allocation3 + $0x3f0] sm:$0xff]
          %v8096 = vld [vmem:[#allocation3 + $0x3f8] sm:$0xff]
          %v8097 = vld [vmem:[#allocation7] sm:$0xf]
          %v8099 = vlaneseq
          %v8100 = vshrl.u32 %v8099, 7
          %v8101 = vsub.s32 0, %v8100
          %v8102 = vrot.slane %v8097, %v8101
          %v8103 = vlaneseq
          %v8104 = vshrl.u32 %v8103, 7
          %v8105 = vsub.s32 1, %v8104
          %v8106 = vrot.slane %v8097, %v8105
          %v8107 = vlaneseq
          %v8108 = vshrl.u32 %v8107, 7
          %v8109 = vsub.s32 2, %v8108
          %v8110 = vrot.slane %v8097, %v8109
          %v8111 = vlaneseq
          %v8112 = vshrl.u32 %v8111, 7
          %v8113 = vsub.s32 3, %v8112
          %v8114 = vrot.slane %v8097, %v8113
          %v8119 = vadd.f32 %v7969, %v8102
          %v8120 = vadd.f32 %v7970, %v8106
          %v8121 = vadd.f32 %v7971, %v8110
          %v8122 = vadd.f32 %v7972, %v8114
          %v8123 = vadd.f32 %v7973, %v8102
          %v8124 = vadd.f32 %v7974, %v8106
          %v8125 = vadd.f32 %v7975, %v8110
          %v8126 = vadd.f32 %v7976, %v8114
          %v8127 = vadd.f32 %v7977, %v8102
          %v8128 = vadd.f32 %v7978, %v8106
          %v8129 = vadd.f32 %v7979, %v8110
          %v8130 = vadd.f32 %v7980, %v8114
          %v8131 = vadd.f32 %v7981, %v8102
          %v8132 = vadd.f32 %v7982, %v8106
          %v8133 = vadd.f32 %v7983, %v8110
          %v8134 = vadd.f32 %v7984, %v8114
          %v8135 = vadd.f32 %v7985, %v8102
          %v8136 = vadd.f32 %v7986, %v8106
          %v8137 = vadd.f32 %v7987, %v8110
          %v8138 = vadd.f32 %v7988, %v8114
          %v8139 = vadd.f32 %v7989, %v8102
          %v8140 = vadd.f32 %v7990, %v8106
          %v8141 = vadd.f32 %v7991, %v8110
          %v8142 = vadd.f32 %v7992, %v8114
          %v8143 = vadd.f32 %v7993, %v8102
          %v8144 = vadd.f32 %v7994, %v8106
          %v8145 = vadd.f32 %v7995, %v8110
          %v8146 = vadd.f32 %v7996, %v8114
          %v8147 = vadd.f32 %v7997, %v8102
          %v8148 = vadd.f32 %v7998, %v8106
          %v8149 = vadd.f32 %v7999, %v8110
          %v8150 = vadd.f32 %v8000, %v8114
          %v8151 = vadd.f32 %v8001, %v8102
          %v8152 = vadd.f32 %v8002, %v8106
          %v8153 = vadd.f32 %v8003, %v8110
          %v8154 = vadd.f32 %v8004, %v8114
          %v8155 = vadd.f32 %v8005, %v8102
          %v8156 = vadd.f32 %v8006, %v8106
          %v8157 = vadd.f32 %v8007, %v8110
          %v8158 = vadd.f32 %v8008, %v8114
          %v8159 = vadd.f32 %v8009, %v8102
          %v8160 = vadd.f32 %v8010, %v8106
          %v8161 = vadd.f32 %v8011, %v8110
          %v8162 = vadd.f32 %v8012, %v8114
          %v8163 = vadd.f32 %v8013, %v8102
          %v8164 = vadd.f32 %v8014, %v8106
          %v8165 = vadd.f32 %v8015, %v8110
          %v8166 = vadd.f32 %v8016, %v8114
          %v8167 = vadd.f32 %v8017, %v8102
          %v8168 = vadd.f32 %v8018, %v8106
          %v8169 = vadd.f32 %v8019, %v8110
          %v8170 = vadd.f32 %v8020, %v8114
          %v8171 = vadd.f32 %v8021, %v8102
          %v8172 = vadd.f32 %v8022, %v8106
          %v8173 = vadd.f32 %v8023, %v8110
          %v8174 = vadd.f32 %v8024, %v8114
          %v8175 = vadd.f32 %v8025, %v8102
          %v8176 = vadd.f32 %v8026, %v8106
          %v8177 = vadd.f32 %v8027, %v8110
          %v8178 = vadd.f32 %v8028, %v8114
          %v8179 = vadd.f32 %v8029, %v8102
          %v8180 = vadd.f32 %v8030, %v8106
          %v8181 = vadd.f32 %v8031, %v8110
          %v8182 = vadd.f32 %v8032, %v8114
          %v8183 = vadd.f32 %v8033, %v8102
          %v8184 = vadd.f32 %v8034, %v8106
          %v8185 = vadd.f32 %v8035, %v8110
          %v8186 = vadd.f32 %v8036, %v8114
          %v8187 = vadd.f32 %v8037, %v8102
          %v8188 = vadd.f32 %v8038, %v8106
          %v8189 = vadd.f32 %v8039, %v8110
          %v8190 = vadd.f32 %v8040, %v8114
          %v8191 = vadd.f32 %v8041, %v8102
          %v8192 = vadd.f32 %v8042, %v8106
          %v8193 = vadd.f32 %v8043, %v8110
          %v8194 = vadd.f32 %v8044, %v8114
          %v8195 = vadd.f32 %v8045, %v8102
          %v8196 = vadd.f32 %v8046, %v8106
          %v8197 = vadd.f32 %v8047, %v8110
          %v8198 = vadd.f32 %v8048, %v8114
          %v8199 = vadd.f32 %v8049, %v8102
          %v8200 = vadd.f32 %v8050, %v8106
          %v8201 = vadd.f32 %v8051, %v8110
          %v8202 = vadd.f32 %v8052, %v8114
          %v8203 = vadd.f32 %v8053, %v8102
          %v8204 = vadd.f32 %v8054, %v8106
          %v8205 = vadd.f32 %v8055, %v8110
          %v8206 = vadd.f32 %v8056, %v8114
          %v8207 = vadd.f32 %v8057, %v8102
          %v8208 = vadd.f32 %v8058, %v8106
          %v8209 = vadd.f32 %v8059, %v8110
          %v8210 = vadd.f32 %v8060, %v8114
          %v8211 = vadd.f32 %v8061, %v8102
          %v8212 = vadd.f32 %v8062, %v8106
          %v8213 = vadd.f32 %v8063, %v8110
          %v8214 = vadd.f32 %v8064, %v8114
          %v8215 = vadd.f32 %v8065, %v8102
          %v8216 = vadd.f32 %v8066, %v8106
          %v8217 = vadd.f32 %v8067, %v8110
          %v8218 = vadd.f32 %v8068, %v8114
          %v8219 = vadd.f32 %v8069, %v8102
          %v8220 = vadd.f32 %v8070, %v8106
          %v8221 = vadd.f32 %v8071, %v8110
          %v8222 = vadd.f32 %v8072, %v8114
          %v8223 = vadd.f32 %v8073, %v8102
          %v8224 = vadd.f32 %v8074, %v8106
          %v8225 = vadd.f32 %v8075, %v8110
          %v8226 = vadd.f32 %v8076, %v8114
          %v8227 = vadd.f32 %v8077, %v8102
          %v8228 = vadd.f32 %v8078, %v8106
          %v8229 = vadd.f32 %v8079, %v8110
          %v8230 = vadd.f32 %v8080, %v8114
          %v8231 = vadd.f32 %v8081, %v8102
          %v8232 = vadd.f32 %v8082, %v8106
          %v8233 = vadd.f32 %v8083, %v8110
          %v8234 = vadd.f32 %v8084, %v8114
          %v8235 = vadd.f32 %v8085, %v8102
          %v8236 = vadd.f32 %v8086, %v8106
          %v8237 = vadd.f32 %v8087, %v8110
          %v8238 = vadd.f32 %v8088, %v8114
          %v8239 = vadd.f32 %v8089, %v8102
          %v8240 = vadd.f32 %v8090, %v8106
          %v8241 = vadd.f32 %v8091, %v8110
          %v8242 = vadd.f32 %v8092, %v8114
          %v8243 = vadd.f32 %v8093, %v8102
          %v8244 = vadd.f32 %v8094, %v8106
          %v8245 = vadd.f32 %v8095, %v8110
          %v8246 = vadd.f32 %v8096, %v8114
          %v8247 = vmax.f32 %v8119, 0.0
          %v8248 = vmax.f32 %v8120, 0.0
          %v8249 = vmax.f32 %v8121, 0.0
          %v8250 = vmax.f32 %v8122, 0.0
          %v8251 = vmax.f32 %v8123, 0.0
          %v8252 = vmax.f32 %v8124, 0.0
          %v8253 = vmax.f32 %v8125, 0.0
          %v8254 = vmax.f32 %v8126, 0.0
          %v8255 = vmax.f32 %v8127, 0.0
          %v8256 = vmax.f32 %v8128, 0.0
          %v8257 = vmax.f32 %v8129, 0.0
          %v8258 = vmax.f32 %v8130, 0.0
          %v8259 = vmax.f32 %v8131, 0.0
          %v8260 = vmax.f32 %v8132, 0.0
          %v8261 = vmax.f32 %v8133, 0.0
          %v8262 = vmax.f32 %v8134, 0.0
          %v8263 = vmax.f32 %v8135, 0.0
          %v8264 = vmax.f32 %v8136, 0.0
          %v8265 = vmax.f32 %v8137, 0.0
          %v8266 = vmax.f32 %v8138, 0.0
          %v8267 = vmax.f32 %v8139, 0.0
          %v8268 = vmax.f32 %v8140, 0.0
          %v8269 = vmax.f32 %v8141, 0.0
          %v8270 = vmax.f32 %v8142, 0.0
          %v8271 = vmax.f32 %v8143, 0.0
          %v8272 = vmax.f32 %v8144, 0.0
          %v8273 = vmax.f32 %v8145, 0.0
          %v8274 = vmax.f32 %v8146, 0.0
          %v8275 = vmax.f32 %v8147, 0.0
          %v8276 = vmax.f32 %v8148, 0.0
          %v8277 = vmax.f32 %v8149, 0.0
          %v8278 = vmax.f32 %v8150, 0.0
          %v8279 = vmax.f32 %v8151, 0.0
          %v8280 = vmax.f32 %v8152, 0.0
          %v8281 = vmax.f32 %v8153, 0.0
          %v8282 = vmax.f32 %v8154, 0.0
          %v8283 = vmax.f32 %v8155, 0.0
          %v8284 = vmax.f32 %v8156, 0.0
          %v8285 = vmax.f32 %v8157, 0.0
          %v8286 = vmax.f32 %v8158, 0.0
          %v8287 = vmax.f32 %v8159, 0.0
          %v8288 = vmax.f32 %v8160, 0.0
          %v8289 = vmax.f32 %v8161, 0.0
          %v8290 = vmax.f32 %v8162, 0.0
          %v8291 = vmax.f32 %v8163, 0.0
          %v8292 = vmax.f32 %v8164, 0.0
          %v8293 = vmax.f32 %v8165, 0.0
          %v8294 = vmax.f32 %v8166, 0.0
          %v8295 = vmax.f32 %v8167, 0.0
          %v8296 = vmax.f32 %v8168, 0.0
          %v8297 = vmax.f32 %v8169, 0.0
          %v8298 = vmax.f32 %v8170, 0.0
          %v8299 = vmax.f32 %v8171, 0.0
          %v8300 = vmax.f32 %v8172, 0.0
          %v8301 = vmax.f32 %v8173, 0.0
          %v8302 = vmax.f32 %v8174, 0.0
          %v8303 = vmax.f32 %v8175, 0.0
          %v8304 = vmax.f32 %v8176, 0.0
          %v8305 = vmax.f32 %v8177, 0.0
          %v8306 = vmax.f32 %v8178, 0.0
          %v8307 = vmax.f32 %v8179, 0.0
          %v8308 = vmax.f32 %v8180, 0.0
          %v8309 = vmax.f32 %v8181, 0.0
          %v8310 = vmax.f32 %v8182, 0.0
          %v8311 = vmax.f32 %v8183, 0.0
          %v8312 = vmax.f32 %v8184, 0.0
          %v8313 = vmax.f32 %v8185, 0.0
          %v8314 = vmax.f32 %v8186, 0.0
          %v8315 = vmax.f32 %v8187, 0.0
          %v8316 = vmax.f32 %v8188, 0.0
          %v8317 = vmax.f32 %v8189, 0.0
          %v8318 = vmax.f32 %v8190, 0.0
          %v8319 = vmax.f32 %v8191, 0.0
          %v8320 = vmax.f32 %v8192, 0.0
          %v8321 = vmax.f32 %v8193, 0.0
          %v8322 = vmax.f32 %v8194, 0.0
          %v8323 = vmax.f32 %v8195, 0.0
          %v8324 = vmax.f32 %v8196, 0.0
          %v8325 = vmax.f32 %v8197, 0.0
          %v8326 = vmax.f32 %v8198, 0.0
          %v8327 = vmax.f32 %v8199, 0.0
          %v8328 = vmax.f32 %v8200, 0.0
          %v8329 = vmax.f32 %v8201, 0.0
          %v8330 = vmax.f32 %v8202, 0.0
          %v8331 = vmax.f32 %v8203, 0.0
          %v8332 = vmax.f32 %v8204, 0.0
          %v8333 = vmax.f32 %v8205, 0.0
          %v8334 = vmax.f32 %v8206, 0.0
          %v8335 = vmax.f32 %v8207, 0.0
          %v8336 = vmax.f32 %v8208, 0.0
          %v8337 = vmax.f32 %v8209, 0.0
          %v8338 = vmax.f32 %v8210, 0.0
          %v8339 = vmax.f32 %v8211, 0.0
          %v8340 = vmax.f32 %v8212, 0.0
          %v8341 = vmax.f32 %v8213, 0.0
          %v8342 = vmax.f32 %v8214, 0.0
          %v8343 = vmax.f32 %v8215, 0.0
          %v8344 = vmax.f32 %v8216, 0.0
          %v8345 = vmax.f32 %v8217, 0.0
          %v8346 = vmax.f32 %v8218, 0.0
          %v8347 = vmax.f32 %v8219, 0.0
          %v8348 = vmax.f32 %v8220, 0.0
          %v8349 = vmax.f32 %v8221, 0.0
          %v8350 = vmax.f32 %v8222, 0.0
          %v8351 = vmax.f32 %v8223, 0.0
          %v8352 = vmax.f32 %v8224, 0.0
          %v8353 = vmax.f32 %v8225, 0.0
          %v8354 = vmax.f32 %v8226, 0.0
          %v8355 = vmax.f32 %v8227, 0.0
          %v8356 = vmax.f32 %v8228, 0.0
          %v8357 = vmax.f32 %v8229, 0.0
          %v8358 = vmax.f32 %v8230, 0.0
          %v8359 = vmax.f32 %v8231, 0.0
          %v8360 = vmax.f32 %v8232, 0.0
          %v8361 = vmax.f32 %v8233, 0.0
          %v8362 = vmax.f32 %v8234, 0.0
          %v8363 = vmax.f32 %v8235, 0.0
          %v8364 = vmax.f32 %v8236, 0.0
          %v8365 = vmax.f32 %v8237, 0.0
          %v8366 = vmax.f32 %v8238, 0.0
          %v8367 = vmax.f32 %v8239, 0.0
          %v8368 = vmax.f32 %v8240, 0.0
          %v8369 = vmax.f32 %v8241, 0.0
          %v8370 = vmax.f32 %v8242, 0.0
          %v8371 = vmax.f32 %v8243, 0.0
          %v8372 = vmax.f32 %v8244, 0.0
          %v8373 = vmax.f32 %v8245, 0.0
          %v8374 = vmax.f32 %v8246, 0.0
          %v8375 = vmax.f32 %v8247, %v8255
          %v8376 = vmax.f32 %v8248, %v8256
          %v8377 = vmax.f32 %v8249, %v8257
          %v8378 = vmax.f32 %v8250, %v8258
          %v8379 = vmax.f32 %v8251, %v8259
          %v8380 = vmax.f32 %v8252, %v8260
          %v8381 = vmax.f32 %v8253, %v8261
          %v8382 = vmax.f32 %v8254, %v8262
          %v8383 = vmax.f32 %v8263, %v8271
          %v8384 = vmax.f32 %v8264, %v8272
          %v8385 = vmax.f32 %v8265, %v8273
          %v8386 = vmax.f32 %v8266, %v8274
          %v8387 = vmax.f32 %v8267, %v8275
          %v8388 = vmax.f32 %v8268, %v8276
          %v8389 = vmax.f32 %v8269, %v8277
          %v8390 = vmax.f32 %v8270, %v8278
          %v8391 = vmax.f32 %v8279, %v8287
          %v8392 = vmax.f32 %v8280, %v8288
          %v8393 = vmax.f32 %v8281, %v8289
          %v8394 = vmax.f32 %v8282, %v8290
          %v8395 = vmax.f32 %v8283, %v8291
          %v8396 = vmax.f32 %v8284, %v8292
          %v8397 = vmax.f32 %v8285, %v8293
          %v8398 = vmax.f32 %v8286, %v8294
          %v8399 = vmax.f32 %v8295, %v8303
          %v8400 = vmax.f32 %v8296, %v8304
          %v8401 = vmax.f32 %v8297, %v8305
          %v8402 = vmax.f32 %v8298, %v8306
          %v8403 = vmax.f32 %v8299, %v8307
          %v8404 = vmax.f32 %v8300, %v8308
          %v8405 = vmax.f32 %v8301, %v8309
          %v8406 = vmax.f32 %v8302, %v8310
          %v8407 = vmax.f32 %v8311, %v8319
          %v8408 = vmax.f32 %v8312, %v8320
          %v8409 = vmax.f32 %v8313, %v8321
          %v8410 = vmax.f32 %v8314, %v8322
          %v8411 = vmax.f32 %v8315, %v8323
          %v8412 = vmax.f32 %v8316, %v8324
          %v8413 = vmax.f32 %v8317, %v8325
          %v8414 = vmax.f32 %v8318, %v8326
          %v8415 = vmax.f32 %v8327, %v8335
          %v8416 = vmax.f32 %v8328, %v8336
          %v8417 = vmax.f32 %v8329, %v8337
          %v8418 = vmax.f32 %v8330, %v8338
          %v8419 = vmax.f32 %v8331, %v8339
          %v8420 = vmax.f32 %v8332, %v8340
          %v8421 = vmax.f32 %v8333, %v8341
          %v8422 = vmax.f32 %v8334, %v8342
          %v8423 = vmax.f32 %v8343, %v8351
          %v8424 = vmax.f32 %v8344, %v8352
          %v8425 = vmax.f32 %v8345, %v8353
          %v8426 = vmax.f32 %v8346, %v8354
          %v8427 = vmax.f32 %v8347, %v8355
          %v8428 = vmax.f32 %v8348, %v8356
          %v8429 = vmax.f32 %v8349, %v8357
          %v8430 = vmax.f32 %v8350, %v8358
          %v8431 = vmax.f32 %v8359, %v8367
          %v8432 = vmax.f32 %v8360, %v8368
          %v8433 = vmax.f32 %v8361, %v8369
          %v8434 = vmax.f32 %v8362, %v8370
          %v8435 = vmax.f32 %v8363, %v8371
          %v8436 = vmax.f32 %v8364, %v8372
          %v8437 = vmax.f32 %v8365, %v8373
          %v8438 = vmax.f32 %v8366, %v8374
          %v8503 = vcombine.low %v8375, %v8376
          %v8504 = vcombine.high %v8375, %v8376
          %v8505 = vcombine.low %v8377, %v8378
          %v8506 = vcombine.high %v8377, %v8378
          %v8508 = vunpack.c.l.s4 1983009808
          %v8509 = vunpack.c.0.s8 %v8508
          %v8510 = vlaneseq
          %v8511 = vshrl.u32 %v8510, 7
          %v8512 = vsub.s32 %v8509, %v8511
          %v8513 = vrot.slane %v8503, %v8512
          %v8515 = vunpack.c.l.s4 1983009808
          %v8516 = vunpack.c.0.s8 %v8515
          %v8517 = vlaneseq
          %v8518 = vshrl.u32 %v8517, 7
          %v8519 = vsub.s32 %v8516, %v8518
          %v8520 = vrot.slane %v8504, %v8519
          %v8522 = vunpack.c.l.s4 1983009808
          %v8523 = vunpack.c.0.s8 %v8522
          %v8524 = vlaneseq
          %v8525 = vshrl.u32 %v8524, 7
          %v8526 = vsub.s32 %v8523, %v8525
          %v8527 = vrot.slane %v8505, %v8526
          %v8529 = vunpack.c.l.s4 1983009808
          %v8530 = vunpack.c.0.s8 %v8529
          %v8531 = vlaneseq
          %v8532 = vshrl.u32 %v8531, 7
          %v8533 = vsub.s32 %v8530, %v8532
          %v8534 = vrot.slane %v8506, %v8533
          %v8535 = vcombine.low %v8513, %v8527
          %v8536 = vcombine.high %v8513, %v8527
          %v8537 = vcombine.low %v8520, %v8534
          %v8538 = vcombine.high %v8520, %v8534
          %v8539 = vcombine.low %v8379, %v8380
          %v8540 = vcombine.high %v8379, %v8380
          %v8541 = vcombine.low %v8381, %v8382
          %v8542 = vcombine.high %v8381, %v8382
          %v8544 = vunpack.c.l.s4 1983009808
          %v8545 = vunpack.c.0.s8 %v8544
          %v8546 = vlaneseq
          %v8547 = vshrl.u32 %v8546, 7
          %v8548 = vsub.s32 %v8545, %v8547
          %v8549 = vrot.slane %v8539, %v8548
          %v8551 = vunpack.c.l.s4 1983009808
          %v8552 = vunpack.c.0.s8 %v8551
          %v8553 = vlaneseq
          %v8554 = vshrl.u32 %v8553, 7
          %v8555 = vsub.s32 %v8552, %v8554
          %v8556 = vrot.slane %v8540, %v8555
          %v8558 = vunpack.c.l.s4 1983009808
          %v8559 = vunpack.c.0.s8 %v8558
          %v8560 = vlaneseq
          %v8561 = vshrl.u32 %v8560, 7
          %v8562 = vsub.s32 %v8559, %v8561
          %v8563 = vrot.slane %v8541, %v8562
          %v8565 = vunpack.c.l.s4 1983009808
          %v8566 = vunpack.c.0.s8 %v8565
          %v8567 = vlaneseq
          %v8568 = vshrl.u32 %v8567, 7
          %v8569 = vsub.s32 %v8566, %v8568
          %v8570 = vrot.slane %v8542, %v8569
          %v8571 = vcombine.low %v8549, %v8563
          %v8572 = vcombine.high %v8549, %v8563
          %v8573 = vcombine.low %v8556, %v8570
          %v8574 = vcombine.high %v8556, %v8570
          %v8575 = vcombine.low %v8383, %v8384
          %v8576 = vcombine.high %v8383, %v8384
          %v8577 = vcombine.low %v8385, %v8386
          %v8578 = vcombine.high %v8385, %v8386
          %v8580 = vunpack.c.l.s4 1983009808
          %v8581 = vunpack.c.0.s8 %v8580
          %v8582 = vlaneseq
          %v8583 = vshrl.u32 %v8582, 7
          %v8584 = vsub.s32 %v8581, %v8583
          %v8585 = vrot.slane %v8575, %v8584
          %v8587 = vunpack.c.l.s4 1983009808
          %v8588 = vunpack.c.0.s8 %v8587
          %v8589 = vlaneseq
          %v8590 = vshrl.u32 %v8589, 7
          %v8591 = vsub.s32 %v8588, %v8590
          %v8592 = vrot.slane %v8576, %v8591
          %v8594 = vunpack.c.l.s4 1983009808
          %v8595 = vunpack.c.0.s8 %v8594
          %v8596 = vlaneseq
          %v8597 = vshrl.u32 %v8596, 7
          %v8598 = vsub.s32 %v8595, %v8597
          %v8599 = vrot.slane %v8577, %v8598
          %v8601 = vunpack.c.l.s4 1983009808
          %v8602 = vunpack.c.0.s8 %v8601
          %v8603 = vlaneseq
          %v8604 = vshrl.u32 %v8603, 7
          %v8605 = vsub.s32 %v8602, %v8604
          %v8606 = vrot.slane %v8578, %v8605
          %v8607 = vcombine.low %v8585, %v8599
          %v8608 = vcombine.high %v8585, %v8599
          %v8609 = vcombine.low %v8592, %v8606
          %v8610 = vcombine.high %v8592, %v8606
          %v8611 = vcombine.low %v8387, %v8388
          %v8612 = vcombine.high %v8387, %v8388
          %v8613 = vcombine.low %v8389, %v8390
          %v8614 = vcombine.high %v8389, %v8390
          %v8616 = vunpack.c.l.s4 1983009808
          %v8617 = vunpack.c.0.s8 %v8616
          %v8618 = vlaneseq
          %v8619 = vshrl.u32 %v8618, 7
          %v8620 = vsub.s32 %v8617, %v8619
          %v8621 = vrot.slane %v8611, %v8620
          %v8623 = vunpack.c.l.s4 1983009808
          %v8624 = vunpack.c.0.s8 %v8623
          %v8625 = vlaneseq
          %v8626 = vshrl.u32 %v8625, 7
          %v8627 = vsub.s32 %v8624, %v8626
          %v8628 = vrot.slane %v8612, %v8627
          %v8630 = vunpack.c.l.s4 1983009808
          %v8631 = vunpack.c.0.s8 %v8630
          %v8632 = vlaneseq
          %v8633 = vshrl.u32 %v8632, 7
          %v8634 = vsub.s32 %v8631, %v8633
          %v8635 = vrot.slane %v8613, %v8634
          %v8637 = vunpack.c.l.s4 1983009808
          %v8638 = vunpack.c.0.s8 %v8637
          %v8639 = vlaneseq
          %v8640 = vshrl.u32 %v8639, 7
          %v8641 = vsub.s32 %v8638, %v8640
          %v8642 = vrot.slane %v8614, %v8641
          %v8643 = vcombine.low %v8621, %v8635
          %v8644 = vcombine.high %v8621, %v8635
          %v8645 = vcombine.low %v8628, %v8642
          %v8646 = vcombine.high %v8628, %v8642
          %v8647 = vcombine.low %v8391, %v8392
          %v8648 = vcombine.high %v8391, %v8392
          %v8649 = vcombine.low %v8393, %v8394
          %v8650 = vcombine.high %v8393, %v8394
          %v8652 = vunpack.c.l.s4 1983009808
          %v8653 = vunpack.c.0.s8 %v8652
          %v8654 = vlaneseq
          %v8655 = vshrl.u32 %v8654, 7
          %v8656 = vsub.s32 %v8653, %v8655
          %v8657 = vrot.slane %v8647, %v8656
          %v8659 = vunpack.c.l.s4 1983009808
          %v8660 = vunpack.c.0.s8 %v8659
          %v8661 = vlaneseq
          %v8662 = vshrl.u32 %v8661, 7
          %v8663 = vsub.s32 %v8660, %v8662
          %v8664 = vrot.slane %v8648, %v8663
          %v8666 = vunpack.c.l.s4 1983009808
          %v8667 = vunpack.c.0.s8 %v8666
          %v8668 = vlaneseq
          %v8669 = vshrl.u32 %v8668, 7
          %v8670 = vsub.s32 %v8667, %v8669
          %v8671 = vrot.slane %v8649, %v8670
          %v8673 = vunpack.c.l.s4 1983009808
          %v8674 = vunpack.c.0.s8 %v8673
          %v8675 = vlaneseq
          %v8676 = vshrl.u32 %v8675, 7
          %v8677 = vsub.s32 %v8674, %v8676
          %v8678 = vrot.slane %v8650, %v8677
          %v8679 = vcombine.low %v8657, %v8671
          %v8680 = vcombine.high %v8657, %v8671
          %v8681 = vcombine.low %v8664, %v8678
          %v8682 = vcombine.high %v8664, %v8678
          %v8683 = vcombine.low %v8395, %v8396
          %v8684 = vcombine.high %v8395, %v8396
          %v8685 = vcombine.low %v8397, %v8398
          %v8686 = vcombine.high %v8397, %v8398
          %v8688 = vunpack.c.l.s4 1983009808
          %v8689 = vunpack.c.0.s8 %v8688
          %v8690 = vlaneseq
          %v8691 = vshrl.u32 %v8690, 7
          %v8692 = vsub.s32 %v8689, %v8691
          %v8693 = vrot.slane %v8683, %v8692
          %v8695 = vunpack.c.l.s4 1983009808
          %v8696 = vunpack.c.0.s8 %v8695
          %v8697 = vlaneseq
          %v8698 = vshrl.u32 %v8697, 7
          %v8699 = vsub.s32 %v8696, %v8698
          %v8700 = vrot.slane %v8684, %v8699
          %v8702 = vunpack.c.l.s4 1983009808
          %v8703 = vunpack.c.0.s8 %v8702
          %v8704 = vlaneseq
          %v8705 = vshrl.u32 %v8704, 7
          %v8706 = vsub.s32 %v8703, %v8705
          %v8707 = vrot.slane %v8685, %v8706
          %v8709 = vunpack.c.l.s4 1983009808
          %v8710 = vunpack.c.0.s8 %v8709
          %v8711 = vlaneseq
          %v8712 = vshrl.u32 %v8711, 7
          %v8713 = vsub.s32 %v8710, %v8712
          %v8714 = vrot.slane %v8686, %v8713
          %v8715 = vcombine.low %v8693, %v8707
          %v8716 = vcombine.high %v8693, %v8707
          %v8717 = vcombine.low %v8700, %v8714
          %v8718 = vcombine.high %v8700, %v8714
          %v8719 = vcombine.low %v8399, %v8400
          %v8720 = vcombine.high %v8399, %v8400
          %v8721 = vcombine.low %v8401, %v8402
          %v8722 = vcombine.high %v8401, %v8402
          %v8724 = vunpack.c.l.s4 1983009808
          %v8725 = vunpack.c.0.s8 %v8724
          %v8726 = vlaneseq
          %v8727 = vshrl.u32 %v8726, 7
          %v8728 = vsub.s32 %v8725, %v8727
          %v8729 = vrot.slane %v8719, %v8728
          %v8731 = vunpack.c.l.s4 1983009808
          %v8732 = vunpack.c.0.s8 %v8731
          %v8733 = vlaneseq
          %v8734 = vshrl.u32 %v8733, 7
          %v8735 = vsub.s32 %v8732, %v8734
          %v8736 = vrot.slane %v8720, %v8735
          %v8738 = vunpack.c.l.s4 1983009808
          %v8739 = vunpack.c.0.s8 %v8738
          %v8740 = vlaneseq
          %v8741 = vshrl.u32 %v8740, 7
          %v8742 = vsub.s32 %v8739, %v8741
          %v8743 = vrot.slane %v8721, %v8742
          %v8745 = vunpack.c.l.s4 1983009808
          %v8746 = vunpack.c.0.s8 %v8745
          %v8747 = vlaneseq
          %v8748 = vshrl.u32 %v8747, 7
          %v8749 = vsub.s32 %v8746, %v8748
          %v8750 = vrot.slane %v8722, %v8749
          %v8751 = vcombine.low %v8729, %v8743
          %v8752 = vcombine.high %v8729, %v8743
          %v8753 = vcombine.low %v8736, %v8750
          %v8754 = vcombine.high %v8736, %v8750
          %v8755 = vcombine.low %v8403, %v8404
          %v8756 = vcombine.high %v8403, %v8404
          %v8757 = vcombine.low %v8405, %v8406
          %v8758 = vcombine.high %v8405, %v8406
          %v8760 = vunpack.c.l.s4 1983009808
          %v8761 = vunpack.c.0.s8 %v8760
          %v8762 = vlaneseq
          %v8763 = vshrl.u32 %v8762, 7
          %v8764 = vsub.s32 %v8761, %v8763
          %v8765 = vrot.slane %v8755, %v8764
          %v8767 = vunpack.c.l.s4 1983009808
          %v8768 = vunpack.c.0.s8 %v8767
          %v8769 = vlaneseq
          %v8770 = vshrl.u32 %v8769, 7
          %v8771 = vsub.s32 %v8768, %v8770
          %v8772 = vrot.slane %v8756, %v8771
          %v8774 = vunpack.c.l.s4 1983009808
          %v8775 = vunpack.c.0.s8 %v8774
          %v8776 = vlaneseq
          %v8777 = vshrl.u32 %v8776, 7
          %v8778 = vsub.s32 %v8775, %v8777
          %v8779 = vrot.slane %v8757, %v8778
          %v8781 = vunpack.c.l.s4 1983009808
          %v8782 = vunpack.c.0.s8 %v8781
          %v8783 = vlaneseq
          %v8784 = vshrl.u32 %v8783, 7
          %v8785 = vsub.s32 %v8782, %v8784
          %v8786 = vrot.slane %v8758, %v8785
          %v8787 = vcombine.low %v8765, %v8779
          %v8788 = vcombine.high %v8765, %v8779
          %v8789 = vcombine.low %v8772, %v8786
          %v8790 = vcombine.high %v8772, %v8786
          %v8791 = vcombine.low %v8407, %v8408
          %v8792 = vcombine.high %v8407, %v8408
          %v8793 = vcombine.low %v8409, %v8410
          %v8794 = vcombine.high %v8409, %v8410
          %v8796 = vunpack.c.l.s4 1983009808
          %v8797 = vunpack.c.0.s8 %v8796
          %v8798 = vlaneseq
          %v8799 = vshrl.u32 %v8798, 7
          %v8800 = vsub.s32 %v8797, %v8799
          %v8801 = vrot.slane %v8791, %v8800
          %v8803 = vunpack.c.l.s4 1983009808
          %v8804 = vunpack.c.0.s8 %v8803
          %v8805 = vlaneseq
          %v8806 = vshrl.u32 %v8805, 7
          %v8807 = vsub.s32 %v8804, %v8806
          %v8808 = vrot.slane %v8792, %v8807
          %v8810 = vunpack.c.l.s4 1983009808
          %v8811 = vunpack.c.0.s8 %v8810
          %v8812 = vlaneseq
          %v8813 = vshrl.u32 %v8812, 7
          %v8814 = vsub.s32 %v8811, %v8813
          %v8815 = vrot.slane %v8793, %v8814
          %v8817 = vunpack.c.l.s4 1983009808
          %v8818 = vunpack.c.0.s8 %v8817
          %v8819 = vlaneseq
          %v8820 = vshrl.u32 %v8819, 7
          %v8821 = vsub.s32 %v8818, %v8820
          %v8822 = vrot.slane %v8794, %v8821
          %v8823 = vcombine.low %v8801, %v8815
          %v8824 = vcombine.high %v8801, %v8815
          %v8825 = vcombine.low %v8808, %v8822
          %v8826 = vcombine.high %v8808, %v8822
          %v8827 = vcombine.low %v8411, %v8412
          %v8828 = vcombine.high %v8411, %v8412
          %v8829 = vcombine.low %v8413, %v8414
          %v8830 = vcombine.high %v8413, %v8414
          %v8832 = vunpack.c.l.s4 1983009808
          %v8833 = vunpack.c.0.s8 %v8832
          %v8834 = vlaneseq
          %v8835 = vshrl.u32 %v8834, 7
          %v8836 = vsub.s32 %v8833, %v8835
          %v8837 = vrot.slane %v8827, %v8836
          %v8839 = vunpack.c.l.s4 1983009808
          %v8840 = vunpack.c.0.s8 %v8839
          %v8841 = vlaneseq
          %v8842 = vshrl.u32 %v8841, 7
          %v8843 = vsub.s32 %v8840, %v8842
          %v8844 = vrot.slane %v8828, %v8843
          %v8846 = vunpack.c.l.s4 1983009808
          %v8847 = vunpack.c.0.s8 %v8846
          %v8848 = vlaneseq
          %v8849 = vshrl.u32 %v8848, 7
          %v8850 = vsub.s32 %v8847, %v8849
          %v8851 = vrot.slane %v8829, %v8850
          %v8853 = vunpack.c.l.s4 1983009808
          %v8854 = vunpack.c.0.s8 %v8853
          %v8855 = vlaneseq
          %v8856 = vshrl.u32 %v8855, 7
          %v8857 = vsub.s32 %v8854, %v8856
          %v8858 = vrot.slane %v8830, %v8857
          %v8859 = vcombine.low %v8837, %v8851
          %v8860 = vcombine.high %v8837, %v8851
          %v8861 = vcombine.low %v8844, %v8858
          %v8862 = vcombine.high %v8844, %v8858
          %v8863 = vcombine.low %v8415, %v8416
          %v8864 = vcombine.high %v8415, %v8416
          %v8865 = vcombine.low %v8417, %v8418
          %v8866 = vcombine.high %v8417, %v8418
          %v8868 = vunpack.c.l.s4 1983009808
          %v8869 = vunpack.c.0.s8 %v8868
          %v8870 = vlaneseq
          %v8871 = vshrl.u32 %v8870, 7
          %v8872 = vsub.s32 %v8869, %v8871
          %v8873 = vrot.slane %v8863, %v8872
          %v8875 = vunpack.c.l.s4 1983009808
          %v8876 = vunpack.c.0.s8 %v8875
          %v8877 = vlaneseq
          %v8878 = vshrl.u32 %v8877, 7
          %v8879 = vsub.s32 %v8876, %v8878
          %v8880 = vrot.slane %v8864, %v8879
          %v8882 = vunpack.c.l.s4 1983009808
          %v8883 = vunpack.c.0.s8 %v8882
          %v8884 = vlaneseq
          %v8885 = vshrl.u32 %v8884, 7
          %v8886 = vsub.s32 %v8883, %v8885
          %v8887 = vrot.slane %v8865, %v8886
          %v8889 = vunpack.c.l.s4 1983009808
          %v8890 = vunpack.c.0.s8 %v8889
          %v8891 = vlaneseq
          %v8892 = vshrl.u32 %v8891, 7
          %v8893 = vsub.s32 %v8890, %v8892
          %v8894 = vrot.slane %v8866, %v8893
          %v8895 = vcombine.low %v8873, %v8887
          %v8896 = vcombine.high %v8873, %v8887
          %v8897 = vcombine.low %v8880, %v8894
          %v8898 = vcombine.high %v8880, %v8894
          %v8899 = vcombine.low %v8419, %v8420
          %v8900 = vcombine.high %v8419, %v8420
          %v8901 = vcombine.low %v8421, %v8422
          %v8902 = vcombine.high %v8421, %v8422
          %v8904 = vunpack.c.l.s4 1983009808
          %v8905 = vunpack.c.0.s8 %v8904
          %v8906 = vlaneseq
          %v8907 = vshrl.u32 %v8906, 7
          %v8908 = vsub.s32 %v8905, %v8907
          %v8909 = vrot.slane %v8899, %v8908
          %v8911 = vunpack.c.l.s4 1983009808
          %v8912 = vunpack.c.0.s8 %v8911
          %v8913 = vlaneseq
          %v8914 = vshrl.u32 %v8913, 7
          %v8915 = vsub.s32 %v8912, %v8914
          %v8916 = vrot.slane %v8900, %v8915
          %v8918 = vunpack.c.l.s4 1983009808
          %v8919 = vunpack.c.0.s8 %v8918
          %v8920 = vlaneseq
          %v8921 = vshrl.u32 %v8920, 7
          %v8922 = vsub.s32 %v8919, %v8921
          %v8923 = vrot.slane %v8901, %v8922
          %v8925 = vunpack.c.l.s4 1983009808
          %v8926 = vunpack.c.0.s8 %v8925
          %v8927 = vlaneseq
          %v8928 = vshrl.u32 %v8927, 7
          %v8929 = vsub.s32 %v8926, %v8928
          %v8930 = vrot.slane %v8902, %v8929
          %v8931 = vcombine.low %v8909, %v8923
          %v8932 = vcombine.high %v8909, %v8923
          %v8933 = vcombine.low %v8916, %v8930
          %v8934 = vcombine.high %v8916, %v8930
          %v8935 = vcombine.low %v8423, %v8424
          %v8936 = vcombine.high %v8423, %v8424
          %v8937 = vcombine.low %v8425, %v8426
          %v8938 = vcombine.high %v8425, %v8426
          %v8940 = vunpack.c.l.s4 1983009808
          %v8941 = vunpack.c.0.s8 %v8940
          %v8942 = vlaneseq
          %v8943 = vshrl.u32 %v8942, 7
          %v8944 = vsub.s32 %v8941, %v8943
          %v8945 = vrot.slane %v8935, %v8944
          %v8947 = vunpack.c.l.s4 1983009808
          %v8948 = vunpack.c.0.s8 %v8947
          %v8949 = vlaneseq
          %v8950 = vshrl.u32 %v8949, 7
          %v8951 = vsub.s32 %v8948, %v8950
          %v8952 = vrot.slane %v8936, %v8951
          %v8954 = vunpack.c.l.s4 1983009808
          %v8955 = vunpack.c.0.s8 %v8954
          %v8956 = vlaneseq
          %v8957 = vshrl.u32 %v8956, 7
          %v8958 = vsub.s32 %v8955, %v8957
          %v8959 = vrot.slane %v8937, %v8958
          %v8961 = vunpack.c.l.s4 1983009808
          %v8962 = vunpack.c.0.s8 %v8961
          %v8963 = vlaneseq
          %v8964 = vshrl.u32 %v8963, 7
          %v8965 = vsub.s32 %v8962, %v8964
          %v8966 = vrot.slane %v8938, %v8965
          %v8967 = vcombine.low %v8945, %v8959
          %v8968 = vcombine.high %v8945, %v8959
          %v8969 = vcombine.low %v8952, %v8966
          %v8970 = vcombine.high %v8952, %v8966
          %v8971 = vcombine.low %v8427, %v8428
          %v8972 = vcombine.high %v8427, %v8428
          %v8973 = vcombine.low %v8429, %v8430
          %v8974 = vcombine.high %v8429, %v8430
          %v8976 = vunpack.c.l.s4 1983009808
          %v8977 = vunpack.c.0.s8 %v8976
          %v8978 = vlaneseq
          %v8979 = vshrl.u32 %v8978, 7
          %v8980 = vsub.s32 %v8977, %v8979
          %v8981 = vrot.slane %v8971, %v8980
          %v8983 = vunpack.c.l.s4 1983009808
          %v8984 = vunpack.c.0.s8 %v8983
          %v8985 = vlaneseq
          %v8986 = vshrl.u32 %v8985, 7
          %v8987 = vsub.s32 %v8984, %v8986
          %v8988 = vrot.slane %v8972, %v8987
          %v8990 = vunpack.c.l.s4 1983009808
          %v8991 = vunpack.c.0.s8 %v8990
          %v8992 = vlaneseq
          %v8993 = vshrl.u32 %v8992, 7
          %v8994 = vsub.s32 %v8991, %v8993
          %v8995 = vrot.slane %v8973, %v8994
          %v8997 = vunpack.c.l.s4 1983009808
          %v8998 = vunpack.c.0.s8 %v8997
          %v8999 = vlaneseq
          %v9000 = vshrl.u32 %v8999, 7
          %v9001 = vsub.s32 %v8998, %v9000
          %v9002 = vrot.slane %v8974, %v9001
          %v9003 = vcombine.low %v8981, %v8995
          %v9004 = vcombine.high %v8981, %v8995
          %v9005 = vcombine.low %v8988, %v9002
          %v9006 = vcombine.high %v8988, %v9002
          %v9007 = vcombine.low %v8431, %v8432
          %v9008 = vcombine.high %v8431, %v8432
          %v9009 = vcombine.low %v8433, %v8434
          %v9010 = vcombine.high %v8433, %v8434
          %v9012 = vunpack.c.l.s4 1983009808
          %v9013 = vunpack.c.0.s8 %v9012
          %v9014 = vlaneseq
          %v9015 = vshrl.u32 %v9014, 7
          %v9016 = vsub.s32 %v9013, %v9015
          %v9017 = vrot.slane %v9007, %v9016
          %v9019 = vunpack.c.l.s4 1983009808
          %v9020 = vunpack.c.0.s8 %v9019
          %v9021 = vlaneseq
          %v9022 = vshrl.u32 %v9021, 7
          %v9023 = vsub.s32 %v9020, %v9022
          %v9024 = vrot.slane %v9008, %v9023
          %v9026 = vunpack.c.l.s4 1983009808
          %v9027 = vunpack.c.0.s8 %v9026
          %v9028 = vlaneseq
          %v9029 = vshrl.u32 %v9028, 7
          %v9030 = vsub.s32 %v9027, %v9029
          %v9031 = vrot.slane %v9009, %v9030
          %v9033 = vunpack.c.l.s4 1983009808
          %v9034 = vunpack.c.0.s8 %v9033
          %v9035 = vlaneseq
          %v9036 = vshrl.u32 %v9035, 7
          %v9037 = vsub.s32 %v9034, %v9036
          %v9038 = vrot.slane %v9010, %v9037
          %v9039 = vcombine.low %v9017, %v9031
          %v9040 = vcombine.high %v9017, %v9031
          %v9041 = vcombine.low %v9024, %v9038
          %v9042 = vcombine.high %v9024, %v9038
          %v9043 = vcombine.low %v8435, %v8436
          %v9044 = vcombine.high %v8435, %v8436
          %v9045 = vcombine.low %v8437, %v8438
          %v9046 = vcombine.high %v8437, %v8438
          %v9048 = vunpack.c.l.s4 1983009808
          %v9049 = vunpack.c.0.s8 %v9048
          %v9050 = vlaneseq
          %v9051 = vshrl.u32 %v9050, 7
          %v9052 = vsub.s32 %v9049, %v9051
          %v9053 = vrot.slane %v9043, %v9052
          %v9055 = vunpack.c.l.s4 1983009808
          %v9056 = vunpack.c.0.s8 %v9055
          %v9057 = vlaneseq
          %v9058 = vshrl.u32 %v9057, 7
          %v9059 = vsub.s32 %v9056, %v9058
          %v9060 = vrot.slane %v9044, %v9059
          %v9062 = vunpack.c.l.s4 1983009808
          %v9063 = vunpack.c.0.s8 %v9062
          %v9064 = vlaneseq
          %v9065 = vshrl.u32 %v9064, 7
          %v9066 = vsub.s32 %v9063, %v9065
          %v9067 = vrot.slane %v9045, %v9066
          %v9069 = vunpack.c.l.s4 1983009808
          %v9070 = vunpack.c.0.s8 %v9069
          %v9071 = vlaneseq
          %v9072 = vshrl.u32 %v9071, 7
          %v9073 = vsub.s32 %v9070, %v9072
          %v9074 = vrot.slane %v9046, %v9073
          %v9075 = vcombine.low %v9053, %v9067
          %v9076 = vcombine.high %v9053, %v9067
          %v9077 = vcombine.low %v9060, %v9074
          %v9078 = vcombine.high %v9060, %v9074
          %v9143 = vrot.slane %v8535, 7
          %v9144 = vrot.slane %v9143, 2
          %v9145 = vrot.slane %v8536, 7
          %v9146 = vrot.slane %v9145, 2
          %v9147 = vrot.slane %v8537, 7
          %v9148 = vrot.slane %v9147, 2
          %v9149 = vrot.slane %v8538, 7
          %v9150 = vrot.slane %v9149, 2
          %v9151 = vrot.slane %v8571, 7
          %v9152 = vrot.slane %v9151, 2
          %v9153 = vrot.slane %v8572, 7
          %v9154 = vrot.slane %v9153, 2
          %v9155 = vrot.slane %v8573, 7
          %v9156 = vrot.slane %v9155, 2
          %v9157 = vrot.slane %v8574, 7
          %v9158 = vrot.slane %v9157, 2
          %v9159 = vrot.slane %v8607, 7
          %v9160 = vrot.slane %v9159, 2
          %v9161 = vrot.slane %v8608, 7
          %v9162 = vrot.slane %v9161, 2
          %v9163 = vrot.slane %v8609, 7
          %v9164 = vrot.slane %v9163, 2
          %v9165 = vrot.slane %v8610, 7
          %v9166 = vrot.slane %v9165, 2
          %v9167 = vrot.slane %v8643, 7
          %v9168 = vrot.slane %v9167, 2
          %v9169 = vrot.slane %v8644, 7
          %v9170 = vrot.slane %v9169, 2
          %v9171 = vrot.slane %v8645, 7
          %v9172 = vrot.slane %v9171, 2
          %v9173 = vrot.slane %v8646, 7
          %v9174 = vrot.slane %v9173, 2
          %v9175 = vrot.slane %v8679, 7
          %v9176 = vrot.slane %v9175, 2
          %v9177 = vrot.slane %v8680, 7
          %v9178 = vrot.slane %v9177, 2
          %v9179 = vrot.slane %v8681, 7
          %v9180 = vrot.slane %v9179, 2
          %v9181 = vrot.slane %v8682, 7
          %v9182 = vrot.slane %v9181, 2
          %v9183 = vrot.slane %v8715, 7
          %v9184 = vrot.slane %v9183, 2
          %v9185 = vrot.slane %v8716, 7
          %v9186 = vrot.slane %v9185, 2
          %v9187 = vrot.slane %v8717, 7
          %v9188 = vrot.slane %v9187, 2
          %v9189 = vrot.slane %v8718, 7
          %v9190 = vrot.slane %v9189, 2
          %v9191 = vrot.slane %v8751, 7
          %v9192 = vrot.slane %v9191, 2
          %v9193 = vrot.slane %v8752, 7
          %v9194 = vrot.slane %v9193, 2
          %v9195 = vrot.slane %v8753, 7
          %v9196 = vrot.slane %v9195, 2
          %v9197 = vrot.slane %v8754, 7
          %v9198 = vrot.slane %v9197, 2
          %v9199 = vrot.slane %v8787, 7
          %v9200 = vrot.slane %v9199, 2
          %v9201 = vrot.slane %v8788, 7
          %v9202 = vrot.slane %v9201, 2
          %v9203 = vrot.slane %v8789, 7
          %v9204 = vrot.slane %v9203, 2
          %v9205 = vrot.slane %v8790, 7
          %v9206 = vrot.slane %v9205, 2
          %v9207 = vrot.slane %v8823, 7
          %v9208 = vrot.slane %v9207, 2
          %v9209 = vrot.slane %v8824, 7
          %v9210 = vrot.slane %v9209, 2
          %v9211 = vrot.slane %v8825, 7
          %v9212 = vrot.slane %v9211, 2
          %v9213 = vrot.slane %v8826, 7
          %v9214 = vrot.slane %v9213, 2
          %v9215 = vrot.slane %v8859, 7
          %v9216 = vrot.slane %v9215, 2
          %v9217 = vrot.slane %v8860, 7
          %v9218 = vrot.slane %v9217, 2
          %v9219 = vrot.slane %v8861, 7
          %v9220 = vrot.slane %v9219, 2
          %v9221 = vrot.slane %v8862, 7
          %v9222 = vrot.slane %v9221, 2
          %v9223 = vrot.slane %v8895, 7
          %v9224 = vrot.slane %v9223, 2
          %v9225 = vrot.slane %v8896, 7
          %v9226 = vrot.slane %v9225, 2
          %v9227 = vrot.slane %v8897, 7
          %v9228 = vrot.slane %v9227, 2
          %v9229 = vrot.slane %v8898, 7
          %v9230 = vrot.slane %v9229, 2
          %v9231 = vrot.slane %v8931, 7
          %v9232 = vrot.slane %v9231, 2
          %v9233 = vrot.slane %v8932, 7
          %v9234 = vrot.slane %v9233, 2
          %v9235 = vrot.slane %v8933, 7
          %v9236 = vrot.slane %v9235, 2
          %v9237 = vrot.slane %v8934, 7
          %v9238 = vrot.slane %v9237, 2
          %v9239 = vrot.slane %v8967, 7
          %v9240 = vrot.slane %v9239, 2
          %v9241 = vrot.slane %v8968, 7
          %v9242 = vrot.slane %v9241, 2
          %v9243 = vrot.slane %v8969, 7
          %v9244 = vrot.slane %v9243, 2
          %v9245 = vrot.slane %v8970, 7
          %v9246 = vrot.slane %v9245, 2
          %v9247 = vrot.slane %v9003, 7
          %v9248 = vrot.slane %v9247, 2
          %v9249 = vrot.slane %v9004, 7
          %v9250 = vrot.slane %v9249, 2
          %v9251 = vrot.slane %v9005, 7
          %v9252 = vrot.slane %v9251, 2
          %v9253 = vrot.slane %v9006, 7
          %v9254 = vrot.slane %v9253, 2
          %v9255 = vrot.slane %v9039, 7
          %v9256 = vrot.slane %v9255, 2
          %v9257 = vrot.slane %v9040, 7
          %v9258 = vrot.slane %v9257, 2
          %v9259 = vrot.slane %v9041, 7
          %v9260 = vrot.slane %v9259, 2
          %v9261 = vrot.slane %v9042, 7
          %v9262 = vrot.slane %v9261, 2
          %v9263 = vrot.slane %v9075, 7
          %v9264 = vrot.slane %v9263, 2
          %v9265 = vrot.slane %v9076, 7
          %v9266 = vrot.slane %v9265, 2
          %v9267 = vrot.slane %v9077, 7
          %v9268 = vrot.slane %v9267, 2
          %v9269 = vrot.slane %v9078, 7
          %v9270 = vrot.slane %v9269, 2
          %v9335 = vmax.f32 %v8535, %v9144
          %v9336 = vmax.f32 %v8536, %v9146
          %v9337 = vmax.f32 %v8537, %v9148
          %v9338 = vmax.f32 %v8538, %v9150
          %v9339 = vmax.f32 %v8571, %v9152
          %v9340 = vmax.f32 %v8572, %v9154
          %v9341 = vmax.f32 %v8573, %v9156
          %v9342 = vmax.f32 %v8574, %v9158
          %v9343 = vmax.f32 %v8607, %v9160
          %v9344 = vmax.f32 %v8608, %v9162
          %v9345 = vmax.f32 %v8609, %v9164
          %v9346 = vmax.f32 %v8610, %v9166
          %v9347 = vmax.f32 %v8643, %v9168
          %v9348 = vmax.f32 %v8644, %v9170
          %v9349 = vmax.f32 %v8645, %v9172
          %v9350 = vmax.f32 %v8646, %v9174
          %v9351 = vmax.f32 %v8679, %v9176
          %v9352 = vmax.f32 %v8680, %v9178
          %v9353 = vmax.f32 %v8681, %v9180
          %v9354 = vmax.f32 %v8682, %v9182
          %v9355 = vmax.f32 %v8715, %v9184
          %v9356 = vmax.f32 %v8716, %v9186
          %v9357 = vmax.f32 %v8717, %v9188
          %v9358 = vmax.f32 %v8718, %v9190
          %v9359 = vmax.f32 %v8751, %v9192
          %v9360 = vmax.f32 %v8752, %v9194
          %v9361 = vmax.f32 %v8753, %v9196
          %v9362 = vmax.f32 %v8754, %v9198
          %v9363 = vmax.f32 %v8787, %v9200
          %v9364 = vmax.f32 %v8788, %v9202
          %v9365 = vmax.f32 %v8789, %v9204
          %v9366 = vmax.f32 %v8790, %v9206
          %v9367 = vmax.f32 %v8823, %v9208
          %v9368 = vmax.f32 %v8824, %v9210
          %v9369 = vmax.f32 %v8825, %v9212
          %v9370 = vmax.f32 %v8826, %v9214
          %v9371 = vmax.f32 %v8859, %v9216
          %v9372 = vmax.f32 %v8860, %v9218
          %v9373 = vmax.f32 %v8861, %v9220
          %v9374 = vmax.f32 %v8862, %v9222
          %v9375 = vmax.f32 %v8895, %v9224
          %v9376 = vmax.f32 %v8896, %v9226
          %v9377 = vmax.f32 %v8897, %v9228
          %v9378 = vmax.f32 %v8898, %v9230
          %v9379 = vmax.f32 %v8931, %v9232
          %v9380 = vmax.f32 %v8932, %v9234
          %v9381 = vmax.f32 %v8933, %v9236
          %v9382 = vmax.f32 %v8934, %v9238
          %v9383 = vmax.f32 %v8967, %v9240
          %v9384 = vmax.f32 %v8968, %v9242
          %v9385 = vmax.f32 %v8969, %v9244
          %v9386 = vmax.f32 %v8970, %v9246
          %v9387 = vmax.f32 %v9003, %v9248
          %v9388 = vmax.f32 %v9004, %v9250
          %v9389 = vmax.f32 %v9005, %v9252
          %v9390 = vmax.f32 %v9006, %v9254
          %v9391 = vmax.f32 %v9039, %v9256
          %v9392 = vmax.f32 %v9040, %v9258
          %v9393 = vmax.f32 %v9041, %v9260
          %v9394 = vmax.f32 %v9042, %v9262
          %v9395 = vmax.f32 %v9075, %v9264
          %v9396 = vmax.f32 %v9076, %v9266
          %v9397 = vmax.f32 %v9077, %v9268
          %v9398 = vmax.f32 %v9078, %v9270
          %v9463 = vlaneseq
          %v9464 = vshrl.u32 %v9463, 7
          %v9465 = vsub.s32 0, %v9464
          %v9466 = vrot.slane %v9335, %v9465
          %v9467 = vlaneseq
          %v9468 = vshrl.u32 %v9467, 7
          %v9469 = vsub.s32 2, %v9468
          %v9470 = vrot.slane %v9335, %v9469
          %v9471 = vlaneseq
          %v9472 = vshrl.u32 %v9471, 7
          %v9473 = vsub.s32 4, %v9472
          %v9474 = vrot.slane %v9335, %v9473
          %v9475 = vlaneseq
          %v9476 = vshrl.u32 %v9475, 7
          %v9477 = vsub.s32 6, %v9476
          %v9478 = vrot.slane %v9335, %v9477
          %v9479 = vlaneseq
          %v9480 = vshrl.u32 %v9479, 7
          %v9481 = vsub.s32 0, %v9480
          %v9482 = vrot.slane %v9336, %v9481
          %v9483 = vlaneseq
          %v9484 = vshrl.u32 %v9483, 7
          %v9485 = vsub.s32 2, %v9484
          %v9486 = vrot.slane %v9336, %v9485
          %v9487 = vlaneseq
          %v9488 = vshrl.u32 %v9487, 7
          %v9489 = vsub.s32 4, %v9488
          %v9490 = vrot.slane %v9336, %v9489
          %v9491 = vlaneseq
          %v9492 = vshrl.u32 %v9491, 7
          %v9493 = vsub.s32 6, %v9492
          %v9494 = vrot.slane %v9336, %v9493
          %v9495 = vlaneseq
          %v9496 = vshrl.u32 %v9495, 7
          %v9497 = vsub.s32 0, %v9496
          %v9498 = vrot.slane %v9337, %v9497
          %v9499 = vlaneseq
          %v9500 = vshrl.u32 %v9499, 7
          %v9501 = vsub.s32 2, %v9500
          %v9502 = vrot.slane %v9337, %v9501
          %v9503 = vlaneseq
          %v9504 = vshrl.u32 %v9503, 7
          %v9505 = vsub.s32 4, %v9504
          %v9506 = vrot.slane %v9337, %v9505
          %v9507 = vlaneseq
          %v9508 = vshrl.u32 %v9507, 7
          %v9509 = vsub.s32 6, %v9508
          %v9510 = vrot.slane %v9337, %v9509
          %v9511 = vlaneseq
          %v9512 = vshrl.u32 %v9511, 7
          %v9513 = vsub.s32 0, %v9512
          %v9514 = vrot.slane %v9338, %v9513
          %v9515 = vlaneseq
          %v9516 = vshrl.u32 %v9515, 7
          %v9517 = vsub.s32 2, %v9516
          %v9518 = vrot.slane %v9338, %v9517
          %v9519 = vlaneseq
          %v9520 = vshrl.u32 %v9519, 7
          %v9521 = vsub.s32 4, %v9520
          %v9522 = vrot.slane %v9338, %v9521
          %v9523 = vlaneseq
          %v9524 = vshrl.u32 %v9523, 7
          %v9525 = vsub.s32 6, %v9524
          %v9526 = vrot.slane %v9338, %v9525
          %v9527 = vlaneseq
          %v9528 = vshrl.u32 %v9527, 7
          %v9529 = vsub.s32 0, %v9528
          %v9530 = vrot.slane %v9339, %v9529
          %v9531 = vlaneseq
          %v9532 = vshrl.u32 %v9531, 7
          %v9533 = vsub.s32 2, %v9532
          %v9534 = vrot.slane %v9339, %v9533
          %v9535 = vlaneseq
          %v9536 = vshrl.u32 %v9535, 7
          %v9537 = vsub.s32 4, %v9536
          %v9538 = vrot.slane %v9339, %v9537
          %v9539 = vlaneseq
          %v9540 = vshrl.u32 %v9539, 7
          %v9541 = vsub.s32 6, %v9540
          %v9542 = vrot.slane %v9339, %v9541
          %v9543 = vlaneseq
          %v9544 = vshrl.u32 %v9543, 7
          %v9545 = vsub.s32 0, %v9544
          %v9546 = vrot.slane %v9340, %v9545
          %v9547 = vlaneseq
          %v9548 = vshrl.u32 %v9547, 7
          %v9549 = vsub.s32 2, %v9548
          %v9550 = vrot.slane %v9340, %v9549
          %v9551 = vlaneseq
          %v9552 = vshrl.u32 %v9551, 7
          %v9553 = vsub.s32 4, %v9552
          %v9554 = vrot.slane %v9340, %v9553
          %v9555 = vlaneseq
          %v9556 = vshrl.u32 %v9555, 7
          %v9557 = vsub.s32 6, %v9556
          %v9558 = vrot.slane %v9340, %v9557
          %v9559 = vlaneseq
          %v9560 = vshrl.u32 %v9559, 7
          %v9561 = vsub.s32 0, %v9560
          %v9562 = vrot.slane %v9341, %v9561
          %v9563 = vlaneseq
          %v9564 = vshrl.u32 %v9563, 7
          %v9565 = vsub.s32 2, %v9564
          %v9566 = vrot.slane %v9341, %v9565
          %v9567 = vlaneseq
          %v9568 = vshrl.u32 %v9567, 7
          %v9569 = vsub.s32 4, %v9568
          %v9570 = vrot.slane %v9341, %v9569
          %v9571 = vlaneseq
          %v9572 = vshrl.u32 %v9571, 7
          %v9573 = vsub.s32 6, %v9572
          %v9574 = vrot.slane %v9341, %v9573
          %v9575 = vlaneseq
          %v9576 = vshrl.u32 %v9575, 7
          %v9577 = vsub.s32 0, %v9576
          %v9578 = vrot.slane %v9342, %v9577
          %v9579 = vlaneseq
          %v9580 = vshrl.u32 %v9579, 7
          %v9581 = vsub.s32 2, %v9580
          %v9582 = vrot.slane %v9342, %v9581
          %v9583 = vlaneseq
          %v9584 = vshrl.u32 %v9583, 7
          %v9585 = vsub.s32 4, %v9584
          %v9586 = vrot.slane %v9342, %v9585
          %v9587 = vlaneseq
          %v9588 = vshrl.u32 %v9587, 7
          %v9589 = vsub.s32 6, %v9588
          %v9590 = vrot.slane %v9342, %v9589
          %v9591 = vlaneseq
          %v9592 = vshrl.u32 %v9591, 7
          %v9593 = vsub.s32 0, %v9592
          %v9594 = vrot.slane %v9343, %v9593
          %v9595 = vlaneseq
          %v9596 = vshrl.u32 %v9595, 7
          %v9597 = vsub.s32 2, %v9596
          %v9598 = vrot.slane %v9343, %v9597
          %v9599 = vlaneseq
          %v9600 = vshrl.u32 %v9599, 7
          %v9601 = vsub.s32 4, %v9600
          %v9602 = vrot.slane %v9343, %v9601
          %v9603 = vlaneseq
          %v9604 = vshrl.u32 %v9603, 7
          %v9605 = vsub.s32 6, %v9604
          %v9606 = vrot.slane %v9343, %v9605
          %v9607 = vlaneseq
          %v9608 = vshrl.u32 %v9607, 7
          %v9609 = vsub.s32 0, %v9608
          %v9610 = vrot.slane %v9344, %v9609
          %v9611 = vlaneseq
          %v9612 = vshrl.u32 %v9611, 7
          %v9613 = vsub.s32 2, %v9612
          %v9614 = vrot.slane %v9344, %v9613
          %v9615 = vlaneseq
          %v9616 = vshrl.u32 %v9615, 7
          %v9617 = vsub.s32 4, %v9616
          %v9618 = vrot.slane %v9344, %v9617
          %v9619 = vlaneseq
          %v9620 = vshrl.u32 %v9619, 7
          %v9621 = vsub.s32 6, %v9620
          %v9622 = vrot.slane %v9344, %v9621
          %v9623 = vlaneseq
          %v9624 = vshrl.u32 %v9623, 7
          %v9625 = vsub.s32 0, %v9624
          %v9626 = vrot.slane %v9345, %v9625
          %v9627 = vlaneseq
          %v9628 = vshrl.u32 %v9627, 7
          %v9629 = vsub.s32 2, %v9628
          %v9630 = vrot.slane %v9345, %v9629
          %v9631 = vlaneseq
          %v9632 = vshrl.u32 %v9631, 7
          %v9633 = vsub.s32 4, %v9632
          %v9634 = vrot.slane %v9345, %v9633
          %v9635 = vlaneseq
          %v9636 = vshrl.u32 %v9635, 7
          %v9637 = vsub.s32 6, %v9636
          %v9638 = vrot.slane %v9345, %v9637
          %v9639 = vlaneseq
          %v9640 = vshrl.u32 %v9639, 7
          %v9641 = vsub.s32 0, %v9640
          %v9642 = vrot.slane %v9346, %v9641
          %v9643 = vlaneseq
          %v9644 = vshrl.u32 %v9643, 7
          %v9645 = vsub.s32 2, %v9644
          %v9646 = vrot.slane %v9346, %v9645
          %v9647 = vlaneseq
          %v9648 = vshrl.u32 %v9647, 7
          %v9649 = vsub.s32 4, %v9648
          %v9650 = vrot.slane %v9346, %v9649
          %v9651 = vlaneseq
          %v9652 = vshrl.u32 %v9651, 7
          %v9653 = vsub.s32 6, %v9652
          %v9654 = vrot.slane %v9346, %v9653
          %v9655 = vlaneseq
          %v9656 = vshrl.u32 %v9655, 7
          %v9657 = vsub.s32 0, %v9656
          %v9658 = vrot.slane %v9347, %v9657
          %v9659 = vlaneseq
          %v9660 = vshrl.u32 %v9659, 7
          %v9661 = vsub.s32 2, %v9660
          %v9662 = vrot.slane %v9347, %v9661
          %v9663 = vlaneseq
          %v9664 = vshrl.u32 %v9663, 7
          %v9665 = vsub.s32 4, %v9664
          %v9666 = vrot.slane %v9347, %v9665
          %v9667 = vlaneseq
          %v9668 = vshrl.u32 %v9667, 7
          %v9669 = vsub.s32 6, %v9668
          %v9670 = vrot.slane %v9347, %v9669
          %v9671 = vlaneseq
          %v9672 = vshrl.u32 %v9671, 7
          %v9673 = vsub.s32 0, %v9672
          %v9674 = vrot.slane %v9348, %v9673
          %v9675 = vlaneseq
          %v9676 = vshrl.u32 %v9675, 7
          %v9677 = vsub.s32 2, %v9676
          %v9678 = vrot.slane %v9348, %v9677
          %v9679 = vlaneseq
          %v9680 = vshrl.u32 %v9679, 7
          %v9681 = vsub.s32 4, %v9680
          %v9682 = vrot.slane %v9348, %v9681
          %v9683 = vlaneseq
          %v9684 = vshrl.u32 %v9683, 7
          %v9685 = vsub.s32 6, %v9684
          %v9686 = vrot.slane %v9348, %v9685
          %v9687 = vlaneseq
          %v9688 = vshrl.u32 %v9687, 7
          %v9689 = vsub.s32 0, %v9688
          %v9690 = vrot.slane %v9349, %v9689
          %v9691 = vlaneseq
          %v9692 = vshrl.u32 %v9691, 7
          %v9693 = vsub.s32 2, %v9692
          %v9694 = vrot.slane %v9349, %v9693
          %v9695 = vlaneseq
          %v9696 = vshrl.u32 %v9695, 7
          %v9697 = vsub.s32 4, %v9696
          %v9698 = vrot.slane %v9349, %v9697
          %v9699 = vlaneseq
          %v9700 = vshrl.u32 %v9699, 7
          %v9701 = vsub.s32 6, %v9700
          %v9702 = vrot.slane %v9349, %v9701
          %v9703 = vlaneseq
          %v9704 = vshrl.u32 %v9703, 7
          %v9705 = vsub.s32 0, %v9704
          %v9706 = vrot.slane %v9350, %v9705
          %v9707 = vlaneseq
          %v9708 = vshrl.u32 %v9707, 7
          %v9709 = vsub.s32 2, %v9708
          %v9710 = vrot.slane %v9350, %v9709
          %v9711 = vlaneseq
          %v9712 = vshrl.u32 %v9711, 7
          %v9713 = vsub.s32 4, %v9712
          %v9714 = vrot.slane %v9350, %v9713
          %v9715 = vlaneseq
          %v9716 = vshrl.u32 %v9715, 7
          %v9717 = vsub.s32 6, %v9716
          %v9718 = vrot.slane %v9350, %v9717
          %v9719 = vlaneseq
          %v9720 = vshrl.u32 %v9719, 7
          %v9721 = vsub.s32 0, %v9720
          %v9722 = vrot.slane %v9351, %v9721
          %v9723 = vlaneseq
          %v9724 = vshrl.u32 %v9723, 7
          %v9725 = vsub.s32 2, %v9724
          %v9726 = vrot.slane %v9351, %v9725
          %v9727 = vlaneseq
          %v9728 = vshrl.u32 %v9727, 7
          %v9729 = vsub.s32 4, %v9728
          %v9730 = vrot.slane %v9351, %v9729
          %v9731 = vlaneseq
          %v9732 = vshrl.u32 %v9731, 7
          %v9733 = vsub.s32 6, %v9732
          %v9734 = vrot.slane %v9351, %v9733
          %v9735 = vlaneseq
          %v9736 = vshrl.u32 %v9735, 7
          %v9737 = vsub.s32 0, %v9736
          %v9738 = vrot.slane %v9352, %v9737
          %v9739 = vlaneseq
          %v9740 = vshrl.u32 %v9739, 7
          %v9741 = vsub.s32 2, %v9740
          %v9742 = vrot.slane %v9352, %v9741
          %v9743 = vlaneseq
          %v9744 = vshrl.u32 %v9743, 7
          %v9745 = vsub.s32 4, %v9744
          %v9746 = vrot.slane %v9352, %v9745
          %v9747 = vlaneseq
          %v9748 = vshrl.u32 %v9747, 7
          %v9749 = vsub.s32 6, %v9748
          %v9750 = vrot.slane %v9352, %v9749
          %v9751 = vlaneseq
          %v9752 = vshrl.u32 %v9751, 7
          %v9753 = vsub.s32 0, %v9752
          %v9754 = vrot.slane %v9353, %v9753
          %v9755 = vlaneseq
          %v9756 = vshrl.u32 %v9755, 7
          %v9757 = vsub.s32 2, %v9756
          %v9758 = vrot.slane %v9353, %v9757
          %v9759 = vlaneseq
          %v9760 = vshrl.u32 %v9759, 7
          %v9761 = vsub.s32 4, %v9760
          %v9762 = vrot.slane %v9353, %v9761
          %v9763 = vlaneseq
          %v9764 = vshrl.u32 %v9763, 7
          %v9765 = vsub.s32 6, %v9764
          %v9766 = vrot.slane %v9353, %v9765
          %v9767 = vlaneseq
          %v9768 = vshrl.u32 %v9767, 7
          %v9769 = vsub.s32 0, %v9768
          %v9770 = vrot.slane %v9354, %v9769
          %v9771 = vlaneseq
          %v9772 = vshrl.u32 %v9771, 7
          %v9773 = vsub.s32 2, %v9772
          %v9774 = vrot.slane %v9354, %v9773
          %v9775 = vlaneseq
          %v9776 = vshrl.u32 %v9775, 7
          %v9777 = vsub.s32 4, %v9776
          %v9778 = vrot.slane %v9354, %v9777
          %v9779 = vlaneseq
          %v9780 = vshrl.u32 %v9779, 7
          %v9781 = vsub.s32 6, %v9780
          %v9782 = vrot.slane %v9354, %v9781
          %v9783 = vlaneseq
          %v9784 = vshrl.u32 %v9783, 7
          %v9785 = vsub.s32 0, %v9784
          %v9786 = vrot.slane %v9355, %v9785
          %v9787 = vlaneseq
          %v9788 = vshrl.u32 %v9787, 7
          %v9789 = vsub.s32 2, %v9788
          %v9790 = vrot.slane %v9355, %v9789
          %v9791 = vlaneseq
          %v9792 = vshrl.u32 %v9791, 7
          %v9793 = vsub.s32 4, %v9792
          %v9794 = vrot.slane %v9355, %v9793
          %v9795 = vlaneseq
          %v9796 = vshrl.u32 %v9795, 7
          %v9797 = vsub.s32 6, %v9796
          %v9798 = vrot.slane %v9355, %v9797
          %v9799 = vlaneseq
          %v9800 = vshrl.u32 %v9799, 7
          %v9801 = vsub.s32 0, %v9800
          %v9802 = vrot.slane %v9356, %v9801
          %v9803 = vlaneseq
          %v9804 = vshrl.u32 %v9803, 7
          %v9805 = vsub.s32 2, %v9804
          %v9806 = vrot.slane %v9356, %v9805
          %v9807 = vlaneseq
          %v9808 = vshrl.u32 %v9807, 7
          %v9809 = vsub.s32 4, %v9808
          %v9810 = vrot.slane %v9356, %v9809
          %v9811 = vlaneseq
          %v9812 = vshrl.u32 %v9811, 7
          %v9813 = vsub.s32 6, %v9812
          %v9814 = vrot.slane %v9356, %v9813
          %v9815 = vlaneseq
          %v9816 = vshrl.u32 %v9815, 7
          %v9817 = vsub.s32 0, %v9816
          %v9818 = vrot.slane %v9357, %v9817
          %v9819 = vlaneseq
          %v9820 = vshrl.u32 %v9819, 7
          %v9821 = vsub.s32 2, %v9820
          %v9822 = vrot.slane %v9357, %v9821
          %v9823 = vlaneseq
          %v9824 = vshrl.u32 %v9823, 7
          %v9825 = vsub.s32 4, %v9824
          %v9826 = vrot.slane %v9357, %v9825
          %v9827 = vlaneseq
          %v9828 = vshrl.u32 %v9827, 7
          %v9829 = vsub.s32 6, %v9828
          %v9830 = vrot.slane %v9357, %v9829
          %v9831 = vlaneseq
          %v9832 = vshrl.u32 %v9831, 7
          %v9833 = vsub.s32 0, %v9832
          %v9834 = vrot.slane %v9358, %v9833
          %v9835 = vlaneseq
          %v9836 = vshrl.u32 %v9835, 7
          %v9837 = vsub.s32 2, %v9836
          %v9838 = vrot.slane %v9358, %v9837
          %v9839 = vlaneseq
          %v9840 = vshrl.u32 %v9839, 7
          %v9841 = vsub.s32 4, %v9840
          %v9842 = vrot.slane %v9358, %v9841
          %v9843 = vlaneseq
          %v9844 = vshrl.u32 %v9843, 7
          %v9845 = vsub.s32 6, %v9844
          %v9846 = vrot.slane %v9358, %v9845
          %v9847 = vlaneseq
          %v9848 = vshrl.u32 %v9847, 7
          %v9849 = vsub.s32 0, %v9848
          %v9850 = vrot.slane %v9359, %v9849
          %v9851 = vlaneseq
          %v9852 = vshrl.u32 %v9851, 7
          %v9853 = vsub.s32 2, %v9852
          %v9854 = vrot.slane %v9359, %v9853
          %v9855 = vlaneseq
          %v9856 = vshrl.u32 %v9855, 7
          %v9857 = vsub.s32 4, %v9856
          %v9858 = vrot.slane %v9359, %v9857
          %v9859 = vlaneseq
          %v9860 = vshrl.u32 %v9859, 7
          %v9861 = vsub.s32 6, %v9860
          %v9862 = vrot.slane %v9359, %v9861
          %v9863 = vlaneseq
          %v9864 = vshrl.u32 %v9863, 7
          %v9865 = vsub.s32 0, %v9864
          %v9866 = vrot.slane %v9360, %v9865
          %v9867 = vlaneseq
          %v9868 = vshrl.u32 %v9867, 7
          %v9869 = vsub.s32 2, %v9868
          %v9870 = vrot.slane %v9360, %v9869
          %v9871 = vlaneseq
          %v9872 = vshrl.u32 %v9871, 7
          %v9873 = vsub.s32 4, %v9872
          %v9874 = vrot.slane %v9360, %v9873
          %v9875 = vlaneseq
          %v9876 = vshrl.u32 %v9875, 7
          %v9877 = vsub.s32 6, %v9876
          %v9878 = vrot.slane %v9360, %v9877
          %v9879 = vlaneseq
          %v9880 = vshrl.u32 %v9879, 7
          %v9881 = vsub.s32 0, %v9880
          %v9882 = vrot.slane %v9361, %v9881
          %v9883 = vlaneseq
          %v9884 = vshrl.u32 %v9883, 7
          %v9885 = vsub.s32 2, %v9884
          %v9886 = vrot.slane %v9361, %v9885
          %v9887 = vlaneseq
          %v9888 = vshrl.u32 %v9887, 7
          %v9889 = vsub.s32 4, %v9888
          %v9890 = vrot.slane %v9361, %v9889
          %v9891 = vlaneseq
          %v9892 = vshrl.u32 %v9891, 7
          %v9893 = vsub.s32 6, %v9892
          %v9894 = vrot.slane %v9361, %v9893
          %v9895 = vlaneseq
          %v9896 = vshrl.u32 %v9895, 7
          %v9897 = vsub.s32 0, %v9896
          %v9898 = vrot.slane %v9362, %v9897
          %v9899 = vlaneseq
          %v9900 = vshrl.u32 %v9899, 7
          %v9901 = vsub.s32 2, %v9900
          %v9902 = vrot.slane %v9362, %v9901
          %v9903 = vlaneseq
          %v9904 = vshrl.u32 %v9903, 7
          %v9905 = vsub.s32 4, %v9904
          %v9906 = vrot.slane %v9362, %v9905
          %v9907 = vlaneseq
          %v9908 = vshrl.u32 %v9907, 7
          %v9909 = vsub.s32 6, %v9908
          %v9910 = vrot.slane %v9362, %v9909
          %v9911 = vlaneseq
          %v9912 = vshrl.u32 %v9911, 7
          %v9913 = vsub.s32 0, %v9912
          %v9914 = vrot.slane %v9363, %v9913
          %v9915 = vlaneseq
          %v9916 = vshrl.u32 %v9915, 7
          %v9917 = vsub.s32 2, %v9916
          %v9918 = vrot.slane %v9363, %v9917
          %v9919 = vlaneseq
          %v9920 = vshrl.u32 %v9919, 7
          %v9921 = vsub.s32 4, %v9920
          %v9922 = vrot.slane %v9363, %v9921
          %v9923 = vlaneseq
          %v9924 = vshrl.u32 %v9923, 7
          %v9925 = vsub.s32 6, %v9924
          %v9926 = vrot.slane %v9363, %v9925
          %v9927 = vlaneseq
          %v9928 = vshrl.u32 %v9927, 7
          %v9929 = vsub.s32 0, %v9928
          %v9930 = vrot.slane %v9364, %v9929
          %v9931 = vlaneseq
          %v9932 = vshrl.u32 %v9931, 7
          %v9933 = vsub.s32 2, %v9932
          %v9934 = vrot.slane %v9364, %v9933
          %v9935 = vlaneseq
          %v9936 = vshrl.u32 %v9935, 7
          %v9937 = vsub.s32 4, %v9936
          %v9938 = vrot.slane %v9364, %v9937
          %v9939 = vlaneseq
          %v9940 = vshrl.u32 %v9939, 7
          %v9941 = vsub.s32 6, %v9940
          %v9942 = vrot.slane %v9364, %v9941
          %v9943 = vlaneseq
          %v9944 = vshrl.u32 %v9943, 7
          %v9945 = vsub.s32 0, %v9944
          %v9946 = vrot.slane %v9365, %v9945
          %v9947 = vlaneseq
          %v9948 = vshrl.u32 %v9947, 7
          %v9949 = vsub.s32 2, %v9948
          %v9950 = vrot.slane %v9365, %v9949
          %v9951 = vlaneseq
          %v9952 = vshrl.u32 %v9951, 7
          %v9953 = vsub.s32 4, %v9952
          %v9954 = vrot.slane %v9365, %v9953
          %v9955 = vlaneseq
          %v9956 = vshrl.u32 %v9955, 7
          %v9957 = vsub.s32 6, %v9956
          %v9958 = vrot.slane %v9365, %v9957
          %v9959 = vlaneseq
          %v9960 = vshrl.u32 %v9959, 7
          %v9961 = vsub.s32 0, %v9960
          %v9962 = vrot.slane %v9366, %v9961
          %v9963 = vlaneseq
          %v9964 = vshrl.u32 %v9963, 7
          %v9965 = vsub.s32 2, %v9964
          %v9966 = vrot.slane %v9366, %v9965
          %v9967 = vlaneseq
          %v9968 = vshrl.u32 %v9967, 7
          %v9969 = vsub.s32 4, %v9968
          %v9970 = vrot.slane %v9366, %v9969
          %v9971 = vlaneseq
          %v9972 = vshrl.u32 %v9971, 7
          %v9973 = vsub.s32 6, %v9972
          %v9974 = vrot.slane %v9366, %v9973
          %v9975 = vlaneseq
          %v9976 = vshrl.u32 %v9975, 7
          %v9977 = vsub.s32 0, %v9976
          %v9978 = vrot.slane %v9367, %v9977
          %v9979 = vlaneseq
          %v9980 = vshrl.u32 %v9979, 7
          %v9981 = vsub.s32 2, %v9980
          %v9982 = vrot.slane %v9367, %v9981
          %v9983 = vlaneseq
          %v9984 = vshrl.u32 %v9983, 7
          %v9985 = vsub.s32 4, %v9984
          %v9986 = vrot.slane %v9367, %v9985
          %v9987 = vlaneseq
          %v9988 = vshrl.u32 %v9987, 7
          %v9989 = vsub.s32 6, %v9988
          %v9990 = vrot.slane %v9367, %v9989
          %v9991 = vlaneseq
          %v9992 = vshrl.u32 %v9991, 7
          %v9993 = vsub.s32 0, %v9992
          %v9994 = vrot.slane %v9368, %v9993
          %v9995 = vlaneseq
          %v9996 = vshrl.u32 %v9995, 7
          %v9997 = vsub.s32 2, %v9996
          %v9998 = vrot.slane %v9368, %v9997
          %v9999 = vlaneseq
          %v10000 = vshrl.u32 %v9999, 7
          %v10001 = vsub.s32 4, %v10000
          %v10002 = vrot.slane %v9368, %v10001
          %v10003 = vlaneseq
          %v10004 = vshrl.u32 %v10003, 7
          %v10005 = vsub.s32 6, %v10004
          %v10006 = vrot.slane %v9368, %v10005
          %v10007 = vlaneseq
          %v10008 = vshrl.u32 %v10007, 7
          %v10009 = vsub.s32 0, %v10008
          %v10010 = vrot.slane %v9369, %v10009
          %v10011 = vlaneseq
          %v10012 = vshrl.u32 %v10011, 7
          %v10013 = vsub.s32 2, %v10012
          %v10014 = vrot.slane %v9369, %v10013
          %v10015 = vlaneseq
          %v10016 = vshrl.u32 %v10015, 7
          %v10017 = vsub.s32 4, %v10016
          %v10018 = vrot.slane %v9369, %v10017
          %v10019 = vlaneseq
          %v10020 = vshrl.u32 %v10019, 7
          %v10021 = vsub.s32 6, %v10020
          %v10022 = vrot.slane %v9369, %v10021
          %v10023 = vlaneseq
          %v10024 = vshrl.u32 %v10023, 7
          %v10025 = vsub.s32 0, %v10024
          %v10026 = vrot.slane %v9370, %v10025
          %v10027 = vlaneseq
          %v10028 = vshrl.u32 %v10027, 7
          %v10029 = vsub.s32 2, %v10028
          %v10030 = vrot.slane %v9370, %v10029
          %v10031 = vlaneseq
          %v10032 = vshrl.u32 %v10031, 7
          %v10033 = vsub.s32 4, %v10032
          %v10034 = vrot.slane %v9370, %v10033
          %v10035 = vlaneseq
          %v10036 = vshrl.u32 %v10035, 7
          %v10037 = vsub.s32 6, %v10036
          %v10038 = vrot.slane %v9370, %v10037
          %v10039 = vlaneseq
          %v10040 = vshrl.u32 %v10039, 7
          %v10041 = vsub.s32 0, %v10040
          %v10042 = vrot.slane %v9371, %v10041
          %v10043 = vlaneseq
          %v10044 = vshrl.u32 %v10043, 7
          %v10045 = vsub.s32 2, %v10044
          %v10046 = vrot.slane %v9371, %v10045
          %v10047 = vlaneseq
          %v10048 = vshrl.u32 %v10047, 7
          %v10049 = vsub.s32 4, %v10048
          %v10050 = vrot.slane %v9371, %v10049
          %v10051 = vlaneseq
          %v10052 = vshrl.u32 %v10051, 7
          %v10053 = vsub.s32 6, %v10052
          %v10054 = vrot.slane %v9371, %v10053
          %v10055 = vlaneseq
          %v10056 = vshrl.u32 %v10055, 7
          %v10057 = vsub.s32 0, %v10056
          %v10058 = vrot.slane %v9372, %v10057
          %v10059 = vlaneseq
          %v10060 = vshrl.u32 %v10059, 7
          %v10061 = vsub.s32 2, %v10060
          %v10062 = vrot.slane %v9372, %v10061
          %v10063 = vlaneseq
          %v10064 = vshrl.u32 %v10063, 7
          %v10065 = vsub.s32 4, %v10064
          %v10066 = vrot.slane %v9372, %v10065
          %v10067 = vlaneseq
          %v10068 = vshrl.u32 %v10067, 7
          %v10069 = vsub.s32 6, %v10068
          %v10070 = vrot.slane %v9372, %v10069
          %v10071 = vlaneseq
          %v10072 = vshrl.u32 %v10071, 7
          %v10073 = vsub.s32 0, %v10072
          %v10074 = vrot.slane %v9373, %v10073
          %v10075 = vlaneseq
          %v10076 = vshrl.u32 %v10075, 7
          %v10077 = vsub.s32 2, %v10076
          %v10078 = vrot.slane %v9373, %v10077
          %v10079 = vlaneseq
          %v10080 = vshrl.u32 %v10079, 7
          %v10081 = vsub.s32 4, %v10080
          %v10082 = vrot.slane %v9373, %v10081
          %v10083 = vlaneseq
          %v10084 = vshrl.u32 %v10083, 7
          %v10085 = vsub.s32 6, %v10084
          %v10086 = vrot.slane %v9373, %v10085
          %v10087 = vlaneseq
          %v10088 = vshrl.u32 %v10087, 7
          %v10089 = vsub.s32 0, %v10088
          %v10090 = vrot.slane %v9374, %v10089
          %v10091 = vlaneseq
          %v10092 = vshrl.u32 %v10091, 7
          %v10093 = vsub.s32 2, %v10092
          %v10094 = vrot.slane %v9374, %v10093
          %v10095 = vlaneseq
          %v10096 = vshrl.u32 %v10095, 7
          %v10097 = vsub.s32 4, %v10096
          %v10098 = vrot.slane %v9374, %v10097
          %v10099 = vlaneseq
          %v10100 = vshrl.u32 %v10099, 7
          %v10101 = vsub.s32 6, %v10100
          %v10102 = vrot.slane %v9374, %v10101
          %v10103 = vlaneseq
          %v10104 = vshrl.u32 %v10103, 7
          %v10105 = vsub.s32 0, %v10104
          %v10106 = vrot.slane %v9375, %v10105
          %v10107 = vlaneseq
          %v10108 = vshrl.u32 %v10107, 7
          %v10109 = vsub.s32 2, %v10108
          %v10110 = vrot.slane %v9375, %v10109
          %v10111 = vlaneseq
          %v10112 = vshrl.u32 %v10111, 7
          %v10113 = vsub.s32 4, %v10112
          %v10114 = vrot.slane %v9375, %v10113
          %v10115 = vlaneseq
          %v10116 = vshrl.u32 %v10115, 7
          %v10117 = vsub.s32 6, %v10116
          %v10118 = vrot.slane %v9375, %v10117
          %v10119 = vlaneseq
          %v10120 = vshrl.u32 %v10119, 7
          %v10121 = vsub.s32 0, %v10120
          %v10122 = vrot.slane %v9376, %v10121
          %v10123 = vlaneseq
          %v10124 = vshrl.u32 %v10123, 7
          %v10125 = vsub.s32 2, %v10124
          %v10126 = vrot.slane %v9376, %v10125
          %v10127 = vlaneseq
          %v10128 = vshrl.u32 %v10127, 7
          %v10129 = vsub.s32 4, %v10128
          %v10130 = vrot.slane %v9376, %v10129
          %v10131 = vlaneseq
          %v10132 = vshrl.u32 %v10131, 7
          %v10133 = vsub.s32 6, %v10132
          %v10134 = vrot.slane %v9376, %v10133
          %v10135 = vlaneseq
          %v10136 = vshrl.u32 %v10135, 7
          %v10137 = vsub.s32 0, %v10136
          %v10138 = vrot.slane %v9377, %v10137
          %v10139 = vlaneseq
          %v10140 = vshrl.u32 %v10139, 7
          %v10141 = vsub.s32 2, %v10140
          %v10142 = vrot.slane %v9377, %v10141
          %v10143 = vlaneseq
          %v10144 = vshrl.u32 %v10143, 7
          %v10145 = vsub.s32 4, %v10144
          %v10146 = vrot.slane %v9377, %v10145
          %v10147 = vlaneseq
          %v10148 = vshrl.u32 %v10147, 7
          %v10149 = vsub.s32 6, %v10148
          %v10150 = vrot.slane %v9377, %v10149
          %v10151 = vlaneseq
          %v10152 = vshrl.u32 %v10151, 7
          %v10153 = vsub.s32 0, %v10152
          %v10154 = vrot.slane %v9378, %v10153
          %v10155 = vlaneseq
          %v10156 = vshrl.u32 %v10155, 7
          %v10157 = vsub.s32 2, %v10156
          %v10158 = vrot.slane %v9378, %v10157
          %v10159 = vlaneseq
          %v10160 = vshrl.u32 %v10159, 7
          %v10161 = vsub.s32 4, %v10160
          %v10162 = vrot.slane %v9378, %v10161
          %v10163 = vlaneseq
          %v10164 = vshrl.u32 %v10163, 7
          %v10165 = vsub.s32 6, %v10164
          %v10166 = vrot.slane %v9378, %v10165
          %v10167 = vlaneseq
          %v10168 = vshrl.u32 %v10167, 7
          %v10169 = vsub.s32 0, %v10168
          %v10170 = vrot.slane %v9379, %v10169
          %v10171 = vlaneseq
          %v10172 = vshrl.u32 %v10171, 7
          %v10173 = vsub.s32 2, %v10172
          %v10174 = vrot.slane %v9379, %v10173
          %v10175 = vlaneseq
          %v10176 = vshrl.u32 %v10175, 7
          %v10177 = vsub.s32 4, %v10176
          %v10178 = vrot.slane %v9379, %v10177
          %v10179 = vlaneseq
          %v10180 = vshrl.u32 %v10179, 7
          %v10181 = vsub.s32 6, %v10180
          %v10182 = vrot.slane %v9379, %v10181
          %v10183 = vlaneseq
          %v10184 = vshrl.u32 %v10183, 7
          %v10185 = vsub.s32 0, %v10184
          %v10186 = vrot.slane %v9380, %v10185
          %v10187 = vlaneseq
          %v10188 = vshrl.u32 %v10187, 7
          %v10189 = vsub.s32 2, %v10188
          %v10190 = vrot.slane %v9380, %v10189
          %v10191 = vlaneseq
          %v10192 = vshrl.u32 %v10191, 7
          %v10193 = vsub.s32 4, %v10192
          %v10194 = vrot.slane %v9380, %v10193
          %v10195 = vlaneseq
          %v10196 = vshrl.u32 %v10195, 7
          %v10197 = vsub.s32 6, %v10196
          %v10198 = vrot.slane %v9380, %v10197
          %v10199 = vlaneseq
          %v10200 = vshrl.u32 %v10199, 7
          %v10201 = vsub.s32 0, %v10200
          %v10202 = vrot.slane %v9381, %v10201
          %v10203 = vlaneseq
          %v10204 = vshrl.u32 %v10203, 7
          %v10205 = vsub.s32 2, %v10204
          %v10206 = vrot.slane %v9381, %v10205
          %v10207 = vlaneseq
          %v10208 = vshrl.u32 %v10207, 7
          %v10209 = vsub.s32 4, %v10208
          %v10210 = vrot.slane %v9381, %v10209
          %v10211 = vlaneseq
          %v10212 = vshrl.u32 %v10211, 7
          %v10213 = vsub.s32 6, %v10212
          %v10214 = vrot.slane %v9381, %v10213
          %v10215 = vlaneseq
          %v10216 = vshrl.u32 %v10215, 7
          %v10217 = vsub.s32 0, %v10216
          %v10218 = vrot.slane %v9382, %v10217
          %v10219 = vlaneseq
          %v10220 = vshrl.u32 %v10219, 7
          %v10221 = vsub.s32 2, %v10220
          %v10222 = vrot.slane %v9382, %v10221
          %v10223 = vlaneseq
          %v10224 = vshrl.u32 %v10223, 7
          %v10225 = vsub.s32 4, %v10224
          %v10226 = vrot.slane %v9382, %v10225
          %v10227 = vlaneseq
          %v10228 = vshrl.u32 %v10227, 7
          %v10229 = vsub.s32 6, %v10228
          %v10230 = vrot.slane %v9382, %v10229
          %v10231 = vlaneseq
          %v10232 = vshrl.u32 %v10231, 7
          %v10233 = vsub.s32 0, %v10232
          %v10234 = vrot.slane %v9383, %v10233
          %v10235 = vlaneseq
          %v10236 = vshrl.u32 %v10235, 7
          %v10237 = vsub.s32 2, %v10236
          %v10238 = vrot.slane %v9383, %v10237
          %v10239 = vlaneseq
          %v10240 = vshrl.u32 %v10239, 7
          %v10241 = vsub.s32 4, %v10240
          %v10242 = vrot.slane %v9383, %v10241
          %v10243 = vlaneseq
          %v10244 = vshrl.u32 %v10243, 7
          %v10245 = vsub.s32 6, %v10244
          %v10246 = vrot.slane %v9383, %v10245
          %v10247 = vlaneseq
          %v10248 = vshrl.u32 %v10247, 7
          %v10249 = vsub.s32 0, %v10248
          %v10250 = vrot.slane %v9384, %v10249
          %v10251 = vlaneseq
          %v10252 = vshrl.u32 %v10251, 7
          %v10253 = vsub.s32 2, %v10252
          %v10254 = vrot.slane %v9384, %v10253
          %v10255 = vlaneseq
          %v10256 = vshrl.u32 %v10255, 7
          %v10257 = vsub.s32 4, %v10256
          %v10258 = vrot.slane %v9384, %v10257
          %v10259 = vlaneseq
          %v10260 = vshrl.u32 %v10259, 7
          %v10261 = vsub.s32 6, %v10260
          %v10262 = vrot.slane %v9384, %v10261
          %v10263 = vlaneseq
          %v10264 = vshrl.u32 %v10263, 7
          %v10265 = vsub.s32 0, %v10264
          %v10266 = vrot.slane %v9385, %v10265
          %v10267 = vlaneseq
          %v10268 = vshrl.u32 %v10267, 7
          %v10269 = vsub.s32 2, %v10268
          %v10270 = vrot.slane %v9385, %v10269
          %v10271 = vlaneseq
          %v10272 = vshrl.u32 %v10271, 7
          %v10273 = vsub.s32 4, %v10272
          %v10274 = vrot.slane %v9385, %v10273
          %v10275 = vlaneseq
          %v10276 = vshrl.u32 %v10275, 7
          %v10277 = vsub.s32 6, %v10276
          %v10278 = vrot.slane %v9385, %v10277
          %v10279 = vlaneseq
          %v10280 = vshrl.u32 %v10279, 7
          %v10281 = vsub.s32 0, %v10280
          %v10282 = vrot.slane %v9386, %v10281
          %v10283 = vlaneseq
          %v10284 = vshrl.u32 %v10283, 7
          %v10285 = vsub.s32 2, %v10284
          %v10286 = vrot.slane %v9386, %v10285
          %v10287 = vlaneseq
          %v10288 = vshrl.u32 %v10287, 7
          %v10289 = vsub.s32 4, %v10288
          %v10290 = vrot.slane %v9386, %v10289
          %v10291 = vlaneseq
          %v10292 = vshrl.u32 %v10291, 7
          %v10293 = vsub.s32 6, %v10292
          %v10294 = vrot.slane %v9386, %v10293
          %v10295 = vlaneseq
          %v10296 = vshrl.u32 %v10295, 7
          %v10297 = vsub.s32 0, %v10296
          %v10298 = vrot.slane %v9387, %v10297
          %v10299 = vlaneseq
          %v10300 = vshrl.u32 %v10299, 7
          %v10301 = vsub.s32 2, %v10300
          %v10302 = vrot.slane %v9387, %v10301
          %v10303 = vlaneseq
          %v10304 = vshrl.u32 %v10303, 7
          %v10305 = vsub.s32 4, %v10304
          %v10306 = vrot.slane %v9387, %v10305
          %v10307 = vlaneseq
          %v10308 = vshrl.u32 %v10307, 7
          %v10309 = vsub.s32 6, %v10308
          %v10310 = vrot.slane %v9387, %v10309
          %v10311 = vlaneseq
          %v10312 = vshrl.u32 %v10311, 7
          %v10313 = vsub.s32 0, %v10312
          %v10314 = vrot.slane %v9388, %v10313
          %v10315 = vlaneseq
          %v10316 = vshrl.u32 %v10315, 7
          %v10317 = vsub.s32 2, %v10316
          %v10318 = vrot.slane %v9388, %v10317
          %v10319 = vlaneseq
          %v10320 = vshrl.u32 %v10319, 7
          %v10321 = vsub.s32 4, %v10320
          %v10322 = vrot.slane %v9388, %v10321
          %v10323 = vlaneseq
          %v10324 = vshrl.u32 %v10323, 7
          %v10325 = vsub.s32 6, %v10324
          %v10326 = vrot.slane %v9388, %v10325
          %v10327 = vlaneseq
          %v10328 = vshrl.u32 %v10327, 7
          %v10329 = vsub.s32 0, %v10328
          %v10330 = vrot.slane %v9389, %v10329
          %v10331 = vlaneseq
          %v10332 = vshrl.u32 %v10331, 7
          %v10333 = vsub.s32 2, %v10332
          %v10334 = vrot.slane %v9389, %v10333
          %v10335 = vlaneseq
          %v10336 = vshrl.u32 %v10335, 7
          %v10337 = vsub.s32 4, %v10336
          %v10338 = vrot.slane %v9389, %v10337
          %v10339 = vlaneseq
          %v10340 = vshrl.u32 %v10339, 7
          %v10341 = vsub.s32 6, %v10340
          %v10342 = vrot.slane %v9389, %v10341
          %v10343 = vlaneseq
          %v10344 = vshrl.u32 %v10343, 7
          %v10345 = vsub.s32 0, %v10344
          %v10346 = vrot.slane %v9390, %v10345
          %v10347 = vlaneseq
          %v10348 = vshrl.u32 %v10347, 7
          %v10349 = vsub.s32 2, %v10348
          %v10350 = vrot.slane %v9390, %v10349
          %v10351 = vlaneseq
          %v10352 = vshrl.u32 %v10351, 7
          %v10353 = vsub.s32 4, %v10352
          %v10354 = vrot.slane %v9390, %v10353
          %v10355 = vlaneseq
          %v10356 = vshrl.u32 %v10355, 7
          %v10357 = vsub.s32 6, %v10356
          %v10358 = vrot.slane %v9390, %v10357
          %v10359 = vlaneseq
          %v10360 = vshrl.u32 %v10359, 7
          %v10361 = vsub.s32 0, %v10360
          %v10362 = vrot.slane %v9391, %v10361
          %v10363 = vlaneseq
          %v10364 = vshrl.u32 %v10363, 7
          %v10365 = vsub.s32 2, %v10364
          %v10366 = vrot.slane %v9391, %v10365
          %v10367 = vlaneseq
          %v10368 = vshrl.u32 %v10367, 7
          %v10369 = vsub.s32 4, %v10368
          %v10370 = vrot.slane %v9391, %v10369
          %v10371 = vlaneseq
          %v10372 = vshrl.u32 %v10371, 7
          %v10373 = vsub.s32 6, %v10372
          %v10374 = vrot.slane %v9391, %v10373
          %v10375 = vlaneseq
          %v10376 = vshrl.u32 %v10375, 7
          %v10377 = vsub.s32 0, %v10376
          %v10378 = vrot.slane %v9392, %v10377
          %v10379 = vlaneseq
          %v10380 = vshrl.u32 %v10379, 7
          %v10381 = vsub.s32 2, %v10380
          %v10382 = vrot.slane %v9392, %v10381
          %v10383 = vlaneseq
          %v10384 = vshrl.u32 %v10383, 7
          %v10385 = vsub.s32 4, %v10384
          %v10386 = vrot.slane %v9392, %v10385
          %v10387 = vlaneseq
          %v10388 = vshrl.u32 %v10387, 7
          %v10389 = vsub.s32 6, %v10388
          %v10390 = vrot.slane %v9392, %v10389
          %v10391 = vlaneseq
          %v10392 = vshrl.u32 %v10391, 7
          %v10393 = vsub.s32 0, %v10392
          %v10394 = vrot.slane %v9393, %v10393
          %v10395 = vlaneseq
          %v10396 = vshrl.u32 %v10395, 7
          %v10397 = vsub.s32 2, %v10396
          %v10398 = vrot.slane %v9393, %v10397
          %v10399 = vlaneseq
          %v10400 = vshrl.u32 %v10399, 7
          %v10401 = vsub.s32 4, %v10400
          %v10402 = vrot.slane %v9393, %v10401
          %v10403 = vlaneseq
          %v10404 = vshrl.u32 %v10403, 7
          %v10405 = vsub.s32 6, %v10404
          %v10406 = vrot.slane %v9393, %v10405
          %v10407 = vlaneseq
          %v10408 = vshrl.u32 %v10407, 7
          %v10409 = vsub.s32 0, %v10408
          %v10410 = vrot.slane %v9394, %v10409
          %v10411 = vlaneseq
          %v10412 = vshrl.u32 %v10411, 7
          %v10413 = vsub.s32 2, %v10412
          %v10414 = vrot.slane %v9394, %v10413
          %v10415 = vlaneseq
          %v10416 = vshrl.u32 %v10415, 7
          %v10417 = vsub.s32 4, %v10416
          %v10418 = vrot.slane %v9394, %v10417
          %v10419 = vlaneseq
          %v10420 = vshrl.u32 %v10419, 7
          %v10421 = vsub.s32 6, %v10420
          %v10422 = vrot.slane %v9394, %v10421
          %v10423 = vlaneseq
          %v10424 = vshrl.u32 %v10423, 7
          %v10425 = vsub.s32 0, %v10424
          %v10426 = vrot.slane %v9395, %v10425
          %v10427 = vlaneseq
          %v10428 = vshrl.u32 %v10427, 7
          %v10429 = vsub.s32 2, %v10428
          %v10430 = vrot.slane %v9395, %v10429
          %v10431 = vlaneseq
          %v10432 = vshrl.u32 %v10431, 7
          %v10433 = vsub.s32 4, %v10432
          %v10434 = vrot.slane %v9395, %v10433
          %v10435 = vlaneseq
          %v10436 = vshrl.u32 %v10435, 7
          %v10437 = vsub.s32 6, %v10436
          %v10438 = vrot.slane %v9395, %v10437
          %v10439 = vlaneseq
          %v10440 = vshrl.u32 %v10439, 7
          %v10441 = vsub.s32 0, %v10440
          %v10442 = vrot.slane %v9396, %v10441
          %v10443 = vlaneseq
          %v10444 = vshrl.u32 %v10443, 7
          %v10445 = vsub.s32 2, %v10444
          %v10446 = vrot.slane %v9396, %v10445
          %v10447 = vlaneseq
          %v10448 = vshrl.u32 %v10447, 7
          %v10449 = vsub.s32 4, %v10448
          %v10450 = vrot.slane %v9396, %v10449
          %v10451 = vlaneseq
          %v10452 = vshrl.u32 %v10451, 7
          %v10453 = vsub.s32 6, %v10452
          %v10454 = vrot.slane %v9396, %v10453
          %v10455 = vlaneseq
          %v10456 = vshrl.u32 %v10455, 7
          %v10457 = vsub.s32 0, %v10456
          %v10458 = vrot.slane %v9397, %v10457
          %v10459 = vlaneseq
          %v10460 = vshrl.u32 %v10459, 7
          %v10461 = vsub.s32 2, %v10460
          %v10462 = vrot.slane %v9397, %v10461
          %v10463 = vlaneseq
          %v10464 = vshrl.u32 %v10463, 7
          %v10465 = vsub.s32 4, %v10464
          %v10466 = vrot.slane %v9397, %v10465
          %v10467 = vlaneseq
          %v10468 = vshrl.u32 %v10467, 7
          %v10469 = vsub.s32 6, %v10468
          %v10470 = vrot.slane %v9397, %v10469
          %v10471 = vlaneseq
          %v10472 = vshrl.u32 %v10471, 7
          %v10473 = vsub.s32 0, %v10472
          %v10474 = vrot.slane %v9398, %v10473
          %v10475 = vlaneseq
          %v10476 = vshrl.u32 %v10475, 7
          %v10477 = vsub.s32 2, %v10476
          %v10478 = vrot.slane %v9398, %v10477
          %v10479 = vlaneseq
          %v10480 = vshrl.u32 %v10479, 7
          %v10481 = vsub.s32 4, %v10480
          %v10482 = vrot.slane %v9398, %v10481
          %v10483 = vlaneseq
          %v10484 = vshrl.u32 %v10483, 7
          %v10485 = vsub.s32 6, %v10484
          %v10486 = vrot.slane %v9398, %v10485
          %vm10487 = vcmask 1041409
          %v10488 = vsel %vm10487, %v9482, %v9466
          %vm10489 = vcmask 1042434
          %v10490 = vsel %vm10489, %v9498, %v10488
          %vm10491 = vcmask 1043459
          %v10492 = vsel %vm10491, %v9514, %v10490
          %vm10493 = vcmask 1044484
          %v10494 = vsel %vm10493, %v9530, %v10492
          %vm10495 = vcmask 1045509
          %v10496 = vsel %vm10495, %v9546, %v10494
          %vm10497 = vcmask 1046534
          %v10498 = vsel %vm10497, %v9562, %v10496
          %vm10499 = vcmask 1047559
          %v10500 = vsel %vm10499, %v9578, %v10498
          %v10501 = vsel %vm10487, %v9486, %v9470
          %v10502 = vsel %vm10489, %v9502, %v10501
          %v10503 = vsel %vm10491, %v9518, %v10502
          %v10504 = vsel %vm10493, %v9534, %v10503
          %v10505 = vsel %vm10495, %v9550, %v10504
          %v10506 = vsel %vm10497, %v9566, %v10505
          %v10507 = vsel %vm10499, %v9582, %v10506
          %v10508 = vsel %vm10487, %v9490, %v9474
          %v10509 = vsel %vm10489, %v9506, %v10508
          %v10510 = vsel %vm10491, %v9522, %v10509
          %v10511 = vsel %vm10493, %v9538, %v10510
          %v10512 = vsel %vm10495, %v9554, %v10511
          %v10513 = vsel %vm10497, %v9570, %v10512
          %v10514 = vsel %vm10499, %v9586, %v10513
          %v10515 = vsel %vm10487, %v9494, %v9478
          %v10516 = vsel %vm10489, %v9510, %v10515
          %v10517 = vsel %vm10491, %v9526, %v10516
          %v10518 = vsel %vm10493, %v9542, %v10517
          %v10519 = vsel %vm10495, %v9558, %v10518
          %v10520 = vsel %vm10497, %v9574, %v10519
          %v10521 = vsel %vm10499, %v9590, %v10520
          %v10522 = vsel %vm10487, %v9610, %v9594
          %v10523 = vsel %vm10489, %v9626, %v10522
          %v10524 = vsel %vm10491, %v9642, %v10523
          %v10525 = vsel %vm10493, %v9658, %v10524
          %v10526 = vsel %vm10495, %v9674, %v10525
          %v10527 = vsel %vm10497, %v9690, %v10526
          %v10528 = vsel %vm10499, %v9706, %v10527
          %v10529 = vsel %vm10487, %v9614, %v9598
          %v10530 = vsel %vm10489, %v9630, %v10529
          %v10531 = vsel %vm10491, %v9646, %v10530
          %v10532 = vsel %vm10493, %v9662, %v10531
          %v10533 = vsel %vm10495, %v9678, %v10532
          %v10534 = vsel %vm10497, %v9694, %v10533
          %v10535 = vsel %vm10499, %v9710, %v10534
          %v10536 = vsel %vm10487, %v9618, %v9602
          %v10537 = vsel %vm10489, %v9634, %v10536
          %v10538 = vsel %vm10491, %v9650, %v10537
          %v10539 = vsel %vm10493, %v9666, %v10538
          %v10540 = vsel %vm10495, %v9682, %v10539
          %v10541 = vsel %vm10497, %v9698, %v10540
          %v10542 = vsel %vm10499, %v9714, %v10541
          %v10543 = vsel %vm10487, %v9622, %v9606
          %v10544 = vsel %vm10489, %v9638, %v10543
          %v10545 = vsel %vm10491, %v9654, %v10544
          %v10546 = vsel %vm10493, %v9670, %v10545
          %v10547 = vsel %vm10495, %v9686, %v10546
          %v10548 = vsel %vm10497, %v9702, %v10547
          %v10549 = vsel %vm10499, %v9718, %v10548
          %v10550 = vsel %vm10487, %v9738, %v9722
          %v10551 = vsel %vm10489, %v9754, %v10550
          %v10552 = vsel %vm10491, %v9770, %v10551
          %v10553 = vsel %vm10493, %v9786, %v10552
          %v10554 = vsel %vm10495, %v9802, %v10553
          %v10555 = vsel %vm10497, %v9818, %v10554
          %v10556 = vsel %vm10499, %v9834, %v10555
          %v10557 = vsel %vm10487, %v9742, %v9726
          %v10558 = vsel %vm10489, %v9758, %v10557
          %v10559 = vsel %vm10491, %v9774, %v10558
          %v10560 = vsel %vm10493, %v9790, %v10559
          %v10561 = vsel %vm10495, %v9806, %v10560
          %v10562 = vsel %vm10497, %v9822, %v10561
          %v10563 = vsel %vm10499, %v9838, %v10562
          %v10564 = vsel %vm10487, %v9746, %v9730
          %v10565 = vsel %vm10489, %v9762, %v10564
          %v10566 = vsel %vm10491, %v9778, %v10565
          %v10567 = vsel %vm10493, %v9794, %v10566
          %v10568 = vsel %vm10495, %v9810, %v10567
          %v10569 = vsel %vm10497, %v9826, %v10568
          %v10570 = vsel %vm10499, %v9842, %v10569
          %v10571 = vsel %vm10487, %v9750, %v9734
          %v10572 = vsel %vm10489, %v9766, %v10571
          %v10573 = vsel %vm10491, %v9782, %v10572
          %v10574 = vsel %vm10493, %v9798, %v10573
          %v10575 = vsel %vm10495, %v9814, %v10574
          %v10576 = vsel %vm10497, %v9830, %v10575
          %v10577 = vsel %vm10499, %v9846, %v10576
          %v10578 = vsel %vm10487, %v9866, %v9850
          %v10579 = vsel %vm10489, %v9882, %v10578
          %v10580 = vsel %vm10491, %v9898, %v10579
          %v10581 = vsel %vm10493, %v9914, %v10580
          %v10582 = vsel %vm10495, %v9930, %v10581
          %v10583 = vsel %vm10497, %v9946, %v10582
          %v10584 = vsel %vm10499, %v9962, %v10583
          %v10585 = vsel %vm10487, %v9870, %v9854
          %v10586 = vsel %vm10489, %v9886, %v10585
          %v10587 = vsel %vm10491, %v9902, %v10586
          %v10588 = vsel %vm10493, %v9918, %v10587
          %v10589 = vsel %vm10495, %v9934, %v10588
          %v10590 = vsel %vm10497, %v9950, %v10589
          %v10591 = vsel %vm10499, %v9966, %v10590
          %v10592 = vsel %vm10487, %v9874, %v9858
          %v10593 = vsel %vm10489, %v9890, %v10592
          %v10594 = vsel %vm10491, %v9906, %v10593
          %v10595 = vsel %vm10493, %v9922, %v10594
          %v10596 = vsel %vm10495, %v9938, %v10595
          %v10597 = vsel %vm10497, %v9954, %v10596
          %v10598 = vsel %vm10499, %v9970, %v10597
          %v10599 = vsel %vm10487, %v9878, %v9862
          %v10600 = vsel %vm10489, %v9894, %v10599
          %v10601 = vsel %vm10491, %v9910, %v10600
          %v10602 = vsel %vm10493, %v9926, %v10601
          %v10603 = vsel %vm10495, %v9942, %v10602
          %v10604 = vsel %vm10497, %v9958, %v10603
          %v10605 = vsel %vm10499, %v9974, %v10604
          %v10606 = vsel %vm10487, %v9994, %v9978
          %v10607 = vsel %vm10489, %v10010, %v10606
          %v10608 = vsel %vm10491, %v10026, %v10607
          %v10609 = vsel %vm10493, %v10042, %v10608
          %v10610 = vsel %vm10495, %v10058, %v10609
          %v10611 = vsel %vm10497, %v10074, %v10610
          %v10612 = vsel %vm10499, %v10090, %v10611
          %v10613 = vsel %vm10487, %v9998, %v9982
          %v10614 = vsel %vm10489, %v10014, %v10613
          %v10615 = vsel %vm10491, %v10030, %v10614
          %v10616 = vsel %vm10493, %v10046, %v10615
          %v10617 = vsel %vm10495, %v10062, %v10616
          %v10618 = vsel %vm10497, %v10078, %v10617
          %v10619 = vsel %vm10499, %v10094, %v10618
          %v10620 = vsel %vm10487, %v10002, %v9986
          %v10621 = vsel %vm10489, %v10018, %v10620
          %v10622 = vsel %vm10491, %v10034, %v10621
          %v10623 = vsel %vm10493, %v10050, %v10622
          %v10624 = vsel %vm10495, %v10066, %v10623
          %v10625 = vsel %vm10497, %v10082, %v10624
          %v10626 = vsel %vm10499, %v10098, %v10625
          %v10627 = vsel %vm10487, %v10006, %v9990
          %v10628 = vsel %vm10489, %v10022, %v10627
          %v10629 = vsel %vm10491, %v10038, %v10628
          %v10630 = vsel %vm10493, %v10054, %v10629
          %v10631 = vsel %vm10495, %v10070, %v10630
          %v10632 = vsel %vm10497, %v10086, %v10631
          %v10633 = vsel %vm10499, %v10102, %v10632
          %v10634 = vsel %vm10487, %v10122, %v10106
          %v10635 = vsel %vm10489, %v10138, %v10634
          %v10636 = vsel %vm10491, %v10154, %v10635
          %v10637 = vsel %vm10493, %v10170, %v10636
          %v10638 = vsel %vm10495, %v10186, %v10637
          %v10639 = vsel %vm10497, %v10202, %v10638
          %v10640 = vsel %vm10499, %v10218, %v10639
          %v10641 = vsel %vm10487, %v10126, %v10110
          %v10642 = vsel %vm10489, %v10142, %v10641
          %v10643 = vsel %vm10491, %v10158, %v10642
          %v10644 = vsel %vm10493, %v10174, %v10643
          %v10645 = vsel %vm10495, %v10190, %v10644
          %v10646 = vsel %vm10497, %v10206, %v10645
          %v10647 = vsel %vm10499, %v10222, %v10646
          %v10648 = vsel %vm10487, %v10130, %v10114
          %v10649 = vsel %vm10489, %v10146, %v10648
          %v10650 = vsel %vm10491, %v10162, %v10649
          %v10651 = vsel %vm10493, %v10178, %v10650
          %v10652 = vsel %vm10495, %v10194, %v10651
          %v10653 = vsel %vm10497, %v10210, %v10652
          %v10654 = vsel %vm10499, %v10226, %v10653
          %v10655 = vsel %vm10487, %v10134, %v10118
          %v10656 = vsel %vm10489, %v10150, %v10655
          %v10657 = vsel %vm10491, %v10166, %v10656
          %v10658 = vsel %vm10493, %v10182, %v10657
          %v10659 = vsel %vm10495, %v10198, %v10658
          %v10660 = vsel %vm10497, %v10214, %v10659
          %v10661 = vsel %vm10499, %v10230, %v10660
          %v10662 = vsel %vm10487, %v10250, %v10234
          %v10663 = vsel %vm10489, %v10266, %v10662
          %v10664 = vsel %vm10491, %v10282, %v10663
          %v10665 = vsel %vm10493, %v10298, %v10664
          %v10666 = vsel %vm10495, %v10314, %v10665
          %v10667 = vsel %vm10497, %v10330, %v10666
          %v10668 = vsel %vm10499, %v10346, %v10667
          %v10669 = vsel %vm10487, %v10254, %v10238
          %v10670 = vsel %vm10489, %v10270, %v10669
          %v10671 = vsel %vm10491, %v10286, %v10670
          %v10672 = vsel %vm10493, %v10302, %v10671
          %v10673 = vsel %vm10495, %v10318, %v10672
          %v10674 = vsel %vm10497, %v10334, %v10673
          %v10675 = vsel %vm10499, %v10350, %v10674
          %v10676 = vsel %vm10487, %v10258, %v10242
          %v10677 = vsel %vm10489, %v10274, %v10676
          %v10678 = vsel %vm10491, %v10290, %v10677
          %v10679 = vsel %vm10493, %v10306, %v10678
          %v10680 = vsel %vm10495, %v10322, %v10679
          %v10681 = vsel %vm10497, %v10338, %v10680
          %v10682 = vsel %vm10499, %v10354, %v10681
          %v10683 = vsel %vm10487, %v10262, %v10246
          %v10684 = vsel %vm10489, %v10278, %v10683
          %v10685 = vsel %vm10491, %v10294, %v10684
          %v10686 = vsel %vm10493, %v10310, %v10685
          %v10687 = vsel %vm10495, %v10326, %v10686
          %v10688 = vsel %vm10497, %v10342, %v10687
          %v10689 = vsel %vm10499, %v10358, %v10688
          %v10690 = vsel %vm10487, %v10378, %v10362
          %v10691 = vsel %vm10489, %v10394, %v10690
          %v10692 = vsel %vm10491, %v10410, %v10691
          %v10693 = vsel %vm10493, %v10426, %v10692
          %v10694 = vsel %vm10495, %v10442, %v10693
          %v10695 = vsel %vm10497, %v10458, %v10694
          %v10696 = vsel %vm10499, %v10474, %v10695
          %v10697 = vsel %vm10487, %v10382, %v10366
          %v10698 = vsel %vm10489, %v10398, %v10697
          %v10699 = vsel %vm10491, %v10414, %v10698
          %v10700 = vsel %vm10493, %v10430, %v10699
          %v10701 = vsel %vm10495, %v10446, %v10700
          %v10702 = vsel %vm10497, %v10462, %v10701
          %v10703 = vsel %vm10499, %v10478, %v10702
          %v10704 = vsel %vm10487, %v10386, %v10370
          %v10705 = vsel %vm10489, %v10402, %v10704
          %v10706 = vsel %vm10491, %v10418, %v10705
          %v10707 = vsel %vm10493, %v10434, %v10706
          %v10708 = vsel %vm10495, %v10450, %v10707
          %v10709 = vsel %vm10497, %v10466, %v10708
          %v10710 = vsel %vm10499, %v10482, %v10709
          %v10711 = vsel %vm10487, %v10390, %v10374
          %v10712 = vsel %vm10489, %v10406, %v10711
          %v10713 = vsel %vm10491, %v10422, %v10712
          %v10714 = vsel %vm10493, %v10438, %v10713
          %v10715 = vsel %vm10495, %v10454, %v10714
          %v10716 = vsel %vm10497, %v10470, %v10715
          %v10717 = vsel %vm10499, %v10486, %v10716
          %v10750 = vadd.f32 %v10500, %v10528
          %v10751 = vadd.f32 %v10750, %v10556
          %v10752 = vadd.f32 %v10751, %v10584
          %v10753 = vadd.f32 %v10752, %v10612
          %v10754 = vadd.f32 %v10753, %v10640
          %v10755 = vadd.f32 %v10754, %v10668
          %v10756 = vadd.f32 %v10755, %v10696
          %v10757 = vrot.slane %v10756, 4
          %v10758 = vadd.f32 %v10756, %v10757
          %v10759 = vrot.slane %v10758, 2
          %v10760 = vadd.f32 %v10758, %v10759
          %v10761 = vrot.slane %v10760, 1
          %v10762 = vadd.f32 %v10760, %v10761
          %v10763 = vadd.f32 %v10507, %v10535
          %v10764 = vadd.f32 %v10763, %v10563
          %v10765 = vadd.f32 %v10764, %v10591
          %v10766 = vadd.f32 %v10765, %v10619
          %v10767 = vadd.f32 %v10766, %v10647
          %v10768 = vadd.f32 %v10767, %v10675
          %v10769 = vadd.f32 %v10768, %v10703
          %v10770 = vrot.slane %v10769, 4
          %v10771 = vadd.f32 %v10769, %v10770
          %v10772 = vrot.slane %v10771, 2
          %v10773 = vadd.f32 %v10771, %v10772
          %v10774 = vrot.slane %v10773, 1
          %v10775 = vadd.f32 %v10773, %v10774
          %v10776 = vadd.f32 %v10514, %v10542
          %v10777 = vadd.f32 %v10776, %v10570
          %v10778 = vadd.f32 %v10777, %v10598
          %v10779 = vadd.f32 %v10778, %v10626
          %v10780 = vadd.f32 %v10779, %v10654
          %v10781 = vadd.f32 %v10780, %v10682
          %v10782 = vadd.f32 %v10781, %v10710
          %v10783 = vrot.slane %v10782, 4
          %v10784 = vadd.f32 %v10782, %v10783
          %v10785 = vrot.slane %v10784, 2
          %v10786 = vadd.f32 %v10784, %v10785
          %v10787 = vrot.slane %v10786, 1
          %v10788 = vadd.f32 %v10786, %v10787
          %v10789 = vadd.f32 %v10521, %v10549
          %v10790 = vadd.f32 %v10789, %v10577
          %v10791 = vadd.f32 %v10790, %v10605
          %v10792 = vadd.f32 %v10791, %v10633
          %v10793 = vadd.f32 %v10792, %v10661
          %v10794 = vadd.f32 %v10793, %v10689
          %v10795 = vadd.f32 %v10794, %v10717
          %v10796 = vrot.slane %v10795, 4
          %v10797 = vadd.f32 %v10795, %v10796
          %v10798 = vrot.slane %v10797, 2
          %v10799 = vadd.f32 %v10797, %v10798
          %v10800 = vrot.slane %v10799, 1
          %v10801 = vadd.f32 %v10799, %v10800
          %v10802 = vmul.f32 %v10762, 0.015625
          %v10803 = vmul.f32 %v10775, 0.015625
          %v10804 = vmul.f32 %v10788, 0.015625
          %v10805 = vmul.f32 %v10801, 0.015625
          %v10806 = vpack.c.bf16 %v10802, %v10802
          %v10807 = vpack.c.bf16 %v10803, %v10803
          %v10808 = vpack.c.bf16 %v10804, %v10804
          %v10809 = vpack.c.bf16 %v10805, %v10805
          %v10810 = vld [vmem:[#allocation9] sm:$0xff]
          %v10811 = vld [vmem:[#allocation9 + $0x8] sm:$0xff]
          %v10812 = vld [vmem:[#allocation9 + $0x10] sm:$0xff]
          %v10813 = vld [vmem:[#allocation9 + $0x18] sm:$0xff]
          %v10814 = vld [vmem:[#allocation9 + $0x20] sm:$0xff]
          %v10815 = vld [vmem:[#allocation9 + $0x28] sm:$0xff]
          %v10816 = vld [vmem:[#allocation9 + $0x30] sm:$0xff]
          %v10817 = vld [vmem:[#allocation9 + $0x38] sm:$0xff]
          %v10818 = vld [vmem:[#allocation9 + $0x40] sm:$0xff]
          %v10819 = vld [vmem:[#allocation9 + $0x48] sm:$0xff]
          %v10820 = vld [vmem:[#allocation9 + $0x50] sm:$0xff]
          %v10821 = vld [vmem:[#allocation9 + $0x58] sm:$0xff]
          %v10822 = vld [vmem:[#allocation9 + $0x60] sm:$0xff]
          %v10823 = vld [vmem:[#allocation9 + $0x68] sm:$0xff]
          %v10824 = vld [vmem:[#allocation9 + $0x70] sm:$0xff]
          %v10825 = vld [vmem:[#allocation9 + $0x78] sm:$0xff]
          %v10826 = vld [vmem:[#allocation9 + $0x80] sm:$0xff]
          %v10827 = vld [vmem:[#allocation9 + $0x88] sm:$0xff]
          %v10828 = vld [vmem:[#allocation9 + $0x90] sm:$0xff]
          %v10829 = vld [vmem:[#allocation9 + $0x98] sm:$0xff]
          %v10830 = vld [vmem:[#allocation9 + $0xa0] sm:$0xff]
          %v10831 = vld [vmem:[#allocation9 + $0xa8] sm:$0xff]
          %v10832 = vld [vmem:[#allocation9 + $0xb0] sm:$0xff]
          %v10833 = vld [vmem:[#allocation9 + $0xb8] sm:$0xff]
          %v10834 = vld [vmem:[#allocation9 + $0xc0] sm:$0xff]
          %v10835 = vld [vmem:[#allocation9 + $0xc8] sm:$0xff]
          %v10836 = vld [vmem:[#allocation9 + $0xd0] sm:$0xff]
          %v10837 = vld [vmem:[#allocation9 + $0xd8] sm:$0xff]
          %v10838 = vld [vmem:[#allocation9 + $0xe0] sm:$0xff]
          %v10839 = vld [vmem:[#allocation9 + $0xe8] sm:$0xff]
          %v10840 = vld [vmem:[#allocation9 + $0xf0] sm:$0xff]
          %v10841 = vld [vmem:[#allocation9 + $0xf8] sm:$0xff]
          %v10842 = vld [vmem:[#allocation9 + $0x100] sm:$0xff]
          %v10843 = vld [vmem:[#allocation9 + $0x108] sm:$0xff]
          %v10844 = vld [vmem:[#allocation9 + $0x110] sm:$0xff]
          %v10845 = vld [vmem:[#allocation9 + $0x118] sm:$0xff]
          %v10846 = vld [vmem:[#allocation9 + $0x120] sm:$0xff]
          %v10847 = vld [vmem:[#allocation9 + $0x128] sm:$0xff]
          %v10848 = vld [vmem:[#allocation9 + $0x130] sm:$0xff]
          %v10849 = vld [vmem:[#allocation9 + $0x138] sm:$0xff]
          %v10850 = vld [vmem:[#allocation9 + $0x140] sm:$0xff]
          %v10851 = vld [vmem:[#allocation9 + $0x148] sm:$0xff]
          %v10852 = vld [vmem:[#allocation9 + $0x150] sm:$0xff]
          %v10853 = vld [vmem:[#allocation9 + $0x158] sm:$0xff]
          %v10854 = vld [vmem:[#allocation9 + $0x160] sm:$0xff]
          %v10855 = vld [vmem:[#allocation9 + $0x168] sm:$0xff]
          %v10856 = vld [vmem:[#allocation9 + $0x170] sm:$0xff]
          %v10857 = vld [vmem:[#allocation9 + $0x178] sm:$0xff]
          %v10858 = vld [vmem:[#allocation9 + $0x180] sm:$0xff]
          %v10859 = vld [vmem:[#allocation9 + $0x188] sm:$0xff]
          %v10860 = vld [vmem:[#allocation9 + $0x190] sm:$0xff]
          %v10861 = vld [vmem:[#allocation9 + $0x198] sm:$0xff]
          %v10862 = vld [vmem:[#allocation9 + $0x1a0] sm:$0xff]
          %v10863 = vld [vmem:[#allocation9 + $0x1a8] sm:$0xff]
          %v10864 = vld [vmem:[#allocation9 + $0x1b0] sm:$0xff]
          %v10865 = vld [vmem:[#allocation9 + $0x1b8] sm:$0xff]
          %v10866 = vld [vmem:[#allocation9 + $0x1c0] sm:$0xff]
          %v10867 = vld [vmem:[#allocation9 + $0x1c8] sm:$0xff]
          %v10868 = vld [vmem:[#allocation9 + $0x1d0] sm:$0xff]
          %v10869 = vld [vmem:[#allocation9 + $0x1d8] sm:$0xff]
          %v10870 = vld [vmem:[#allocation9 + $0x1e0] sm:$0xff]
          %v10871 = vld [vmem:[#allocation9 + $0x1e8] sm:$0xff]
          %v10872 = vld [vmem:[#allocation9 + $0x1f0] sm:$0xff]
          %v10873 = vld [vmem:[#allocation9 + $0x1f8] sm:$0xff]
          %v10874 = vld [vmem:[#allocation9 + $0x200] sm:$0xff]
          %v10875 = vld [vmem:[#allocation9 + $0x208] sm:$0xff]
          %v10876 = vld [vmem:[#allocation9 + $0x210] sm:$0xff]
          %v10877 = vld [vmem:[#allocation9 + $0x218] sm:$0xff]
          %v10878 = vld [vmem:[#allocation9 + $0x220] sm:$0xff]
          %v10879 = vld [vmem:[#allocation9 + $0x228] sm:$0xff]
          %v10880 = vld [vmem:[#allocation9 + $0x230] sm:$0xff]
          %v10881 = vld [vmem:[#allocation9 + $0x238] sm:$0xff]
          %v10882 = vld [vmem:[#allocation9 + $0x240] sm:$0xff]
          %v10883 = vld [vmem:[#allocation9 + $0x248] sm:$0xff]
          %v10884 = vld [vmem:[#allocation9 + $0x250] sm:$0xff]
          %v10885 = vld [vmem:[#allocation9 + $0x258] sm:$0xff]
          %v10886 = vld [vmem:[#allocation9 + $0x260] sm:$0xff]
          %v10887 = vld [vmem:[#allocation9 + $0x268] sm:$0xff]
          %v10888 = vld [vmem:[#allocation9 + $0x270] sm:$0xff]
          %v10889 = vld [vmem:[#allocation9 + $0x278] sm:$0xff]
          %v10890 = vld [vmem:[#allocation9 + $0x280] sm:$0xff]
          %v10891 = vld [vmem:[#allocation9 + $0x288] sm:$0xff]
          %v10892 = vld [vmem:[#allocation9 + $0x290] sm:$0xff]
          %v10893 = vld [vmem:[#allocation9 + $0x298] sm:$0xff]
          %v10894 = vld [vmem:[#allocation9 + $0x2a0] sm:$0xff]
          %v10895 = vld [vmem:[#allocation9 + $0x2a8] sm:$0xff]
          %v10896 = vld [vmem:[#allocation9 + $0x2b0] sm:$0xff]
          %v10897 = vld [vmem:[#allocation9 + $0x2b8] sm:$0xff]
          %v10898 = vld [vmem:[#allocation9 + $0x2c0] sm:$0xff]
          %v10899 = vld [vmem:[#allocation9 + $0x2c8] sm:$0xff]
          %v10900 = vld [vmem:[#allocation9 + $0x2d0] sm:$0xff]
          %v10901 = vld [vmem:[#allocation9 + $0x2d8] sm:$0xff]
          %v10902 = vld [vmem:[#allocation9 + $0x2e0] sm:$0xff]
          %v10903 = vld [vmem:[#allocation9 + $0x2e8] sm:$0xff]
          %v10904 = vld [vmem:[#allocation9 + $0x2f0] sm:$0xff]
          %v10905 = vld [vmem:[#allocation9 + $0x2f8] sm:$0xff]
          %v10906 = vld [vmem:[#allocation9 + $0x300] sm:$0xff]
          %v10907 = vld [vmem:[#allocation9 + $0x308] sm:$0xff]
          %v10908 = vld [vmem:[#allocation9 + $0x310] sm:$0xff]
          %v10909 = vld [vmem:[#allocation9 + $0x318] sm:$0xff]
          %v10910 = vld [vmem:[#allocation9 + $0x320] sm:$0xff]
          %v10911 = vld [vmem:[#allocation9 + $0x328] sm:$0xff]
          %v10912 = vld [vmem:[#allocation9 + $0x330] sm:$0xff]
          %v10913 = vld [vmem:[#allocation9 + $0x338] sm:$0xff]
          %v10914 = vld [vmem:[#allocation9 + $0x340] sm:$0xff]
          %v10915 = vld [vmem:[#allocation9 + $0x348] sm:$0xff]
          %v10916 = vld [vmem:[#allocation9 + $0x350] sm:$0xff]
          %v10917 = vld [vmem:[#allocation9 + $0x358] sm:$0xff]
          %v10918 = vld [vmem:[#allocation9 + $0x360] sm:$0xff]
          %v10919 = vld [vmem:[#allocation9 + $0x368] sm:$0xff]
          %v10920 = vld [vmem:[#allocation9 + $0x370] sm:$0xff]
          %v10921 = vld [vmem:[#allocation9 + $0x378] sm:$0xff]
          %v10922 = vld [vmem:[#allocation9 + $0x380] sm:$0xff]
          %v10923 = vld [vmem:[#allocation9 + $0x388] sm:$0xff]
          %v10924 = vld [vmem:[#allocation9 + $0x390] sm:$0xff]
          %v10925 = vld [vmem:[#allocation9 + $0x398] sm:$0xff]
          %v10926 = vld [vmem:[#allocation9 + $0x3a0] sm:$0xff]
          %v10927 = vld [vmem:[#allocation9 + $0x3a8] sm:$0xff]
          %v10928 = vld [vmem:[#allocation9 + $0x3b0] sm:$0xff]
          %v10929 = vld [vmem:[#allocation9 + $0x3b8] sm:$0xff]
          %v10930 = vld [vmem:[#allocation9 + $0x3c0] sm:$0xff]
          %v10931 = vld [vmem:[#allocation9 + $0x3c8] sm:$0xff]
          %v10932 = vld [vmem:[#allocation9 + $0x3d0] sm:$0xff]
          %v10933 = vld [vmem:[#allocation9 + $0x3d8] sm:$0xff]
          %v10934 = vld [vmem:[#allocation9 + $0x3e0] sm:$0xff]
          %v10935 = vld [vmem:[#allocation9 + $0x3e8] sm:$0xff]
          %v10936 = vld [vmem:[#allocation9 + $0x3f0] sm:$0xff]
          %v10937 = vld [vmem:[#allocation9 + $0x3f8] sm:$0xff]
          %v10938 = vld [vmem:[#allocation10] sm:$0xf]
          %v11067 = vunpack.c.l.b16 %v10810
          %v11068 = vunpack.c.h.b16 %v10810
          %v11069 = vunpack.c.l.b16 %v10811
          %v11070 = vunpack.c.h.b16 %v10811
          %v11071 = vunpack.c.l.b16 %v10812
          %v11072 = vunpack.c.h.b16 %v10812
          %v11073 = vunpack.c.l.b16 %v10813
          %v11074 = vunpack.c.h.b16 %v10813
          %v11075 = vunpack.c.l.b16 %v10814
          %v11076 = vunpack.c.h.b16 %v10814
          %v11077 = vunpack.c.l.b16 %v10815
          %v11078 = vunpack.c.h.b16 %v10815
          %v11079 = vunpack.c.l.b16 %v10816
          %v11080 = vunpack.c.h.b16 %v10816
          %v11081 = vunpack.c.l.b16 %v10817
          %v11082 = vunpack.c.h.b16 %v10817
          %v11083 = vunpack.c.l.b16 %v10818
          %v11084 = vunpack.c.h.b16 %v10818
          %v11085 = vunpack.c.l.b16 %v10819
          %v11086 = vunpack.c.h.b16 %v10819
          %v11087 = vunpack.c.l.b16 %v10820
          %v11088 = vunpack.c.h.b16 %v10820
          %v11089 = vunpack.c.l.b16 %v10821
          %v11090 = vunpack.c.h.b16 %v10821
          %v11091 = vunpack.c.l.b16 %v10822
          %v11092 = vunpack.c.h.b16 %v10822
          %v11093 = vunpack.c.l.b16 %v10823
          %v11094 = vunpack.c.h.b16 %v10823
          %v11095 = vunpack.c.l.b16 %v10824
          %v11096 = vunpack.c.h.b16 %v10824
          %v11097 = vunpack.c.l.b16 %v10825
          %v11098 = vunpack.c.h.b16 %v10825
          %v11099 = vunpack.c.l.b16 %v10826
          %v11100 = vunpack.c.h.b16 %v10826
          %v11101 = vunpack.c.l.b16 %v10827
          %v11102 = vunpack.c.h.b16 %v10827
          %v11103 = vunpack.c.l.b16 %v10828
          %v11104 = vunpack.c.h.b16 %v10828
          %v11105 = vunpack.c.l.b16 %v10829
          %v11106 = vunpack.c.h.b16 %v10829
          %v11107 = vunpack.c.l.b16 %v10830
          %v11108 = vunpack.c.h.b16 %v10830
          %v11109 = vunpack.c.l.b16 %v10831
          %v11110 = vunpack.c.h.b16 %v10831
          %v11111 = vunpack.c.l.b16 %v10832
          %v11112 = vunpack.c.h.b16 %v10832
          %v11113 = vunpack.c.l.b16 %v10833
          %v11114 = vunpack.c.h.b16 %v10833
          %v11115 = vunpack.c.l.b16 %v10834
          %v11116 = vunpack.c.h.b16 %v10834
          %v11117 = vunpack.c.l.b16 %v10835
          %v11118 = vunpack.c.h.b16 %v10835
          %v11119 = vunpack.c.l.b16 %v10836
          %v11120 = vunpack.c.h.b16 %v10836
          %v11121 = vunpack.c.l.b16 %v10837
          %v11122 = vunpack.c.h.b16 %v10837
          %v11123 = vunpack.c.l.b16 %v10838
          %v11124 = vunpack.c.h.b16 %v10838
          %v11125 = vunpack.c.l.b16 %v10839
          %v11126 = vunpack.c.h.b16 %v10839
          %v11127 = vunpack.c.l.b16 %v10840
          %v11128 = vunpack.c.h.b16 %v10840
          %v11129 = vunpack.c.l.b16 %v10841
          %v11130 = vunpack.c.h.b16 %v10841
          %v11131 = vunpack.c.l.b16 %v10842
          %v11132 = vunpack.c.h.b16 %v10842
          %v11133 = vunpack.c.l.b16 %v10843
          %v11134 = vunpack.c.h.b16 %v10843
          %v11135 = vunpack.c.l.b16 %v10844
          %v11136 = vunpack.c.h.b16 %v10844
          %v11137 = vunpack.c.l.b16 %v10845
          %v11138 = vunpack.c.h.b16 %v10845
          %v11139 = vunpack.c.l.b16 %v10846
          %v11140 = vunpack.c.h.b16 %v10846
          %v11141 = vunpack.c.l.b16 %v10847
          %v11142 = vunpack.c.h.b16 %v10847
          %v11143 = vunpack.c.l.b16 %v10848
          %v11144 = vunpack.c.h.b16 %v10848
          %v11145 = vunpack.c.l.b16 %v10849
          %v11146 = vunpack.c.h.b16 %v10849
          %v11147 = vunpack.c.l.b16 %v10850
          %v11148 = vunpack.c.h.b16 %v10850
          %v11149 = vunpack.c.l.b16 %v10851
          %v11150 = vunpack.c.h.b16 %v10851
          %v11151 = vunpack.c.l.b16 %v10852
          %v11152 = vunpack.c.h.b16 %v10852
          %v11153 = vunpack.c.l.b16 %v10853
          %v11154 = vunpack.c.h.b16 %v10853
          %v11155 = vunpack.c.l.b16 %v10854
          %v11156 = vunpack.c.h.b16 %v10854
          %v11157 = vunpack.c.l.b16 %v10855
          %v11158 = vunpack.c.h.b16 %v10855
          %v11159 = vunpack.c.l.b16 %v10856
          %v11160 = vunpack.c.h.b16 %v10856
          %v11161 = vunpack.c.l.b16 %v10857
          %v11162 = vunpack.c.h.b16 %v10857
          %v11163 = vunpack.c.l.b16 %v10858
          %v11164 = vunpack.c.h.b16 %v10858
          %v11165 = vunpack.c.l.b16 %v10859
          %v11166 = vunpack.c.h.b16 %v10859
          %v11167 = vunpack.c.l.b16 %v10860
          %v11168 = vunpack.c.h.b16 %v10860
          %v11169 = vunpack.c.l.b16 %v10861
          %v11170 = vunpack.c.h.b16 %v10861
          %v11171 = vunpack.c.l.b16 %v10862
          %v11172 = vunpack.c.h.b16 %v10862
          %v11173 = vunpack.c.l.b16 %v10863
          %v11174 = vunpack.c.h.b16 %v10863
          %v11175 = vunpack.c.l.b16 %v10864
          %v11176 = vunpack.c.h.b16 %v10864
          %v11177 = vunpack.c.l.b16 %v10865
          %v11178 = vunpack.c.h.b16 %v10865
          %v11179 = vunpack.c.l.b16 %v10866
          %v11180 = vunpack.c.h.b16 %v10866
          %v11181 = vunpack.c.l.b16 %v10867
          %v11182 = vunpack.c.h.b16 %v10867
          %v11183 = vunpack.c.l.b16 %v10868
          %v11184 = vunpack.c.h.b16 %v10868
          %v11185 = vunpack.c.l.b16 %v10869
          %v11186 = vunpack.c.h.b16 %v10869
          %v11187 = vunpack.c.l.b16 %v10870
          %v11188 = vunpack.c.h.b16 %v10870
          %v11189 = vunpack.c.l.b16 %v10871
          %v11190 = vunpack.c.h.b16 %v10871
          %v11191 = vunpack.c.l.b16 %v10872
          %v11192 = vunpack.c.h.b16 %v10872
          %v11193 = vunpack.c.l.b16 %v10873
          %v11194 = vunpack.c.h.b16 %v10873
          %v11195 = vunpack.c.l.b16 %v10874
          %v11196 = vunpack.c.h.b16 %v10874
          %v11197 = vunpack.c.l.b16 %v10875
          %v11198 = vunpack.c.h.b16 %v10875
          %v11199 = vunpack.c.l.b16 %v10876
          %v11200 = vunpack.c.h.b16 %v10876
          %v11201 = vunpack.c.l.b16 %v10877
          %v11202 = vunpack.c.h.b16 %v10877
          %v11203 = vunpack.c.l.b16 %v10878
          %v11204 = vunpack.c.h.b16 %v10878
          %v11205 = vunpack.c.l.b16 %v10879
          %v11206 = vunpack.c.h.b16 %v10879
          %v11207 = vunpack.c.l.b16 %v10880
          %v11208 = vunpack.c.h.b16 %v10880
          %v11209 = vunpack.c.l.b16 %v10881
          %v11210 = vunpack.c.h.b16 %v10881
          %v11211 = vunpack.c.l.b16 %v10882
          %v11212 = vunpack.c.h.b16 %v10882
          %v11213 = vunpack.c.l.b16 %v10883
          %v11214 = vunpack.c.h.b16 %v10883
          %v11215 = vunpack.c.l.b16 %v10884
          %v11216 = vunpack.c.h.b16 %v10884
          %v11217 = vunpack.c.l.b16 %v10885
          %v11218 = vunpack.c.h.b16 %v10885
          %v11219 = vunpack.c.l.b16 %v10886
          %v11220 = vunpack.c.h.b16 %v10886
          %v11221 = vunpack.c.l.b16 %v10887
          %v11222 = vunpack.c.h.b16 %v10887
          %v11223 = vunpack.c.l.b16 %v10888
          %v11224 = vunpack.c.h.b16 %v10888
          %v11225 = vunpack.c.l.b16 %v10889
          %v11226 = vunpack.c.h.b16 %v10889
          %v11227 = vunpack.c.l.b16 %v10890
          %v11228 = vunpack.c.h.b16 %v10890
          %v11229 = vunpack.c.l.b16 %v10891
          %v11230 = vunpack.c.h.b16 %v10891
          %v11231 = vunpack.c.l.b16 %v10892
          %v11232 = vunpack.c.h.b16 %v10892
          %v11233 = vunpack.c.l.b16 %v10893
          %v11234 = vunpack.c.h.b16 %v10893
          %v11235 = vunpack.c.l.b16 %v10894
          %v11236 = vunpack.c.h.b16 %v10894
          %v11237 = vunpack.c.l.b16 %v10895
          %v11238 = vunpack.c.h.b16 %v10895
          %v11239 = vunpack.c.l.b16 %v10896
          %v11240 = vunpack.c.h.b16 %v10896
          %v11241 = vunpack.c.l.b16 %v10897
          %v11242 = vunpack.c.h.b16 %v10897
          %v11243 = vunpack.c.l.b16 %v10898
          %v11244 = vunpack.c.h.b16 %v10898
          %v11245 = vunpack.c.l.b16 %v10899
          %v11246 = vunpack.c.h.b16 %v10899
          %v11247 = vunpack.c.l.b16 %v10900
          %v11248 = vunpack.c.h.b16 %v10900
          %v11249 = vunpack.c.l.b16 %v10901
          %v11250 = vunpack.c.h.b16 %v10901
          %v11251 = vunpack.c.l.b16 %v10902
          %v11252 = vunpack.c.h.b16 %v10902
          %v11253 = vunpack.c.l.b16 %v10903
          %v11254 = vunpack.c.h.b16 %v10903
          %v11255 = vunpack.c.l.b16 %v10904
          %v11256 = vunpack.c.h.b16 %v10904
          %v11257 = vunpack.c.l.b16 %v10905
          %v11258 = vunpack.c.h.b16 %v10905
          %v11259 = vunpack.c.l.b16 %v10906
          %v11260 = vunpack.c.h.b16 %v10906
          %v11261 = vunpack.c.l.b16 %v10907
          %v11262 = vunpack.c.h.b16 %v10907
          %v11263 = vunpack.c.l.b16 %v10908
          %v11264 = vunpack.c.h.b16 %v10908
          %v11265 = vunpack.c.l.b16 %v10909
          %v11266 = vunpack.c.h.b16 %v10909
          %v11267 = vunpack.c.l.b16 %v10910
          %v11268 = vunpack.c.h.b16 %v10910
          %v11269 = vunpack.c.l.b16 %v10911
          %v11270 = vunpack.c.h.b16 %v10911
          %v11271 = vunpack.c.l.b16 %v10912
          %v11272 = vunpack.c.h.b16 %v10912
          %v11273 = vunpack.c.l.b16 %v10913
          %v11274 = vunpack.c.h.b16 %v10913
          %v11275 = vunpack.c.l.b16 %v10914
          %v11276 = vunpack.c.h.b16 %v10914
          %v11277 = vunpack.c.l.b16 %v10915
          %v11278 = vunpack.c.h.b16 %v10915
          %v11279 = vunpack.c.l.b16 %v10916
          %v11280 = vunpack.c.h.b16 %v10916
          %v11281 = vunpack.c.l.b16 %v10917
          %v11282 = vunpack.c.h.b16 %v10917
          %v11283 = vunpack.c.l.b16 %v10918
          %v11284 = vunpack.c.h.b16 %v10918
          %v11285 = vunpack.c.l.b16 %v10919
          %v11286 = vunpack.c.h.b16 %v10919
          %v11287 = vunpack.c.l.b16 %v10920
          %v11288 = vunpack.c.h.b16 %v10920
          %v11289 = vunpack.c.l.b16 %v10921
          %v11290 = vunpack.c.h.b16 %v10921
          %v11291 = vunpack.c.l.b16 %v10922
          %v11292 = vunpack.c.h.b16 %v10922
          %v11293 = vunpack.c.l.b16 %v10923
          %v11294 = vunpack.c.h.b16 %v10923
          %v11295 = vunpack.c.l.b16 %v10924
          %v11296 = vunpack.c.h.b16 %v10924
          %v11297 = vunpack.c.l.b16 %v10925
          %v11298 = vunpack.c.h.b16 %v10925
          %v11299 = vunpack.c.l.b16 %v10926
          %v11300 = vunpack.c.h.b16 %v10926
          %v11301 = vunpack.c.l.b16 %v10927
          %v11302 = vunpack.c.h.b16 %v10927
          %v11303 = vunpack.c.l.b16 %v10928
          %v11304 = vunpack.c.h.b16 %v10928
          %v11305 = vunpack.c.l.b16 %v10929
          %v11306 = vunpack.c.h.b16 %v10929
          %v11307 = vunpack.c.l.b16 %v10930
          %v11308 = vunpack.c.h.b16 %v10930
          %v11309 = vunpack.c.l.b16 %v10931
          %v11310 = vunpack.c.h.b16 %v10931
          %v11311 = vunpack.c.l.b16 %v10932
          %v11312 = vunpack.c.h.b16 %v10932
          %v11313 = vunpack.c.l.b16 %v10933
          %v11314 = vunpack.c.h.b16 %v10933
          %v11315 = vunpack.c.l.b16 %v10934
          %v11316 = vunpack.c.h.b16 %v10934
          %v11317 = vunpack.c.l.b16 %v10935
          %v11318 = vunpack.c.h.b16 %v10935
          %v11319 = vunpack.c.l.b16 %v10936
          %v11320 = vunpack.c.h.b16 %v10936
          %v11321 = vunpack.c.l.b16 %v10937
          %v11322 = vunpack.c.h.b16 %v10937
          %v11323 = vpack.c.b16 %v11071, %v11067
          %v11324 = vpack.c.b16 %v11072, %v11068
          %v11325 = vpack.c.b16 %v11073, %v11069
          %v11326 = vpack.c.b16 %v11074, %v11070
          %v11327 = vpack.c.b16 %v11079, %v11075
          %v11328 = vpack.c.b16 %v11080, %v11076
          %v11329 = vpack.c.b16 %v11081, %v11077
          %v11330 = vpack.c.b16 %v11082, %v11078
          %v11331 = vpack.c.b16 %v11087, %v11083
          %v11332 = vpack.c.b16 %v11088, %v11084
          %v11333 = vpack.c.b16 %v11089, %v11085
          %v11334 = vpack.c.b16 %v11090, %v11086
          %v11335 = vpack.c.b16 %v11095, %v11091
          %v11336 = vpack.c.b16 %v11096, %v11092
          %v11337 = vpack.c.b16 %v11097, %v11093
          %v11338 = vpack.c.b16 %v11098, %v11094
          %v11339 = vpack.c.b16 %v11103, %v11099
          %v11340 = vpack.c.b16 %v11104, %v11100
          %v11341 = vpack.c.b16 %v11105, %v11101
          %v11342 = vpack.c.b16 %v11106, %v11102
          %v11343 = vpack.c.b16 %v11111, %v11107
          %v11344 = vpack.c.b16 %v11112, %v11108
          %v11345 = vpack.c.b16 %v11113, %v11109
          %v11346 = vpack.c.b16 %v11114, %v11110
          %v11347 = vpack.c.b16 %v11119, %v11115
          %v11348 = vpack.c.b16 %v11120, %v11116
          %v11349 = vpack.c.b16 %v11121, %v11117
          %v11350 = vpack.c.b16 %v11122, %v11118
          %v11351 = vpack.c.b16 %v11127, %v11123
          %v11352 = vpack.c.b16 %v11128, %v11124
          %v11353 = vpack.c.b16 %v11129, %v11125
          %v11354 = vpack.c.b16 %v11130, %v11126
          %v11355 = vpack.c.b16 %v11135, %v11131
          %v11356 = vpack.c.b16 %v11136, %v11132
          %v11357 = vpack.c.b16 %v11137, %v11133
          %v11358 = vpack.c.b16 %v11138, %v11134
          %v11359 = vpack.c.b16 %v11143, %v11139
          %v11360 = vpack.c.b16 %v11144, %v11140
          %v11361 = vpack.c.b16 %v11145, %v11141
          %v11362 = vpack.c.b16 %v11146, %v11142
          %v11363 = vpack.c.b16 %v11151, %v11147
          %v11364 = vpack.c.b16 %v11152, %v11148
          %v11365 = vpack.c.b16 %v11153, %v11149
          %v11366 = vpack.c.b16 %v11154, %v11150
          %v11367 = vpack.c.b16 %v11159, %v11155
          %v11368 = vpack.c.b16 %v11160, %v11156
          %v11369 = vpack.c.b16 %v11161, %v11157
          %v11370 = vpack.c.b16 %v11162, %v11158
          %v11371 = vpack.c.b16 %v11167, %v11163
          %v11372 = vpack.c.b16 %v11168, %v11164
          %v11373 = vpack.c.b16 %v11169, %v11165
          %v11374 = vpack.c.b16 %v11170, %v11166
          %v11375 = vpack.c.b16 %v11175, %v11171
          %v11376 = vpack.c.b16 %v11176, %v11172
          %v11377 = vpack.c.b16 %v11177, %v11173
          %v11378 = vpack.c.b16 %v11178, %v11174
          %v11379 = vpack.c.b16 %v11183, %v11179
          %v11380 = vpack.c.b16 %v11184, %v11180
          %v11381 = vpack.c.b16 %v11185, %v11181
          %v11382 = vpack.c.b16 %v11186, %v11182
          %v11383 = vpack.c.b16 %v11191, %v11187
          %v11384 = vpack.c.b16 %v11192, %v11188
          %v11385 = vpack.c.b16 %v11193, %v11189
          %v11386 = vpack.c.b16 %v11194, %v11190
          %v11387 = vpack.c.b16 %v11199, %v11195
          %v11388 = vpack.c.b16 %v11200, %v11196
          %v11389 = vpack.c.b16 %v11201, %v11197
          %v11390 = vpack.c.b16 %v11202, %v11198
          %v11391 = vpack.c.b16 %v11207, %v11203
          %v11392 = vpack.c.b16 %v11208, %v11204
          %v11393 = vpack.c.b16 %v11209, %v11205
          %v11394 = vpack.c.b16 %v11210, %v11206
          %v11395 = vpack.c.b16 %v11215, %v11211
          %v11396 = vpack.c.b16 %v11216, %v11212
          %v11397 = vpack.c.b16 %v11217, %v11213
          %v11398 = vpack.c.b16 %v11218, %v11214
          %v11399 = vpack.c.b16 %v11223, %v11219
          %v11400 = vpack.c.b16 %v11224, %v11220
          %v11401 = vpack.c.b16 %v11225, %v11221
          %v11402 = vpack.c.b16 %v11226, %v11222
          %v11403 = vpack.c.b16 %v11231, %v11227
          %v11404 = vpack.c.b16 %v11232, %v11228
          %v11405 = vpack.c.b16 %v11233, %v11229
          %v11406 = vpack.c.b16 %v11234, %v11230
          %v11407 = vpack.c.b16 %v11239, %v11235
          %v11408 = vpack.c.b16 %v11240, %v11236
          %v11409 = vpack.c.b16 %v11241, %v11237
          %v11410 = vpack.c.b16 %v11242, %v11238
          %v11411 = vpack.c.b16 %v11247, %v11243
          %v11412 = vpack.c.b16 %v11248, %v11244
          %v11413 = vpack.c.b16 %v11249, %v11245
          %v11414 = vpack.c.b16 %v11250, %v11246
          %v11415 = vpack.c.b16 %v11255, %v11251
          %v11416 = vpack.c.b16 %v11256, %v11252
          %v11417 = vpack.c.b16 %v11257, %v11253
          %v11418 = vpack.c.b16 %v11258, %v11254
          %v11419 = vpack.c.b16 %v11263, %v11259
          %v11420 = vpack.c.b16 %v11264, %v11260
          %v11421 = vpack.c.b16 %v11265, %v11261
          %v11422 = vpack.c.b16 %v11266, %v11262
          %v11423 = vpack.c.b16 %v11271, %v11267
          %v11424 = vpack.c.b16 %v11272, %v11268
          %v11425 = vpack.c.b16 %v11273, %v11269
          %v11426 = vpack.c.b16 %v11274, %v11270
          %v11427 = vpack.c.b16 %v11279, %v11275
          %v11428 = vpack.c.b16 %v11280, %v11276
          %v11429 = vpack.c.b16 %v11281, %v11277
          %v11430 = vpack.c.b16 %v11282, %v11278
          %v11431 = vpack.c.b16 %v11287, %v11283
          %v11432 = vpack.c.b16 %v11288, %v11284
          %v11433 = vpack.c.b16 %v11289, %v11285
          %v11434 = vpack.c.b16 %v11290, %v11286
          %v11435 = vpack.c.b16 %v11295, %v11291
          %v11436 = vpack.c.b16 %v11296, %v11292
          %v11437 = vpack.c.b16 %v11297, %v11293
          %v11438 = vpack.c.b16 %v11298, %v11294
          %v11439 = vpack.c.b16 %v11303, %v11299
          %v11440 = vpack.c.b16 %v11304, %v11300
          %v11441 = vpack.c.b16 %v11305, %v11301
          %v11442 = vpack.c.b16 %v11306, %v11302
          %v11443 = vpack.c.b16 %v11311, %v11307
          %v11444 = vpack.c.b16 %v11312, %v11308
          %v11445 = vpack.c.b16 %v11313, %v11309
          %v11446 = vpack.c.b16 %v11314, %v11310
          %v11447 = vpack.c.b16 %v11319, %v11315
          %v11448 = vpack.c.b16 %v11320, %v11316
          %v11449 = vpack.c.b16 %v11321, %v11317
          %v11450 = vpack.c.b16 %v11322, %v11318
          %v11580 = vlaneseq
          %v11581 = vshrl.u32 %v11580, 7
          %v11582 = vsub.s32 0, %v11581
          %v11583 = vrot.slane %v10938, %v11582
          %v11584 = vlaneseq
          %v11585 = vshrl.u32 %v11584, 7
          %v11586 = vsub.s32 1, %v11585
          %v11587 = vrot.slane %v10938, %v11586
          %v11588 = vlaneseq
          %v11589 = vshrl.u32 %v11588, 7
          %v11590 = vsub.s32 2, %v11589
          %v11591 = vrot.slane %v10938, %v11590
          %v11592 = vlaneseq
          %v11593 = vshrl.u32 %v11592, 7
          %v11594 = vsub.s32 3, %v11593
          %v11595 = vrot.slane %v10938, %v11594
          %11600 = vmatprep.subr.bf16.mxu0 %v11352
          %11601 = vmatpush1.bf16.msra.mxu0 %v11351
          %11602 = vmatprep.subr.bf16.mxu0 %v11348
          %11603 = vmatpush1.bf16.msra.mxu0 %v11347
          %11604 = vmatprep.subr.bf16.mxu0 %v11344
          %11605 = vmatpush1.bf16.msra.mxu0 %v11343
          %11606 = vmatprep.subr.bf16.mxu0 %v11340
          %11607 = vmatpush1.bf16.msra.mxu0 %v11339
          %11608 = vmatprep.subr.bf16.mxu0 %v11336
          %11609 = vmatpush1.bf16.msra.mxu0 %v11335
          %11610 = vmatprep.subr.bf16.mxu0 %v11332
          %11611 = vmatpush1.bf16.msra.mxu0 %v11331
          %11612 = vmatprep.subr.bf16.mxu0 %v11328
          %11613 = vmatpush1.bf16.msra.mxu0 %v11327
          %11614 = vmatprep.subr.bf16.mxu0 %v11324
          %11615 = vmatpush1.bf16.msra.mxu0 %v11323
          %11616 = vmatprep.subr.bf16.mxu0 %v11384
          %11617 = vmatpush2.bf16.msra.mxu0 %v11383
          %11618 = vmatprep.subr.bf16.mxu0 %v11380
          %11619 = vmatpush2.bf16.msra.mxu0 %v11379
          %11620 = vmatprep.subr.bf16.mxu0 %v11376
          %11621 = vmatpush2.bf16.msra.mxu0 %v11375
          %11622 = vmatprep.subr.bf16.mxu0 %v11372
          %11623 = vmatpush2.bf16.msra.mxu0 %v11371
          %11624 = vmatprep.subr.bf16.mxu0 %v11368
          %11625 = vmatpush2.bf16.msra.mxu0 %v11367
          %11626 = vmatprep.subr.bf16.mxu0 %v11364
          %11627 = vmatpush2.bf16.msra.mxu0 %v11363
          %11628 = vmatprep.subr.bf16.mxu0 %v11360
          %11629 = vmatpush2.bf16.msra.mxu0 %v11359
          %11630 = vmatprep.subr.bf16.mxu0 %v11356
          %11631 = vmatpush2.bf16.msra.mxu0 %v11355
          %11632 = vmatprep.mubr.bf16.mxu0 %v10807
          %11633 = vmatmul.mubr.bf16.gmra.mxu0 %v10806
          %v11634 = vpop.f32.mrf.mxu0
          %v11635 = vadd.f32 %v11583, %v11634
          %v11636 = vpop.f32.mrf.mxu0
          %v11637 = vadd.f32 %v11587, %v11636
          %v11638 = vpop.f32.mrf.mxu0
          %v11639 = vpop.f32.mrf.mxu0
          %11640 = vdwg.mxu0
          %11641 = vmatprep.subr.bf16.mxu0 %v11416
          %11642 = vmatpush1.bf16.msra.mxu0 %v11415
          %11643 = vmatprep.subr.bf16.mxu0 %v11412
          %11644 = vmatpush1.bf16.msra.mxu0 %v11411
          %11645 = vmatprep.subr.bf16.mxu0 %v11408
          %11646 = vmatpush1.bf16.msra.mxu0 %v11407
          %11647 = vmatprep.subr.bf16.mxu0 %v11404
          %11648 = vmatpush1.bf16.msra.mxu0 %v11403
          %11649 = vmatprep.subr.bf16.mxu0 %v11400
          %11650 = vmatpush1.bf16.msra.mxu0 %v11399
          %11651 = vmatprep.subr.bf16.mxu0 %v11396
          %11652 = vmatpush1.bf16.msra.mxu0 %v11395
          %11653 = vmatprep.subr.bf16.mxu0 %v11392
          %11654 = vmatpush1.bf16.msra.mxu0 %v11391
          %11655 = vmatprep.subr.bf16.mxu0 %v11388
          %11656 = vmatpush1.bf16.msra.mxu0 %v11387
          %11657 = vmatprep.subr.bf16.mxu0 %v11448
          %11658 = vmatpush2.bf16.msra.mxu0 %v11447
          %11659 = vmatprep.subr.bf16.mxu0 %v11444
          %11660 = vmatpush2.bf16.msra.mxu0 %v11443
          %11661 = vmatprep.subr.bf16.mxu0 %v11440
          %11662 = vmatpush2.bf16.msra.mxu0 %v11439
          %11663 = vmatprep.subr.bf16.mxu0 %v11436
          %11664 = vmatpush2.bf16.msra.mxu0 %v11435
          %11665 = vmatprep.subr.bf16.mxu0 %v11432
          %11666 = vmatpush2.bf16.msra.mxu0 %v11431
          %11667 = vmatprep.subr.bf16.mxu0 %v11428
          %11668 = vmatpush2.bf16.msra.mxu0 %v11427
          %11669 = vmatprep.subr.bf16.mxu0 %v11424
          %11670 = vmatpush2.bf16.msra.mxu0 %v11423
          %11671 = vmatprep.subr.bf16.mxu0 %v11420
          %11672 = vmatpush2.bf16.msra.mxu0 %v11419
          %11673 = vmatprep.mubr.bf16.mxu0 %v10809
          %11674 = vmatmul.mubr.bf16.gmra.mxu0 %v10808
          %v11675 = vpop.f32.mrf.mxu0
          %v11676 = vadd.f32 %v11635, %v11675
          %v11677 = vpop.f32.mrf.mxu0
          %v11678 = vadd.f32 %v11637, %v11677
          %v11679 = vpop.f32.mrf.mxu0
          %v11680 = vpop.f32.mrf.mxu0
          %11681 = vdwg.mxu0
          %11682 = vmatprep.subr.bf16.mxu0 %v11354
          %11683 = vmatpush1.bf16.msra.mxu0 %v11353
          %11684 = vmatprep.subr.bf16.mxu0 %v11350
          %11685 = vmatpush1.bf16.msra.mxu0 %v11349
          %11686 = vmatprep.subr.bf16.mxu0 %v11346
          %11687 = vmatpush1.bf16.msra.mxu0 %v11345
          %11688 = vmatprep.subr.bf16.mxu0 %v11342
          %11689 = vmatpush1.bf16.msra.mxu0 %v11341
          %11690 = vmatprep.subr.bf16.mxu0 %v11338
          %11691 = vmatpush1.bf16.msra.mxu0 %v11337
          %11692 = vmatprep.subr.bf16.mxu0 %v11334
          %11693 = vmatpush1.bf16.msra.mxu0 %v11333
          %11694 = vmatprep.subr.bf16.mxu0 %v11330
          %11695 = vmatpush1.bf16.msra.mxu0 %v11329
          %11696 = vmatprep.subr.bf16.mxu0 %v11326
          %11697 = vmatpush1.bf16.msra.mxu0 %v11325
          %11698 = vmatprep.subr.bf16.mxu0 %v11386
          %11699 = vmatpush2.bf16.msra.mxu0 %v11385
          %11700 = vmatprep.subr.bf16.mxu0 %v11382
          %11701 = vmatpush2.bf16.msra.mxu0 %v11381
          %11702 = vmatprep.subr.bf16.mxu0 %v11378
          %11703 = vmatpush2.bf16.msra.mxu0 %v11377
          %11704 = vmatprep.subr.bf16.mxu0 %v11374
          %11705 = vmatpush2.bf16.msra.mxu0 %v11373
          %11706 = vmatprep.subr.bf16.mxu0 %v11370
          %11707 = vmatpush2.bf16.msra.mxu0 %v11369
          %11708 = vmatprep.subr.bf16.mxu0 %v11366
          %11709 = vmatpush2.bf16.msra.mxu0 %v11365
          %11710 = vmatprep.subr.bf16.mxu0 %v11362
          %11711 = vmatpush2.bf16.msra.mxu0 %v11361
          %11712 = vmatprep.subr.bf16.mxu0 %v11358
          %11713 = vmatpush2.bf16.msra.mxu0 %v11357
          %11714 = vmatprep.mubr.bf16.mxu0 %v10807
          %11715 = vmatmul.mubr.bf16.gmra.mxu0 %v10806
          %v11716 = vpop.f32.mrf.mxu0
          %v11717 = vadd.f32 %v11591, %v11716
          %v11718 = vpop.f32.mrf.mxu0
          %v11719 = vadd.f32 %v11595, %v11718
          %v11720 = vpop.f32.mrf.mxu0
          %v11721 = vpop.f32.mrf.mxu0
          %11722 = vdwg.mxu0
          %11723 = vmatprep.subr.bf16.mxu0 %v11418
          %11724 = vmatpush1.bf16.msra.mxu0 %v11417
          %11725 = vmatprep.subr.bf16.mxu0 %v11414
          %11726 = vmatpush1.bf16.msra.mxu0 %v11413
          %11727 = vmatprep.subr.bf16.mxu0 %v11410
          %11728 = vmatpush1.bf16.msra.mxu0 %v11409
          %11729 = vmatprep.subr.bf16.mxu0 %v11406
          %11730 = vmatpush1.bf16.msra.mxu0 %v11405
          %11731 = vmatprep.subr.bf16.mxu0 %v11402
          %11732 = vmatpush1.bf16.msra.mxu0 %v11401
          %11733 = vmatprep.subr.bf16.mxu0 %v11398
          %11734 = vmatpush1.bf16.msra.mxu0 %v11397
          %11735 = vmatprep.subr.bf16.mxu0 %v11394
          %11736 = vmatpush1.bf16.msra.mxu0 %v11393
          %11737 = vmatprep.subr.bf16.mxu0 %v11390
          %11738 = vmatpush1.bf16.msra.mxu0 %v11389
          %11739 = vmatprep.subr.bf16.mxu0 %v11450
          %11740 = vmatpush2.bf16.msra.mxu0 %v11449
          %11741 = vmatprep.subr.bf16.mxu0 %v11446
          %11742 = vmatpush2.bf16.msra.mxu0 %v11445
          %11743 = vmatprep.subr.bf16.mxu0 %v11442
          %11744 = vmatpush2.bf16.msra.mxu0 %v11441
          %11745 = vmatprep.subr.bf16.mxu0 %v11438
          %11746 = vmatpush2.bf16.msra.mxu0 %v11437
          %11747 = vmatprep.subr.bf16.mxu0 %v11434
          %11748 = vmatpush2.bf16.msra.mxu0 %v11433
          %11749 = vmatprep.subr.bf16.mxu0 %v11430
          %11750 = vmatpush2.bf16.msra.mxu0 %v11429
          %11751 = vmatprep.subr.bf16.mxu0 %v11426
          %11752 = vmatpush2.bf16.msra.mxu0 %v11425
          %11753 = vmatprep.subr.bf16.mxu0 %v11422
          %11754 = vmatpush2.bf16.msra.mxu0 %v11421
          %11755 = vmatprep.mubr.bf16.mxu0 %v10809
          %11756 = vmatmul.mubr.bf16.gmra.mxu0 %v10808
          %v11757 = vpop.f32.mrf.mxu0
          %v11758 = vadd.f32 %v11717, %v11757
          %v11759 = vpop.f32.mrf.mxu0
          %v11760 = vadd.f32 %v11719, %v11759
          %v11761 = vpop.f32.mrf.mxu0
          %v11762 = vpop.f32.mrf.mxu0
          %11763 = vdwg.mxu0
          %v11764 = vmax.f32 %v11676, 0.0
          %v11765 = vmax.f32 %v11678, 0.0
          %v11766 = vmax.f32 %v11758, 0.0
          %v11767 = vmax.f32 %v11760, 0.0
          %v11768 = vpack.c.bf16 %v11764, %v11764
          %v11769 = vpack.c.bf16 %v11765, %v11765
          %v11770 = vpack.c.bf16 %v11766, %v11766
          %v11771 = vpack.c.bf16 %v11767, %v11767
          %v11772 = vld [vmem:[#allocation12] sm:$0xf]
          %v11773 = vld [vmem:[#allocation12 + $0x4] sm:$0xf]
          %v11774 = vld [vmem:[#allocation12 + $0x8] sm:$0xf]
          %v11775 = vld [vmem:[#allocation12 + $0xc] sm:$0xf]
          %v11776 = vld [vmem:[#allocation12 + $0x10] sm:$0xf]
          %v11777 = vld [vmem:[#allocation12 + $0x14] sm:$0xf]
          %v11778 = vld [vmem:[#allocation12 + $0x18] sm:$0xf]
          %v11779 = vld [vmem:[#allocation12 + $0x1c] sm:$0xf]
          %v11780 = vld [vmem:[#allocation12 + $0x20] sm:$0xf]
          %v11781 = vld [vmem:[#allocation12 + $0x24] sm:$0xf]
          %v11782 = vld [vmem:[#allocation12 + $0x28] sm:$0xf]
          %v11783 = vld [vmem:[#allocation12 + $0x2c] sm:$0xf]
          %v11784 = vld [vmem:[#allocation12 + $0x30] sm:$0xf]
          %v11785 = vld [vmem:[#allocation12 + $0x34] sm:$0xf]
          %v11786 = vld [vmem:[#allocation12 + $0x38] sm:$0xf]
          %v11787 = vld [vmem:[#allocation12 + $0x3c] sm:$0xf]
          %v11788 = vld [vmem:[#allocation12 + $0x40] sm:$0xf]
          %v11789 = vld [vmem:[#allocation12 + $0x44] sm:$0xf]
          %v11790 = vld [vmem:[#allocation12 + $0x48] sm:$0xf]
          %v11791 = vld [vmem:[#allocation12 + $0x4c] sm:$0xf]
          %v11792 = vld [vmem:[#allocation12 + $0x50] sm:$0xf]
          %v11793 = vld [vmem:[#allocation12 + $0x54] sm:$0xf]
          %v11794 = vld [vmem:[#allocation12 + $0x58] sm:$0xf]
          %v11795 = vld [vmem:[#allocation12 + $0x5c] sm:$0xf]
          %v11796 = vld [vmem:[#allocation12 + $0x60] sm:$0xf]
          %v11797 = vld [vmem:[#allocation12 + $0x64] sm:$0xf]
          %v11798 = vld [vmem:[#allocation12 + $0x68] sm:$0xf]
          %v11799 = vld [vmem:[#allocation12 + $0x6c] sm:$0xf]
          %v11800 = vld [vmem:[#allocation12 + $0x70] sm:$0xf]
          %v11801 = vld [vmem:[#allocation12 + $0x74] sm:$0xf]
          %v11802 = vld [vmem:[#allocation12 + $0x78] sm:$0xf]
          %v11803 = vld [vmem:[#allocation12 + $0x7c] sm:$0xf]
          %v11804 = vld [vmem:[#allocation12 + $0x80] sm:$0xf]
          %v11805 = vld [vmem:[#allocation12 + $0x84] sm:$0xf]
          %v11806 = vld [vmem:[#allocation12 + $0x88] sm:$0xf]
          %v11807 = vld [vmem:[#allocation12 + $0x8c] sm:$0xf]
          %v11808 = vld [vmem:[#allocation12 + $0x90] sm:$0xf]
          %v11809 = vld [vmem:[#allocation12 + $0x94] sm:$0xf]
          %v11810 = vld [vmem:[#allocation12 + $0x98] sm:$0xf]
          %v11811 = vld [vmem:[#allocation12 + $0x9c] sm:$0xf]
          %v11812 = vld [vmem:[#allocation12 + $0xa0] sm:$0xf]
          %v11813 = vld [vmem:[#allocation12 + $0xa4] sm:$0xf]
          %v11814 = vld [vmem:[#allocation12 + $0xa8] sm:$0xf]
          %v11815 = vld [vmem:[#allocation12 + $0xac] sm:$0xf]
          %v11816 = vld [vmem:[#allocation12 + $0xb0] sm:$0xf]
          %v11817 = vld [vmem:[#allocation12 + $0xb4] sm:$0xf]
          %v11818 = vld [vmem:[#allocation12 + $0xb8] sm:$0xf]
          %v11819 = vld [vmem:[#allocation12 + $0xbc] sm:$0xf]
          %v11820 = vld [vmem:[#allocation12 + $0xc0] sm:$0xf]
          %v11821 = vld [vmem:[#allocation12 + $0xc4] sm:$0xf]
          %v11822 = vld [vmem:[#allocation12 + $0xc8] sm:$0xf]
          %v11823 = vld [vmem:[#allocation12 + $0xcc] sm:$0xf]
          %v11824 = vld [vmem:[#allocation12 + $0xd0] sm:$0xf]
          %v11825 = vld [vmem:[#allocation12 + $0xd4] sm:$0xf]
          %v11826 = vld [vmem:[#allocation12 + $0xd8] sm:$0xf]
          %v11827 = vld [vmem:[#allocation12 + $0xdc] sm:$0xf]
          %v11828 = vld [vmem:[#allocation12 + $0xe0] sm:$0xf]
          %v11829 = vld [vmem:[#allocation12 + $0xe4] sm:$0xf]
          %v11830 = vld [vmem:[#allocation12 + $0xe8] sm:$0xf]
          %v11831 = vld [vmem:[#allocation12 + $0xec] sm:$0xf]
          %v11832 = vld [vmem:[#allocation12 + $0xf0] sm:$0xf]
          %v11833 = vld [vmem:[#allocation12 + $0xf4] sm:$0xf]
          %v11834 = vld [vmem:[#allocation12 + $0xf8] sm:$0xf]
          %v11835 = vld [vmem:[#allocation12 + $0xfc] sm:$0xf]
          %v11836 = vld [vmem:[#allocation13] sm:$0x1]
          %v11901 = vunpack.c.l.b16 %v11772
          %v11902 = vunpack.c.l.b16 %v11773
          %v11903 = vunpack.c.l.b16 %v11774
          %v11904 = vunpack.c.l.b16 %v11775
          %v11905 = vunpack.c.l.b16 %v11776
          %v11906 = vunpack.c.l.b16 %v11777
          %v11907 = vunpack.c.l.b16 %v11778
          %v11908 = vunpack.c.l.b16 %v11779
          %v11909 = vunpack.c.l.b16 %v11780
          %v11910 = vunpack.c.l.b16 %v11781
          %v11911 = vunpack.c.l.b16 %v11782
          %v11912 = vunpack.c.l.b16 %v11783
          %v11913 = vunpack.c.l.b16 %v11784
          %v11914 = vunpack.c.l.b16 %v11785
          %v11915 = vunpack.c.l.b16 %v11786
          %v11916 = vunpack.c.l.b16 %v11787
          %v11917 = vunpack.c.l.b16 %v11788
          %v11918 = vunpack.c.l.b16 %v11789
          %v11919 = vunpack.c.l.b16 %v11790
          %v11920 = vunpack.c.l.b16 %v11791
          %v11921 = vunpack.c.l.b16 %v11792
          %v11922 = vunpack.c.l.b16 %v11793
          %v11923 = vunpack.c.l.b16 %v11794
          %v11924 = vunpack.c.l.b16 %v11795
          %v11925 = vunpack.c.l.b16 %v11796
          %v11926 = vunpack.c.l.b16 %v11797
          %v11927 = vunpack.c.l.b16 %v11798
          %v11928 = vunpack.c.l.b16 %v11799
          %v11929 = vunpack.c.l.b16 %v11800
          %v11930 = vunpack.c.l.b16 %v11801
          %v11931 = vunpack.c.l.b16 %v11802
          %v11932 = vunpack.c.l.b16 %v11803
          %v11933 = vunpack.c.l.b16 %v11804
          %v11934 = vunpack.c.l.b16 %v11805
          %v11935 = vunpack.c.l.b16 %v11806
          %v11936 = vunpack.c.l.b16 %v11807
          %v11937 = vunpack.c.l.b16 %v11808
          %v11938 = vunpack.c.l.b16 %v11809
          %v11939 = vunpack.c.l.b16 %v11810
          %v11940 = vunpack.c.l.b16 %v11811
          %v11941 = vunpack.c.l.b16 %v11812
          %v11942 = vunpack.c.l.b16 %v11813
          %v11943 = vunpack.c.l.b16 %v11814
          %v11944 = vunpack.c.l.b16 %v11815
          %v11945 = vunpack.c.l.b16 %v11816
          %v11946 = vunpack.c.l.b16 %v11817
          %v11947 = vunpack.c.l.b16 %v11818
          %v11948 = vunpack.c.l.b16 %v11819
          %v11949 = vunpack.c.l.b16 %v11820
          %v11950 = vunpack.c.l.b16 %v11821
          %v11951 = vunpack.c.l.b16 %v11822
          %v11952 = vunpack.c.l.b16 %v11823
          %v11953 = vunpack.c.l.b16 %v11824
          %v11954 = vunpack.c.l.b16 %v11825
          %v11955 = vunpack.c.l.b16 %v11826
          %v11956 = vunpack.c.l.b16 %v11827
          %v11957 = vunpack.c.l.b16 %v11828
          %v11958 = vunpack.c.l.b16 %v11829
          %v11959 = vunpack.c.l.b16 %v11830
          %v11960 = vunpack.c.l.b16 %v11831
          %v11961 = vunpack.c.l.b16 %v11832
          %v11962 = vunpack.c.l.b16 %v11833
          %v11963 = vunpack.c.l.b16 %v11834
          %v11964 = vunpack.c.l.b16 %v11835
          %v11965 = vpack.c.b16 %v11902, %v11901
          %v11966 = vpack.c.b16 %v11904, %v11903
          %v11967 = vpack.c.b16 %v11906, %v11905
          %v11968 = vpack.c.b16 %v11908, %v11907
          %v11969 = vpack.c.b16 %v11910, %v11909
          %v11970 = vpack.c.b16 %v11912, %v11911
          %v11971 = vpack.c.b16 %v11914, %v11913
          %v11972 = vpack.c.b16 %v11916, %v11915
          %v11973 = vpack.c.b16 %v11918, %v11917
          %v11974 = vpack.c.b16 %v11920, %v11919
          %v11975 = vpack.c.b16 %v11922, %v11921
          %v11976 = vpack.c.b16 %v11924, %v11923
          %v11977 = vpack.c.b16 %v11926, %v11925
          %v11978 = vpack.c.b16 %v11928, %v11927
          %v11979 = vpack.c.b16 %v11930, %v11929
          %v11980 = vpack.c.b16 %v11932, %v11931
          %v11981 = vpack.c.b16 %v11934, %v11933
          %v11982 = vpack.c.b16 %v11936, %v11935
          %v11983 = vpack.c.b16 %v11938, %v11937
          %v11984 = vpack.c.b16 %v11940, %v11939
          %v11985 = vpack.c.b16 %v11942, %v11941
          %v11986 = vpack.c.b16 %v11944, %v11943
          %v11987 = vpack.c.b16 %v11946, %v11945
          %v11988 = vpack.c.b16 %v11948, %v11947
          %v11989 = vpack.c.b16 %v11950, %v11949
          %v11990 = vpack.c.b16 %v11952, %v11951
          %v11991 = vpack.c.b16 %v11954, %v11953
          %v11992 = vpack.c.b16 %v11956, %v11955
          %v11993 = vpack.c.b16 %v11958, %v11957
          %v11994 = vpack.c.b16 %v11960, %v11959
          %v11995 = vpack.c.b16 %v11962, %v11961
          %v11996 = vpack.c.b16 %v11964, %v11963
          %12029 = vmatprep.subr.bf16.mxu0 0
          %12030 = vmatpush1.bf16.msra.mxu0 %v11972
          %12031 = vmatprep.subr.bf16.mxu0 0
          %12032 = vmatpush1.bf16.msra.mxu0 %v11971
          %12033 = vmatprep.subr.bf16.mxu0 0
          %12034 = vmatpush1.bf16.msra.mxu0 %v11970
          %12035 = vmatprep.subr.bf16.mxu0 0
          %12036 = vmatpush1.bf16.msra.mxu0 %v11969
          %12037 = vmatprep.subr.bf16.mxu0 0
          %12038 = vmatpush1.bf16.msra.mxu0 %v11968
          %12039 = vmatprep.subr.bf16.mxu0 0
          %12040 = vmatpush1.bf16.msra.mxu0 %v11967
          %12041 = vmatprep.subr.bf16.mxu0 0
          %12042 = vmatpush1.bf16.msra.mxu0 %v11966
          %12043 = vmatprep.subr.bf16.mxu0 0
          %12044 = vmatpush1.bf16.msra.mxu0 %v11965
          %12045 = vmatprep.subr.bf16.mxu0 0
          %12046 = vmatpush2.bf16.msra.mxu0 %v11980
          %12047 = vmatprep.subr.bf16.mxu0 0
          %12048 = vmatpush2.bf16.msra.mxu0 %v11979
          %12049 = vmatprep.subr.bf16.mxu0 0
          %12050 = vmatpush2.bf16.msra.mxu0 %v11978
          %12051 = vmatprep.subr.bf16.mxu0 0
          %12052 = vmatpush2.bf16.msra.mxu0 %v11977
          %12053 = vmatprep.subr.bf16.mxu0 0
          %12054 = vmatpush2.bf16.msra.mxu0 %v11976
          %12055 = vmatprep.subr.bf16.mxu0 0
          %12056 = vmatpush2.bf16.msra.mxu0 %v11975
          %12057 = vmatprep.subr.bf16.mxu0 0
          %12058 = vmatpush2.bf16.msra.mxu0 %v11974
          %12059 = vmatprep.subr.bf16.mxu0 0
          %12060 = vmatpush2.bf16.msra.mxu0 %v11973
          %12061 = vmatprep.mubr.bf16.mxu0 %v11769
          %12062 = vmatmul.mubr.bf16.gmra.mxu0 %v11768
          %v12063 = vpop.f32.mrf.mxu0
          %v12064 = vadd.f32 %v11836, %v12063
          %v12065 = vpop.f32.mrf.mxu0
          %v12066 = vpop.f32.mrf.mxu0
          %v12067 = vpop.f32.mrf.mxu0
          %12068 = vdwg.mxu0
          %12069 = vmatprep.subr.bf16.mxu0 0
          %12070 = vmatpush1.bf16.msra.mxu0 %v11988
          %12071 = vmatprep.subr.bf16.mxu0 0
          %12072 = vmatpush1.bf16.msra.mxu0 %v11987
          %12073 = vmatprep.subr.bf16.mxu0 0
          %12074 = vmatpush1.bf16.msra.mxu0 %v11986
          %12075 = vmatprep.subr.bf16.mxu0 0
          %12076 = vmatpush1.bf16.msra.mxu0 %v11985
          %12077 = vmatprep.subr.bf16.mxu0 0
          %12078 = vmatpush1.bf16.msra.mxu0 %v11984
          %12079 = vmatprep.subr.bf16.mxu0 0
          %12080 = vmatpush1.bf16.msra.mxu0 %v11983
          %12081 = vmatprep.subr.bf16.mxu0 0
          %12082 = vmatpush1.bf16.msra.mxu0 %v11982
          %12083 = vmatprep.subr.bf16.mxu0 0
          %12084 = vmatpush1.bf16.msra.mxu0 %v11981
          %12085 = vmatprep.subr.bf16.mxu0 0
          %12086 = vmatpush2.bf16.msra.mxu0 %v11996
          %12087 = vmatprep.subr.bf16.mxu0 0
          %12088 = vmatpush2.bf16.msra.mxu0 %v11995
          %12089 = vmatprep.subr.bf16.mxu0 0
          %12090 = vmatpush2.bf16.msra.mxu0 %v11994
          %12091 = vmatprep.subr.bf16.mxu0 0
          %12092 = vmatpush2.bf16.msra.mxu0 %v11993
          %12093 = vmatprep.subr.bf16.mxu0 0
          %12094 = vmatpush2.bf16.msra.mxu0 %v11992
          %12095 = vmatprep.subr.bf16.mxu0 0
          %12096 = vmatpush2.bf16.msra.mxu0 %v11991
          %12097 = vmatprep.subr.bf16.mxu0 0
          %12098 = vmatpush2.bf16.msra.mxu0 %v11990
          %12099 = vmatprep.subr.bf16.mxu0 0
          %12100 = vmatpush2.bf16.msra.mxu0 %v11989
          %12101 = vmatprep.mubr.bf16.mxu0 %v11771
          %12102 = vmatmul.mubr.bf16.gmra.mxu0 %v11770
          %v12103 = vpop.f32.mrf.mxu0
          %v12104 = vadd.f32 %v12064, %v12103
          %v12105 = vpop.f32.mrf.mxu0
          %v12106 = vpop.f32.mrf.mxu0
          %v12107 = vpop.f32.mrf.mxu0
          %12108 = vdwg.mxu0
          %12109 = vst [vmem:[%s381] sm:$0x1] %v12104
        $region80: #{tpu_custom_call.1} parent=47 // pred_fallthru
          _
        %s12110 = sand.u32 %s204, 1
        %s12111 = scalar_lea.sflag [#allocation6], %s12110
        %s12112 = sand.u32 %s204, 1
        %s12113 = scalar_lea.vmem [#allocation15], %s12112
        // Predicated region
        $region81: #{tpu_custom_call.1} parent=47 // pred_check
          %p12114 = pneg %p214
        $region82: #{tpu_custom_call.1} parent=47 // pred_check_branch
          %12116 = sbr.rel (%p12114) target = $region84
        $region83: #{tpu_custom_call.1} parent=47 // pred_region
          %s12118 = ssub.s32 16, 16
          %12119 = vsyncadd %s12111, %s12118
          %s12120 = smul.addr %s29, 16
          %s12121 = scalar_lea.hbm %s7, %s12120
          %s12123 = sshll.u32 %s12113, 4
          %s12124 = int_to_ptr.vmem [resolvable:$true] %s12123
          %12126 = dma.vmem_to_hbm [thread:$0]  %s12124, 16, %s12121, %s12111
        $region84: #{tpu_custom_call.1} parent=47 // pred_fallthru
          _
      $region48: #{tpu_custom_call.1} parent=5 // pred_fallthru
        _
      %p12127 = scmp.le.s32.totalorder 2, %s20
      // Predicated region
      $region85: #{tpu_custom_call.1} parent=5 // pred_check
        %p12128 = pneg %p12127
      $region86: #{tpu_custom_call.1} parent=5 // pred_check_branch
        %12130 = sbr.rel (%p12128) target = $region88
      $region87: #{tpu_custom_call.1} parent=5 // pred_region
        %s12131 = ssub.s32 %s20, 2
        // Predicated region
        $region89: #{tpu_custom_call.1} parent=87 // pred_check
          %p12132 = pneg %p220
        $region90: #{tpu_custom_call.1} parent=87 // pred_check_branch
          %12134 = sbr.rel (%p12132) target = $region92
        $region91: #{tpu_custom_call.1} parent=87 // pred_region
          %s12135 = sand.u32 %s205, 1
          %s12136 = scalar_lea.sflag [#allocation6], %s12135
          %s12137 = sand.u32 %s205, 1
          %s12138 = scalar_lea.vmem [#allocation15], %s12137
          %12139 = dma.done %s12136, 16
        $region92: #{tpu_custom_call.1} parent=87 // pred_fallthru
          _
      $region88: #{tpu_custom_call.1} parent=5 // pred_fallthru
        _
    $region6: #{tpu_custom_call.1} parent=1 // loop_footer
      %s24 = sadd.s32 1, %s20
    $region7: #{tpu_custom_call.1} parent=1 // loop_footer_branch
      %19 = sbr.rel target = $region3
    $region8: #{tpu_custom_call.1} parent=1 // loop_exit
      _
    %12140 = vsyncpa [#allocation5], 1
    %s12141 = scalar_lea.sflag [#allocation5], 1
    %12142 = vsyncpa %s12141, 1
    %12143 = vsyncpa [#allocation8], 1
    %12144 = vsyncpa [#allocation11], 1
    %12145 = vsyncpa [#allocation14], 1
    %12146 = vsyncpa [#allocation6], 1
    %s12147 = scalar_lea.sflag [#allocation6], 1
    %12148 = vsyncpa %s12147, 1

</llo_original>
